<compile_context>
chip_gen: v7x
topology: tpu7x:2x2x1
jax: 0.10.0
libtpu: 0.0.40
codegen_flags: <defaults>
</compile_context>

<pallas_src>
import functools

import jax
import jax.numpy as jnp
from jax import lax
from jax.experimental import pallas as pl
from jax.experimental.pallas import tpu as pltpu

HIDDEN = (400, 250, 150, 30, 10)
BN_EPS = 1e-5
LANE = 128
_FUSED_VMEM_BUDGET = 8 * 1024 * 1024  # bytes of (params + activations) estimate


# --------------------------------------------------------------------------
# Small helpers
# --------------------------------------------------------------------------
def _round_up(v, m):
    return (v + m - 1) // m * m


def _pad_cols(a, target):
    pad = target - a.shape[-1]
    return a if pad == 0 else jnp.pad(a, ((0, 0), (0, pad)))


def _pad_rows(a, target):
    pad = target - a.shape[0]
    return a if pad == 0 else jnp.pad(a, ((0, pad), (0, 0)))


def _pick_tile_b(batch):
    # Prefer 256 rows (MXU row dim on v6e/v7x, 2x128 on v5e).
    for t in (256, 128, 512, 64, 32, 16, 8):
        if batch % t == 0:
            return t
    return batch  # fall back to a single whole-batch block


def _const_spec(shape):
    # Resident block: same block for every grid step (DMA'd once).
    return pl.BlockSpec(shape, lambda i, _n=len(shape): (0,) * _n)


# --------------------------------------------------------------------------
# Fused single-call kernel (whole batch + all params resident in VMEM)
# --------------------------------------------------------------------------
def _fused_kernel(x_ref, w1_ref, b1_ref, g1_ref, be1_ref,
                  w2_ref, b2_ref, w3_ref, b3_ref, g3_ref, be3_ref,
                  w4_ref, b4_ref, w5_ref, b5_ref, wo_ref, bo_ref, o_ref):
    def bn(h, g_ref, b_ref):
        # Training-mode BatchNorm1d: biased variance over the batch (two-pass,
        # activations are VMEM-resident).  Padded columns: gamma = beta = 0
        # so they stay exactly zero.
        mu = jnp.mean(h, axis=0, keepdims=True)
        d = h - mu
        var = jnp.mean(d * d, axis=0, keepdims=True)
        scale = g_ref[...] * lax.rsqrt(var + BN_EPS)   # EUP rsqrt
        return d * scale + b_ref[...]

    h = jnp.dot(x_ref[...], w1_ref[...], preferred_element_type=jnp.float32)
    h = jnp.maximum(h + b1_ref[...], 0.0)
    h = bn(h, g1_ref, be1_ref)
    h = jnp.dot(h, w2_ref[...], preferred_element_type=jnp.float32)
    h = jnp.maximum(h + b2_ref[...], 0.0)
    h = jnp.dot(h, w3_ref[...], preferred_element_type=jnp.float32)
    h = jnp.maximum(h + b3_ref[...], 0.0)
    h = bn(h, g3_ref, be3_ref)
    h = jnp.dot(h, w4_ref[...], preferred_element_type=jnp.float32)
    h = jnp.maximum(h + b4_ref[...], 0.0)
    h = jnp.dot(h, w5_ref[...], preferred_element_type=jnp.float32)
    h = jnp.maximum(h + b5_ref[...], 0.0)
    o_ref[...] = (jnp.dot(h, wo_ref[...], preferred_element_type=jnp.float32)
                  + bo_ref[...])


# --------------------------------------------------------------------------
# Batch-tiled 3-stage kernels (1-D grid over batch tiles)
# --------------------------------------------------------------------------
def _stage1_kernel(x_ref, w1_ref, b1_ref, h1_ref, s1_ref, ss1_ref):
    # fc1 -> relu ; per-tile partial stats for norm1 (training-mode BN).
    h = jnp.dot(x_ref[...], w1_ref[...], preferred_element_type=jnp.float32)
    h = jnp.maximum(h + b1_ref[...], 0.0)
    h1_ref[...] = h
    s1_ref[...] = jnp.sum(h, axis=0, keepdims=True)[None]
    ss1_ref[...] = jnp.sum(h * h, axis=0, keepdims=True)[None]


def _stage2_kernel(h1_ref, sc1_ref, sh1_ref, w2_ref, b2_ref, w3_ref, b3_ref,
                   h3_ref, s3_ref, ss3_ref):
    # norm1 (folded affine) -> fc2 -> relu -> fc3 -> relu ; stats for norm3.
    h = h1_ref[...] * sc1_ref[...] + sh1_ref[...]
    h = jnp.dot(h, w2_ref[...], preferred_element_type=jnp.float32)
    h = jnp.maximum(h + b2_ref[...], 0.0)
    h = jnp.dot(h, w3_ref[...], preferred_element_type=jnp.float32)
    h = jnp.maximum(h + b3_ref[...], 0.0)
    h3_ref[...] = h
    s3_ref[...] = jnp.sum(h, axis=0, keepdims=True)[None]
    ss3_ref[...] = jnp.sum(h * h, axis=0, keepdims=True)[None]


def _stage3_kernel(h3_ref, sc3_ref, sh3_ref, w4_ref, b4_ref, w5_ref, b5_ref,
                   wo_ref, bo_ref, o_ref):
    # norm3 (folded affine) -> fc4 -> relu -> fc5 -> relu -> out.
    h = h3_ref[...] * sc3_ref[...] + sh3_ref[...]
    h = jnp.dot(h, w4_ref[...], preferred_element_type=jnp.float32)
    h = jnp.maximum(h + b4_ref[...], 0.0)
    h = jnp.dot(h, w5_ref[...], preferred_element_type=jnp.float32)
    h = jnp.maximum(h + b5_ref[...], 0.0)
    o_ref[...] = (jnp.dot(h, wo_ref[...], preferred_element_type=jnp.float32)
                  + bo_ref[...])


# --------------------------------------------------------------------------
# Parameter init (PyTorch-like) and lane padding
# --------------------------------------------------------------------------
def init_params(key, input_size, output_size):
    """Synthetic init mimicking nn.Linear uniform(-1/sqrt(fan_in), +)."""
    dims = (input_size,) + HIDDEN + (output_size,)
    params = []
    keys = jax.random.split(key, 2 * (len(dims) - 1) + 4)
    ki = 0
    for i in range(len(dims) - 1):
        fan_in, fan_out = dims[i], dims[i + 1]
        bound = 1.0 / float(fan_in) ** 0.5
        w = jax.random.uniform(keys[ki], (fan_in, fan_out), jnp.float32,
                               -bound, bound); ki += 1
        b = jax.random.uniform(keys[ki], (1, fan_out), jnp.float32,
                               -bound, bound); ki += 1
        params.append((w, b))
    # BatchNorm affine params (perturbed so the BN path is exercised).
    g1 = 1.0 + 0.1 * jax.random.normal(keys[ki], (1, HIDDEN[0]), jnp.float32); ki += 1
    be1 = 0.1 * jax.random.normal(keys[ki], (1, HIDDEN[0]), jnp.float32); ki += 1
    g3 = 1.0 + 0.1 * jax.random.normal(keys[ki], (1, HIDDEN[2]), jnp.float32); ki += 1
    be3 = 0.1 * jax.random.normal(keys[ki], (1, HIDDEN[2]), jnp.float32); ki += 1
    return params, (g1, be1, g3, be3)


def prepare_params(linear_params, bn_params):
    """Zero-pad feature dims to multiples of 128 (lane-dense stores, aligned MXU)."""
    (w1, b1), (w2, b2), (w3, b3), (w4, b4), (w5, b5), (wo, bo) = linear_params
    g1, be1, g3, be3 = bn_params
    h1p = _round_up(w1.shape[1], LANE)   # 400 -> 512
    h2p = _round_up(w2.shape[1], LANE)   # 250 -> 256
    h3p = _round_up(w3.shape[1], LANE)   # 150 -> 256
    outp = _round_up(wo.shape[1], LANE)  # 10  -> 128

    w1p = _pad_cols(w1, h1p); b1p = _pad_cols(b1, h1p)
    g1p = _pad_cols(g1, h1p); be1p = _pad_cols(be1, h1p)
    w2p = _pad_cols(_pad_rows(w2, h1p), h2p); b2p = _pad_cols(b2, h2p)
    w3p = _pad_cols(_pad_rows(w3, h2p), h3p); b3p = _pad_cols(b3, h3p)
    g3p = _pad_cols(g3, h3p); be3p = _pad_cols(be3, h3p)
    w4p = _pad_rows(w4, h3p)
    wop = _pad_cols(wo, outp); bop = _pad_cols(bo, outp)
    return (w1p, b1p, g1p, be1p, w2p, b2p, w3p, b3p, g3p, be3p,
            w4p, b4, w5, b5, wop, bop)


def _bn_fold(sums, sumsqs, gamma, beta, n):
    """Combine per-tile partial stats and fold BN into (scale, shift) rows."""
    mean = jnp.sum(sums, axis=0) / n                  # (1, F)
    ex2 = jnp.sum(sumsqs, axis=0) / n                 # (1, F)
    var = jnp.maximum(ex2 - mean * mean, 0.0)
    scale = gamma / jnp.sqrt(var + BN_EPS)
    shift = beta - mean * scale
    return scale, shift


# --------------------------------------------------------------------------
# Forward pass
# --------------------------------------------------------------------------
@functools.partial(jax.jit, static_argnames=("out_features", "force_path"))
def pseudo_label_nn(x, padded_params, *, out_features, force_path=None):
    (w1p, b1p, g1p, be1p, w2p, b2p, w3p, b3p, g3p, be3p,
     w4p, b4, w5, b5, wop, bop) = padded_params

    batch, d_in = x.shape
    h1p = w1p.shape[1]
    h2p = w2p.shape[1]
    h3p = w3p.shape[1]
    h4 = w4p.shape[1]
    h5 = w5.shape[1]
    outp = wop.shape[1]

    # Static VMEM estimate for dispatch (shapes are static under jit).
    param_bytes = 4 * (w1p.size + b1p.size + g1p.size + be1p.size + w2p.size
                       + b2p.size + w3p.size + b3p.size + g3p.size + be3p.size
                       + w4p.size + b4.size + w5.size + b5.size
                       + wop.size + bop.size)
    act_bytes = 4 * batch * (d_in + h1p + h2p + h3p + h4 + h5 + outp)
    fits_vmem = (param_bytes + act_bytes) <= _FUSED_VMEM_BUDGET

    if force_path == "fused" or (force_path is None and fits_vmem):
        # ---- fused single-call path: everything resident in VMEM ----------
        out = pl.pallas_call(
            _fused_kernel,
            out_shape=jax.ShapeDtypeStruct((batch, outp), jnp.float32),
            compiler_params=pltpu.CompilerParams(
                vmem_limit_bytes=32 * 1024 * 1024),
        )(x, w1p, b1p, g1p, be1p, w2p, b2p, w3p, b3p, g3p, be3p,
          w4p, b4, w5, b5, wop, bop)
        return out[:, :out_features]

    # ---- batch-tiled 3-stage pipeline -------------------------------------
    tile_b = _pick_tile_b(batch)
    nt = batch // tile_b
    fbatch = jnp.float32(batch)
    cparams = pltpu.CompilerParams(dimension_semantics=("parallel",))

    # stage 1: fc1 + relu, per-tile BN1 partial stats
    h1, s1, ss1 = pl.pallas_call(
        _stage1_kernel,
        out_shape=(jax.ShapeDtypeStruct((batch, h1p), jnp.float32),
                   jax.ShapeDtypeStruct((nt, 1, h1p), jnp.float32),
                   jax.ShapeDtypeStruct((nt, 1, h1p), jnp.float32)),
        grid=(nt,),
        in_specs=[
            pl.BlockSpec((tile_b, d_in), lambda i: (i, 0)),
            _const_spec((d_in, h1p)),
            _const_spec((1, h1p)),
        ],
        out_specs=(
            pl.BlockSpec((tile_b, h1p), lambda i: (i, 0)),
            pl.BlockSpec((1, 1, h1p), lambda i: (i, 0, 0)),
            pl.BlockSpec((1, 1, h1p), lambda i: (i, 0, 0)),
        ),
        compiler_params=cparams,
    )(x, w1p, b1p)

    scale1, shift1 = _bn_fold(s1, ss1, g1p, be1p, fbatch)

    # stage 2: norm1 -> fc2 -> relu -> fc3 -> relu, BN3 partial stats
    h3, s3, ss3 = pl.pallas_call(
        _stage2_kernel,
        out_shape=(jax.ShapeDtypeStruct((batch, h3p), jnp.float32),
                   jax.ShapeDtypeStruct((nt, 1, h3p), jnp.float32),
                   jax.ShapeDtypeStruct((nt, 1, h3p), jnp.float32)),
        grid=(nt,),
        in_specs=[
            pl.BlockSpec((tile_b, h1p), lambda i: (i, 0)),
            _const_spec((1, h1p)),
            _const_spec((1, h1p)),
            _const_spec((h1p, h2p)),
            _const_spec((1, h2p)),
            _const_spec((h2p, h3p)),
            _const_spec((1, h3p)),
        ],
        out_specs=(
            pl.BlockSpec((tile_b, h3p), lambda i: (i, 0)),
            pl.BlockSpec((1, 1, h3p), lambda i: (i, 0, 0)),
            pl.BlockSpec((1, 1, h3p), lambda i: (i, 0, 0)),
        ),
        compiler_params=cparams,
    )(h1, scale1, shift1, w2p, b2p, w3p, b3p)

    scale3, shift3 = _bn_fold(s3, ss3, g3p, be3p, fbatch)

    # stage 3: norm3 -> fc4 -> relu -> fc5 -> relu -> out
    out = pl.pallas_call(
        _stage3_kernel,
        out_shape=jax.ShapeDtypeStruct((batch, outp), jnp.float32),
        grid=(nt,),
        in_specs=[
            pl.BlockSpec((tile_b, h3p), lambda i: (i, 0)),
            _const_spec((1, h3p)),
            _const_spec((1, h3p)),
            _const_spec((h3p, h4)),
            _const_spec((1, h4)),
            _const_spec((h4, h5)),
            _const_spec((1, h5)),
            _const_spec((h5, outp)),
            _const_spec((1, outp)),
        ],
        out_specs=pl.BlockSpec((tile_b, outp), lambda i: (i, 0)),
        compiler_params=cparams,
    )(h3, scale3, shift3, w4p, b4, w5, b5, wop, bop)

    return out[:, :out_features]


# --------------------------------------------------------------------------
# Pure-JAX reference (unpadded params, two-pass BN) for verification
# --------------------------------------------------------------------------
def reference(x, linear_params, bn_params):
    (w1, b1), (w2, b2), (w3, b3), (w4, b4), (w5, b5), (wo, bo) = linear_params
    g1, be1, g3, be3 = bn_params

    def bn(h, g, b):
        mu = jnp.mean(h, axis=0, keepdims=True)
        var = jnp.mean((h - mu) ** 2, axis=0, keepdims=True)
        return (h - mu) / jnp.sqrt(var + BN_EPS) * g + b

    h = jnp.maximum(x @ w1 + b1, 0.0)
    h = bn(h, g1, be1)
    h = jnp.maximum(h @ w2 + b2, 0.0)
    h = jnp.maximum(h @ w3 + b3, 0.0)
    h = bn(h, g3, be3)
    h = jnp.maximum(h @ w4 + b4, 0.0)
    h = jnp.maximum(h @ w5 + b5, 0.0)
    return h @ wo + bo


if __name__ == "__main__":
    key = jax.random.PRNGKey(0)
    k_param, k_x = jax.random.split(key)

    # Batch >= 2 MXU row-tiles so the cross-tile BatchNorm path is exercised.
    batch, input_size, output_size = 512, 64, 10
    linear_params, bn_params = init_params(k_param, input_size, output_size)
    padded_params = prepare_params(linear_params, bn_params)
    x = jax.random.normal(k_x, (batch, input_size), jnp.float32)

    y_ref = reference(x, linear_params, bn_params)

    # Auto-dispatch: this size is VMEM-resident, so the fused single-call
    # kernel is used.
    y_fused = jax.block_until_ready(
        pseudo_label_nn(x, padded_params, out_features=output_size))
    # Batch-tiled 3-stage path (used for large batches) exercised explicitly.
    y_tiled = jax.block_until_ready(
        pseudo_label_nn(x, padded_params, out_features=output_size,
                        force_path="tiled"))

    assert y_fused.shape == (batch, output_size)
    assert y_tiled.shape == (batch, output_size)
    assert jnp.allclose(y_fused, y_ref, atol=1e-3, rtol=1e-3), "fused mismatch"
    assert jnp.allclose(y_tiled, y_ref, atol=1e-3, rtol=1e-3), "tiled mismatch"

    print("KERNEL_OK")
</pallas_src>

<mosaic_0001>
module attributes {stable_mosaic.version = 11 : i64} {
  func.func @_fused_kernel(%arg0: memref<512x64xf32, #tpu.memory_space<vmem>>, %arg1: memref<64x512xf32, #tpu.memory_space<vmem>>, %arg2: memref<1x512xf32, #tpu.memory_space<vmem>>, %arg3: memref<1x512xf32, #tpu.memory_space<vmem>>, %arg4: memref<1x512xf32, #tpu.memory_space<vmem>>, %arg5: memref<512x256xf32, #tpu.memory_space<vmem>>, %arg6: memref<1x256xf32, #tpu.memory_space<vmem>>, %arg7: memref<256x256xf32, #tpu.memory_space<vmem>>, %arg8: memref<1x256xf32, #tpu.memory_space<vmem>>, %arg9: memref<1x256xf32, #tpu.memory_space<vmem>>, %arg10: memref<1x256xf32, #tpu.memory_space<vmem>>, %arg11: memref<256x30xf32, #tpu.memory_space<vmem>>, %arg12: memref<1x30xf32, #tpu.memory_space<vmem>>, %arg13: memref<30x10xf32, #tpu.memory_space<vmem>>, %arg14: memref<1x10xf32, #tpu.memory_space<vmem>>, %arg15: memref<10x128xf32, #tpu.memory_space<vmem>>, %arg16: memref<1x128xf32, #tpu.memory_space<vmem>>, %arg17: memref<512x128xf32, #tpu.memory_space<vmem>>) attributes {dimension_semantics = [], scalar_prefetch = 0 : i64, scratch_operands = 0 : i64, tpu.core_type = #tpu.core_type<tc>} {
    %c0 = arith.constant 0 : index
    %c0_0 = arith.constant 0 : index
    %0 = vector.load %arg0[%c0, %c0_0] : memref<512x64xf32, #tpu.memory_space<vmem>>, vector<512x64xf32>
    %c0_1 = arith.constant 0 : index
    %c0_2 = arith.constant 0 : index
    %1 = vector.load %arg1[%c0_1, %c0_2] : memref<64x512xf32, #tpu.memory_space<vmem>>, vector<64x512xf32>
    %cst = arith.constant dense<0.000000e+00> : vector<512x512xf32>
    %2 = tpu.matmul %0, %1, %cst {dimension_numbers = #tpu.dot_dimension_numbers<[1], [0], [0], [1], [0, 0, 1, 1], [], []>} : vector<512x64xf32>, vector<64x512xf32>, vector<512x512xf32> -> vector<512x512xf32>
    %c0_3 = arith.constant 0 : index
    %c0_4 = arith.constant 0 : index
    %3 = vector.load %arg2[%c0_3, %c0_4] : memref<1x512xf32, #tpu.memory_space<vmem>>, vector<1x512xf32>
    %4 = vector.broadcast %3 : vector<1x512xf32> to vector<512x512xf32>
    %5 = arith.addf %2, %4 : vector<512x512xf32>
    %cst_5 = arith.constant 0.000000e+00 : f32
    %6 = vector.broadcast %cst_5 : f32 to vector<512x512xf32>
    %7 = arith.maximumf %5, %6 : vector<512x512xf32>
    %cst_6 = arith.constant dense<0.000000e+00> : vector<512xf32>
    %8 = vector.multi_reduction <add>, %7, %cst_6 [0] : vector<512x512xf32> to vector<512xf32>
    %9 = vector.shape_cast %8 : vector<512xf32> to vector<1x512xf32>
    %cst_7 = arith.constant 5.120000e+02 : f32
    %10 = vector.broadcast %cst_7 : f32 to vector<1x512xf32>
    %11 = arith.divf %9, %10 : vector<1x512xf32>
    %12 = vector.broadcast %11 : vector<1x512xf32> to vector<512x512xf32>
    %13 = arith.subf %7, %12 : vector<512x512xf32>
    %14 = arith.mulf %13, %13 : vector<512x512xf32>
    %cst_8 = arith.constant dense<0.000000e+00> : vector<512xf32>
    %15 = vector.multi_reduction <add>, %14, %cst_8 [0] : vector<512x512xf32> to vector<512xf32>
    %16 = vector.shape_cast %15 : vector<512xf32> to vector<1x512xf32>
    %cst_9 = arith.constant 5.120000e+02 : f32
    %17 = vector.broadcast %cst_9 : f32 to vector<1x512xf32>
    %18 = arith.divf %16, %17 : vector<1x512xf32>
    %c0_10 = arith.constant 0 : index
    %c0_11 = arith.constant 0 : index
    %19 = vector.load %arg3[%c0_10, %c0_11] : memref<1x512xf32, #tpu.memory_space<vmem>>, vector<1x512xf32>
    %cst_12 = arith.constant 9.99999974E-6 : f32
    %20 = vector.broadcast %cst_12 : f32 to vector<1x512xf32>
    %21 = arith.addf %18, %20 : vector<1x512xf32>
    %22 = math.rsqrt %21 : vector<1x512xf32>
    %23 = arith.mulf %19, %22 : vector<1x512xf32>
    %24 = vector.broadcast %23 : vector<1x512xf32> to vector<512x512xf32>
    %25 = arith.mulf %13, %24 : vector<512x512xf32>
    %c0_13 = arith.constant 0 : index
    %c0_14 = arith.constant 0 : index
    %26 = vector.load %arg4[%c0_13, %c0_14] : memref<1x512xf32, #tpu.memory_space<vmem>>, vector<1x512xf32>
    %27 = vector.broadcast %26 : vector<1x512xf32> to vector<512x512xf32>
    %28 = arith.addf %25, %27 : vector<512x512xf32>
    %c0_15 = arith.constant 0 : index
    %c0_16 = arith.constant 0 : index
    %29 = vector.load %arg5[%c0_15, %c0_16] : memref<512x256xf32, #tpu.memory_space<vmem>>, vector<512x256xf32>
    %cst_17 = arith.constant dense<0.000000e+00> : vector<512x256xf32>
    %30 = tpu.matmul %28, %29, %cst_17 {dimension_numbers = #tpu.dot_dimension_numbers<[1], [0], [0], [1], [0, 0, 1, 1], [], []>} : vector<512x512xf32>, vector<512x256xf32>, vector<512x256xf32> -> vector<512x256xf32>
    %c0_18 = arith.constant 0 : index
    %c0_19 = arith.constant 0 : index
    %31 = vector.load %arg6[%c0_18, %c0_19] : memref<1x256xf32, #tpu.memory_space<vmem>>, vector<1x256xf32>
    %32 = vector.broadcast %31 : vector<1x256xf32> to vector<512x256xf32>
    %33 = arith.addf %30, %32 : vector<512x256xf32>
    %cst_20 = arith.constant 0.000000e+00 : f32
    %34 = vector.broadcast %cst_20 : f32 to vector<512x256xf32>
    %35 = arith.maximumf %33, %34 : vector<512x256xf32>
    %c0_21 = arith.constant 0 : index
    %c0_22 = arith.constant 0 : index
    %36 = vector.load %arg7[%c0_21, %c0_22] : memref<256x256xf32, #tpu.memory_space<vmem>>, vector<256x256xf32>
    %cst_23 = arith.constant dense<0.000000e+00> : vector<512x256xf32>
    %37 = tpu.matmul %35, %36, %cst_23 {dimension_numbers = #tpu.dot_dimension_numbers<[1], [0], [0], [1], [0, 0, 1, 1], [], []>} : vector<512x256xf32>, vector<256x256xf32>, vector<512x256xf32> -> vector<512x256xf32>
    %c0_24 = arith.constant 0 : index
    %c0_25 = arith.constant 0 : index
    %38 = vector.load %arg8[%c0_24, %c0_25] : memref<1x256xf32, #tpu.memory_space<vmem>>, vector<1x256xf32>
    %39 = vector.broadcast %38 : vector<1x256xf32> to vector<512x256xf32>
    %40 = arith.addf %37, %39 : vector<512x256xf32>
    %cst_26 = arith.constant 0.000000e+00 : f32
    %41 = vector.broadcast %cst_26 : f32 to vector<512x256xf32>
    %42 = arith.maximumf %40, %41 : vector<512x256xf32>
    %cst_27 = arith.constant dense<0.000000e+00> : vector<256xf32>
    %43 = vector.multi_reduction <add>, %42, %cst_27 [0] : vector<512x256xf32> to vector<256xf32>
    %44 = vector.shape_cast %43 : vector<256xf32> to vector<1x256xf32>
    %cst_28 = arith.constant 5.120000e+02 : f32
    %45 = vector.broadcast %cst_28 : f32 to vector<1x256xf32>
    %46 = arith.divf %44, %45 : vector<1x256xf32>
    %47 = vector.broadcast %46 : vector<1x256xf32> to vector<512x256xf32>
    %48 = arith.subf %42, %47 : vector<512x256xf32>
    %49 = arith.mulf %48, %48 : vector<512x256xf32>
    %cst_29 = arith.constant dense<0.000000e+00> : vector<256xf32>
    %50 = vector.multi_reduction <add>, %49, %cst_29 [0] : vector<512x256xf32> to vector<256xf32>
    %51 = vector.shape_cast %50 : vector<256xf32> to vector<1x256xf32>
    %cst_30 = arith.constant 5.120000e+02 : f32
    %52 = vector.broadcast %cst_30 : f32 to vector<1x256xf32>
    %53 = arith.divf %51, %52 : vector<1x256xf32>
    %c0_31 = arith.constant 0 : index
    %c0_32 = arith.constant 0 : index
    %54 = vector.load %arg9[%c0_31, %c0_32] : memref<1x256xf32, #tpu.memory_space<vmem>>, vector<1x256xf32>
    %cst_33 = arith.constant 9.99999974E-6 : f32
    %55 = vector.broadcast %cst_33 : f32 to vector<1x256xf32>
    %56 = arith.addf %53, %55 : vector<1x256xf32>
    %57 = math.rsqrt %56 : vector<1x256xf32>
    %58 = arith.mulf %54, %57 : vector<1x256xf32>
    %59 = vector.broadcast %58 : vector<1x256xf32> to vector<512x256xf32>
    %60 = arith.mulf %48, %59 : vector<512x256xf32>
    %c0_34 = arith.constant 0 : index
    %c0_35 = arith.constant 0 : index
    %61 = vector.load %arg10[%c0_34, %c0_35] : memref<1x256xf32, #tpu.memory_space<vmem>>, vector<1x256xf32>
    %62 = vector.broadcast %61 : vector<1x256xf32> to vector<512x256xf32>
    %63 = arith.addf %60, %62 : vector<512x256xf32>
    %c0_36 = arith.constant 0 : index
    %c0_37 = arith.constant 0 : index
    %64 = vector.load %arg11[%c0_36, %c0_37] : memref<256x30xf32, #tpu.memory_space<vmem>>, vector<256x30xf32>
    %cst_38 = arith.constant dense<0.000000e+00> : vector<512x30xf32>
    %65 = tpu.matmul %63, %64, %cst_38 {dimension_numbers = #tpu.dot_dimension_numbers<[1], [0], [0], [1], [0, 0, 1, 1], [], []>} : vector<512x256xf32>, vector<256x30xf32>, vector<512x30xf32> -> vector<512x30xf32>
    %c0_39 = arith.constant 0 : index
    %c0_40 = arith.constant 0 : index
    %66 = vector.load %arg12[%c0_39, %c0_40] : memref<1x30xf32, #tpu.memory_space<vmem>>, vector<1x30xf32>
    %67 = vector.broadcast %66 : vector<1x30xf32> to vector<512x30xf32>
    %68 = arith.addf %65, %67 : vector<512x30xf32>
    %cst_41 = arith.constant 0.000000e+00 : f32
    %69 = vector.broadcast %cst_41 : f32 to vector<512x30xf32>
    %70 = arith.maximumf %68, %69 : vector<512x30xf32>
    %c0_42 = arith.constant 0 : index
    %c0_43 = arith.constant 0 : index
    %71 = vector.load %arg13[%c0_42, %c0_43] : memref<30x10xf32, #tpu.memory_space<vmem>>, vector<30x10xf32>
    %cst_44 = arith.constant dense<0.000000e+00> : vector<512x10xf32>
    %72 = tpu.matmul %70, %71, %cst_44 {dimension_numbers = #tpu.dot_dimension_numbers<[1], [0], [0], [1], [0, 0, 1, 1], [], []>} : vector<512x30xf32>, vector<30x10xf32>, vector<512x10xf32> -> vector<512x10xf32>
    %c0_45 = arith.constant 0 : index
    %c0_46 = arith.constant 0 : index
    %73 = vector.load %arg14[%c0_45, %c0_46] : memref<1x10xf32, #tpu.memory_space<vmem>>, vector<1x10xf32>
    %74 = vector.broadcast %73 : vector<1x10xf32> to vector<512x10xf32>
    %75 = arith.addf %72, %74 : vector<512x10xf32>
    %cst_47 = arith.constant 0.000000e+00 : f32
    %76 = vector.broadcast %cst_47 : f32 to vector<512x10xf32>
    %77 = arith.maximumf %75, %76 : vector<512x10xf32>
    %c0_48 = arith.constant 0 : index
    %c0_49 = arith.constant 0 : index
    %78 = vector.load %arg15[%c0_48, %c0_49] : memref<10x128xf32, #tpu.memory_space<vmem>>, vector<10x128xf32>
    %cst_50 = arith.constant dense<0.000000e+00> : vector<512x128xf32>
    %79 = tpu.matmul %77, %78, %cst_50 {dimension_numbers = #tpu.dot_dimension_numbers<[1], [0], [0], [1], [0, 0, 1, 1], [], []>} : vector<512x10xf32>, vector<10x128xf32>, vector<512x128xf32> -> vector<512x128xf32>
    %c0_51 = arith.constant 0 : index
    %c0_52 = arith.constant 0 : index
    %80 = vector.load %arg16[%c0_51, %c0_52] : memref<1x128xf32, #tpu.memory_space<vmem>>, vector<1x128xf32>
    %81 = vector.broadcast %80 : vector<1x128xf32> to vector<512x128xf32>
    %82 = arith.addf %79, %81 : vector<512x128xf32>
    %c0_53 = arith.constant 0 : index
    %c0_54 = arith.constant 0 : index
    %83 = vector.load %arg17[%c0_53, %c0_54] : memref<512x128xf32, #tpu.memory_space<vmem>>, vector<512x128xf32>
    tpu.vector_store %arg17[%c0_53, %c0_54], %82 {strides = array<i32>} : memref<512x128xf32, #tpu.memory_space<vmem>>, vector<512x128xf32>,
    return
  }
}

</mosaic_0001>

<llo_original>
// kernel: pseudo_label_nn.1
$region0: #{pseudo_label_nn.1}
  #allocation0 [shape = 'u32[]', space=smem, size = 0x4, offset = 0x4, fixed_abs, tag = 'smem constant byte address 0x4 - core index']
  #allocation1 [shape = 'u32[144,128]{1,0:T(1,128)}', space=vmem, size = 0x12000, scoped, tag = 'internal scratch']
  %s0 = inlined_call_operand.vmem [shape: f32[512,64], index: 0, kind: input, shape index: {}]
  %s1 = inlined_call_operand.hbm [shape: f32[64,512], index: 1, kind: input, shape index: {}]
  %s2 = inlined_call_operand.vmem [shape: f32[1,512], index: 2, kind: input, shape index: {}]
  %s3 = inlined_call_operand.vmem [shape: f32[1,512], index: 3, kind: input, shape index: {}]
  %s4 = inlined_call_operand.vmem [shape: f32[1,512], index: 4, kind: input, shape index: {}]
  %s5 = inlined_call_operand.vmem [shape: f32[512,256], index: 5, kind: input, shape index: {}]
  %s6 = inlined_call_operand.vmem [shape: f32[1,256], index: 6, kind: input, shape index: {}]
  %s7 = inlined_call_operand.hbm [shape: f32[256,256], index: 7, kind: input, shape index: {}]
  %s8 = inlined_call_operand.vmem [shape: f32[1,256], index: 8, kind: input, shape index: {}]
  %s9 = inlined_call_operand.vmem [shape: f32[1,256], index: 9, kind: input, shape index: {}]
  %s10 = inlined_call_operand.vmem [shape: f32[1,256], index: 10, kind: input, shape index: {}]
  %s11 = inlined_call_operand.vmem [shape: f32[256,30], index: 11, kind: input, shape index: {}]
  %s12 = inlined_call_operand.vmem [shape: f32[1,30], index: 12, kind: input, shape index: {}]
  %s13 = inlined_call_operand.vmem [shape: f32[30,10], index: 13, kind: input, shape index: {}]
  %s14 = inlined_call_operand.vmem [shape: f32[1,10], index: 14, kind: input, shape index: {}]
  %s15 = inlined_call_operand.vmem [shape: f32[10,128], index: 15, kind: input, shape index: {}]
  %s16 = inlined_call_operand.vmem [shape: f32[1,128], index: 16, kind: input, shape index: {}]
  %s17 = inlined_call_operand.vmem [shape: f32[512,128], index: 17, kind: output, shape index: {}]
  %s18 = sld [smem:[#allocation0]]
  $region86: #{pseudo_label_nn.1} parent=0
    _
  %s20 = ssub.s32 1, %s18
  %s21 = scalar_select 0, %s20, %s18
  $region1: #{pseudo_label_nn.1} parent=0
    #allocation2 [shape = 'u8[131072]{0}', space=vmem, size = 0x20000, scoped, tag = 'input window, operand 1, single buffered']
    #allocation3 [shape = 's32[1]{0}', space=sflag, size = 0x4, scoped, tag = 'scoped memory for pseudo_label_nn.1']
    #allocation4 [shape = 'u8[262144]{0}', space=vmem, size = 0x40000, scoped, tag = 'input window, operand 7, single buffered']
    #allocation5 [shape = 's32[1]{0}', space=sflag, size = 0x4, scoped, tag = 'scoped memory for pseudo_label_nn.1']
    %22 = vsyncpa [#allocation3], 0
    %23 = vsyncpa [#allocation5], 0
    // Predicated region
    $region2: #{pseudo_label_nn.1} parent=1 // pred_check
      _
    $region3: #{pseudo_label_nn.1} parent=1 // pred_check_branch
      %25 = sbr.rel (0) target = $region5
    $region4: #{pseudo_label_nn.1} parent=1 // pred_region
      _
    $region5: #{pseudo_label_nn.1} parent=1 // pred_fallthru
      _
    // Predicated region
    $region6: #{pseudo_label_nn.1} parent=1 // pred_check
      _
    $region7: #{pseudo_label_nn.1} parent=1 // pred_check_branch
      %27 = sbr.rel (0) target = $region9
    $region8: #{pseudo_label_nn.1} parent=1 // pred_region
      %s29 = ssub.s32 4096, 4096
      %30 = vsyncadd [#allocation3], %s29
      %s31 = sshll.u32 [#allocation2], 4
      %s32 = int_to_ptr.vmem [resolvable:$true] %s31
      %37 = dma.hbm_to_vmem [thread:$0]  %s1, 4096, %s32, [#allocation3], 512, 512, 32
    $region9: #{pseudo_label_nn.1} parent=1 // pred_fallthru
      _
    // Predicated region
    $region10: #{pseudo_label_nn.1} parent=1 // pred_check
      _
    $region11: #{pseudo_label_nn.1} parent=1 // pred_check_branch
      %39 = sbr.rel (0) target = $region13
    $region12: #{pseudo_label_nn.1} parent=1 // pred_region
      _
    $region13: #{pseudo_label_nn.1} parent=1 // pred_fallthru
      _
    // Predicated region
    $region14: #{pseudo_label_nn.1} parent=1 // pred_check
      _
    $region15: #{pseudo_label_nn.1} parent=1 // pred_check_branch
      %41 = sbr.rel (0) target = $region17
    $region16: #{pseudo_label_nn.1} parent=1 // pred_region
      _
    $region17: #{pseudo_label_nn.1} parent=1 // pred_fallthru
      _
    // Predicated region
    $region18: #{pseudo_label_nn.1} parent=1 // pred_check
      _
    $region19: #{pseudo_label_nn.1} parent=1 // pred_check_branch
      %43 = sbr.rel (0) target = $region21
    $region20: #{pseudo_label_nn.1} parent=1 // pred_region
      _
    $region21: #{pseudo_label_nn.1} parent=1 // pred_fallthru
      _
    // Predicated region
    $region22: #{pseudo_label_nn.1} parent=1 // pred_check
      _
    $region23: #{pseudo_label_nn.1} parent=1 // pred_check_branch
      %45 = sbr.rel (0) target = $region25
    $region24: #{pseudo_label_nn.1} parent=1 // pred_region
      _
    $region25: #{pseudo_label_nn.1} parent=1 // pred_fallthru
      _
    // Predicated region
    $region26: #{pseudo_label_nn.1} parent=1 // pred_check
      _
    $region27: #{pseudo_label_nn.1} parent=1 // pred_check_branch
      %47 = sbr.rel (0) target = $region29
    $region28: #{pseudo_label_nn.1} parent=1 // pred_region
      _
    $region29: #{pseudo_label_nn.1} parent=1 // pred_fallthru
      _
    // Predicated region
    $region30: #{pseudo_label_nn.1} parent=1 // pred_check
      _
    $region31: #{pseudo_label_nn.1} parent=1 // pred_check_branch
      %49 = sbr.rel (0) target = $region33
    $region32: #{pseudo_label_nn.1} parent=1 // pred_region
      %s51 = ssub.s32 8192, 8192
      %52 = vsyncadd [#allocation5], %s51
      %s53 = sshll.u32 [#allocation4], 4
      %s54 = int_to_ptr.vmem [resolvable:$true] %s53
      %59 = dma.hbm_to_vmem [thread:$0]  %s7, 8192, %s54, [#allocation5], 256, 256, 16
    $region33: #{pseudo_label_nn.1} parent=1 // pred_fallthru
      _
    // Predicated region
    $region34: #{pseudo_label_nn.1} parent=1 // pred_check
      _
    $region35: #{pseudo_label_nn.1} parent=1 // pred_check_branch
      %61 = sbr.rel (0) target = $region37
    $region36: #{pseudo_label_nn.1} parent=1 // pred_region
      _
    $region37: #{pseudo_label_nn.1} parent=1 // pred_fallthru
      _
    // Predicated region
    $region38: #{pseudo_label_nn.1} parent=1 // pred_check
      _
    $region39: #{pseudo_label_nn.1} parent=1 // pred_check_branch
      %63 = sbr.rel (0) target = $region41
    $region40: #{pseudo_label_nn.1} parent=1 // pred_region
      _
    $region41: #{pseudo_label_nn.1} parent=1 // pred_fallthru
      _
    // Predicated region
    $region42: #{pseudo_label_nn.1} parent=1 // pred_check
      _
    $region43: #{pseudo_label_nn.1} parent=1 // pred_check_branch
      %65 = sbr.rel (0) target = $region45
    $region44: #{pseudo_label_nn.1} parent=1 // pred_region
      _
    $region45: #{pseudo_label_nn.1} parent=1 // pred_fallthru
      _
    // Predicated region
    $region46: #{pseudo_label_nn.1} parent=1 // pred_check
      _
    $region47: #{pseudo_label_nn.1} parent=1 // pred_check_branch
      %67 = sbr.rel (0) target = $region49
    $region48: #{pseudo_label_nn.1} parent=1 // pred_region
      _
    $region49: #{pseudo_label_nn.1} parent=1 // pred_fallthru
      _
    // Predicated region
    $region50: #{pseudo_label_nn.1} parent=1 // pred_check
      _
    $region51: #{pseudo_label_nn.1} parent=1 // pred_check_branch
      %69 = sbr.rel (0) target = $region53
    $region52: #{pseudo_label_nn.1} parent=1 // pred_region
      _
    $region53: #{pseudo_label_nn.1} parent=1 // pred_fallthru
      _
    // Predicated region
    $region54: #{pseudo_label_nn.1} parent=1 // pred_check
      _
    $region55: #{pseudo_label_nn.1} parent=1 // pred_check_branch
      %71 = sbr.rel (0) target = $region57
    $region56: #{pseudo_label_nn.1} parent=1 // pred_region
      _
    $region57: #{pseudo_label_nn.1} parent=1 // pred_fallthru
      _
    // Predicated region
    $region58: #{pseudo_label_nn.1} parent=1 // pred_check
      _
    $region59: #{pseudo_label_nn.1} parent=1 // pred_check_branch
      %73 = sbr.rel (0) target = $region61
    $region60: #{pseudo_label_nn.1} parent=1 // pred_region
      _
    $region61: #{pseudo_label_nn.1} parent=1 // pred_fallthru
      _
    // Predicated region
    $region62: #{pseudo_label_nn.1} parent=1 // pred_check
      _
    $region63: #{pseudo_label_nn.1} parent=1 // pred_check_branch
      %75 = sbr.rel (0) target = $region65
    $region64: #{pseudo_label_nn.1} parent=1 // pred_region
      _
    $region65: #{pseudo_label_nn.1} parent=1 // pred_fallthru
      _
    // Predicated region
    $region66: #{pseudo_label_nn.1} parent=1 // pred_check
      _
    $region67: #{pseudo_label_nn.1} parent=1 // pred_check_branch
      %77 = sbr.rel (0) target = $region69
    $region68: #{pseudo_label_nn.1} parent=1 // pred_region
      _
    $region69: #{pseudo_label_nn.1} parent=1 // pred_fallthru
      _
    // Predicated region
    $region70: #{pseudo_label_nn.1} parent=1 // pred_check
      _
    $region71: #{pseudo_label_nn.1} parent=1 // pred_check_branch
      %79 = sbr.rel (0) target = $region73
    $region72: #{pseudo_label_nn.1} parent=1 // pred_region
      %80 = dma.done [#allocation3], 4096
    $region73: #{pseudo_label_nn.1} parent=1 // pred_fallthru
      _
    // Predicated region
    $region74: #{pseudo_label_nn.1} parent=1 // pred_check
      _
    $region75: #{pseudo_label_nn.1} parent=1 // pred_check_branch
      %82 = sbr.rel (0) target = $region77
    $region76: #{pseudo_label_nn.1} parent=1 // pred_region
      %83 = dma.done [#allocation5], 8192
    $region77: #{pseudo_label_nn.1} parent=1 // pred_fallthru
      _
    %v84 = vld [vmem:[%s0] sm:$0xff]
    %v85 = vld [vmem:[%s0 + $0x8] sm:$0xff]
    %v86 = vld [vmem:[%s0 + $0x10] sm:$0xff]
    %v87 = vld [vmem:[%s0 + $0x18] sm:$0xff]
    %v88 = vld [vmem:[%s0 + $0x20] sm:$0xff]
    %v89 = vld [vmem:[%s0 + $0x28] sm:$0xff]
    %v90 = vld [vmem:[%s0 + $0x30] sm:$0xff]
    %v91 = vld [vmem:[%s0 + $0x38] sm:$0xff]
    %v92 = vld [vmem:[%s0 + $0x40] sm:$0xff]
    %v93 = vld [vmem:[%s0 + $0x48] sm:$0xff]
    %v94 = vld [vmem:[%s0 + $0x50] sm:$0xff]
    %v95 = vld [vmem:[%s0 + $0x58] sm:$0xff]
    %v96 = vld [vmem:[%s0 + $0x60] sm:$0xff]
    %v97 = vld [vmem:[%s0 + $0x68] sm:$0xff]
    %v98 = vld [vmem:[%s0 + $0x70] sm:$0xff]
    %v99 = vld [vmem:[%s0 + $0x78] sm:$0xff]
    %v100 = vld [vmem:[%s0 + $0x80] sm:$0xff]
    %v101 = vld [vmem:[%s0 + $0x88] sm:$0xff]
    %v102 = vld [vmem:[%s0 + $0x90] sm:$0xff]
    %v103 = vld [vmem:[%s0 + $0x98] sm:$0xff]
    %v104 = vld [vmem:[%s0 + $0xa0] sm:$0xff]
    %v105 = vld [vmem:[%s0 + $0xa8] sm:$0xff]
    %v106 = vld [vmem:[%s0 + $0xb0] sm:$0xff]
    %v107 = vld [vmem:[%s0 + $0xb8] sm:$0xff]
    %v108 = vld [vmem:[%s0 + $0xc0] sm:$0xff]
    %v109 = vld [vmem:[%s0 + $0xc8] sm:$0xff]
    %v110 = vld [vmem:[%s0 + $0xd0] sm:$0xff]
    %v111 = vld [vmem:[%s0 + $0xd8] sm:$0xff]
    %v112 = vld [vmem:[%s0 + $0xe0] sm:$0xff]
    %v113 = vld [vmem:[%s0 + $0xe8] sm:$0xff]
    %v114 = vld [vmem:[%s0 + $0xf0] sm:$0xff]
    %v115 = vld [vmem:[%s0 + $0xf8] sm:$0xff]
    %v116 = vld [vmem:[%s0 + $0x100] sm:$0xff]
    %v117 = vld [vmem:[%s0 + $0x108] sm:$0xff]
    %v118 = vld [vmem:[%s0 + $0x110] sm:$0xff]
    %v119 = vld [vmem:[%s0 + $0x118] sm:$0xff]
    %v120 = vld [vmem:[%s0 + $0x120] sm:$0xff]
    %v121 = vld [vmem:[%s0 + $0x128] sm:$0xff]
    %v122 = vld [vmem:[%s0 + $0x130] sm:$0xff]
    %v123 = vld [vmem:[%s0 + $0x138] sm:$0xff]
    %v124 = vld [vmem:[%s0 + $0x140] sm:$0xff]
    %v125 = vld [vmem:[%s0 + $0x148] sm:$0xff]
    %v126 = vld [vmem:[%s0 + $0x150] sm:$0xff]
    %v127 = vld [vmem:[%s0 + $0x158] sm:$0xff]
    %v128 = vld [vmem:[%s0 + $0x160] sm:$0xff]
    %v129 = vld [vmem:[%s0 + $0x168] sm:$0xff]
    %v130 = vld [vmem:[%s0 + $0x170] sm:$0xff]
    %v131 = vld [vmem:[%s0 + $0x178] sm:$0xff]
    %v132 = vld [vmem:[%s0 + $0x180] sm:$0xff]
    %v133 = vld [vmem:[%s0 + $0x188] sm:$0xff]
    %v134 = vld [vmem:[%s0 + $0x190] sm:$0xff]
    %v135 = vld [vmem:[%s0 + $0x198] sm:$0xff]
    %v136 = vld [vmem:[%s0 + $0x1a0] sm:$0xff]
    %v137 = vld [vmem:[%s0 + $0x1a8] sm:$0xff]
    %v138 = vld [vmem:[%s0 + $0x1b0] sm:$0xff]
    %v139 = vld [vmem:[%s0 + $0x1b8] sm:$0xff]
    %v140 = vld [vmem:[%s0 + $0x1c0] sm:$0xff]
    %v141 = vld [vmem:[%s0 + $0x1c8] sm:$0xff]
    %v142 = vld [vmem:[%s0 + $0x1d0] sm:$0xff]
    %v143 = vld [vmem:[%s0 + $0x1d8] sm:$0xff]
    %v144 = vld [vmem:[%s0 + $0x1e0] sm:$0xff]
    %v145 = vld [vmem:[%s0 + $0x1e8] sm:$0xff]
    %v146 = vld [vmem:[%s0 + $0x1f0] sm:$0xff]
    %v147 = vld [vmem:[%s0 + $0x1f8] sm:$0xff]
    %v148 = vld [vmem:[#allocation2] sm:$0xff]
    %v149 = vld [vmem:[#allocation2 + $0x8] sm:$0xff]
    %v150 = vld [vmem:[#allocation2 + $0x10] sm:$0xff]
    %v151 = vld [vmem:[#allocation2 + $0x18] sm:$0xff]
    %v152 = vld [vmem:[#allocation2 + $0x20] sm:$0xff]
    %v153 = vld [vmem:[#allocation2 + $0x28] sm:$0xff]
    %v154 = vld [vmem:[#allocation2 + $0x30] sm:$0xff]
    %v155 = vld [vmem:[#allocation2 + $0x38] sm:$0xff]
    %v156 = vld [vmem:[#allocation2 + $0x40] sm:$0xff]
    %v157 = vld [vmem:[#allocation2 + $0x48] sm:$0xff]
    %v158 = vld [vmem:[#allocation2 + $0x50] sm:$0xff]
    %v159 = vld [vmem:[#allocation2 + $0x58] sm:$0xff]
    %v160 = vld [vmem:[#allocation2 + $0x60] sm:$0xff]
    %v161 = vld [vmem:[#allocation2 + $0x68] sm:$0xff]
    %v162 = vld [vmem:[#allocation2 + $0x70] sm:$0xff]
    %v163 = vld [vmem:[#allocation2 + $0x78] sm:$0xff]
    %v164 = vld [vmem:[#allocation2 + $0x80] sm:$0xff]
    %v165 = vld [vmem:[#allocation2 + $0x88] sm:$0xff]
    %v166 = vld [vmem:[#allocation2 + $0x90] sm:$0xff]
    %v167 = vld [vmem:[#allocation2 + $0x98] sm:$0xff]
    %v168 = vld [vmem:[#allocation2 + $0xa0] sm:$0xff]
    %v169 = vld [vmem:[#allocation2 + $0xa8] sm:$0xff]
    %v170 = vld [vmem:[#allocation2 + $0xb0] sm:$0xff]
    %v171 = vld [vmem:[#allocation2 + $0xb8] sm:$0xff]
    %v172 = vld [vmem:[#allocation2 + $0xc0] sm:$0xff]
    %v173 = vld [vmem:[#allocation2 + $0xc8] sm:$0xff]
    %v174 = vld [vmem:[#allocation2 + $0xd0] sm:$0xff]
    %v175 = vld [vmem:[#allocation2 + $0xd8] sm:$0xff]
    %v176 = vld [vmem:[#allocation2 + $0xe0] sm:$0xff]
    %v177 = vld [vmem:[#allocation2 + $0xe8] sm:$0xff]
    %v178 = vld [vmem:[#allocation2 + $0xf0] sm:$0xff]
    %v179 = vld [vmem:[#allocation2 + $0xf8] sm:$0xff]
    %v180 = vld [vmem:[%s2] sm:$0xf]
    %v182 = vlaneseq
    %v183 = vshrl.u32 %v182, 7
    %v184 = vsub.s32 0, %v183
    %v185 = vrot.slane %v180, %v184
    %v186 = vlaneseq
    %v187 = vshrl.u32 %v186, 7
    %v188 = vsub.s32 1, %v187
    %v189 = vrot.slane %v180, %v188
    %v190 = vlaneseq
    %v191 = vshrl.u32 %v190, 7
    %v192 = vsub.s32 2, %v191
    %v193 = vrot.slane %v180, %v192
    %v194 = vlaneseq
    %v195 = vshrl.u32 %v194, 7
    %v196 = vsub.s32 3, %v195
    %v197 = vrot.slane %v180, %v196
    %vm202 = vcmask 523264
    %v204 = vsel %vm202, %v84, 0
    %v207 = vsel %vm202, %v85, 0
    %v210 = vsel %vm202, %v86, 0
    %v213 = vsel %vm202, %v87, 0
    %v216 = vsel %vm202, %v88, 0
    %v219 = vsel %vm202, %v89, 0
    %v222 = vsel %vm202, %v90, 0
    %v225 = vsel %vm202, %v91, 0
    %v228 = vsel %vm202, %v92, 0
    %v231 = vsel %vm202, %v93, 0
    %v234 = vsel %vm202, %v94, 0
    %v237 = vsel %vm202, %v95, 0
    %v240 = vsel %vm202, %v96, 0
    %v243 = vsel %vm202, %v97, 0
    %v246 = vsel %vm202, %v98, 0
    %v249 = vsel %vm202, %v99, 0
    %v252 = vsel %vm202, %v100, 0
    %v255 = vsel %vm202, %v101, 0
    %v258 = vsel %vm202, %v102, 0
    %v261 = vsel %vm202, %v103, 0
    %v264 = vsel %vm202, %v104, 0
    %v267 = vsel %vm202, %v105, 0
    %v270 = vsel %vm202, %v106, 0
    %v273 = vsel %vm202, %v107, 0
    %v276 = vsel %vm202, %v108, 0
    %v279 = vsel %vm202, %v109, 0
    %v282 = vsel %vm202, %v110, 0
    %v285 = vsel %vm202, %v111, 0
    %v288 = vsel %vm202, %v112, 0
    %v291 = vsel %vm202, %v113, 0
    %v294 = vsel %vm202, %v114, 0
    %v297 = vsel %vm202, %v115, 0
    %v300 = vsel %vm202, %v116, 0
    %v303 = vsel %vm202, %v117, 0
    %v306 = vsel %vm202, %v118, 0
    %v309 = vsel %vm202, %v119, 0
    %v312 = vsel %vm202, %v120, 0
    %v315 = vsel %vm202, %v121, 0
    %v318 = vsel %vm202, %v122, 0
    %v321 = vsel %vm202, %v123, 0
    %v324 = vsel %vm202, %v124, 0
    %v327 = vsel %vm202, %v125, 0
    %v330 = vsel %vm202, %v126, 0
    %v333 = vsel %vm202, %v127, 0
    %v336 = vsel %vm202, %v128, 0
    %v339 = vsel %vm202, %v129, 0
    %v342 = vsel %vm202, %v130, 0
    %v345 = vsel %vm202, %v131, 0
    %v348 = vsel %vm202, %v132, 0
    %v351 = vsel %vm202, %v133, 0
    %v354 = vsel %vm202, %v134, 0
    %v357 = vsel %vm202, %v135, 0
    %v360 = vsel %vm202, %v136, 0
    %v363 = vsel %vm202, %v137, 0
    %v366 = vsel %vm202, %v138, 0
    %v369 = vsel %vm202, %v139, 0
    %v372 = vsel %vm202, %v140, 0
    %v375 = vsel %vm202, %v141, 0
    %v378 = vsel %vm202, %v142, 0
    %v381 = vsel %vm202, %v143, 0
    %v384 = vsel %vm202, %v144, 0
    %v387 = vsel %vm202, %v145, 0
    %v390 = vsel %vm202, %v146, 0
    %v393 = vsel %vm202, %v147, 0
    %395 = vmatprep.subr.mxu0 %v149
    %396 = vmatpush1.msra.mxu0 %v148
    %397 = vmatprep.subr.mxu0 %v153
    %398 = vmatpush1.msra.mxu0 %v152
    %399 = vmatprep.subr.mxu0 %v157
    %400 = vmatpush1.msra.mxu0 %v156
    %401 = vmatprep.subr.mxu0 %v161
    %402 = vmatpush1.msra.mxu0 %v160
    %403 = vmatprep.subr.mxu0 %v165
    %404 = vmatpush1.msra.mxu0 %v164
    %405 = vmatprep.subr.mxu0 %v169
    %406 = vmatpush1.msra.mxu0 %v168
    %407 = vmatprep.subr.mxu0 %v173
    %408 = vmatpush1.msra.mxu0 %v172
    %409 = vmatprep.subr.mxu0 %v177
    %410 = vmatpush1.msra.mxu0 %v176
    %411 = vmatprep.subr.mxu0 0.0
    %412 = vmatpush1.msra.mxu0 0.0
    %413 = vmatprep.subr.mxu0 0.0
    %414 = vmatpush1.msra.mxu0 0.0
    %415 = vmatprep.subr.mxu0 0.0
    %416 = vmatpush1.msra.mxu0 0.0
    %417 = vmatprep.subr.mxu0 0.0
    %418 = vmatpush1.msra.mxu0 0.0
    %419 = vmatprep.subr.mxu0 0.0
    %420 = vmatpush1.msra.mxu0 0.0
    %421 = vmatprep.subr.mxu0 0.0
    %422 = vmatpush1.msra.mxu0 0.0
    %423 = vmatprep.subr.mxu0 0.0
    %424 = vmatpush1.msra.mxu0 0.0
    %425 = vmatprep.subr.mxu0 0.0
    %426 = vmatpush1.msra.mxu0 0.0
    %427 = vmatprep.subr.mxu0 0.0
    %428 = vmatpush1.msra.mxu0 0.0
    %429 = vmatprep.subr.mxu0 0.0
    %430 = vmatpush1.msra.mxu0 0.0
    %431 = vmatprep.subr.mxu0 0.0
    %432 = vmatpush1.msra.mxu0 0.0
    %433 = vmatprep.subr.mxu0 0.0
    %434 = vmatpush1.msra.mxu0 0.0
    %435 = vmatprep.subr.mxu0 0.0
    %436 = vmatpush1.msra.mxu0 0.0
    %437 = vmatprep.subr.mxu0 0.0
    %438 = vmatpush1.msra.mxu0 0.0
    %439 = vmatprep.subr.mxu0 0.0
    %440 = vmatpush1.msra.mxu0 0.0
    %441 = vmatprep.subr.mxu0 0.0
    %442 = vmatpush1.msra.mxu0 0.0
    %443 = vmatprep.subr.mxu0 0.0
    %444 = vmatpush1.msra.mxu0 0.0
    %445 = vmatprep.subr.mxu0 0.0
    %446 = vmatpush1.msra.mxu0 0.0
    %447 = vmatprep.subr.mxu0 0.0
    %448 = vmatpush1.msra.mxu0 0.0
    %449 = vmatprep.subr.mxu0 0.0
    %450 = vmatpush1.msra.mxu0 0.0
    %451 = vmatprep.subr.mxu0 0.0
    %452 = vmatpush1.msra.mxu0 0.0
    %453 = vmatprep.subr.mxu0 0.0
    %454 = vmatpush1.msra.mxu0 0.0
    %455 = vmatprep.subr.mxu0 0.0
    %456 = vmatpush1.msra.mxu0 0.0
    %457 = vmatprep.subr.mxu0 0.0
    %458 = vmatpush1.msra.mxu0 0.0
    %459 = vmatprep.mubr.f32.mxu0 0.0
    %460 = vmatmul.mubr.f32.gmra.mrb[0].mxu0 %v204
    %v461 = vpop.f32.mrb[0].mxu0
    %v462 = vadd.f32 %v185, %v461
    %v463 = vpop.f32.mrb[0].mxu0
    %v464 = vadd.f32 %v189, %v463
    %465 = vmatprep.mubr.f32.mxu0 0.0
    %466 = vmatmul.mubr.f32.gmra.mrb[0].mxu0 %v207
    %v467 = vpop.f32.mrb[0].mxu0
    %v468 = vadd.f32 %v185, %v467
    %v469 = vpop.f32.mrb[0].mxu0
    %v470 = vadd.f32 %v189, %v469
    %471 = vmatprep.mubr.f32.mxu0 0.0
    %472 = vmatmul.mubr.f32.gmra.mrb[0].mxu0 %v210
    %v473 = vpop.f32.mrb[0].mxu0
    %v474 = vadd.f32 %v185, %v473
    %v475 = vpop.f32.mrb[0].mxu0
    %v476 = vadd.f32 %v189, %v475
    %477 = vmatprep.mubr.f32.mxu0 0.0
    %478 = vmatmul.mubr.f32.gmra.mrb[0].mxu0 %v213
    %v479 = vpop.f32.mrb[0].mxu0
    %v480 = vadd.f32 %v185, %v479
    %v481 = vpop.f32.mrb[0].mxu0
    %v482 = vadd.f32 %v189, %v481
    %483 = vmatprep.mubr.f32.mxu0 0.0
    %484 = vmatmul.mubr.f32.gmra.mrb[0].mxu0 %v216
    %v485 = vpop.f32.mrb[0].mxu0
    %v486 = vadd.f32 %v185, %v485
    %v487 = vpop.f32.mrb[0].mxu0
    %v488 = vadd.f32 %v189, %v487
    %489 = vmatprep.mubr.f32.mxu0 0.0
    %490 = vmatmul.mubr.f32.gmra.mrb[0].mxu0 %v219
    %v491 = vpop.f32.mrb[0].mxu0
    %v492 = vadd.f32 %v185, %v491
    %v493 = vpop.f32.mrb[0].mxu0
    %v494 = vadd.f32 %v189, %v493
    %495 = vmatprep.mubr.f32.mxu0 0.0
    %496 = vmatmul.mubr.f32.gmra.mrb[0].mxu0 %v222
    %v497 = vpop.f32.mrb[0].mxu0
    %v498 = vadd.f32 %v185, %v497
    %v499 = vpop.f32.mrb[0].mxu0
    %v500 = vadd.f32 %v189, %v499
    %501 = vmatprep.mubr.f32.mxu0 0.0
    %502 = vmatmul.mubr.f32.gmra.mrb[0].mxu0 %v225
    %v503 = vpop.f32.mrb[0].mxu0
    %v504 = vadd.f32 %v185, %v503
    %v505 = vpop.f32.mrb[0].mxu0
    %v506 = vadd.f32 %v189, %v505
    %507 = vmatprep.mubr.f32.mxu0 0.0
    %508 = vmatmul.mubr.f32.gmra.mrb[0].mxu0 %v228
    %v509 = vpop.f32.mrb[0].mxu0
    %v510 = vadd.f32 %v185, %v509
    %v511 = vpop.f32.mrb[0].mxu0
    %v512 = vadd.f32 %v189, %v511
    %513 = vmatprep.mubr.f32.mxu0 0.0
    %514 = vmatmul.mubr.f32.gmra.mrb[0].mxu0 %v231
    %v515 = vpop.f32.mrb[0].mxu0
    %v516 = vadd.f32 %v185, %v515
    %v517 = vpop.f32.mrb[0].mxu0
    %v518 = vadd.f32 %v189, %v517
    %519 = vmatprep.mubr.f32.mxu0 0.0
    %520 = vmatmul.mubr.f32.gmra.mrb[0].mxu0 %v234
    %v521 = vpop.f32.mrb[0].mxu0
    %v522 = vadd.f32 %v185, %v521
    %v523 = vpop.f32.mrb[0].mxu0
    %v524 = vadd.f32 %v189, %v523
    %525 = vmatprep.mubr.f32.mxu0 0.0
    %526 = vmatmul.mubr.f32.gmra.mrb[0].mxu0 %v237
    %v527 = vpop.f32.mrb[0].mxu0
    %v528 = vadd.f32 %v185, %v527
    %v529 = vpop.f32.mrb[0].mxu0
    %v530 = vadd.f32 %v189, %v529
    %531 = vmatprep.mubr.f32.mxu0 0.0
    %532 = vmatmul.mubr.f32.gmra.mrb[0].mxu0 %v240
    %v533 = vpop.f32.mrb[0].mxu0
    %v534 = vadd.f32 %v185, %v533
    %v535 = vpop.f32.mrb[0].mxu0
    %v536 = vadd.f32 %v189, %v535
    %537 = vmatprep.mubr.f32.mxu0 0.0
    %538 = vmatmul.mubr.f32.gmra.mrb[0].mxu0 %v243
    %v539 = vpop.f32.mrb[0].mxu0
    %v540 = vadd.f32 %v185, %v539
    %v541 = vpop.f32.mrb[0].mxu0
    %v542 = vadd.f32 %v189, %v541
    %543 = vmatprep.mubr.f32.mxu0 0.0
    %544 = vmatmul.mubr.f32.gmra.mrb[0].mxu0 %v246
    %v545 = vpop.f32.mrb[0].mxu0
    %v546 = vadd.f32 %v185, %v545
    %v547 = vpop.f32.mrb[0].mxu0
    %v548 = vadd.f32 %v189, %v547
    %549 = vmatprep.mubr.f32.mxu0 0.0
    %550 = vmatmul.mubr.f32.gmra.mrb[0].mxu0 %v249
    %v551 = vpop.f32.mrb[0].mxu0
    %v552 = vadd.f32 %v185, %v551
    %v553 = vpop.f32.mrb[0].mxu0
    %v554 = vadd.f32 %v189, %v553
    %555 = vmatprep.mubr.f32.mxu0 0.0
    %556 = vmatmul.mubr.f32.gmra.mrb[0].mxu0 %v252
    %v557 = vpop.f32.mrb[0].mxu0
    %v558 = vadd.f32 %v185, %v557
    %v559 = vpop.f32.mrb[0].mxu0
    %v560 = vadd.f32 %v189, %v559
    %561 = vmatprep.mubr.f32.mxu0 0.0
    %562 = vmatmul.mubr.f32.gmra.mrb[0].mxu0 %v255
    %v563 = vpop.f32.mrb[0].mxu0
    %v564 = vadd.f32 %v185, %v563
    %v565 = vpop.f32.mrb[0].mxu0
    %v566 = vadd.f32 %v189, %v565
    %567 = vmatprep.mubr.f32.mxu0 0.0
    %568 = vmatmul.mubr.f32.gmra.mrb[0].mxu0 %v258
    %v569 = vpop.f32.mrb[0].mxu0
    %v570 = vadd.f32 %v185, %v569
    %v571 = vpop.f32.mrb[0].mxu0
    %v572 = vadd.f32 %v189, %v571
    %573 = vmatprep.mubr.f32.mxu0 0.0
    %574 = vmatmul.mubr.f32.gmra.mrb[0].mxu0 %v261
    %v575 = vpop.f32.mrb[0].mxu0
    %v576 = vadd.f32 %v185, %v575
    %v577 = vpop.f32.mrb[0].mxu0
    %v578 = vadd.f32 %v189, %v577
    %579 = vmatprep.mubr.f32.mxu0 0.0
    %580 = vmatmul.mubr.f32.gmra.mrb[0].mxu0 %v264
    %v581 = vpop.f32.mrb[0].mxu0
    %v582 = vadd.f32 %v185, %v581
    %v583 = vpop.f32.mrb[0].mxu0
    %v584 = vadd.f32 %v189, %v583
    %585 = vmatprep.mubr.f32.mxu0 0.0
    %586 = vmatmul.mubr.f32.gmra.mrb[0].mxu0 %v267
    %v587 = vpop.f32.mrb[0].mxu0
    %v588 = vadd.f32 %v185, %v587
    %v589 = vpop.f32.mrb[0].mxu0
    %v590 = vadd.f32 %v189, %v589
    %591 = vmatprep.mubr.f32.mxu0 0.0
    %592 = vmatmul.mubr.f32.gmra.mrb[0].mxu0 %v270
    %v593 = vpop.f32.mrb[0].mxu0
    %v594 = vadd.f32 %v185, %v593
    %v595 = vpop.f32.mrb[0].mxu0
    %v596 = vadd.f32 %v189, %v595
    %597 = vmatprep.mubr.f32.mxu0 0.0
    %598 = vmatmul.mubr.f32.gmra.mrb[0].mxu0 %v273
    %v599 = vpop.f32.mrb[0].mxu0
    %v600 = vadd.f32 %v185, %v599
    %v601 = vpop.f32.mrb[0].mxu0
    %v602 = vadd.f32 %v189, %v601
    %603 = vmatprep.mubr.f32.mxu0 0.0
    %604 = vmatmul.mubr.f32.gmra.mrb[0].mxu0 %v276
    %v605 = vpop.f32.mrb[0].mxu0
    %v606 = vadd.f32 %v185, %v605
    %v607 = vpop.f32.mrb[0].mxu0
    %v608 = vadd.f32 %v189, %v607
    %609 = vmatprep.mubr.f32.mxu0 0.0
    %610 = vmatmul.mubr.f32.gmra.mrb[0].mxu0 %v279
    %v611 = vpop.f32.mrb[0].mxu0
    %v612 = vadd.f32 %v185, %v611
    %v613 = vpop.f32.mrb[0].mxu0
    %v614 = vadd.f32 %v189, %v613
    %615 = vmatprep.mubr.f32.mxu0 0.0
    %616 = vmatmul.mubr.f32.gmra.mrb[0].mxu0 %v282
    %v617 = vpop.f32.mrb[0].mxu0
    %v618 = vadd.f32 %v185, %v617
    %v619 = vpop.f32.mrb[0].mxu0
    %v620 = vadd.f32 %v189, %v619
    %621 = vmatprep.mubr.f32.mxu0 0.0
    %622 = vmatmul.mubr.f32.gmra.mrb[0].mxu0 %v285
    %v623 = vpop.f32.mrb[0].mxu0
    %v624 = vadd.f32 %v185, %v623
    %v625 = vpop.f32.mrb[0].mxu0
    %v626 = vadd.f32 %v189, %v625
    %627 = vmatprep.mubr.f32.mxu0 0.0
    %628 = vmatmul.mubr.f32.gmra.mrb[0].mxu0 %v288
    %v629 = vpop.f32.mrb[0].mxu0
    %v630 = vadd.f32 %v185, %v629
    %v631 = vpop.f32.mrb[0].mxu0
    %v632 = vadd.f32 %v189, %v631
    %633 = vmatprep.mubr.f32.mxu0 0.0
    %634 = vmatmul.mubr.f32.gmra.mrb[0].mxu0 %v291
    %v635 = vpop.f32.mrb[0].mxu0
    %v636 = vadd.f32 %v185, %v635
    %v637 = vpop.f32.mrb[0].mxu0
    %v638 = vadd.f32 %v189, %v637
    %639 = vmatprep.mubr.f32.mxu0 0.0
    %640 = vmatmul.mubr.f32.gmra.mrb[0].mxu0 %v294
    %v641 = vpop.f32.mrb[0].mxu0
    %v642 = vadd.f32 %v185, %v641
    %v643 = vpop.f32.mrb[0].mxu0
    %v644 = vadd.f32 %v189, %v643
    %645 = vmatprep.mubr.f32.mxu0 0.0
    %646 = vmatmul.mubr.f32.gmra.mrb[0].mxu0 %v297
    %v647 = vpop.f32.mrb[0].mxu0
    %v648 = vadd.f32 %v185, %v647
    %v649 = vpop.f32.mrb[0].mxu0
    %v650 = vadd.f32 %v189, %v649
    %651 = vmatprep.mubr.f32.mxu0 0.0
    %652 = vmatmul.mubr.f32.gmra.mrb[0].mxu0 %v300
    %v653 = vpop.f32.mrb[0].mxu0
    %v654 = vadd.f32 %v185, %v653
    %v655 = vpop.f32.mrb[0].mxu0
    %v656 = vadd.f32 %v189, %v655
    %657 = vmatprep.mubr.f32.mxu0 0.0
    %658 = vmatmul.mubr.f32.gmra.mrb[0].mxu0 %v303
    %v659 = vpop.f32.mrb[0].mxu0
    %v660 = vadd.f32 %v185, %v659
    %v661 = vpop.f32.mrb[0].mxu0
    %v662 = vadd.f32 %v189, %v661
    %663 = vmatprep.mubr.f32.mxu0 0.0
    %664 = vmatmul.mubr.f32.gmra.mrb[0].mxu0 %v306
    %v665 = vpop.f32.mrb[0].mxu0
    %v666 = vadd.f32 %v185, %v665
    %v667 = vpop.f32.mrb[0].mxu0
    %v668 = vadd.f32 %v189, %v667
    %669 = vmatprep.mubr.f32.mxu0 0.0
    %670 = vmatmul.mubr.f32.gmra.mrb[0].mxu0 %v309
    %v671 = vpop.f32.mrb[0].mxu0
    %v672 = vadd.f32 %v185, %v671
    %v673 = vpop.f32.mrb[0].mxu0
    %v674 = vadd.f32 %v189, %v673
    %675 = vmatprep.mubr.f32.mxu0 0.0
    %676 = vmatmul.mubr.f32.gmra.mrb[0].mxu0 %v312
    %v677 = vpop.f32.mrb[0].mxu0
    %v678 = vadd.f32 %v185, %v677
    %v679 = vpop.f32.mrb[0].mxu0
    %v680 = vadd.f32 %v189, %v679
    %681 = vmatprep.mubr.f32.mxu0 0.0
    %682 = vmatmul.mubr.f32.gmra.mrb[0].mxu0 %v315
    %v683 = vpop.f32.mrb[0].mxu0
    %v684 = vadd.f32 %v185, %v683
    %v685 = vpop.f32.mrb[0].mxu0
    %v686 = vadd.f32 %v189, %v685
    %687 = vmatprep.mubr.f32.mxu0 0.0
    %688 = vmatmul.mubr.f32.gmra.mrb[0].mxu0 %v318
    %v689 = vpop.f32.mrb[0].mxu0
    %v690 = vadd.f32 %v185, %v689
    %v691 = vpop.f32.mrb[0].mxu0
    %v692 = vadd.f32 %v189, %v691
    %693 = vmatprep.mubr.f32.mxu0 0.0
    %694 = vmatmul.mubr.f32.gmra.mrb[0].mxu0 %v321
    %v695 = vpop.f32.mrb[0].mxu0
    %v696 = vadd.f32 %v185, %v695
    %v697 = vpop.f32.mrb[0].mxu0
    %v698 = vadd.f32 %v189, %v697
    %699 = vmatprep.mubr.f32.mxu0 0.0
    %700 = vmatmul.mubr.f32.gmra.mrb[0].mxu0 %v324
    %v701 = vpop.f32.mrb[0].mxu0
    %v702 = vadd.f32 %v185, %v701
    %v703 = vpop.f32.mrb[0].mxu0
    %v704 = vadd.f32 %v189, %v703
    %705 = vmatprep.mubr.f32.mxu0 0.0
    %706 = vmatmul.mubr.f32.gmra.mrb[0].mxu0 %v327
    %v707 = vpop.f32.mrb[0].mxu0
    %v708 = vadd.f32 %v185, %v707
    %v709 = vpop.f32.mrb[0].mxu0
    %v710 = vadd.f32 %v189, %v709
    %711 = vmatprep.mubr.f32.mxu0 0.0
    %712 = vmatmul.mubr.f32.gmra.mrb[0].mxu0 %v330
    %v713 = vpop.f32.mrb[0].mxu0
    %v714 = vadd.f32 %v185, %v713
    %v715 = vpop.f32.mrb[0].mxu0
    %v716 = vadd.f32 %v189, %v715
    %717 = vmatprep.mubr.f32.mxu0 0.0
    %718 = vmatmul.mubr.f32.gmra.mrb[0].mxu0 %v333
    %v719 = vpop.f32.mrb[0].mxu0
    %v720 = vadd.f32 %v185, %v719
    %v721 = vpop.f32.mrb[0].mxu0
    %v722 = vadd.f32 %v189, %v721
    %723 = vmatprep.mubr.f32.mxu0 0.0
    %724 = vmatmul.mubr.f32.gmra.mrb[0].mxu0 %v336
    %v725 = vpop.f32.mrb[0].mxu0
    %v726 = vadd.f32 %v185, %v725
    %v727 = vpop.f32.mrb[0].mxu0
    %v728 = vadd.f32 %v189, %v727
    %729 = vmatprep.mubr.f32.mxu0 0.0
    %730 = vmatmul.mubr.f32.gmra.mrb[0].mxu0 %v339
    %v731 = vpop.f32.mrb[0].mxu0
    %v732 = vadd.f32 %v185, %v731
    %v733 = vpop.f32.mrb[0].mxu0
    %v734 = vadd.f32 %v189, %v733
    %735 = vmatprep.mubr.f32.mxu0 0.0
    %736 = vmatmul.mubr.f32.gmra.mrb[0].mxu0 %v342
    %v737 = vpop.f32.mrb[0].mxu0
    %v738 = vadd.f32 %v185, %v737
    %v739 = vpop.f32.mrb[0].mxu0
    %v740 = vadd.f32 %v189, %v739
    %741 = vmatprep.mubr.f32.mxu0 0.0
    %742 = vmatmul.mubr.f32.gmra.mrb[0].mxu0 %v345
    %v743 = vpop.f32.mrb[0].mxu0
    %v744 = vadd.f32 %v185, %v743
    %v745 = vpop.f32.mrb[0].mxu0
    %v746 = vadd.f32 %v189, %v745
    %747 = vmatprep.mubr.f32.mxu0 0.0
    %748 = vmatmul.mubr.f32.gmra.mrb[0].mxu0 %v348
    %v749 = vpop.f32.mrb[0].mxu0
    %v750 = vadd.f32 %v185, %v749
    %v751 = vpop.f32.mrb[0].mxu0
    %v752 = vadd.f32 %v189, %v751
    %753 = vmatprep.mubr.f32.mxu0 0.0
    %754 = vmatmul.mubr.f32.gmra.mrb[0].mxu0 %v351
    %v755 = vpop.f32.mrb[0].mxu0
    %v756 = vadd.f32 %v185, %v755
    %v757 = vpop.f32.mrb[0].mxu0
    %v758 = vadd.f32 %v189, %v757
    %759 = vmatprep.mubr.f32.mxu0 0.0
    %760 = vmatmul.mubr.f32.gmra.mrb[0].mxu0 %v354
    %v761 = vpop.f32.mrb[0].mxu0
    %v762 = vadd.f32 %v185, %v761
    %v763 = vpop.f32.mrb[0].mxu0
    %v764 = vadd.f32 %v189, %v763
    %765 = vmatprep.mubr.f32.mxu0 0.0
    %766 = vmatmul.mubr.f32.gmra.mrb[0].mxu0 %v357
    %v767 = vpop.f32.mrb[0].mxu0
    %v768 = vadd.f32 %v185, %v767
    %v769 = vpop.f32.mrb[0].mxu0
    %v770 = vadd.f32 %v189, %v769
    %771 = vmatprep.mubr.f32.mxu0 0.0
    %772 = vmatmul.mubr.f32.gmra.mrb[0].mxu0 %v360
    %v773 = vpop.f32.mrb[0].mxu0
    %v774 = vadd.f32 %v185, %v773
    %v775 = vpop.f32.mrb[0].mxu0
    %v776 = vadd.f32 %v189, %v775
    %777 = vmatprep.mubr.f32.mxu0 0.0
    %778 = vmatmul.mubr.f32.gmra.mrb[0].mxu0 %v363
    %v779 = vpop.f32.mrb[0].mxu0
    %v780 = vadd.f32 %v185, %v779
    %v781 = vpop.f32.mrb[0].mxu0
    %v782 = vadd.f32 %v189, %v781
    %783 = vmatprep.mubr.f32.mxu0 0.0
    %784 = vmatmul.mubr.f32.gmra.mrb[0].mxu0 %v366
    %v785 = vpop.f32.mrb[0].mxu0
    %v786 = vadd.f32 %v185, %v785
    %v787 = vpop.f32.mrb[0].mxu0
    %v788 = vadd.f32 %v189, %v787
    %789 = vmatprep.mubr.f32.mxu0 0.0
    %790 = vmatmul.mubr.f32.gmra.mrb[0].mxu0 %v369
    %v791 = vpop.f32.mrb[0].mxu0
    %v792 = vadd.f32 %v185, %v791
    %v793 = vpop.f32.mrb[0].mxu0
    %v794 = vadd.f32 %v189, %v793
    %795 = vmatprep.mubr.f32.mxu0 0.0
    %796 = vmatmul.mubr.f32.gmra.mrb[0].mxu0 %v372
    %v797 = vpop.f32.mrb[0].mxu0
    %v798 = vadd.f32 %v185, %v797
    %v799 = vpop.f32.mrb[0].mxu0
    %v800 = vadd.f32 %v189, %v799
    %801 = vmatprep.mubr.f32.mxu0 0.0
    %802 = vmatmul.mubr.f32.gmra.mrb[0].mxu0 %v375
    %v803 = vpop.f32.mrb[0].mxu0
    %v804 = vadd.f32 %v185, %v803
    %v805 = vpop.f32.mrb[0].mxu0
    %v806 = vadd.f32 %v189, %v805
    %807 = vmatprep.mubr.f32.mxu0 0.0
    %808 = vmatmul.mubr.f32.gmra.mrb[0].mxu0 %v378
    %v809 = vpop.f32.mrb[0].mxu0
    %v810 = vadd.f32 %v185, %v809
    %v811 = vpop.f32.mrb[0].mxu0
    %v812 = vadd.f32 %v189, %v811
    %813 = vmatprep.mubr.f32.mxu0 0.0
    %814 = vmatmul.mubr.f32.gmra.mrb[0].mxu0 %v381
    %v815 = vpop.f32.mrb[0].mxu0
    %v816 = vadd.f32 %v185, %v815
    %v817 = vpop.f32.mrb[0].mxu0
    %v818 = vadd.f32 %v189, %v817
    %819 = vmatprep.mubr.f32.mxu0 0.0
    %820 = vmatmul.mubr.f32.gmra.mrb[0].mxu0 %v384
    %v821 = vpop.f32.mrb[0].mxu0
    %v822 = vadd.f32 %v185, %v821
    %v823 = vpop.f32.mrb[0].mxu0
    %v824 = vadd.f32 %v189, %v823
    %825 = vmatprep.mubr.f32.mxu0 0.0
    %826 = vmatmul.mubr.f32.gmra.mrb[0].mxu0 %v387
    %v827 = vpop.f32.mrb[0].mxu0
    %v828 = vadd.f32 %v185, %v827
    %v829 = vpop.f32.mrb[0].mxu0
    %v830 = vadd.f32 %v189, %v829
    %831 = vmatprep.mubr.f32.mxu0 0.0
    %832 = vmatmul.mubr.f32.gmra.mrb[0].mxu0 %v390
    %v833 = vpop.f32.mrb[0].mxu0
    %v834 = vadd.f32 %v185, %v833
    %v835 = vpop.f32.mrb[0].mxu0
    %v836 = vadd.f32 %v189, %v835
    %837 = vmatprep.mubr.f32.mxu0 0.0
    %838 = vmatmul.mubr.f32.gmra.mrb[0].mxu0 %v393
    %v839 = vpop.f32.mrb[0].mxu0
    %v840 = vadd.f32 %v185, %v839
    %v841 = vpop.f32.mrb[0].mxu0
    %v842 = vadd.f32 %v189, %v841
    %843 = vdwg.mxu0
    %844 = vmatprep.subr.mxu0 %v151
    %845 = vmatpush1.msra.mxu0 %v150
    %846 = vmatprep.subr.mxu0 %v155
    %847 = vmatpush1.msra.mxu0 %v154
    %848 = vmatprep.subr.mxu0 %v159
    %849 = vmatpush1.msra.mxu0 %v158
    %850 = vmatprep.subr.mxu0 %v163
    %851 = vmatpush1.msra.mxu0 %v162
    %852 = vmatprep.subr.mxu0 %v167
    %853 = vmatpush1.msra.mxu0 %v166
    %854 = vmatprep.subr.mxu0 %v171
    %855 = vmatpush1.msra.mxu0 %v170
    %856 = vmatprep.subr.mxu0 %v175
    %857 = vmatpush1.msra.mxu0 %v174
    %858 = vmatprep.subr.mxu0 %v179
    %859 = vmatpush1.msra.mxu0 %v178
    %860 = vmatprep.subr.mxu0 0.0
    %861 = vmatpush1.msra.mxu0 0.0
    %862 = vmatprep.subr.mxu0 0.0
    %863 = vmatpush1.msra.mxu0 0.0
    %864 = vmatprep.subr.mxu0 0.0
    %865 = vmatpush1.msra.mxu0 0.0
    %866 = vmatprep.subr.mxu0 0.0
    %867 = vmatpush1.msra.mxu0 0.0
    %868 = vmatprep.subr.mxu0 0.0
    %869 = vmatpush1.msra.mxu0 0.0
    %870 = vmatprep.subr.mxu0 0.0
    %871 = vmatpush1.msra.mxu0 0.0
    %872 = vmatprep.subr.mxu0 0.0
    %873 = vmatpush1.msra.mxu0 0.0
    %874 = vmatprep.subr.mxu0 0.0
    %875 = vmatpush1.msra.mxu0 0.0
    %876 = vmatprep.subr.mxu0 0.0
    %877 = vmatpush1.msra.mxu0 0.0
    %878 = vmatprep.subr.mxu0 0.0
    %879 = vmatpush1.msra.mxu0 0.0
    %880 = vmatprep.subr.mxu0 0.0
    %881 = vmatpush1.msra.mxu0 0.0
    %882 = vmatprep.subr.mxu0 0.0
    %883 = vmatpush1.msra.mxu0 0.0
    %884 = vmatprep.subr.mxu0 0.0
    %885 = vmatpush1.msra.mxu0 0.0
    %886 = vmatprep.subr.mxu0 0.0
    %887 = vmatpush1.msra.mxu0 0.0
    %888 = vmatprep.subr.mxu0 0.0
    %889 = vmatpush1.msra.mxu0 0.0
    %890 = vmatprep.subr.mxu0 0.0
    %891 = vmatpush1.msra.mxu0 0.0
    %892 = vmatprep.subr.mxu0 0.0
    %893 = vmatpush1.msra.mxu0 0.0
    %894 = vmatprep.subr.mxu0 0.0
    %895 = vmatpush1.msra.mxu0 0.0
    %896 = vmatprep.subr.mxu0 0.0
    %897 = vmatpush1.msra.mxu0 0.0
    %898 = vmatprep.subr.mxu0 0.0
    %899 = vmatpush1.msra.mxu0 0.0
    %900 = vmatprep.subr.mxu0 0.0
    %901 = vmatpush1.msra.mxu0 0.0
    %902 = vmatprep.subr.mxu0 0.0
    %903 = vmatpush1.msra.mxu0 0.0
    %904 = vmatprep.subr.mxu0 0.0
    %905 = vmatpush1.msra.mxu0 0.0
    %906 = vmatprep.subr.mxu0 0.0
    %907 = vmatpush1.msra.mxu0 0.0
    %908 = vmatprep.mubr.f32.mxu0 0.0
    %909 = vmatmul.mubr.f32.gmra.mrb[0].mxu0 %v204
    %v910 = vpop.f32.mrb[0].mxu0
    %v911 = vadd.f32 %v193, %v910
    %v912 = vpop.f32.mrb[0].mxu0
    %v913 = vadd.f32 %v197, %v912
    %914 = vmatprep.mubr.f32.mxu0 0.0
    %915 = vmatmul.mubr.f32.gmra.mrb[0].mxu0 %v207
    %v916 = vpop.f32.mrb[0].mxu0
    %v917 = vadd.f32 %v193, %v916
    %v918 = vpop.f32.mrb[0].mxu0
    %v919 = vadd.f32 %v197, %v918
    %920 = vmatprep.mubr.f32.mxu0 0.0
    %921 = vmatmul.mubr.f32.gmra.mrb[0].mxu0 %v210
    %v922 = vpop.f32.mrb[0].mxu0
    %v923 = vadd.f32 %v193, %v922
    %v924 = vpop.f32.mrb[0].mxu0
    %v925 = vadd.f32 %v197, %v924
    %926 = vmatprep.mubr.f32.mxu0 0.0
    %927 = vmatmul.mubr.f32.gmra.mrb[0].mxu0 %v213
    %v928 = vpop.f32.mrb[0].mxu0
    %v929 = vadd.f32 %v193, %v928
    %v930 = vpop.f32.mrb[0].mxu0
    %v931 = vadd.f32 %v197, %v930
    %932 = vmatprep.mubr.f32.mxu0 0.0
    %933 = vmatmul.mubr.f32.gmra.mrb[0].mxu0 %v216
    %v934 = vpop.f32.mrb[0].mxu0
    %v935 = vadd.f32 %v193, %v934
    %v936 = vpop.f32.mrb[0].mxu0
    %v937 = vadd.f32 %v197, %v936
    %938 = vmatprep.mubr.f32.mxu0 0.0
    %939 = vmatmul.mubr.f32.gmra.mrb[0].mxu0 %v219
    %v940 = vpop.f32.mrb[0].mxu0
    %v941 = vadd.f32 %v193, %v940
    %v942 = vpop.f32.mrb[0].mxu0
    %v943 = vadd.f32 %v197, %v942
    %944 = vmatprep.mubr.f32.mxu0 0.0
    %945 = vmatmul.mubr.f32.gmra.mrb[0].mxu0 %v222
    %v946 = vpop.f32.mrb[0].mxu0
    %v947 = vadd.f32 %v193, %v946
    %v948 = vpop.f32.mrb[0].mxu0
    %v949 = vadd.f32 %v197, %v948
    %950 = vmatprep.mubr.f32.mxu0 0.0
    %951 = vmatmul.mubr.f32.gmra.mrb[0].mxu0 %v225
    %v952 = vpop.f32.mrb[0].mxu0
    %v953 = vadd.f32 %v193, %v952
    %v954 = vpop.f32.mrb[0].mxu0
    %v955 = vadd.f32 %v197, %v954
    %956 = vmatprep.mubr.f32.mxu0 0.0
    %957 = vmatmul.mubr.f32.gmra.mrb[0].mxu0 %v228
    %v958 = vpop.f32.mrb[0].mxu0
    %v959 = vadd.f32 %v193, %v958
    %v960 = vpop.f32.mrb[0].mxu0
    %v961 = vadd.f32 %v197, %v960
    %962 = vmatprep.mubr.f32.mxu0 0.0
    %963 = vmatmul.mubr.f32.gmra.mrb[0].mxu0 %v231
    %v964 = vpop.f32.mrb[0].mxu0
    %v965 = vadd.f32 %v193, %v964
    %v966 = vpop.f32.mrb[0].mxu0
    %v967 = vadd.f32 %v197, %v966
    %968 = vmatprep.mubr.f32.mxu0 0.0
    %969 = vmatmul.mubr.f32.gmra.mrb[0].mxu0 %v234
    %v970 = vpop.f32.mrb[0].mxu0
    %v971 = vadd.f32 %v193, %v970
    %v972 = vpop.f32.mrb[0].mxu0
    %v973 = vadd.f32 %v197, %v972
    %974 = vmatprep.mubr.f32.mxu0 0.0
    %975 = vmatmul.mubr.f32.gmra.mrb[0].mxu0 %v237
    %v976 = vpop.f32.mrb[0].mxu0
    %v977 = vadd.f32 %v193, %v976
    %v978 = vpop.f32.mrb[0].mxu0
    %v979 = vadd.f32 %v197, %v978
    %980 = vmatprep.mubr.f32.mxu0 0.0
    %981 = vmatmul.mubr.f32.gmra.mrb[0].mxu0 %v240
    %v982 = vpop.f32.mrb[0].mxu0
    %v983 = vadd.f32 %v193, %v982
    %v984 = vpop.f32.mrb[0].mxu0
    %v985 = vadd.f32 %v197, %v984
    %986 = vmatprep.mubr.f32.mxu0 0.0
    %987 = vmatmul.mubr.f32.gmra.mrb[0].mxu0 %v243
    %v988 = vpop.f32.mrb[0].mxu0
    %v989 = vadd.f32 %v193, %v988
    %v990 = vpop.f32.mrb[0].mxu0
    %v991 = vadd.f32 %v197, %v990
    %992 = vmatprep.mubr.f32.mxu0 0.0
    %993 = vmatmul.mubr.f32.gmra.mrb[0].mxu0 %v246
    %v994 = vpop.f32.mrb[0].mxu0
    %v995 = vadd.f32 %v193, %v994
    %v996 = vpop.f32.mrb[0].mxu0
    %v997 = vadd.f32 %v197, %v996
    %998 = vmatprep.mubr.f32.mxu0 0.0
    %999 = vmatmul.mubr.f32.gmra.mrb[0].mxu0 %v249
    %v1000 = vpop.f32.mrb[0].mxu0
    %v1001 = vadd.f32 %v193, %v1000
    %v1002 = vpop.f32.mrb[0].mxu0
    %v1003 = vadd.f32 %v197, %v1002
    %1004 = vmatprep.mubr.f32.mxu0 0.0
    %1005 = vmatmul.mubr.f32.gmra.mrb[0].mxu0 %v252
    %v1006 = vpop.f32.mrb[0].mxu0
    %v1007 = vadd.f32 %v193, %v1006
    %v1008 = vpop.f32.mrb[0].mxu0
    %v1009 = vadd.f32 %v197, %v1008
    %1010 = vmatprep.mubr.f32.mxu0 0.0
    %1011 = vmatmul.mubr.f32.gmra.mrb[0].mxu0 %v255
    %v1012 = vpop.f32.mrb[0].mxu0
    %v1013 = vadd.f32 %v193, %v1012
    %v1014 = vpop.f32.mrb[0].mxu0
    %v1015 = vadd.f32 %v197, %v1014
    %1016 = vmatprep.mubr.f32.mxu0 0.0
    %1017 = vmatmul.mubr.f32.gmra.mrb[0].mxu0 %v258
    %v1018 = vpop.f32.mrb[0].mxu0
    %v1019 = vadd.f32 %v193, %v1018
    %v1020 = vpop.f32.mrb[0].mxu0
    %v1021 = vadd.f32 %v197, %v1020
    %1022 = vmatprep.mubr.f32.mxu0 0.0
    %1023 = vmatmul.mubr.f32.gmra.mrb[0].mxu0 %v261
    %v1024 = vpop.f32.mrb[0].mxu0
    %v1025 = vadd.f32 %v193, %v1024
    %v1026 = vpop.f32.mrb[0].mxu0
    %v1027 = vadd.f32 %v197, %v1026
    %1028 = vmatprep.mubr.f32.mxu0 0.0
    %1029 = vmatmul.mubr.f32.gmra.mrb[0].mxu0 %v264
    %v1030 = vpop.f32.mrb[0].mxu0
    %v1031 = vadd.f32 %v193, %v1030
    %v1032 = vpop.f32.mrb[0].mxu0
    %v1033 = vadd.f32 %v197, %v1032
    %1034 = vmatprep.mubr.f32.mxu0 0.0
    %1035 = vmatmul.mubr.f32.gmra.mrb[0].mxu0 %v267
    %v1036 = vpop.f32.mrb[0].mxu0
    %v1037 = vadd.f32 %v193, %v1036
    %v1038 = vpop.f32.mrb[0].mxu0
    %v1039 = vadd.f32 %v197, %v1038
    %1040 = vmatprep.mubr.f32.mxu0 0.0
    %1041 = vmatmul.mubr.f32.gmra.mrb[0].mxu0 %v270
    %v1042 = vpop.f32.mrb[0].mxu0
    %v1043 = vadd.f32 %v193, %v1042
    %v1044 = vpop.f32.mrb[0].mxu0
    %v1045 = vadd.f32 %v197, %v1044
    %1046 = vmatprep.mubr.f32.mxu0 0.0
    %1047 = vmatmul.mubr.f32.gmra.mrb[0].mxu0 %v273
    %v1048 = vpop.f32.mrb[0].mxu0
    %v1049 = vadd.f32 %v193, %v1048
    %v1050 = vpop.f32.mrb[0].mxu0
    %v1051 = vadd.f32 %v197, %v1050
    %1052 = vmatprep.mubr.f32.mxu0 0.0
    %1053 = vmatmul.mubr.f32.gmra.mrb[0].mxu0 %v276
    %v1054 = vpop.f32.mrb[0].mxu0
    %v1055 = vadd.f32 %v193, %v1054
    %v1056 = vpop.f32.mrb[0].mxu0
    %v1057 = vadd.f32 %v197, %v1056
    %1058 = vmatprep.mubr.f32.mxu0 0.0
    %1059 = vmatmul.mubr.f32.gmra.mrb[0].mxu0 %v279
    %v1060 = vpop.f32.mrb[0].mxu0
    %v1061 = vadd.f32 %v193, %v1060
    %v1062 = vpop.f32.mrb[0].mxu0
    %v1063 = vadd.f32 %v197, %v1062
    %1064 = vmatprep.mubr.f32.mxu0 0.0
    %1065 = vmatmul.mubr.f32.gmra.mrb[0].mxu0 %v282
    %v1066 = vpop.f32.mrb[0].mxu0
    %v1067 = vadd.f32 %v193, %v1066
    %v1068 = vpop.f32.mrb[0].mxu0
    %v1069 = vadd.f32 %v197, %v1068
    %1070 = vmatprep.mubr.f32.mxu0 0.0
    %1071 = vmatmul.mubr.f32.gmra.mrb[0].mxu0 %v285
    %v1072 = vpop.f32.mrb[0].mxu0
    %v1073 = vadd.f32 %v193, %v1072
    %v1074 = vpop.f32.mrb[0].mxu0
    %v1075 = vadd.f32 %v197, %v1074
    %1076 = vmatprep.mubr.f32.mxu0 0.0
    %1077 = vmatmul.mubr.f32.gmra.mrb[0].mxu0 %v288
    %v1078 = vpop.f32.mrb[0].mxu0
    %v1079 = vadd.f32 %v193, %v1078
    %v1080 = vpop.f32.mrb[0].mxu0
    %v1081 = vadd.f32 %v197, %v1080
    %1082 = vmatprep.mubr.f32.mxu0 0.0
    %1083 = vmatmul.mubr.f32.gmra.mrb[0].mxu0 %v291
    %v1084 = vpop.f32.mrb[0].mxu0
    %v1085 = vadd.f32 %v193, %v1084
    %v1086 = vpop.f32.mrb[0].mxu0
    %v1087 = vadd.f32 %v197, %v1086
    %1088 = vmatprep.mubr.f32.mxu0 0.0
    %1089 = vmatmul.mubr.f32.gmra.mrb[0].mxu0 %v294
    %v1090 = vpop.f32.mrb[0].mxu0
    %v1091 = vadd.f32 %v193, %v1090
    %v1092 = vpop.f32.mrb[0].mxu0
    %v1093 = vadd.f32 %v197, %v1092
    %1094 = vmatprep.mubr.f32.mxu0 0.0
    %1095 = vmatmul.mubr.f32.gmra.mrb[0].mxu0 %v297
    %v1096 = vpop.f32.mrb[0].mxu0
    %v1097 = vadd.f32 %v193, %v1096
    %v1098 = vpop.f32.mrb[0].mxu0
    %v1099 = vadd.f32 %v197, %v1098
    %1100 = vmatprep.mubr.f32.mxu0 0.0
    %1101 = vmatmul.mubr.f32.gmra.mrb[0].mxu0 %v300
    %v1102 = vpop.f32.mrb[0].mxu0
    %v1103 = vadd.f32 %v193, %v1102
    %v1104 = vpop.f32.mrb[0].mxu0
    %v1105 = vadd.f32 %v197, %v1104
    %1106 = vmatprep.mubr.f32.mxu0 0.0
    %1107 = vmatmul.mubr.f32.gmra.mrb[0].mxu0 %v303
    %v1108 = vpop.f32.mrb[0].mxu0
    %v1109 = vadd.f32 %v193, %v1108
    %v1110 = vpop.f32.mrb[0].mxu0
    %v1111 = vadd.f32 %v197, %v1110
    %1112 = vmatprep.mubr.f32.mxu0 0.0
    %1113 = vmatmul.mubr.f32.gmra.mrb[0].mxu0 %v306
    %v1114 = vpop.f32.mrb[0].mxu0
    %v1115 = vadd.f32 %v193, %v1114
    %v1116 = vpop.f32.mrb[0].mxu0
    %v1117 = vadd.f32 %v197, %v1116
    %1118 = vmatprep.mubr.f32.mxu0 0.0
    %1119 = vmatmul.mubr.f32.gmra.mrb[0].mxu0 %v309
    %v1120 = vpop.f32.mrb[0].mxu0
    %v1121 = vadd.f32 %v193, %v1120
    %v1122 = vpop.f32.mrb[0].mxu0
    %v1123 = vadd.f32 %v197, %v1122
    %1124 = vmatprep.mubr.f32.mxu0 0.0
    %1125 = vmatmul.mubr.f32.gmra.mrb[0].mxu0 %v312
    %v1126 = vpop.f32.mrb[0].mxu0
    %v1127 = vadd.f32 %v193, %v1126
    %v1128 = vpop.f32.mrb[0].mxu0
    %v1129 = vadd.f32 %v197, %v1128
    %1130 = vmatprep.mubr.f32.mxu0 0.0
    %1131 = vmatmul.mubr.f32.gmra.mrb[0].mxu0 %v315
    %v1132 = vpop.f32.mrb[0].mxu0
    %v1133 = vadd.f32 %v193, %v1132
    %v1134 = vpop.f32.mrb[0].mxu0
    %v1135 = vadd.f32 %v197, %v1134
    %1136 = vmatprep.mubr.f32.mxu0 0.0
    %1137 = vmatmul.mubr.f32.gmra.mrb[0].mxu0 %v318
    %v1138 = vpop.f32.mrb[0].mxu0
    %v1139 = vadd.f32 %v193, %v1138
    %v1140 = vpop.f32.mrb[0].mxu0
    %v1141 = vadd.f32 %v197, %v1140
    %1142 = vmatprep.mubr.f32.mxu0 0.0
    %1143 = vmatmul.mubr.f32.gmra.mrb[0].mxu0 %v321
    %v1144 = vpop.f32.mrb[0].mxu0
    %v1145 = vadd.f32 %v193, %v1144
    %v1146 = vpop.f32.mrb[0].mxu0
    %v1147 = vadd.f32 %v197, %v1146
    %1148 = vmatprep.mubr.f32.mxu0 0.0
    %1149 = vmatmul.mubr.f32.gmra.mrb[0].mxu0 %v324
    %v1150 = vpop.f32.mrb[0].mxu0
    %v1151 = vadd.f32 %v193, %v1150
    %v1152 = vpop.f32.mrb[0].mxu0
    %v1153 = vadd.f32 %v197, %v1152
    %1154 = vmatprep.mubr.f32.mxu0 0.0
    %1155 = vmatmul.mubr.f32.gmra.mrb[0].mxu0 %v327
    %v1156 = vpop.f32.mrb[0].mxu0
    %v1157 = vadd.f32 %v193, %v1156
    %v1158 = vpop.f32.mrb[0].mxu0
    %v1159 = vadd.f32 %v197, %v1158
    %1160 = vmatprep.mubr.f32.mxu0 0.0
    %1161 = vmatmul.mubr.f32.gmra.mrb[0].mxu0 %v330
    %v1162 = vpop.f32.mrb[0].mxu0
    %v1163 = vadd.f32 %v193, %v1162
    %v1164 = vpop.f32.mrb[0].mxu0
    %v1165 = vadd.f32 %v197, %v1164
    %1166 = vmatprep.mubr.f32.mxu0 0.0
    %1167 = vmatmul.mubr.f32.gmra.mrb[0].mxu0 %v333
    %v1168 = vpop.f32.mrb[0].mxu0
    %v1169 = vadd.f32 %v193, %v1168
    %v1170 = vpop.f32.mrb[0].mxu0
    %v1171 = vadd.f32 %v197, %v1170
    %1172 = vmatprep.mubr.f32.mxu0 0.0
    %1173 = vmatmul.mubr.f32.gmra.mrb[0].mxu0 %v336
    %v1174 = vpop.f32.mrb[0].mxu0
    %v1175 = vadd.f32 %v193, %v1174
    %v1176 = vpop.f32.mrb[0].mxu0
    %v1177 = vadd.f32 %v197, %v1176
    %1178 = vmatprep.mubr.f32.mxu0 0.0
    %1179 = vmatmul.mubr.f32.gmra.mrb[0].mxu0 %v339
    %v1180 = vpop.f32.mrb[0].mxu0
    %v1181 = vadd.f32 %v193, %v1180
    %v1182 = vpop.f32.mrb[0].mxu0
    %v1183 = vadd.f32 %v197, %v1182
    %1184 = vmatprep.mubr.f32.mxu0 0.0
    %1185 = vmatmul.mubr.f32.gmra.mrb[0].mxu0 %v342
    %v1186 = vpop.f32.mrb[0].mxu0
    %v1187 = vadd.f32 %v193, %v1186
    %v1188 = vpop.f32.mrb[0].mxu0
    %v1189 = vadd.f32 %v197, %v1188
    %1190 = vmatprep.mubr.f32.mxu0 0.0
    %1191 = vmatmul.mubr.f32.gmra.mrb[0].mxu0 %v345
    %v1192 = vpop.f32.mrb[0].mxu0
    %v1193 = vadd.f32 %v193, %v1192
    %v1194 = vpop.f32.mrb[0].mxu0
    %v1195 = vadd.f32 %v197, %v1194
    %1196 = vmatprep.mubr.f32.mxu0 0.0
    %1197 = vmatmul.mubr.f32.gmra.mrb[0].mxu0 %v348
    %v1198 = vpop.f32.mrb[0].mxu0
    %v1199 = vadd.f32 %v193, %v1198
    %v1200 = vpop.f32.mrb[0].mxu0
    %v1201 = vadd.f32 %v197, %v1200
    %1202 = vmatprep.mubr.f32.mxu0 0.0
    %1203 = vmatmul.mubr.f32.gmra.mrb[0].mxu0 %v351
    %v1204 = vpop.f32.mrb[0].mxu0
    %v1205 = vadd.f32 %v193, %v1204
    %v1206 = vpop.f32.mrb[0].mxu0
    %v1207 = vadd.f32 %v197, %v1206
    %1208 = vmatprep.mubr.f32.mxu0 0.0
    %1209 = vmatmul.mubr.f32.gmra.mrb[0].mxu0 %v354
    %v1210 = vpop.f32.mrb[0].mxu0
    %v1211 = vadd.f32 %v193, %v1210
    %v1212 = vpop.f32.mrb[0].mxu0
    %v1213 = vadd.f32 %v197, %v1212
    %1214 = vmatprep.mubr.f32.mxu0 0.0
    %1215 = vmatmul.mubr.f32.gmra.mrb[0].mxu0 %v357
    %v1216 = vpop.f32.mrb[0].mxu0
    %v1217 = vadd.f32 %v193, %v1216
    %v1218 = vpop.f32.mrb[0].mxu0
    %v1219 = vadd.f32 %v197, %v1218
    %1220 = vmatprep.mubr.f32.mxu0 0.0
    %1221 = vmatmul.mubr.f32.gmra.mrb[0].mxu0 %v360
    %v1222 = vpop.f32.mrb[0].mxu0
    %v1223 = vadd.f32 %v193, %v1222
    %v1224 = vpop.f32.mrb[0].mxu0
    %v1225 = vadd.f32 %v197, %v1224
    %1226 = vmatprep.mubr.f32.mxu0 0.0
    %1227 = vmatmul.mubr.f32.gmra.mrb[0].mxu0 %v363
    %v1228 = vpop.f32.mrb[0].mxu0
    %v1229 = vadd.f32 %v193, %v1228
    %v1230 = vpop.f32.mrb[0].mxu0
    %v1231 = vadd.f32 %v197, %v1230
    %1232 = vmatprep.mubr.f32.mxu0 0.0
    %1233 = vmatmul.mubr.f32.gmra.mrb[0].mxu0 %v366
    %v1234 = vpop.f32.mrb[0].mxu0
    %v1235 = vadd.f32 %v193, %v1234
    %v1236 = vpop.f32.mrb[0].mxu0
    %v1237 = vadd.f32 %v197, %v1236
    %1238 = vmatprep.mubr.f32.mxu0 0.0
    %1239 = vmatmul.mubr.f32.gmra.mrb[0].mxu0 %v369
    %v1240 = vpop.f32.mrb[0].mxu0
    %v1241 = vadd.f32 %v193, %v1240
    %v1242 = vpop.f32.mrb[0].mxu0
    %v1243 = vadd.f32 %v197, %v1242
    %1244 = vmatprep.mubr.f32.mxu0 0.0
    %1245 = vmatmul.mubr.f32.gmra.mrb[0].mxu0 %v372
    %v1246 = vpop.f32.mrb[0].mxu0
    %v1247 = vadd.f32 %v193, %v1246
    %v1248 = vpop.f32.mrb[0].mxu0
    %v1249 = vadd.f32 %v197, %v1248
    %1250 = vmatprep.mubr.f32.mxu0 0.0
    %1251 = vmatmul.mubr.f32.gmra.mrb[0].mxu0 %v375
    %v1252 = vpop.f32.mrb[0].mxu0
    %v1253 = vadd.f32 %v193, %v1252
    %v1254 = vpop.f32.mrb[0].mxu0
    %v1255 = vadd.f32 %v197, %v1254
    %1256 = vmatprep.mubr.f32.mxu0 0.0
    %1257 = vmatmul.mubr.f32.gmra.mrb[0].mxu0 %v378
    %v1258 = vpop.f32.mrb[0].mxu0
    %v1259 = vadd.f32 %v193, %v1258
    %v1260 = vpop.f32.mrb[0].mxu0
    %v1261 = vadd.f32 %v197, %v1260
    %1262 = vmatprep.mubr.f32.mxu0 0.0
    %1263 = vmatmul.mubr.f32.gmra.mrb[0].mxu0 %v381
    %v1264 = vpop.f32.mrb[0].mxu0
    %v1265 = vadd.f32 %v193, %v1264
    %v1266 = vpop.f32.mrb[0].mxu0
    %v1267 = vadd.f32 %v197, %v1266
    %1268 = vmatprep.mubr.f32.mxu0 0.0
    %1269 = vmatmul.mubr.f32.gmra.mrb[0].mxu0 %v384
    %v1270 = vpop.f32.mrb[0].mxu0
    %v1271 = vadd.f32 %v193, %v1270
    %v1272 = vpop.f32.mrb[0].mxu0
    %v1273 = vadd.f32 %v197, %v1272
    %1274 = vmatprep.mubr.f32.mxu0 0.0
    %1275 = vmatmul.mubr.f32.gmra.mrb[0].mxu0 %v387
    %v1276 = vpop.f32.mrb[0].mxu0
    %v1277 = vadd.f32 %v193, %v1276
    %v1278 = vpop.f32.mrb[0].mxu0
    %v1279 = vadd.f32 %v197, %v1278
    %1280 = vmatprep.mubr.f32.mxu0 0.0
    %1281 = vmatmul.mubr.f32.gmra.mrb[0].mxu0 %v390
    %v1282 = vpop.f32.mrb[0].mxu0
    %v1283 = vadd.f32 %v193, %v1282
    %v1284 = vpop.f32.mrb[0].mxu0
    %v1285 = vadd.f32 %v197, %v1284
    %1286 = vmatprep.mubr.f32.mxu0 0.0
    %1287 = vmatmul.mubr.f32.gmra.mrb[0].mxu0 %v393
    %v1288 = vpop.f32.mrb[0].mxu0
    %v1289 = vadd.f32 %v193, %v1288
    %v1290 = vpop.f32.mrb[0].mxu0
    %v1291 = vadd.f32 %v197, %v1290
    %1292 = vdwg.mxu0
    %v1293 = vmax.f32 %v462, 0.0
    %v1294 = vmax.f32 %v464, 0.0
    %v1295 = vmax.f32 %v911, 0.0
    %v1296 = vmax.f32 %v913, 0.0
    %v1297 = vmax.f32 %v468, 0.0
    %v1298 = vmax.f32 %v470, 0.0
    %v1299 = vmax.f32 %v917, 0.0
    %v1300 = vmax.f32 %v919, 0.0
    %v1301 = vmax.f32 %v474, 0.0
    %v1302 = vmax.f32 %v476, 0.0
    %v1303 = vmax.f32 %v923, 0.0
    %v1304 = vmax.f32 %v925, 0.0
    %v1305 = vmax.f32 %v480, 0.0
    %v1306 = vmax.f32 %v482, 0.0
    %v1307 = vmax.f32 %v929, 0.0
    %v1308 = vmax.f32 %v931, 0.0
    %v1309 = vmax.f32 %v486, 0.0
    %v1310 = vmax.f32 %v488, 0.0
    %v1311 = vmax.f32 %v935, 0.0
    %v1312 = vmax.f32 %v937, 0.0
    %v1313 = vmax.f32 %v492, 0.0
    %v1314 = vmax.f32 %v494, 0.0
    %v1315 = vmax.f32 %v941, 0.0
    %v1316 = vmax.f32 %v943, 0.0
    %v1317 = vmax.f32 %v498, 0.0
    %v1318 = vmax.f32 %v500, 0.0
    %v1319 = vmax.f32 %v947, 0.0
    %v1320 = vmax.f32 %v949, 0.0
    %v1321 = vmax.f32 %v504, 0.0
    %v1322 = vmax.f32 %v506, 0.0
    %v1323 = vmax.f32 %v953, 0.0
    %v1324 = vmax.f32 %v955, 0.0
    %v1325 = vmax.f32 %v510, 0.0
    %v1326 = vmax.f32 %v512, 0.0
    %v1327 = vmax.f32 %v959, 0.0
    %v1328 = vmax.f32 %v961, 0.0
    %v1329 = vmax.f32 %v516, 0.0
    %v1330 = vmax.f32 %v518, 0.0
    %v1331 = vmax.f32 %v965, 0.0
    %v1332 = vmax.f32 %v967, 0.0
    %v1333 = vmax.f32 %v522, 0.0
    %v1334 = vmax.f32 %v524, 0.0
    %v1335 = vmax.f32 %v971, 0.0
    %v1336 = vmax.f32 %v973, 0.0
    %v1337 = vmax.f32 %v528, 0.0
    %v1338 = vmax.f32 %v530, 0.0
    %v1339 = vmax.f32 %v977, 0.0
    %v1340 = vmax.f32 %v979, 0.0
    %v1341 = vmax.f32 %v534, 0.0
    %v1342 = vmax.f32 %v536, 0.0
    %v1343 = vmax.f32 %v983, 0.0
    %v1344 = vmax.f32 %v985, 0.0
    %v1345 = vmax.f32 %v540, 0.0
    %v1346 = vmax.f32 %v542, 0.0
    %v1347 = vmax.f32 %v989, 0.0
    %v1348 = vmax.f32 %v991, 0.0
    %v1349 = vmax.f32 %v546, 0.0
    %v1350 = vmax.f32 %v548, 0.0
    %v1351 = vmax.f32 %v995, 0.0
    %v1352 = vmax.f32 %v997, 0.0
    %v1353 = vmax.f32 %v552, 0.0
    %v1354 = vmax.f32 %v554, 0.0
    %v1355 = vmax.f32 %v1001, 0.0
    %v1356 = vmax.f32 %v1003, 0.0
    %v1357 = vmax.f32 %v558, 0.0
    %v1358 = vmax.f32 %v560, 0.0
    %v1359 = vmax.f32 %v1007, 0.0
    %v1360 = vmax.f32 %v1009, 0.0
    %v1361 = vmax.f32 %v564, 0.0
    %v1362 = vmax.f32 %v566, 0.0
    %v1363 = vmax.f32 %v1013, 0.0
    %v1364 = vmax.f32 %v1015, 0.0
    %v1365 = vmax.f32 %v570, 0.0
    %v1366 = vmax.f32 %v572, 0.0
    %v1367 = vmax.f32 %v1019, 0.0
    %v1368 = vmax.f32 %v1021, 0.0
    %v1369 = vmax.f32 %v576, 0.0
    %v1370 = vmax.f32 %v578, 0.0
    %v1371 = vmax.f32 %v1025, 0.0
    %v1372 = vmax.f32 %v1027, 0.0
    %v1373 = vmax.f32 %v582, 0.0
    %v1374 = vmax.f32 %v584, 0.0
    %v1375 = vmax.f32 %v1031, 0.0
    %v1376 = vmax.f32 %v1033, 0.0
    %v1377 = vmax.f32 %v588, 0.0
    %v1378 = vmax.f32 %v590, 0.0
    %v1379 = vmax.f32 %v1037, 0.0
    %v1380 = vmax.f32 %v1039, 0.0
    %v1381 = vmax.f32 %v594, 0.0
    %v1382 = vmax.f32 %v596, 0.0
    %v1383 = vmax.f32 %v1043, 0.0
    %v1384 = vmax.f32 %v1045, 0.0
    %v1385 = vmax.f32 %v600, 0.0
    %v1386 = vmax.f32 %v602, 0.0
    %v1387 = vmax.f32 %v1049, 0.0
    %v1388 = vmax.f32 %v1051, 0.0
    %v1389 = vmax.f32 %v606, 0.0
    %v1390 = vmax.f32 %v608, 0.0
    %v1391 = vmax.f32 %v1055, 0.0
    %v1392 = vmax.f32 %v1057, 0.0
    %v1393 = vmax.f32 %v612, 0.0
    %v1394 = vmax.f32 %v614, 0.0
    %v1395 = vmax.f32 %v1061, 0.0
    %v1396 = vmax.f32 %v1063, 0.0
    %v1397 = vmax.f32 %v618, 0.0
    %v1398 = vmax.f32 %v620, 0.0
    %v1399 = vmax.f32 %v1067, 0.0
    %v1400 = vmax.f32 %v1069, 0.0
    %v1401 = vmax.f32 %v624, 0.0
    %v1402 = vmax.f32 %v626, 0.0
    %v1403 = vmax.f32 %v1073, 0.0
    %v1404 = vmax.f32 %v1075, 0.0
    %v1405 = vmax.f32 %v630, 0.0
    %v1406 = vmax.f32 %v632, 0.0
    %v1407 = vmax.f32 %v1079, 0.0
    %v1408 = vmax.f32 %v1081, 0.0
    %v1409 = vmax.f32 %v636, 0.0
    %v1410 = vmax.f32 %v638, 0.0
    %v1411 = vmax.f32 %v1085, 0.0
    %v1412 = vmax.f32 %v1087, 0.0
    %v1413 = vmax.f32 %v642, 0.0
    %v1414 = vmax.f32 %v644, 0.0
    %v1415 = vmax.f32 %v1091, 0.0
    %v1416 = vmax.f32 %v1093, 0.0
    %v1417 = vmax.f32 %v648, 0.0
    %v1418 = vmax.f32 %v650, 0.0
    %v1419 = vmax.f32 %v1097, 0.0
    %v1420 = vmax.f32 %v1099, 0.0
    %v1421 = vmax.f32 %v654, 0.0
    %v1422 = vmax.f32 %v656, 0.0
    %v1423 = vmax.f32 %v1103, 0.0
    %v1424 = vmax.f32 %v1105, 0.0
    %v1425 = vmax.f32 %v660, 0.0
    %v1426 = vmax.f32 %v662, 0.0
    %v1427 = vmax.f32 %v1109, 0.0
    %v1428 = vmax.f32 %v1111, 0.0
    %v1429 = vmax.f32 %v666, 0.0
    %v1430 = vmax.f32 %v668, 0.0
    %v1431 = vmax.f32 %v1115, 0.0
    %v1432 = vmax.f32 %v1117, 0.0
    %v1433 = vmax.f32 %v672, 0.0
    %v1434 = vmax.f32 %v674, 0.0
    %v1435 = vmax.f32 %v1121, 0.0
    %v1436 = vmax.f32 %v1123, 0.0
    %v1437 = vmax.f32 %v678, 0.0
    %v1438 = vmax.f32 %v680, 0.0
    %v1439 = vmax.f32 %v1127, 0.0
    %v1440 = vmax.f32 %v1129, 0.0
    %v1441 = vmax.f32 %v684, 0.0
    %v1442 = vmax.f32 %v686, 0.0
    %v1443 = vmax.f32 %v1133, 0.0
    %v1444 = vmax.f32 %v1135, 0.0
    %v1445 = vmax.f32 %v690, 0.0
    %v1446 = vmax.f32 %v692, 0.0
    %v1447 = vmax.f32 %v1139, 0.0
    %v1448 = vmax.f32 %v1141, 0.0
    %v1449 = vmax.f32 %v696, 0.0
    %v1450 = vmax.f32 %v698, 0.0
    %v1451 = vmax.f32 %v1145, 0.0
    %v1452 = vmax.f32 %v1147, 0.0
    %v1453 = vmax.f32 %v702, 0.0
    %v1454 = vmax.f32 %v704, 0.0
    %v1455 = vmax.f32 %v1151, 0.0
    %v1456 = vmax.f32 %v1153, 0.0
    %v1457 = vmax.f32 %v708, 0.0
    %v1458 = vmax.f32 %v710, 0.0
    %v1459 = vmax.f32 %v1157, 0.0
    %v1460 = vmax.f32 %v1159, 0.0
    %v1461 = vmax.f32 %v714, 0.0
    %v1462 = vmax.f32 %v716, 0.0
    %v1463 = vmax.f32 %v1163, 0.0
    %v1464 = vmax.f32 %v1165, 0.0
    %v1465 = vmax.f32 %v720, 0.0
    %v1466 = vmax.f32 %v722, 0.0
    %v1467 = vmax.f32 %v1169, 0.0
    %v1468 = vmax.f32 %v1171, 0.0
    %v1469 = vmax.f32 %v726, 0.0
    %v1470 = vmax.f32 %v728, 0.0
    %v1471 = vmax.f32 %v1175, 0.0
    %v1472 = vmax.f32 %v1177, 0.0
    %v1473 = vmax.f32 %v732, 0.0
    %v1474 = vmax.f32 %v734, 0.0
    %v1475 = vmax.f32 %v1181, 0.0
    %v1476 = vmax.f32 %v1183, 0.0
    %v1477 = vmax.f32 %v738, 0.0
    %v1478 = vmax.f32 %v740, 0.0
    %v1479 = vmax.f32 %v1187, 0.0
    %v1480 = vmax.f32 %v1189, 0.0
    %v1481 = vmax.f32 %v744, 0.0
    %v1482 = vmax.f32 %v746, 0.0
    %v1483 = vmax.f32 %v1193, 0.0
    %v1484 = vmax.f32 %v1195, 0.0
    %v1485 = vmax.f32 %v750, 0.0
    %v1486 = vmax.f32 %v752, 0.0
    %v1487 = vmax.f32 %v1199, 0.0
    %v1488 = vmax.f32 %v1201, 0.0
    %v1489 = vmax.f32 %v756, 0.0
    %v1490 = vmax.f32 %v758, 0.0
    %v1491 = vmax.f32 %v1205, 0.0
    %v1492 = vmax.f32 %v1207, 0.0
    %v1493 = vmax.f32 %v762, 0.0
    %v1494 = vmax.f32 %v764, 0.0
    %v1495 = vmax.f32 %v1211, 0.0
    %v1496 = vmax.f32 %v1213, 0.0
    %v1497 = vmax.f32 %v768, 0.0
    %v1498 = vmax.f32 %v770, 0.0
    %v1499 = vmax.f32 %v1217, 0.0
    %v1500 = vmax.f32 %v1219, 0.0
    %v1501 = vmax.f32 %v774, 0.0
    %v1502 = vmax.f32 %v776, 0.0
    %v1503 = vmax.f32 %v1223, 0.0
    %v1504 = vmax.f32 %v1225, 0.0
    %v1505 = vmax.f32 %v780, 0.0
    %v1506 = vmax.f32 %v782, 0.0
    %v1507 = vmax.f32 %v1229, 0.0
    %v1508 = vmax.f32 %v1231, 0.0
    %v1509 = vmax.f32 %v786, 0.0
    %v1510 = vmax.f32 %v788, 0.0
    %v1511 = vmax.f32 %v1235, 0.0
    %v1512 = vmax.f32 %v1237, 0.0
    %v1513 = vmax.f32 %v792, 0.0
    %v1514 = vmax.f32 %v794, 0.0
    %v1515 = vmax.f32 %v1241, 0.0
    %v1516 = vmax.f32 %v1243, 0.0
    %v1517 = vmax.f32 %v798, 0.0
    %v1518 = vmax.f32 %v800, 0.0
    %v1519 = vmax.f32 %v1247, 0.0
    %v1520 = vmax.f32 %v1249, 0.0
    %v1521 = vmax.f32 %v804, 0.0
    %v1522 = vmax.f32 %v806, 0.0
    %v1523 = vmax.f32 %v1253, 0.0
    %v1524 = vmax.f32 %v1255, 0.0
    %v1525 = vmax.f32 %v810, 0.0
    %v1526 = vmax.f32 %v812, 0.0
    %v1527 = vmax.f32 %v1259, 0.0
    %v1528 = vmax.f32 %v1261, 0.0
    %v1529 = vmax.f32 %v816, 0.0
    %v1530 = vmax.f32 %v818, 0.0
    %v1531 = vmax.f32 %v1265, 0.0
    %v1532 = vmax.f32 %v1267, 0.0
    %v1533 = vmax.f32 %v822, 0.0
    %v1534 = vmax.f32 %v824, 0.0
    %v1535 = vmax.f32 %v1271, 0.0
    %v1536 = vmax.f32 %v1273, 0.0
    %v1537 = vmax.f32 %v828, 0.0
    %v1538 = vmax.f32 %v830, 0.0
    %v1539 = vmax.f32 %v1277, 0.0
    %v1540 = vmax.f32 %v1279, 0.0
    %v1541 = vmax.f32 %v834, 0.0
    %v1542 = vmax.f32 %v836, 0.0
    %v1543 = vmax.f32 %v1283, 0.0
    %v1544 = vmax.f32 %v1285, 0.0
    %v1545 = vmax.f32 %v840, 0.0
    %v1546 = vmax.f32 %v842, 0.0
    %v1547 = vmax.f32 %v1289, 0.0
    %v1548 = vmax.f32 %v1291, 0.0
    %v1549 = vadd.f32 %v1293, %v1297
    %v1550 = vadd.f32 %v1549, %v1301
    %v1551 = vadd.f32 %v1550, %v1305
    %v1552 = vadd.f32 %v1551, %v1309
    %v1553 = vadd.f32 %v1552, %v1313
    %v1554 = vadd.f32 %v1553, %v1317
    %v1555 = vadd.f32 %v1554, %v1321
    %v1556 = vadd.f32 %v1555, %v1325
    %v1557 = vadd.f32 %v1556, %v1329
    %v1558 = vadd.f32 %v1557, %v1333
    %v1559 = vadd.f32 %v1558, %v1337
    %v1560 = vadd.f32 %v1559, %v1341
    %v1561 = vadd.f32 %v1560, %v1345
    %v1562 = vadd.f32 %v1561, %v1349
    %v1563 = vadd.f32 %v1562, %v1353
    %v1564 = vadd.f32 %v1563, %v1357
    %v1565 = vadd.f32 %v1564, %v1361
    %v1566 = vadd.f32 %v1565, %v1365
    %v1567 = vadd.f32 %v1566, %v1369
    %v1568 = vadd.f32 %v1567, %v1373
    %v1569 = vadd.f32 %v1568, %v1377
    %v1570 = vadd.f32 %v1569, %v1381
    %v1571 = vadd.f32 %v1570, %v1385
    %v1572 = vadd.f32 %v1571, %v1389
    %v1573 = vadd.f32 %v1572, %v1393
    %v1574 = vadd.f32 %v1573, %v1397
    %v1575 = vadd.f32 %v1574, %v1401
    %v1576 = vadd.f32 %v1575, %v1405
    %v1577 = vadd.f32 %v1576, %v1409
    %v1578 = vadd.f32 %v1577, %v1413
    %v1579 = vadd.f32 %v1578, %v1417
    %v1580 = vadd.f32 %v1579, %v1421
    %v1581 = vadd.f32 %v1580, %v1425
    %v1582 = vadd.f32 %v1581, %v1429
    %v1583 = vadd.f32 %v1582, %v1433
    %v1584 = vadd.f32 %v1583, %v1437
    %v1585 = vadd.f32 %v1584, %v1441
    %v1586 = vadd.f32 %v1585, %v1445
    %v1587 = vadd.f32 %v1586, %v1449
    %v1588 = vadd.f32 %v1587, %v1453
    %v1589 = vadd.f32 %v1588, %v1457
    %v1590 = vadd.f32 %v1589, %v1461
    %v1591 = vadd.f32 %v1590, %v1465
    %v1592 = vadd.f32 %v1591, %v1469
    %v1593 = vadd.f32 %v1592, %v1473
    %v1594 = vadd.f32 %v1593, %v1477
    %v1595 = vadd.f32 %v1594, %v1481
    %v1596 = vadd.f32 %v1595, %v1485
    %v1597 = vadd.f32 %v1596, %v1489
    %v1598 = vadd.f32 %v1597, %v1493
    %v1599 = vadd.f32 %v1598, %v1497
    %v1600 = vadd.f32 %v1599, %v1501
    %v1601 = vadd.f32 %v1600, %v1505
    %v1602 = vadd.f32 %v1601, %v1509
    %v1603 = vadd.f32 %v1602, %v1513
    %v1604 = vadd.f32 %v1603, %v1517
    %v1605 = vadd.f32 %v1604, %v1521
    %v1606 = vadd.f32 %v1605, %v1525
    %v1607 = vadd.f32 %v1606, %v1529
    %v1608 = vadd.f32 %v1607, %v1533
    %v1609 = vadd.f32 %v1608, %v1537
    %v1610 = vadd.f32 %v1609, %v1541
    %v1611 = vadd.f32 %v1610, %v1545
    %v1612 = vrot.slane %v1611, 4
    %v1613 = vadd.f32 %v1611, %v1612
    %v1614 = vrot.slane %v1613, 2
    %v1615 = vadd.f32 %v1613, %v1614
    %v1616 = vrot.slane %v1615, 1
    %v1617 = vadd.f32 %v1615, %v1616
    %v1618 = vadd.f32 %v1294, %v1298
    %v1619 = vadd.f32 %v1618, %v1302
    %v1620 = vadd.f32 %v1619, %v1306
    %v1621 = vadd.f32 %v1620, %v1310
    %v1622 = vadd.f32 %v1621, %v1314
    %v1623 = vadd.f32 %v1622, %v1318
    %v1624 = vadd.f32 %v1623, %v1322
    %v1625 = vadd.f32 %v1624, %v1326
    %v1626 = vadd.f32 %v1625, %v1330
    %v1627 = vadd.f32 %v1626, %v1334
    %v1628 = vadd.f32 %v1627, %v1338
    %v1629 = vadd.f32 %v1628, %v1342
    %v1630 = vadd.f32 %v1629, %v1346
    %v1631 = vadd.f32 %v1630, %v1350
    %v1632 = vadd.f32 %v1631, %v1354
    %v1633 = vadd.f32 %v1632, %v1358
    %v1634 = vadd.f32 %v1633, %v1362
    %v1635 = vadd.f32 %v1634, %v1366
    %v1636 = vadd.f32 %v1635, %v1370
    %v1637 = vadd.f32 %v1636, %v1374
    %v1638 = vadd.f32 %v1637, %v1378
    %v1639 = vadd.f32 %v1638, %v1382
    %v1640 = vadd.f32 %v1639, %v1386
    %v1641 = vadd.f32 %v1640, %v1390
    %v1642 = vadd.f32 %v1641, %v1394
    %v1643 = vadd.f32 %v1642, %v1398
    %v1644 = vadd.f32 %v1643, %v1402
    %v1645 = vadd.f32 %v1644, %v1406
    %v1646 = vadd.f32 %v1645, %v1410
    %v1647 = vadd.f32 %v1646, %v1414
    %v1648 = vadd.f32 %v1647, %v1418
    %v1649 = vadd.f32 %v1648, %v1422
    %v1650 = vadd.f32 %v1649, %v1426
    %v1651 = vadd.f32 %v1650, %v1430
    %v1652 = vadd.f32 %v1651, %v1434
    %v1653 = vadd.f32 %v1652, %v1438
    %v1654 = vadd.f32 %v1653, %v1442
    %v1655 = vadd.f32 %v1654, %v1446
    %v1656 = vadd.f32 %v1655, %v1450
    %v1657 = vadd.f32 %v1656, %v1454
    %v1658 = vadd.f32 %v1657, %v1458
    %v1659 = vadd.f32 %v1658, %v1462
    %v1660 = vadd.f32 %v1659, %v1466
    %v1661 = vadd.f32 %v1660, %v1470
    %v1662 = vadd.f32 %v1661, %v1474
    %v1663 = vadd.f32 %v1662, %v1478
    %v1664 = vadd.f32 %v1663, %v1482
    %v1665 = vadd.f32 %v1664, %v1486
    %v1666 = vadd.f32 %v1665, %v1490
    %v1667 = vadd.f32 %v1666, %v1494
    %v1668 = vadd.f32 %v1667, %v1498
    %v1669 = vadd.f32 %v1668, %v1502
    %v1670 = vadd.f32 %v1669, %v1506
    %v1671 = vadd.f32 %v1670, %v1510
    %v1672 = vadd.f32 %v1671, %v1514
    %v1673 = vadd.f32 %v1672, %v1518
    %v1674 = vadd.f32 %v1673, %v1522
    %v1675 = vadd.f32 %v1674, %v1526
    %v1676 = vadd.f32 %v1675, %v1530
    %v1677 = vadd.f32 %v1676, %v1534
    %v1678 = vadd.f32 %v1677, %v1538
    %v1679 = vadd.f32 %v1678, %v1542
    %v1680 = vadd.f32 %v1679, %v1546
    %v1681 = vrot.slane %v1680, 4
    %v1682 = vadd.f32 %v1680, %v1681
    %v1683 = vrot.slane %v1682, 2
    %v1684 = vadd.f32 %v1682, %v1683
    %v1685 = vrot.slane %v1684, 1
    %v1686 = vadd.f32 %v1684, %v1685
    %v1687 = vadd.f32 %v1295, %v1299
    %v1688 = vadd.f32 %v1687, %v1303
    %v1689 = vadd.f32 %v1688, %v1307
    %v1690 = vadd.f32 %v1689, %v1311
    %v1691 = vadd.f32 %v1690, %v1315
    %v1692 = vadd.f32 %v1691, %v1319
    %v1693 = vadd.f32 %v1692, %v1323
    %v1694 = vadd.f32 %v1693, %v1327
    %v1695 = vadd.f32 %v1694, %v1331
    %v1696 = vadd.f32 %v1695, %v1335
    %v1697 = vadd.f32 %v1696, %v1339
    %v1698 = vadd.f32 %v1697, %v1343
    %v1699 = vadd.f32 %v1698, %v1347
    %v1700 = vadd.f32 %v1699, %v1351
    %v1701 = vadd.f32 %v1700, %v1355
    %v1702 = vadd.f32 %v1701, %v1359
    %v1703 = vadd.f32 %v1702, %v1363
    %v1704 = vadd.f32 %v1703, %v1367
    %v1705 = vadd.f32 %v1704, %v1371
    %v1706 = vadd.f32 %v1705, %v1375
    %v1707 = vadd.f32 %v1706, %v1379
    %v1708 = vadd.f32 %v1707, %v1383
    %v1709 = vadd.f32 %v1708, %v1387
    %v1710 = vadd.f32 %v1709, %v1391
    %v1711 = vadd.f32 %v1710, %v1395
    %v1712 = vadd.f32 %v1711, %v1399
    %v1713 = vadd.f32 %v1712, %v1403
    %v1714 = vadd.f32 %v1713, %v1407
    %v1715 = vadd.f32 %v1714, %v1411
    %v1716 = vadd.f32 %v1715, %v1415
    %v1717 = vadd.f32 %v1716, %v1419
    %v1718 = vadd.f32 %v1717, %v1423
    %v1719 = vadd.f32 %v1718, %v1427
    %v1720 = vadd.f32 %v1719, %v1431
    %v1721 = vadd.f32 %v1720, %v1435
    %v1722 = vadd.f32 %v1721, %v1439
    %v1723 = vadd.f32 %v1722, %v1443
    %v1724 = vadd.f32 %v1723, %v1447
    %v1725 = vadd.f32 %v1724, %v1451
    %v1726 = vadd.f32 %v1725, %v1455
    %v1727 = vadd.f32 %v1726, %v1459
    %v1728 = vadd.f32 %v1727, %v1463
    %v1729 = vadd.f32 %v1728, %v1467
    %v1730 = vadd.f32 %v1729, %v1471
    %v1731 = vadd.f32 %v1730, %v1475
    %v1732 = vadd.f32 %v1731, %v1479
    %v1733 = vadd.f32 %v1732, %v1483
    %v1734 = vadd.f32 %v1733, %v1487
    %v1735 = vadd.f32 %v1734, %v1491
    %v1736 = vadd.f32 %v1735, %v1495
    %v1737 = vadd.f32 %v1736, %v1499
    %v1738 = vadd.f32 %v1737, %v1503
    %v1739 = vadd.f32 %v1738, %v1507
    %v1740 = vadd.f32 %v1739, %v1511
    %v1741 = vadd.f32 %v1740, %v1515
    %v1742 = vadd.f32 %v1741, %v1519
    %v1743 = vadd.f32 %v1742, %v1523
    %v1744 = vadd.f32 %v1743, %v1527
    %v1745 = vadd.f32 %v1744, %v1531
    %v1746 = vadd.f32 %v1745, %v1535
    %v1747 = vadd.f32 %v1746, %v1539
    %v1748 = vadd.f32 %v1747, %v1543
    %v1749 = vadd.f32 %v1748, %v1547
    %v1750 = vrot.slane %v1749, 4
    %v1751 = vadd.f32 %v1749, %v1750
    %v1752 = vrot.slane %v1751, 2
    %v1753 = vadd.f32 %v1751, %v1752
    %v1754 = vrot.slane %v1753, 1
    %v1755 = vadd.f32 %v1753, %v1754
    %v1756 = vadd.f32 %v1296, %v1300
    %v1757 = vadd.f32 %v1756, %v1304
    %v1758 = vadd.f32 %v1757, %v1308
    %v1759 = vadd.f32 %v1758, %v1312
    %v1760 = vadd.f32 %v1759, %v1316
    %v1761 = vadd.f32 %v1760, %v1320
    %v1762 = vadd.f32 %v1761, %v1324
    %v1763 = vadd.f32 %v1762, %v1328
    %v1764 = vadd.f32 %v1763, %v1332
    %v1765 = vadd.f32 %v1764, %v1336
    %v1766 = vadd.f32 %v1765, %v1340
    %v1767 = vadd.f32 %v1766, %v1344
    %v1768 = vadd.f32 %v1767, %v1348
    %v1769 = vadd.f32 %v1768, %v1352
    %v1770 = vadd.f32 %v1769, %v1356
    %v1771 = vadd.f32 %v1770, %v1360
    %v1772 = vadd.f32 %v1771, %v1364
    %v1773 = vadd.f32 %v1772, %v1368
    %v1774 = vadd.f32 %v1773, %v1372
    %v1775 = vadd.f32 %v1774, %v1376
    %v1776 = vadd.f32 %v1775, %v1380
    %v1777 = vadd.f32 %v1776, %v1384
    %v1778 = vadd.f32 %v1777, %v1388
    %v1779 = vadd.f32 %v1778, %v1392
    %v1780 = vadd.f32 %v1779, %v1396
    %v1781 = vadd.f32 %v1780, %v1400
    %v1782 = vadd.f32 %v1781, %v1404
    %v1783 = vadd.f32 %v1782, %v1408
    %v1784 = vadd.f32 %v1783, %v1412
    %v1785 = vadd.f32 %v1784, %v1416
    %v1786 = vadd.f32 %v1785, %v1420
    %v1787 = vadd.f32 %v1786, %v1424
    %v1788 = vadd.f32 %v1787, %v1428
    %v1789 = vadd.f32 %v1788, %v1432
    %v1790 = vadd.f32 %v1789, %v1436
    %v1791 = vadd.f32 %v1790, %v1440
    %v1792 = vadd.f32 %v1791, %v1444
    %v1793 = vadd.f32 %v1792, %v1448
    %v1794 = vadd.f32 %v1793, %v1452
    %v1795 = vadd.f32 %v1794, %v1456
    %v1796 = vadd.f32 %v1795, %v1460
    %v1797 = vadd.f32 %v1796, %v1464
    %v1798 = vadd.f32 %v1797, %v1468
    %v1799 = vadd.f32 %v1798, %v1472
    %v1800 = vadd.f32 %v1799, %v1476
    %v1801 = vadd.f32 %v1800, %v1480
    %v1802 = vadd.f32 %v1801, %v1484
    %v1803 = vadd.f32 %v1802, %v1488
    %v1804 = vadd.f32 %v1803, %v1492
    %v1805 = vadd.f32 %v1804, %v1496
    %v1806 = vadd.f32 %v1805, %v1500
    %v1807 = vadd.f32 %v1806, %v1504
    %v1808 = vadd.f32 %v1807, %v1508
    %v1809 = vadd.f32 %v1808, %v1512
    %v1810 = vadd.f32 %v1809, %v1516
    %v1811 = vadd.f32 %v1810, %v1520
    %v1812 = vadd.f32 %v1811, %v1524
    %v1813 = vadd.f32 %v1812, %v1528
    %v1814 = vadd.f32 %v1813, %v1532
    %v1815 = vadd.f32 %v1814, %v1536
    %v1816 = vadd.f32 %v1815, %v1540
    %v1817 = vadd.f32 %v1816, %v1544
    %v1818 = vadd.f32 %v1817, %v1548
    %v1819 = vrot.slane %v1818, 4
    %v1820 = vadd.f32 %v1818, %v1819
    %v1821 = vrot.slane %v1820, 2
    %v1822 = vadd.f32 %v1820, %v1821
    %v1823 = vrot.slane %v1822, 1
    %v1824 = vadd.f32 %v1822, %v1823
    %v1825 = vrcp.pop 512.0
    %v1826 = vmul.f32 %v1617, %v1825
    %v1827 = vmul.f32 %v1686, %v1825
    %v1828 = vmul.f32 %v1755, %v1825
    %v1829 = vmul.f32 %v1824, %v1825
    %v1830 = vsub.f32 %v1293, %v1826
    %v1831 = vsub.f32 %v1294, %v1827
    %v1832 = vsub.f32 %v1295, %v1828
    %v1833 = vsub.f32 %v1296, %v1829
    %v1834 = vsub.f32 %v1297, %v1826
    %v1835 = vsub.f32 %v1298, %v1827
    %v1836 = vsub.f32 %v1299, %v1828
    %v1837 = vsub.f32 %v1300, %v1829
    %v1838 = vsub.f32 %v1301, %v1826
    %v1839 = vsub.f32 %v1302, %v1827
    %v1840 = vsub.f32 %v1303, %v1828
    %v1841 = vsub.f32 %v1304, %v1829
    %v1842 = vsub.f32 %v1305, %v1826
    %v1843 = vsub.f32 %v1306, %v1827
    %v1844 = vsub.f32 %v1307, %v1828
    %v1845 = vsub.f32 %v1308, %v1829
    %v1846 = vsub.f32 %v1309, %v1826
    %v1847 = vsub.f32 %v1310, %v1827
    %v1848 = vsub.f32 %v1311, %v1828
    %v1849 = vsub.f32 %v1312, %v1829
    %v1850 = vsub.f32 %v1313, %v1826
    %v1851 = vsub.f32 %v1314, %v1827
    %v1852 = vsub.f32 %v1315, %v1828
    %v1853 = vsub.f32 %v1316, %v1829
    %v1854 = vsub.f32 %v1317, %v1826
    %v1855 = vsub.f32 %v1318, %v1827
    %v1856 = vsub.f32 %v1319, %v1828
    %v1857 = vsub.f32 %v1320, %v1829
    %v1858 = vsub.f32 %v1321, %v1826
    %v1859 = vsub.f32 %v1322, %v1827
    %v1860 = vsub.f32 %v1323, %v1828
    %v1861 = vsub.f32 %v1324, %v1829
    %v1862 = vsub.f32 %v1325, %v1826
    %v1863 = vsub.f32 %v1326, %v1827
    %v1864 = vsub.f32 %v1327, %v1828
    %v1865 = vsub.f32 %v1328, %v1829
    %v1866 = vsub.f32 %v1329, %v1826
    %v1867 = vsub.f32 %v1330, %v1827
    %v1868 = vsub.f32 %v1331, %v1828
    %v1869 = vsub.f32 %v1332, %v1829
    %v1870 = vsub.f32 %v1333, %v1826
    %v1871 = vsub.f32 %v1334, %v1827
    %v1872 = vsub.f32 %v1335, %v1828
    %v1873 = vsub.f32 %v1336, %v1829
    %v1874 = vsub.f32 %v1337, %v1826
    %v1875 = vsub.f32 %v1338, %v1827
    %v1876 = vsub.f32 %v1339, %v1828
    %v1877 = vsub.f32 %v1340, %v1829
    %v1878 = vsub.f32 %v1341, %v1826
    %v1879 = vsub.f32 %v1342, %v1827
    %v1880 = vsub.f32 %v1343, %v1828
    %v1881 = vsub.f32 %v1344, %v1829
    %v1882 = vsub.f32 %v1345, %v1826
    %v1883 = vsub.f32 %v1346, %v1827
    %v1884 = vsub.f32 %v1347, %v1828
    %v1885 = vsub.f32 %v1348, %v1829
    %v1886 = vsub.f32 %v1349, %v1826
    %v1887 = vsub.f32 %v1350, %v1827
    %v1888 = vsub.f32 %v1351, %v1828
    %v1889 = vsub.f32 %v1352, %v1829
    %v1890 = vsub.f32 %v1353, %v1826
    %v1891 = vsub.f32 %v1354, %v1827
    %v1892 = vsub.f32 %v1355, %v1828
    %v1893 = vsub.f32 %v1356, %v1829
    %v1894 = vsub.f32 %v1357, %v1826
    %v1895 = vsub.f32 %v1358, %v1827
    %v1896 = vsub.f32 %v1359, %v1828
    %v1897 = vsub.f32 %v1360, %v1829
    %v1898 = vsub.f32 %v1361, %v1826
    %v1899 = vsub.f32 %v1362, %v1827
    %v1900 = vsub.f32 %v1363, %v1828
    %v1901 = vsub.f32 %v1364, %v1829
    %v1902 = vsub.f32 %v1365, %v1826
    %v1903 = vsub.f32 %v1366, %v1827
    %v1904 = vsub.f32 %v1367, %v1828
    %v1905 = vsub.f32 %v1368, %v1829
    %v1906 = vsub.f32 %v1369, %v1826
    %v1907 = vsub.f32 %v1370, %v1827
    %v1908 = vsub.f32 %v1371, %v1828
    %v1909 = vsub.f32 %v1372, %v1829
    %v1910 = vsub.f32 %v1373, %v1826
    %v1911 = vsub.f32 %v1374, %v1827
    %v1912 = vsub.f32 %v1375, %v1828
    %v1913 = vsub.f32 %v1376, %v1829
    %v1914 = vsub.f32 %v1377, %v1826
    %v1915 = vsub.f32 %v1378, %v1827
    %v1916 = vsub.f32 %v1379, %v1828
    %v1917 = vsub.f32 %v1380, %v1829
    %v1918 = vsub.f32 %v1381, %v1826
    %v1919 = vsub.f32 %v1382, %v1827
    %v1920 = vsub.f32 %v1383, %v1828
    %v1921 = vsub.f32 %v1384, %v1829
    %v1922 = vsub.f32 %v1385, %v1826
    %v1923 = vsub.f32 %v1386, %v1827
    %v1924 = vsub.f32 %v1387, %v1828
    %v1925 = vsub.f32 %v1388, %v1829
    %v1926 = vsub.f32 %v1389, %v1826
    %v1927 = vsub.f32 %v1390, %v1827
    %v1928 = vsub.f32 %v1391, %v1828
    %v1929 = vsub.f32 %v1392, %v1829
    %v1930 = vsub.f32 %v1393, %v1826
    %v1931 = vsub.f32 %v1394, %v1827
    %v1932 = vsub.f32 %v1395, %v1828
    %v1933 = vsub.f32 %v1396, %v1829
    %v1934 = vsub.f32 %v1397, %v1826
    %v1935 = vsub.f32 %v1398, %v1827
    %v1936 = vsub.f32 %v1399, %v1828
    %v1937 = vsub.f32 %v1400, %v1829
    %v1938 = vsub.f32 %v1401, %v1826
    %v1939 = vsub.f32 %v1402, %v1827
    %v1940 = vsub.f32 %v1403, %v1828
    %v1941 = vsub.f32 %v1404, %v1829
    %v1942 = vsub.f32 %v1405, %v1826
    %v1943 = vsub.f32 %v1406, %v1827
    %v1944 = vsub.f32 %v1407, %v1828
    %v1945 = vsub.f32 %v1408, %v1829
    %v1946 = vsub.f32 %v1409, %v1826
    %v1947 = vsub.f32 %v1410, %v1827
    %v1948 = vsub.f32 %v1411, %v1828
    %v1949 = vsub.f32 %v1412, %v1829
    %v1950 = vsub.f32 %v1413, %v1826
    %v1951 = vsub.f32 %v1414, %v1827
    %v1952 = vsub.f32 %v1415, %v1828
    %v1953 = vsub.f32 %v1416, %v1829
    %v1954 = vsub.f32 %v1417, %v1826
    %v1955 = vsub.f32 %v1418, %v1827
    %v1956 = vsub.f32 %v1419, %v1828
    %v1957 = vsub.f32 %v1420, %v1829
    %v1958 = vsub.f32 %v1421, %v1826
    %v1959 = vsub.f32 %v1422, %v1827
    %v1960 = vsub.f32 %v1423, %v1828
    %v1961 = vsub.f32 %v1424, %v1829
    %v1962 = vsub.f32 %v1425, %v1826
    %v1963 = vsub.f32 %v1426, %v1827
    %v1964 = vsub.f32 %v1427, %v1828
    %v1965 = vsub.f32 %v1428, %v1829
    %v1966 = vsub.f32 %v1429, %v1826
    %v1967 = vsub.f32 %v1430, %v1827
    %v1968 = vsub.f32 %v1431, %v1828
    %v1969 = vsub.f32 %v1432, %v1829
    %v1970 = vsub.f32 %v1433, %v1826
    %v1971 = vsub.f32 %v1434, %v1827
    %v1972 = vsub.f32 %v1435, %v1828
    %v1973 = vsub.f32 %v1436, %v1829
    %v1974 = vsub.f32 %v1437, %v1826
    %v1975 = vsub.f32 %v1438, %v1827
    %v1976 = vsub.f32 %v1439, %v1828
    %v1977 = vsub.f32 %v1440, %v1829
    %v1978 = vsub.f32 %v1441, %v1826
    %v1979 = vsub.f32 %v1442, %v1827
    %v1980 = vsub.f32 %v1443, %v1828
    %v1981 = vsub.f32 %v1444, %v1829
    %v1982 = vsub.f32 %v1445, %v1826
    %v1983 = vsub.f32 %v1446, %v1827
    %v1984 = vsub.f32 %v1447, %v1828
    %v1985 = vsub.f32 %v1448, %v1829
    %v1986 = vsub.f32 %v1449, %v1826
    %v1987 = vsub.f32 %v1450, %v1827
    %v1988 = vsub.f32 %v1451, %v1828
    %v1989 = vsub.f32 %v1452, %v1829
    %v1990 = vsub.f32 %v1453, %v1826
    %v1991 = vsub.f32 %v1454, %v1827
    %v1992 = vsub.f32 %v1455, %v1828
    %v1993 = vsub.f32 %v1456, %v1829
    %v1994 = vsub.f32 %v1457, %v1826
    %v1995 = vsub.f32 %v1458, %v1827
    %v1996 = vsub.f32 %v1459, %v1828
    %v1997 = vsub.f32 %v1460, %v1829
    %v1998 = vsub.f32 %v1461, %v1826
    %v1999 = vsub.f32 %v1462, %v1827
    %v2000 = vsub.f32 %v1463, %v1828
    %v2001 = vsub.f32 %v1464, %v1829
    %v2002 = vsub.f32 %v1465, %v1826
    %v2003 = vsub.f32 %v1466, %v1827
    %v2004 = vsub.f32 %v1467, %v1828
    %v2005 = vsub.f32 %v1468, %v1829
    %v2006 = vsub.f32 %v1469, %v1826
    %v2007 = vsub.f32 %v1470, %v1827
    %v2008 = vsub.f32 %v1471, %v1828
    %v2009 = vsub.f32 %v1472, %v1829
    %v2010 = vsub.f32 %v1473, %v1826
    %v2011 = vsub.f32 %v1474, %v1827
    %v2012 = vsub.f32 %v1475, %v1828
    %v2013 = vsub.f32 %v1476, %v1829
    %v2014 = vsub.f32 %v1477, %v1826
    %v2015 = vsub.f32 %v1478, %v1827
    %v2016 = vsub.f32 %v1479, %v1828
    %v2017 = vsub.f32 %v1480, %v1829
    %v2018 = vsub.f32 %v1481, %v1826
    %v2019 = vsub.f32 %v1482, %v1827
    %v2020 = vsub.f32 %v1483, %v1828
    %v2021 = vsub.f32 %v1484, %v1829
    %v2022 = vsub.f32 %v1485, %v1826
    %v2023 = vsub.f32 %v1486, %v1827
    %v2024 = vsub.f32 %v1487, %v1828
    %v2025 = vsub.f32 %v1488, %v1829
    %v2026 = vsub.f32 %v1489, %v1826
    %v2027 = vsub.f32 %v1490, %v1827
    %v2028 = vsub.f32 %v1491, %v1828
    %v2029 = vsub.f32 %v1492, %v1829
    %v2030 = vsub.f32 %v1493, %v1826
    %v2031 = vsub.f32 %v1494, %v1827
    %v2032 = vsub.f32 %v1495, %v1828
    %v2033 = vsub.f32 %v1496, %v1829
    %v2034 = vsub.f32 %v1497, %v1826
    %v2035 = vsub.f32 %v1498, %v1827
    %v2036 = vsub.f32 %v1499, %v1828
    %v2037 = vsub.f32 %v1500, %v1829
    %v2038 = vsub.f32 %v1501, %v1826
    %v2039 = vsub.f32 %v1502, %v1827
    %v2040 = vsub.f32 %v1503, %v1828
    %v2041 = vsub.f32 %v1504, %v1829
    %v2042 = vsub.f32 %v1505, %v1826
    %v2043 = vsub.f32 %v1506, %v1827
    %v2044 = vsub.f32 %v1507, %v1828
    %v2045 = vsub.f32 %v1508, %v1829
    %v2046 = vsub.f32 %v1509, %v1826
    %v2047 = vsub.f32 %v1510, %v1827
    %v2048 = vsub.f32 %v1511, %v1828
    %v2049 = vsub.f32 %v1512, %v1829
    %v2050 = vsub.f32 %v1513, %v1826
    %v2051 = vsub.f32 %v1514, %v1827
    %v2052 = vsub.f32 %v1515, %v1828
    %v2053 = vsub.f32 %v1516, %v1829
    %v2054 = vsub.f32 %v1517, %v1826
    %v2055 = vsub.f32 %v1518, %v1827
    %v2056 = vsub.f32 %v1519, %v1828
    %v2057 = vsub.f32 %v1520, %v1829
    %v2058 = vsub.f32 %v1521, %v1826
    %v2059 = vsub.f32 %v1522, %v1827
    %v2060 = vsub.f32 %v1523, %v1828
    %v2061 = vsub.f32 %v1524, %v1829
    %v2062 = vsub.f32 %v1525, %v1826
    %v2063 = vsub.f32 %v1526, %v1827
    %v2064 = vsub.f32 %v1527, %v1828
    %v2065 = vsub.f32 %v1528, %v1829
    %v2066 = vsub.f32 %v1529, %v1826
    %v2067 = vsub.f32 %v1530, %v1827
    %v2068 = vsub.f32 %v1531, %v1828
    %v2069 = vsub.f32 %v1532, %v1829
    %v2070 = vsub.f32 %v1533, %v1826
    %v2071 = vsub.f32 %v1534, %v1827
    %v2072 = vsub.f32 %v1535, %v1828
    %v2073 = vsub.f32 %v1536, %v1829
    %v2074 = vsub.f32 %v1537, %v1826
    %v2075 = vsub.f32 %v1538, %v1827
    %v2076 = vsub.f32 %v1539, %v1828
    %v2077 = vsub.f32 %v1540, %v1829
    %v2078 = vsub.f32 %v1541, %v1826
    %v2079 = vsub.f32 %v1542, %v1827
    %v2080 = vsub.f32 %v1543, %v1828
    %v2081 = vsub.f32 %v1544, %v1829
    %v2082 = vsub.f32 %v1545, %v1826
    %v2083 = vsub.f32 %v1546, %v1827
    %v2084 = vsub.f32 %v1547, %v1828
    %v2085 = vsub.f32 %v1548, %v1829
    %v2086 = vmul.f32 %v1830, %v1830
    %v2087 = vmul.f32 %v1831, %v1831
    %v2088 = vmul.f32 %v1832, %v1832
    %v2089 = vmul.f32 %v1833, %v1833
    %v2090 = vmul.f32 %v1834, %v1834
    %v2091 = vmul.f32 %v1835, %v1835
    %v2092 = vmul.f32 %v1836, %v1836
    %v2093 = vmul.f32 %v1837, %v1837
    %v2094 = vmul.f32 %v1838, %v1838
    %v2095 = vmul.f32 %v1839, %v1839
    %v2096 = vmul.f32 %v1840, %v1840
    %v2097 = vmul.f32 %v1841, %v1841
    %v2098 = vmul.f32 %v1842, %v1842
    %v2099 = vmul.f32 %v1843, %v1843
    %v2100 = vmul.f32 %v1844, %v1844
    %v2101 = vmul.f32 %v1845, %v1845
    %v2102 = vmul.f32 %v1846, %v1846
    %v2103 = vmul.f32 %v1847, %v1847
    %v2104 = vmul.f32 %v1848, %v1848
    %v2105 = vmul.f32 %v1849, %v1849
    %v2106 = vmul.f32 %v1850, %v1850
    %v2107 = vmul.f32 %v1851, %v1851
    %v2108 = vmul.f32 %v1852, %v1852
    %v2109 = vmul.f32 %v1853, %v1853
    %v2110 = vmul.f32 %v1854, %v1854
    %v2111 = vmul.f32 %v1855, %v1855
    %v2112 = vmul.f32 %v1856, %v1856
    %v2113 = vmul.f32 %v1857, %v1857
    %v2114 = vmul.f32 %v1858, %v1858
    %v2115 = vmul.f32 %v1859, %v1859
    %v2116 = vmul.f32 %v1860, %v1860
    %v2117 = vmul.f32 %v1861, %v1861
    %v2118 = vmul.f32 %v1862, %v1862
    %v2119 = vmul.f32 %v1863, %v1863
    %v2120 = vmul.f32 %v1864, %v1864
    %v2121 = vmul.f32 %v1865, %v1865
    %v2122 = vmul.f32 %v1866, %v1866
    %v2123 = vmul.f32 %v1867, %v1867
    %v2124 = vmul.f32 %v1868, %v1868
    %v2125 = vmul.f32 %v1869, %v1869
    %v2126 = vmul.f32 %v1870, %v1870
    %v2127 = vmul.f32 %v1871, %v1871
    %v2128 = vmul.f32 %v1872, %v1872
    %v2129 = vmul.f32 %v1873, %v1873
    %v2130 = vmul.f32 %v1874, %v1874
    %v2131 = vmul.f32 %v1875, %v1875
    %v2132 = vmul.f32 %v1876, %v1876
    %v2133 = vmul.f32 %v1877, %v1877
    %v2134 = vmul.f32 %v1878, %v1878
    %v2135 = vmul.f32 %v1879, %v1879
    %v2136 = vmul.f32 %v1880, %v1880
    %v2137 = vmul.f32 %v1881, %v1881
    %v2138 = vmul.f32 %v1882, %v1882
    %v2139 = vmul.f32 %v1883, %v1883
    %v2140 = vmul.f32 %v1884, %v1884
    %v2141 = vmul.f32 %v1885, %v1885
    %v2142 = vmul.f32 %v1886, %v1886
    %v2143 = vmul.f32 %v1887, %v1887
    %v2144 = vmul.f32 %v1888, %v1888
    %v2145 = vmul.f32 %v1889, %v1889
    %v2146 = vmul.f32 %v1890, %v1890
    %v2147 = vmul.f32 %v1891, %v1891
    %v2148 = vmul.f32 %v1892, %v1892
    %v2149 = vmul.f32 %v1893, %v1893
    %v2150 = vmul.f32 %v1894, %v1894
    %v2151 = vmul.f32 %v1895, %v1895
    %v2152 = vmul.f32 %v1896, %v1896
    %v2153 = vmul.f32 %v1897, %v1897
    %v2154 = vmul.f32 %v1898, %v1898
    %v2155 = vmul.f32 %v1899, %v1899
    %v2156 = vmul.f32 %v1900, %v1900
    %v2157 = vmul.f32 %v1901, %v1901
    %v2158 = vmul.f32 %v1902, %v1902
    %v2159 = vmul.f32 %v1903, %v1903
    %v2160 = vmul.f32 %v1904, %v1904
    %v2161 = vmul.f32 %v1905, %v1905
    %v2162 = vmul.f32 %v1906, %v1906
    %v2163 = vmul.f32 %v1907, %v1907
    %v2164 = vmul.f32 %v1908, %v1908
    %v2165 = vmul.f32 %v1909, %v1909
    %v2166 = vmul.f32 %v1910, %v1910
    %v2167 = vmul.f32 %v1911, %v1911
    %v2168 = vmul.f32 %v1912, %v1912
    %v2169 = vmul.f32 %v1913, %v1913
    %v2170 = vmul.f32 %v1914, %v1914
    %v2171 = vmul.f32 %v1915, %v1915
    %v2172 = vmul.f32 %v1916, %v1916
    %v2173 = vmul.f32 %v1917, %v1917
    %v2174 = vmul.f32 %v1918, %v1918
    %v2175 = vmul.f32 %v1919, %v1919
    %v2176 = vmul.f32 %v1920, %v1920
    %v2177 = vmul.f32 %v1921, %v1921
    %v2178 = vmul.f32 %v1922, %v1922
    %v2179 = vmul.f32 %v1923, %v1923
    %v2180 = vmul.f32 %v1924, %v1924
    %v2181 = vmul.f32 %v1925, %v1925
    %v2182 = vmul.f32 %v1926, %v1926
    %v2183 = vmul.f32 %v1927, %v1927
    %v2184 = vmul.f32 %v1928, %v1928
    %v2185 = vmul.f32 %v1929, %v1929
    %v2186 = vmul.f32 %v1930, %v1930
    %v2187 = vmul.f32 %v1931, %v1931
    %v2188 = vmul.f32 %v1932, %v1932
    %v2189 = vmul.f32 %v1933, %v1933
    %v2190 = vmul.f32 %v1934, %v1934
    %v2191 = vmul.f32 %v1935, %v1935
    %v2192 = vmul.f32 %v1936, %v1936
    %v2193 = vmul.f32 %v1937, %v1937
    %v2194 = vmul.f32 %v1938, %v1938
    %v2195 = vmul.f32 %v1939, %v1939
    %v2196 = vmul.f32 %v1940, %v1940
    %v2197 = vmul.f32 %v1941, %v1941
    %v2198 = vmul.f32 %v1942, %v1942
    %v2199 = vmul.f32 %v1943, %v1943
    %v2200 = vmul.f32 %v1944, %v1944
    %v2201 = vmul.f32 %v1945, %v1945
    %v2202 = vmul.f32 %v1946, %v1946
    %v2203 = vmul.f32 %v1947, %v1947
    %v2204 = vmul.f32 %v1948, %v1948
    %v2205 = vmul.f32 %v1949, %v1949
    %v2206 = vmul.f32 %v1950, %v1950
    %v2207 = vmul.f32 %v1951, %v1951
    %v2208 = vmul.f32 %v1952, %v1952
    %v2209 = vmul.f32 %v1953, %v1953
    %v2210 = vmul.f32 %v1954, %v1954
    %v2211 = vmul.f32 %v1955, %v1955
    %v2212 = vmul.f32 %v1956, %v1956
    %v2213 = vmul.f32 %v1957, %v1957
    %v2214 = vmul.f32 %v1958, %v1958
    %v2215 = vmul.f32 %v1959, %v1959
    %v2216 = vmul.f32 %v1960, %v1960
    %v2217 = vmul.f32 %v1961, %v1961
    %v2218 = vmul.f32 %v1962, %v1962
    %v2219 = vmul.f32 %v1963, %v1963
    %v2220 = vmul.f32 %v1964, %v1964
    %v2221 = vmul.f32 %v1965, %v1965
    %v2222 = vmul.f32 %v1966, %v1966
    %v2223 = vmul.f32 %v1967, %v1967
    %v2224 = vmul.f32 %v1968, %v1968
    %v2225 = vmul.f32 %v1969, %v1969
    %v2226 = vmul.f32 %v1970, %v1970
    %v2227 = vmul.f32 %v1971, %v1971
    %v2228 = vmul.f32 %v1972, %v1972
    %v2229 = vmul.f32 %v1973, %v1973
    %v2230 = vmul.f32 %v1974, %v1974
    %v2231 = vmul.f32 %v1975, %v1975
    %v2232 = vmul.f32 %v1976, %v1976
    %v2233 = vmul.f32 %v1977, %v1977
    %v2234 = vmul.f32 %v1978, %v1978
    %v2235 = vmul.f32 %v1979, %v1979
    %v2236 = vmul.f32 %v1980, %v1980
    %v2237 = vmul.f32 %v1981, %v1981
    %v2238 = vmul.f32 %v1982, %v1982
    %v2239 = vmul.f32 %v1983, %v1983
    %v2240 = vmul.f32 %v1984, %v1984
    %v2241 = vmul.f32 %v1985, %v1985
    %v2242 = vmul.f32 %v1986, %v1986
    %v2243 = vmul.f32 %v1987, %v1987
    %v2244 = vmul.f32 %v1988, %v1988
    %v2245 = vmul.f32 %v1989, %v1989
    %v2246 = vmul.f32 %v1990, %v1990
    %v2247 = vmul.f32 %v1991, %v1991
    %v2248 = vmul.f32 %v1992, %v1992
    %v2249 = vmul.f32 %v1993, %v1993
    %v2250 = vmul.f32 %v1994, %v1994
    %v2251 = vmul.f32 %v1995, %v1995
    %v2252 = vmul.f32 %v1996, %v1996
    %v2253 = vmul.f32 %v1997, %v1997
    %v2254 = vmul.f32 %v1998, %v1998
    %v2255 = vmul.f32 %v1999, %v1999
    %v2256 = vmul.f32 %v2000, %v2000
    %v2257 = vmul.f32 %v2001, %v2001
    %v2258 = vmul.f32 %v2002, %v2002
    %v2259 = vmul.f32 %v2003, %v2003
    %v2260 = vmul.f32 %v2004, %v2004
    %v2261 = vmul.f32 %v2005, %v2005
    %v2262 = vmul.f32 %v2006, %v2006
    %v2263 = vmul.f32 %v2007, %v2007
    %v2264 = vmul.f32 %v2008, %v2008
    %v2265 = vmul.f32 %v2009, %v2009
    %v2266 = vmul.f32 %v2010, %v2010
    %v2267 = vmul.f32 %v2011, %v2011
    %v2268 = vmul.f32 %v2012, %v2012
    %v2269 = vmul.f32 %v2013, %v2013
    %v2270 = vmul.f32 %v2014, %v2014
    %v2271 = vmul.f32 %v2015, %v2015
    %v2272 = vmul.f32 %v2016, %v2016
    %v2273 = vmul.f32 %v2017, %v2017
    %v2274 = vmul.f32 %v2018, %v2018
    %v2275 = vmul.f32 %v2019, %v2019
    %v2276 = vmul.f32 %v2020, %v2020
    %v2277 = vmul.f32 %v2021, %v2021
    %v2278 = vmul.f32 %v2022, %v2022
    %v2279 = vmul.f32 %v2023, %v2023
    %v2280 = vmul.f32 %v2024, %v2024
    %v2281 = vmul.f32 %v2025, %v2025
    %v2282 = vmul.f32 %v2026, %v2026
    %v2283 = vmul.f32 %v2027, %v2027
    %v2284 = vmul.f32 %v2028, %v2028
    %v2285 = vmul.f32 %v2029, %v2029
    %v2286 = vmul.f32 %v2030, %v2030
    %v2287 = vmul.f32 %v2031, %v2031
    %v2288 = vmul.f32 %v2032, %v2032
    %v2289 = vmul.f32 %v2033, %v2033
    %v2290 = vmul.f32 %v2034, %v2034
    %v2291 = vmul.f32 %v2035, %v2035
    %v2292 = vmul.f32 %v2036, %v2036
    %v2293 = vmul.f32 %v2037, %v2037
    %v2294 = vmul.f32 %v2038, %v2038
    %v2295 = vmul.f32 %v2039, %v2039
    %v2296 = vmul.f32 %v2040, %v2040
    %v2297 = vmul.f32 %v2041, %v2041
    %v2298 = vmul.f32 %v2042, %v2042
    %v2299 = vmul.f32 %v2043, %v2043
    %v2300 = vmul.f32 %v2044, %v2044
    %v2301 = vmul.f32 %v2045, %v2045
    %v2302 = vmul.f32 %v2046, %v2046
    %v2303 = vmul.f32 %v2047, %v2047
    %v2304 = vmul.f32 %v2048, %v2048
    %v2305 = vmul.f32 %v2049, %v2049
    %v2306 = vmul.f32 %v2050, %v2050
    %v2307 = vmul.f32 %v2051, %v2051
    %v2308 = vmul.f32 %v2052, %v2052
    %v2309 = vmul.f32 %v2053, %v2053
    %v2310 = vmul.f32 %v2054, %v2054
    %v2311 = vmul.f32 %v2055, %v2055
    %v2312 = vmul.f32 %v2056, %v2056
    %v2313 = vmul.f32 %v2057, %v2057
    %v2314 = vmul.f32 %v2058, %v2058
    %v2315 = vmul.f32 %v2059, %v2059
    %v2316 = vmul.f32 %v2060, %v2060
    %v2317 = vmul.f32 %v2061, %v2061
    %v2318 = vmul.f32 %v2062, %v2062
    %v2319 = vmul.f32 %v2063, %v2063
    %v2320 = vmul.f32 %v2064, %v2064
    %v2321 = vmul.f32 %v2065, %v2065
    %v2322 = vmul.f32 %v2066, %v2066
    %v2323 = vmul.f32 %v2067, %v2067
    %v2324 = vmul.f32 %v2068, %v2068
    %v2325 = vmul.f32 %v2069, %v2069
    %v2326 = vmul.f32 %v2070, %v2070
    %v2327 = vmul.f32 %v2071, %v2071
    %v2328 = vmul.f32 %v2072, %v2072
    %v2329 = vmul.f32 %v2073, %v2073
    %v2330 = vmul.f32 %v2074, %v2074
    %v2331 = vmul.f32 %v2075, %v2075
    %v2332 = vmul.f32 %v2076, %v2076
    %v2333 = vmul.f32 %v2077, %v2077
    %v2334 = vmul.f32 %v2078, %v2078
    %v2335 = vmul.f32 %v2079, %v2079
    %v2336 = vmul.f32 %v2080, %v2080
    %v2337 = vmul.f32 %v2081, %v2081
    %v2338 = vmul.f32 %v2082, %v2082
    %v2339 = vmul.f32 %v2083, %v2083
    %v2340 = vmul.f32 %v2084, %v2084
    %v2341 = vmul.f32 %v2085, %v2085
    %v2342 = vadd.f32 %v2086, %v2090
    %v2343 = vadd.f32 %v2342, %v2094
    %v2344 = vadd.f32 %v2343, %v2098
    %v2345 = vadd.f32 %v2344, %v2102
    %v2346 = vadd.f32 %v2345, %v2106
    %v2347 = vadd.f32 %v2346, %v2110
    %v2348 = vadd.f32 %v2347, %v2114
    %v2349 = vadd.f32 %v2348, %v2118
    %v2350 = vadd.f32 %v2349, %v2122
    %v2351 = vadd.f32 %v2350, %v2126
    %v2352 = vadd.f32 %v2351, %v2130
    %v2353 = vadd.f32 %v2352, %v2134
    %v2354 = vadd.f32 %v2353, %v2138
    %v2355 = vadd.f32 %v2354, %v2142
    %v2356 = vadd.f32 %v2355, %v2146
    %v2357 = vadd.f32 %v2356, %v2150
    %v2358 = vadd.f32 %v2357, %v2154
    %v2359 = vadd.f32 %v2358, %v2158
    %v2360 = vadd.f32 %v2359, %v2162
    %v2361 = vadd.f32 %v2360, %v2166
    %v2362 = vadd.f32 %v2361, %v2170
    %v2363 = vadd.f32 %v2362, %v2174
    %v2364 = vadd.f32 %v2363, %v2178
    %v2365 = vadd.f32 %v2364, %v2182
    %v2366 = vadd.f32 %v2365, %v2186
    %v2367 = vadd.f32 %v2366, %v2190
    %v2368 = vadd.f32 %v2367, %v2194
    %v2369 = vadd.f32 %v2368, %v2198
    %v2370 = vadd.f32 %v2369, %v2202
    %v2371 = vadd.f32 %v2370, %v2206
    %v2372 = vadd.f32 %v2371, %v2210
    %v2373 = vadd.f32 %v2372, %v2214
    %v2374 = vadd.f32 %v2373, %v2218
    %v2375 = vadd.f32 %v2374, %v2222
    %v2376 = vadd.f32 %v2375, %v2226
    %v2377 = vadd.f32 %v2376, %v2230
    %v2378 = vadd.f32 %v2377, %v2234
    %v2379 = vadd.f32 %v2378, %v2238
    %v2380 = vadd.f32 %v2379, %v2242
    %v2381 = vadd.f32 %v2380, %v2246
    %v2382 = vadd.f32 %v2381, %v2250
    %v2383 = vadd.f32 %v2382, %v2254
    %v2384 = vadd.f32 %v2383, %v2258
    %v2385 = vadd.f32 %v2384, %v2262
    %v2386 = vadd.f32 %v2385, %v2266
    %v2387 = vadd.f32 %v2386, %v2270
    %v2388 = vadd.f32 %v2387, %v2274
    %v2389 = vadd.f32 %v2388, %v2278
    %v2390 = vadd.f32 %v2389, %v2282
    %v2391 = vadd.f32 %v2390, %v2286
    %v2392 = vadd.f32 %v2391, %v2290
    %v2393 = vadd.f32 %v2392, %v2294
    %v2394 = vadd.f32 %v2393, %v2298
    %v2395 = vadd.f32 %v2394, %v2302
    %v2396 = vadd.f32 %v2395, %v2306
    %v2397 = vadd.f32 %v2396, %v2310
    %v2398 = vadd.f32 %v2397, %v2314
    %v2399 = vadd.f32 %v2398, %v2318
    %v2400 = vadd.f32 %v2399, %v2322
    %v2401 = vadd.f32 %v2400, %v2326
    %v2402 = vadd.f32 %v2401, %v2330
    %v2403 = vadd.f32 %v2402, %v2334
    %v2404 = vadd.f32 %v2403, %v2338
    %v2405 = vrot.slane %v2404, 4
    %v2406 = vadd.f32 %v2404, %v2405
    %v2407 = vrot.slane %v2406, 2
    %v2408 = vadd.f32 %v2406, %v2407
    %v2409 = vrot.slane %v2408, 1
    %v2410 = vadd.f32 %v2408, %v2409
    %v2411 = vadd.f32 %v2087, %v2091
    %v2412 = vadd.f32 %v2411, %v2095
    %v2413 = vadd.f32 %v2412, %v2099
    %v2414 = vadd.f32 %v2413, %v2103
    %v2415 = vadd.f32 %v2414, %v2107
    %v2416 = vadd.f32 %v2415, %v2111
    %v2417 = vadd.f32 %v2416, %v2115
    %v2418 = vadd.f32 %v2417, %v2119
    %v2419 = vadd.f32 %v2418, %v2123
    %v2420 = vadd.f32 %v2419, %v2127
    %v2421 = vadd.f32 %v2420, %v2131
    %v2422 = vadd.f32 %v2421, %v2135
    %v2423 = vadd.f32 %v2422, %v2139
    %v2424 = vadd.f32 %v2423, %v2143
    %v2425 = vadd.f32 %v2424, %v2147
    %v2426 = vadd.f32 %v2425, %v2151
    %v2427 = vadd.f32 %v2426, %v2155
    %v2428 = vadd.f32 %v2427, %v2159
    %v2429 = vadd.f32 %v2428, %v2163
    %v2430 = vadd.f32 %v2429, %v2167
    %v2431 = vadd.f32 %v2430, %v2171
    %v2432 = vadd.f32 %v2431, %v2175
    %v2433 = vadd.f32 %v2432, %v2179
    %v2434 = vadd.f32 %v2433, %v2183
    %v2435 = vadd.f32 %v2434, %v2187
    %v2436 = vadd.f32 %v2435, %v2191
    %v2437 = vadd.f32 %v2436, %v2195
    %v2438 = vadd.f32 %v2437, %v2199
    %v2439 = vadd.f32 %v2438, %v2203
    %v2440 = vadd.f32 %v2439, %v2207
    %v2441 = vadd.f32 %v2440, %v2211
    %v2442 = vadd.f32 %v2441, %v2215
    %v2443 = vadd.f32 %v2442, %v2219
    %v2444 = vadd.f32 %v2443, %v2223
    %v2445 = vadd.f32 %v2444, %v2227
    %v2446 = vadd.f32 %v2445, %v2231
    %v2447 = vadd.f32 %v2446, %v2235
    %v2448 = vadd.f32 %v2447, %v2239
    %v2449 = vadd.f32 %v2448, %v2243
    %v2450 = vadd.f32 %v2449, %v2247
    %v2451 = vadd.f32 %v2450, %v2251
    %v2452 = vadd.f32 %v2451, %v2255
    %v2453 = vadd.f32 %v2452, %v2259
    %v2454 = vadd.f32 %v2453, %v2263
    %v2455 = vadd.f32 %v2454, %v2267
    %v2456 = vadd.f32 %v2455, %v2271
    %v2457 = vadd.f32 %v2456, %v2275
    %v2458 = vadd.f32 %v2457, %v2279
    %v2459 = vadd.f32 %v2458, %v2283
    %v2460 = vadd.f32 %v2459, %v2287
    %v2461 = vadd.f32 %v2460, %v2291
    %v2462 = vadd.f32 %v2461, %v2295
    %v2463 = vadd.f32 %v2462, %v2299
    %v2464 = vadd.f32 %v2463, %v2303
    %v2465 = vadd.f32 %v2464, %v2307
    %v2466 = vadd.f32 %v2465, %v2311
    %v2467 = vadd.f32 %v2466, %v2315
    %v2468 = vadd.f32 %v2467, %v2319
    %v2469 = vadd.f32 %v2468, %v2323
    %v2470 = vadd.f32 %v2469, %v2327
    %v2471 = vadd.f32 %v2470, %v2331
    %v2472 = vadd.f32 %v2471, %v2335
    %v2473 = vadd.f32 %v2472, %v2339
    %v2474 = vrot.slane %v2473, 4
    %v2475 = vadd.f32 %v2473, %v2474
    %v2476 = vrot.slane %v2475, 2
    %v2477 = vadd.f32 %v2475, %v2476
    %v2478 = vrot.slane %v2477, 1
    %v2479 = vadd.f32 %v2477, %v2478
    %v2480 = vadd.f32 %v2088, %v2092
    %v2481 = vadd.f32 %v2480, %v2096
    %v2482 = vadd.f32 %v2481, %v2100
    %v2483 = vadd.f32 %v2482, %v2104
    %v2484 = vadd.f32 %v2483, %v2108
    %v2485 = vadd.f32 %v2484, %v2112
    %v2486 = vadd.f32 %v2485, %v2116
    %v2487 = vadd.f32 %v2486, %v2120
    %v2488 = vadd.f32 %v2487, %v2124
    %v2489 = vadd.f32 %v2488, %v2128
    %v2490 = vadd.f32 %v2489, %v2132
    %v2491 = vadd.f32 %v2490, %v2136
    %v2492 = vadd.f32 %v2491, %v2140
    %v2493 = vadd.f32 %v2492, %v2144
    %v2494 = vadd.f32 %v2493, %v2148
    %v2495 = vadd.f32 %v2494, %v2152
    %v2496 = vadd.f32 %v2495, %v2156
    %v2497 = vadd.f32 %v2496, %v2160
    %v2498 = vadd.f32 %v2497, %v2164
    %v2499 = vadd.f32 %v2498, %v2168
    %v2500 = vadd.f32 %v2499, %v2172
    %v2501 = vadd.f32 %v2500, %v2176
    %v2502 = vadd.f32 %v2501, %v2180
    %v2503 = vadd.f32 %v2502, %v2184
    %v2504 = vadd.f32 %v2503, %v2188
    %v2505 = vadd.f32 %v2504, %v2192
    %v2506 = vadd.f32 %v2505, %v2196
    %v2507 = vadd.f32 %v2506, %v2200
    %v2508 = vadd.f32 %v2507, %v2204
    %v2509 = vadd.f32 %v2508, %v2208
    %v2510 = vadd.f32 %v2509, %v2212
    %v2511 = vadd.f32 %v2510, %v2216
    %v2512 = vadd.f32 %v2511, %v2220
    %v2513 = vadd.f32 %v2512, %v2224
    %v2514 = vadd.f32 %v2513, %v2228
    %v2515 = vadd.f32 %v2514, %v2232
    %v2516 = vadd.f32 %v2515, %v2236
    %v2517 = vadd.f32 %v2516, %v2240
    %v2518 = vadd.f32 %v2517, %v2244
    %v2519 = vadd.f32 %v2518, %v2248
    %v2520 = vadd.f32 %v2519, %v2252
    %v2521 = vadd.f32 %v2520, %v2256
    %v2522 = vadd.f32 %v2521, %v2260
    %v2523 = vadd.f32 %v2522, %v2264
    %v2524 = vadd.f32 %v2523, %v2268
    %v2525 = vadd.f32 %v2524, %v2272
    %v2526 = vadd.f32 %v2525, %v2276
    %v2527 = vadd.f32 %v2526, %v2280
    %v2528 = vadd.f32 %v2527, %v2284
    %v2529 = vadd.f32 %v2528, %v2288
    %v2530 = vadd.f32 %v2529, %v2292
    %v2531 = vadd.f32 %v2530, %v2296
    %v2532 = vadd.f32 %v2531, %v2300
    %v2533 = vadd.f32 %v2532, %v2304
    %v2534 = vadd.f32 %v2533, %v2308
    %v2535 = vadd.f32 %v2534, %v2312
    %v2536 = vadd.f32 %v2535, %v2316
    %v2537 = vadd.f32 %v2536, %v2320
    %v2538 = vadd.f32 %v2537, %v2324
    %v2539 = vadd.f32 %v2538, %v2328
    %v2540 = vadd.f32 %v2539, %v2332
    %v2541 = vadd.f32 %v2540, %v2336
    %v2542 = vadd.f32 %v2541, %v2340
    %v2543 = vrot.slane %v2542, 4
    %v2544 = vadd.f32 %v2542, %v2543
    %v2545 = vrot.slane %v2544, 2
    %v2546 = vadd.f32 %v2544, %v2545
    %v2547 = vrot.slane %v2546, 1
    %v2548 = vadd.f32 %v2546, %v2547
    %v2549 = vadd.f32 %v2089, %v2093
    %v2550 = vadd.f32 %v2549, %v2097
    %v2551 = vadd.f32 %v2550, %v2101
    %v2552 = vadd.f32 %v2551, %v2105
    %v2553 = vadd.f32 %v2552, %v2109
    %v2554 = vadd.f32 %v2553, %v2113
    %v2555 = vadd.f32 %v2554, %v2117
    %v2556 = vadd.f32 %v2555, %v2121
    %v2557 = vadd.f32 %v2556, %v2125
    %v2558 = vadd.f32 %v2557, %v2129
    %v2559 = vadd.f32 %v2558, %v2133
    %v2560 = vadd.f32 %v2559, %v2137
    %v2561 = vadd.f32 %v2560, %v2141
    %v2562 = vadd.f32 %v2561, %v2145
    %v2563 = vadd.f32 %v2562, %v2149
    %v2564 = vadd.f32 %v2563, %v2153
    %v2565 = vadd.f32 %v2564, %v2157
    %v2566 = vadd.f32 %v2565, %v2161
    %v2567 = vadd.f32 %v2566, %v2165
    %v2568 = vadd.f32 %v2567, %v2169
    %v2569 = vadd.f32 %v2568, %v2173
    %v2570 = vadd.f32 %v2569, %v2177
    %v2571 = vadd.f32 %v2570, %v2181
    %v2572 = vadd.f32 %v2571, %v2185
    %v2573 = vadd.f32 %v2572, %v2189
    %v2574 = vadd.f32 %v2573, %v2193
    %v2575 = vadd.f32 %v2574, %v2197
    %v2576 = vadd.f32 %v2575, %v2201
    %v2577 = vadd.f32 %v2576, %v2205
    %v2578 = vadd.f32 %v2577, %v2209
    %v2579 = vadd.f32 %v2578, %v2213
    %v2580 = vadd.f32 %v2579, %v2217
    %v2581 = vadd.f32 %v2580, %v2221
    %v2582 = vadd.f32 %v2581, %v2225
    %v2583 = vadd.f32 %v2582, %v2229
    %v2584 = vadd.f32 %v2583, %v2233
    %v2585 = vadd.f32 %v2584, %v2237
    %v2586 = vadd.f32 %v2585, %v2241
    %v2587 = vadd.f32 %v2586, %v2245
    %v2588 = vadd.f32 %v2587, %v2249
    %v2589 = vadd.f32 %v2588, %v2253
    %v2590 = vadd.f32 %v2589, %v2257
    %v2591 = vadd.f32 %v2590, %v2261
    %v2592 = vadd.f32 %v2591, %v2265
    %v2593 = vadd.f32 %v2592, %v2269
    %v2594 = vadd.f32 %v2593, %v2273
    %v2595 = vadd.f32 %v2594, %v2277
    %v2596 = vadd.f32 %v2595, %v2281
    %v2597 = vadd.f32 %v2596, %v2285
    %v2598 = vadd.f32 %v2597, %v2289
    %v2599 = vadd.f32 %v2598, %v2293
    %v2600 = vadd.f32 %v2599, %v2297
    %v2601 = vadd.f32 %v2600, %v2301
    %v2602 = vadd.f32 %v2601, %v2305
    %v2603 = vadd.f32 %v2602, %v2309
    %v2604 = vadd.f32 %v2603, %v2313
    %v2605 = vadd.f32 %v2604, %v2317
    %v2606 = vadd.f32 %v2605, %v2321
    %v2607 = vadd.f32 %v2606, %v2325
    %v2608 = vadd.f32 %v2607, %v2329
    %v2609 = vadd.f32 %v2608, %v2333
    %v2610 = vadd.f32 %v2609, %v2337
    %v2611 = vadd.f32 %v2610, %v2341
    %v2612 = vrot.slane %v2611, 4
    %v2613 = vadd.f32 %v2611, %v2612
    %v2614 = vrot.slane %v2613, 2
    %v2615 = vadd.f32 %v2613, %v2614
    %v2616 = vrot.slane %v2615, 1
    %v2617 = vadd.f32 %v2615, %v2616
    %v2618 = vmul.f32 %v2410, %v1825
    %v2619 = vmul.f32 %v2479, %v1825
    %v2620 = vmul.f32 %v2548, %v1825
    %v2621 = vmul.f32 %v2617, %v1825
    %v2622 = vld [vmem:[%s3] sm:$0xf]
    %v2623 = vadd.f32 %v2618, 1e-05
    %v2624 = vadd.f32 %v2619, 1e-05
    %v2625 = vadd.f32 %v2620, 1e-05
    %v2626 = vadd.f32 %v2621, 1e-05
    %v2627 = vrsqrt.pop %v2623
    %v2628 = vrsqrt.pop %v2624
    %v2629 = vrsqrt.pop %v2625
    %v2630 = vrsqrt.pop %v2626
    %v2635 = vcombine.low %v2627, %v2628
    %v2636 = vcombine.low %v2629, %v2630
    %v2638 = vunpack.c.l.s4 1966171168
    %v2639 = vunpack.c.0.s8 %v2638
    %v2640 = vlaneseq
    %v2641 = vshrl.u32 %v2640, 7
    %v2642 = vsub.s32 %v2639, %v2641
    %v2643 = vrot.slane %v2635, %v2642
    %v2645 = vunpack.c.l.s4 1966171168
    %v2646 = vunpack.c.0.s8 %v2645
    %v2647 = vlaneseq
    %v2648 = vshrl.u32 %v2647, 7
    %v2649 = vsub.s32 %v2646, %v2648
    %v2650 = vrot.slane %v2636, %v2649
    %v2651 = vcombine.low %v2643, %v2650
    %v2653 = vunpack.c.l.s4 1966171168
    %v2654 = vunpack.c.0.s8 %v2653
    %v2655 = vlaneseq
    %v2656 = vshrl.u32 %v2655, 7
    %v2657 = vsub.s32 %v2654, %v2656
    %v2658 = vrot.slane %v2651, %v2657
    %v2660 = vmul.f32 %v2622, %v2658
    %v2662 = vlaneseq
    %v2663 = vshrl.u32 %v2662, 7
    %v2664 = vsub.s32 0, %v2663
    %v2665 = vrot.slane %v2660, %v2664
    %v2666 = vlaneseq
    %v2667 = vshrl.u32 %v2666, 7
    %v2668 = vsub.s32 1, %v2667
    %v2669 = vrot.slane %v2660, %v2668
    %v2670 = vlaneseq
    %v2671 = vshrl.u32 %v2670, 7
    %v2672 = vsub.s32 2, %v2671
    %v2673 = vrot.slane %v2660, %v2672
    %v2674 = vlaneseq
    %v2675 = vshrl.u32 %v2674, 7
    %v2676 = vsub.s32 3, %v2675
    %v2677 = vrot.slane %v2660, %v2676
    %v2682 = vmul.f32 %v1830, %v2665
    %v2683 = vmul.f32 %v1831, %v2669
    %v2684 = vmul.f32 %v1832, %v2673
    %v2685 = vmul.f32 %v1833, %v2677
    %v2686 = vmul.f32 %v1834, %v2665
    %v2687 = vmul.f32 %v1835, %v2669
    %v2688 = vmul.f32 %v1836, %v2673
    %v2689 = vmul.f32 %v1837, %v2677
    %v2690 = vmul.f32 %v1838, %v2665
    %v2691 = vmul.f32 %v1839, %v2669
    %v2692 = vmul.f32 %v1840, %v2673
    %v2693 = vmul.f32 %v1841, %v2677
    %v2694 = vmul.f32 %v1842, %v2665
    %v2695 = vmul.f32 %v1843, %v2669
    %v2696 = vmul.f32 %v1844, %v2673
    %v2697 = vmul.f32 %v1845, %v2677
    %v2698 = vmul.f32 %v1846, %v2665
    %v2699 = vmul.f32 %v1847, %v2669
    %v2700 = vmul.f32 %v1848, %v2673
    %v2701 = vmul.f32 %v1849, %v2677
    %v2702 = vmul.f32 %v1850, %v2665
    %v2703 = vmul.f32 %v1851, %v2669
    %v2704 = vmul.f32 %v1852, %v2673
    %v2705 = vmul.f32 %v1853, %v2677
    %v2706 = vmul.f32 %v1854, %v2665
    %v2707 = vmul.f32 %v1855, %v2669
    %v2708 = vmul.f32 %v1856, %v2673
    %v2709 = vmul.f32 %v1857, %v2677
    %v2710 = vmul.f32 %v1858, %v2665
    %v2711 = vmul.f32 %v1859, %v2669
    %v2712 = vmul.f32 %v1860, %v2673
    %v2713 = vmul.f32 %v1861, %v2677
    %v2714 = vmul.f32 %v1862, %v2665
    %v2715 = vmul.f32 %v1863, %v2669
    %v2716 = vmul.f32 %v1864, %v2673
    %v2717 = vmul.f32 %v1865, %v2677
    %v2718 = vmul.f32 %v1866, %v2665
    %v2719 = vmul.f32 %v1867, %v2669
    %v2720 = vmul.f32 %v1868, %v2673
    %v2721 = vmul.f32 %v1869, %v2677
    %v2722 = vmul.f32 %v1870, %v2665
    %v2723 = vmul.f32 %v1871, %v2669
    %v2724 = vmul.f32 %v1872, %v2673
    %v2725 = vmul.f32 %v1873, %v2677
    %v2726 = vmul.f32 %v1874, %v2665
    %v2727 = vmul.f32 %v1875, %v2669
    %v2728 = vmul.f32 %v1876, %v2673
    %v2729 = vmul.f32 %v1877, %v2677
    %v2730 = vmul.f32 %v1878, %v2665
    %v2731 = vmul.f32 %v1879, %v2669
    %v2732 = vmul.f32 %v1880, %v2673
    %v2733 = vmul.f32 %v1881, %v2677
    %v2734 = vmul.f32 %v1882, %v2665
    %v2735 = vmul.f32 %v1883, %v2669
    %v2736 = vmul.f32 %v1884, %v2673
    %v2737 = vmul.f32 %v1885, %v2677
    %v2738 = vmul.f32 %v1886, %v2665
    %v2739 = vmul.f32 %v1887, %v2669
    %v2740 = vmul.f32 %v1888, %v2673
    %v2741 = vmul.f32 %v1889, %v2677
    %v2742 = vmul.f32 %v1890, %v2665
    %v2743 = vmul.f32 %v1891, %v2669
    %v2744 = vmul.f32 %v1892, %v2673
    %v2745 = vmul.f32 %v1893, %v2677
    %v2746 = vmul.f32 %v1894, %v2665
    %v2747 = vmul.f32 %v1895, %v2669
    %v2748 = vmul.f32 %v1896, %v2673
    %v2749 = vmul.f32 %v1897, %v2677
    %v2750 = vmul.f32 %v1898, %v2665
    %v2751 = vmul.f32 %v1899, %v2669
    %v2752 = vmul.f32 %v1900, %v2673
    %v2753 = vmul.f32 %v1901, %v2677
    %v2754 = vmul.f32 %v1902, %v2665
    %v2755 = vmul.f32 %v1903, %v2669
    %v2756 = vmul.f32 %v1904, %v2673
    %v2757 = vmul.f32 %v1905, %v2677
    %v2758 = vmul.f32 %v1906, %v2665
    %v2759 = vmul.f32 %v1907, %v2669
    %v2760 = vmul.f32 %v1908, %v2673
    %v2761 = vmul.f32 %v1909, %v2677
    %v2762 = vmul.f32 %v1910, %v2665
    %v2763 = vmul.f32 %v1911, %v2669
    %v2764 = vmul.f32 %v1912, %v2673
    %v2765 = vmul.f32 %v1913, %v2677
    %v2766 = vmul.f32 %v1914, %v2665
    %v2767 = vmul.f32 %v1915, %v2669
    %v2768 = vmul.f32 %v1916, %v2673
    %v2769 = vmul.f32 %v1917, %v2677
    %v2770 = vmul.f32 %v1918, %v2665
    %v2771 = vmul.f32 %v1919, %v2669
    %v2772 = vmul.f32 %v1920, %v2673
    %v2773 = vmul.f32 %v1921, %v2677
    %v2774 = vmul.f32 %v1922, %v2665
    %v2775 = vmul.f32 %v1923, %v2669
    %v2776 = vmul.f32 %v1924, %v2673
    %v2777 = vmul.f32 %v1925, %v2677
    %v2778 = vmul.f32 %v1926, %v2665
    %v2779 = vmul.f32 %v1927, %v2669
    %v2780 = vmul.f32 %v1928, %v2673
    %v2781 = vmul.f32 %v1929, %v2677
    %v2782 = vmul.f32 %v1930, %v2665
    %v2783 = vmul.f32 %v1931, %v2669
    %v2784 = vmul.f32 %v1932, %v2673
    %v2785 = vmul.f32 %v1933, %v2677
    %v2786 = vmul.f32 %v1934, %v2665
    %v2787 = vmul.f32 %v1935, %v2669
    %v2788 = vmul.f32 %v1936, %v2673
    %v2789 = vmul.f32 %v1937, %v2677
    %v2790 = vmul.f32 %v1938, %v2665
    %v2791 = vmul.f32 %v1939, %v2669
    %v2792 = vmul.f32 %v1940, %v2673
    %v2793 = vmul.f32 %v1941, %v2677
    %v2794 = vmul.f32 %v1942, %v2665
    %v2795 = vmul.f32 %v1943, %v2669
    %v2796 = vmul.f32 %v1944, %v2673
    %v2797 = vmul.f32 %v1945, %v2677
    %v2798 = vmul.f32 %v1946, %v2665
    %v2799 = vmul.f32 %v1947, %v2669
    %v2800 = vmul.f32 %v1948, %v2673
    %v2801 = vmul.f32 %v1949, %v2677
    %v2802 = vmul.f32 %v1950, %v2665
    %v2803 = vmul.f32 %v1951, %v2669
    %v2804 = vmul.f32 %v1952, %v2673
    %v2805 = vmul.f32 %v1953, %v2677
    %v2806 = vmul.f32 %v1954, %v2665
    %v2807 = vmul.f32 %v1955, %v2669
    %v2808 = vmul.f32 %v1956, %v2673
    %v2809 = vmul.f32 %v1957, %v2677
    %v2810 = vmul.f32 %v1958, %v2665
    %v2811 = vmul.f32 %v1959, %v2669
    %v2812 = vmul.f32 %v1960, %v2673
    %v2813 = vmul.f32 %v1961, %v2677
    %v2814 = vmul.f32 %v1962, %v2665
    %v2815 = vmul.f32 %v1963, %v2669
    %v2816 = vmul.f32 %v1964, %v2673
    %v2817 = vmul.f32 %v1965, %v2677
    %v2818 = vmul.f32 %v1966, %v2665
    %v2819 = vmul.f32 %v1967, %v2669
    %v2820 = vmul.f32 %v1968, %v2673
    %v2821 = vmul.f32 %v1969, %v2677
    %v2822 = vmul.f32 %v1970, %v2665
    %v2823 = vmul.f32 %v1971, %v2669
    %v2824 = vmul.f32 %v1972, %v2673
    %v2825 = vmul.f32 %v1973, %v2677
    %v2826 = vmul.f32 %v1974, %v2665
    %v2827 = vmul.f32 %v1975, %v2669
    %v2828 = vmul.f32 %v1976, %v2673
    %v2829 = vmul.f32 %v1977, %v2677
    %v2830 = vmul.f32 %v1978, %v2665
    %v2831 = vmul.f32 %v1979, %v2669
    %v2832 = vmul.f32 %v1980, %v2673
    %v2833 = vmul.f32 %v1981, %v2677
    %v2834 = vmul.f32 %v1982, %v2665
    %v2835 = vmul.f32 %v1983, %v2669
    %v2836 = vmul.f32 %v1984, %v2673
    %v2837 = vmul.f32 %v1985, %v2677
    %v2838 = vmul.f32 %v1986, %v2665
    %v2839 = vmul.f32 %v1987, %v2669
    %v2840 = vmul.f32 %v1988, %v2673
    %v2841 = vmul.f32 %v1989, %v2677
    %v2842 = vmul.f32 %v1990, %v2665
    %v2843 = vmul.f32 %v1991, %v2669
    %v2844 = vmul.f32 %v1992, %v2673
    %v2845 = vmul.f32 %v1993, %v2677
    %v2846 = vmul.f32 %v1994, %v2665
    %v2847 = vmul.f32 %v1995, %v2669
    %v2848 = vmul.f32 %v1996, %v2673
    %v2849 = vmul.f32 %v1997, %v2677
    %v2850 = vmul.f32 %v1998, %v2665
    %v2851 = vmul.f32 %v1999, %v2669
    %v2852 = vmul.f32 %v2000, %v2673
    %v2853 = vmul.f32 %v2001, %v2677
    %v2854 = vmul.f32 %v2002, %v2665
    %v2855 = vmul.f32 %v2003, %v2669
    %v2856 = vmul.f32 %v2004, %v2673
    %v2857 = vmul.f32 %v2005, %v2677
    %v2858 = vmul.f32 %v2006, %v2665
    %v2859 = vmul.f32 %v2007, %v2669
    %v2860 = vmul.f32 %v2008, %v2673
    %v2861 = vmul.f32 %v2009, %v2677
    %v2862 = vmul.f32 %v2010, %v2665
    %v2863 = vmul.f32 %v2011, %v2669
    %v2864 = vmul.f32 %v2012, %v2673
    %v2865 = vmul.f32 %v2013, %v2677
    %v2866 = vmul.f32 %v2014, %v2665
    %v2867 = vmul.f32 %v2015, %v2669
    %v2868 = vmul.f32 %v2016, %v2673
    %v2869 = vmul.f32 %v2017, %v2677
    %v2870 = vmul.f32 %v2018, %v2665
    %v2871 = vmul.f32 %v2019, %v2669
    %v2872 = vmul.f32 %v2020, %v2673
    %v2873 = vmul.f32 %v2021, %v2677
    %v2874 = vmul.f32 %v2022, %v2665
    %v2875 = vmul.f32 %v2023, %v2669
    %v2876 = vmul.f32 %v2024, %v2673
    %v2877 = vmul.f32 %v2025, %v2677
    %v2878 = vmul.f32 %v2026, %v2665
    %v2879 = vmul.f32 %v2027, %v2669
    %v2880 = vmul.f32 %v2028, %v2673
    %v2881 = vmul.f32 %v2029, %v2677
    %v2882 = vmul.f32 %v2030, %v2665
    %v2883 = vmul.f32 %v2031, %v2669
    %v2884 = vmul.f32 %v2032, %v2673
    %v2885 = vmul.f32 %v2033, %v2677
    %v2886 = vmul.f32 %v2034, %v2665
    %v2887 = vmul.f32 %v2035, %v2669
    %v2888 = vmul.f32 %v2036, %v2673
    %v2889 = vmul.f32 %v2037, %v2677
    %v2890 = vmul.f32 %v2038, %v2665
    %v2891 = vmul.f32 %v2039, %v2669
    %v2892 = vmul.f32 %v2040, %v2673
    %v2893 = vmul.f32 %v2041, %v2677
    %v2894 = vmul.f32 %v2042, %v2665
    %v2895 = vmul.f32 %v2043, %v2669
    %v2896 = vmul.f32 %v2044, %v2673
    %v2897 = vmul.f32 %v2045, %v2677
    %v2898 = vmul.f32 %v2046, %v2665
    %v2899 = vmul.f32 %v2047, %v2669
    %v2900 = vmul.f32 %v2048, %v2673
    %v2901 = vmul.f32 %v2049, %v2677
    %v2902 = vmul.f32 %v2050, %v2665
    %v2903 = vmul.f32 %v2051, %v2669
    %v2904 = vmul.f32 %v2052, %v2673
    %v2905 = vmul.f32 %v2053, %v2677
    %v2906 = vmul.f32 %v2054, %v2665
    %v2907 = vmul.f32 %v2055, %v2669
    %v2908 = vmul.f32 %v2056, %v2673
    %v2909 = vmul.f32 %v2057, %v2677
    %v2910 = vmul.f32 %v2058, %v2665
    %v2911 = vmul.f32 %v2059, %v2669
    %v2912 = vmul.f32 %v2060, %v2673
    %v2913 = vmul.f32 %v2061, %v2677
    %v2914 = vmul.f32 %v2062, %v2665
    %v2915 = vmul.f32 %v2063, %v2669
    %v2916 = vmul.f32 %v2064, %v2673
    %v2917 = vmul.f32 %v2065, %v2677
    %v2918 = vmul.f32 %v2066, %v2665
    %v2919 = vmul.f32 %v2067, %v2669
    %v2920 = vmul.f32 %v2068, %v2673
    %v2921 = vmul.f32 %v2069, %v2677
    %v2922 = vmul.f32 %v2070, %v2665
    %v2923 = vmul.f32 %v2071, %v2669
    %v2924 = vmul.f32 %v2072, %v2673
    %v2925 = vmul.f32 %v2073, %v2677
    %v2926 = vmul.f32 %v2074, %v2665
    %v2927 = vmul.f32 %v2075, %v2669
    %v2928 = vmul.f32 %v2076, %v2673
    %v2929 = vmul.f32 %v2077, %v2677
    %v2930 = vmul.f32 %v2078, %v2665
    %v2931 = vmul.f32 %v2079, %v2669
    %v2932 = vmul.f32 %v2080, %v2673
    %v2933 = vmul.f32 %v2081, %v2677
    %v2934 = vmul.f32 %v2082, %v2665
    %v2935 = vmul.f32 %v2083, %v2669
    %v2936 = vmul.f32 %v2084, %v2673
    %v2937 = vmul.f32 %v2085, %v2677
    %v2938 = vld [vmem:[%s4] sm:$0xf]
    %v2940 = vlaneseq
    %v2941 = vshrl.u32 %v2940, 7
    %v2942 = vsub.s32 0, %v2941
    %v2943 = vrot.slane %v2938, %v2942
    %v2944 = vlaneseq
    %v2945 = vshrl.u32 %v2944, 7
    %v2946 = vsub.s32 1, %v2945
    %v2947 = vrot.slane %v2938, %v2946
    %v2948 = vlaneseq
    %v2949 = vshrl.u32 %v2948, 7
    %v2950 = vsub.s32 2, %v2949
    %v2951 = vrot.slane %v2938, %v2950
    %v2952 = vlaneseq
    %v2953 = vshrl.u32 %v2952, 7
    %v2954 = vsub.s32 3, %v2953
    %v2955 = vrot.slane %v2938, %v2954
    %v2960 = vadd.f32 %v2682, %v2943
    %v2961 = vadd.f32 %v2683, %v2947
    %v2962 = vadd.f32 %v2684, %v2951
    %v2963 = vadd.f32 %v2685, %v2955
    %v2964 = vadd.f32 %v2686, %v2943
    %v2965 = vadd.f32 %v2687, %v2947
    %v2966 = vadd.f32 %v2688, %v2951
    %v2967 = vadd.f32 %v2689, %v2955
    %v2968 = vadd.f32 %v2690, %v2943
    %v2969 = vadd.f32 %v2691, %v2947
    %v2970 = vadd.f32 %v2692, %v2951
    %v2971 = vadd.f32 %v2693, %v2955
    %v2972 = vadd.f32 %v2694, %v2943
    %v2973 = vadd.f32 %v2695, %v2947
    %v2974 = vadd.f32 %v2696, %v2951
    %v2975 = vadd.f32 %v2697, %v2955
    %v2976 = vadd.f32 %v2698, %v2943
    %v2977 = vadd.f32 %v2699, %v2947
    %v2978 = vadd.f32 %v2700, %v2951
    %v2979 = vadd.f32 %v2701, %v2955
    %v2980 = vadd.f32 %v2702, %v2943
    %v2981 = vadd.f32 %v2703, %v2947
    %v2982 = vadd.f32 %v2704, %v2951
    %v2983 = vadd.f32 %v2705, %v2955
    %v2984 = vadd.f32 %v2706, %v2943
    %v2985 = vadd.f32 %v2707, %v2947
    %v2986 = vadd.f32 %v2708, %v2951
    %v2987 = vadd.f32 %v2709, %v2955
    %v2988 = vadd.f32 %v2710, %v2943
    %v2989 = vadd.f32 %v2711, %v2947
    %v2990 = vadd.f32 %v2712, %v2951
    %v2991 = vadd.f32 %v2713, %v2955
    %v2992 = vadd.f32 %v2714, %v2943
    %v2993 = vadd.f32 %v2715, %v2947
    %v2994 = vadd.f32 %v2716, %v2951
    %v2995 = vadd.f32 %v2717, %v2955
    %v2996 = vadd.f32 %v2718, %v2943
    %v2997 = vadd.f32 %v2719, %v2947
    %v2998 = vadd.f32 %v2720, %v2951
    %v2999 = vadd.f32 %v2721, %v2955
    %v3000 = vadd.f32 %v2722, %v2943
    %v3001 = vadd.f32 %v2723, %v2947
    %v3002 = vadd.f32 %v2724, %v2951
    %v3003 = vadd.f32 %v2725, %v2955
    %v3004 = vadd.f32 %v2726, %v2943
    %v3005 = vadd.f32 %v2727, %v2947
    %v3006 = vadd.f32 %v2728, %v2951
    %v3007 = vadd.f32 %v2729, %v2955
    %v3008 = vadd.f32 %v2730, %v2943
    %v3009 = vadd.f32 %v2731, %v2947
    %v3010 = vadd.f32 %v2732, %v2951
    %v3011 = vadd.f32 %v2733, %v2955
    %v3012 = vadd.f32 %v2734, %v2943
    %v3013 = vadd.f32 %v2735, %v2947
    %v3014 = vadd.f32 %v2736, %v2951
    %v3015 = vadd.f32 %v2737, %v2955
    %v3016 = vadd.f32 %v2738, %v2943
    %v3017 = vadd.f32 %v2739, %v2947
    %v3018 = vadd.f32 %v2740, %v2951
    %v3019 = vadd.f32 %v2741, %v2955
    %v3020 = vadd.f32 %v2742, %v2943
    %v3021 = vadd.f32 %v2743, %v2947
    %v3022 = vadd.f32 %v2744, %v2951
    %v3023 = vadd.f32 %v2745, %v2955
    %v3024 = vadd.f32 %v2746, %v2943
    %v3025 = vadd.f32 %v2747, %v2947
    %v3026 = vadd.f32 %v2748, %v2951
    %v3027 = vadd.f32 %v2749, %v2955
    %v3028 = vadd.f32 %v2750, %v2943
    %v3029 = vadd.f32 %v2751, %v2947
    %v3030 = vadd.f32 %v2752, %v2951
    %v3031 = vadd.f32 %v2753, %v2955
    %v3032 = vadd.f32 %v2754, %v2943
    %v3033 = vadd.f32 %v2755, %v2947
    %v3034 = vadd.f32 %v2756, %v2951
    %v3035 = vadd.f32 %v2757, %v2955
    %v3036 = vadd.f32 %v2758, %v2943
    %v3037 = vadd.f32 %v2759, %v2947
    %v3038 = vadd.f32 %v2760, %v2951
    %v3039 = vadd.f32 %v2761, %v2955
    %v3040 = vadd.f32 %v2762, %v2943
    %v3041 = vadd.f32 %v2763, %v2947
    %v3042 = vadd.f32 %v2764, %v2951
    %v3043 = vadd.f32 %v2765, %v2955
    %v3044 = vadd.f32 %v2766, %v2943
    %v3045 = vadd.f32 %v2767, %v2947
    %v3046 = vadd.f32 %v2768, %v2951
    %v3047 = vadd.f32 %v2769, %v2955
    %v3048 = vadd.f32 %v2770, %v2943
    %v3049 = vadd.f32 %v2771, %v2947
    %v3050 = vadd.f32 %v2772, %v2951
    %v3051 = vadd.f32 %v2773, %v2955
    %v3052 = vadd.f32 %v2774, %v2943
    %v3053 = vadd.f32 %v2775, %v2947
    %v3054 = vadd.f32 %v2776, %v2951
    %v3055 = vadd.f32 %v2777, %v2955
    %v3056 = vadd.f32 %v2778, %v2943
    %v3057 = vadd.f32 %v2779, %v2947
    %v3058 = vadd.f32 %v2780, %v2951
    %v3059 = vadd.f32 %v2781, %v2955
    %v3060 = vadd.f32 %v2782, %v2943
    %v3061 = vadd.f32 %v2783, %v2947
    %v3062 = vadd.f32 %v2784, %v2951
    %v3063 = vadd.f32 %v2785, %v2955
    %v3064 = vadd.f32 %v2786, %v2943
    %v3065 = vadd.f32 %v2787, %v2947
    %v3066 = vadd.f32 %v2788, %v2951
    %v3067 = vadd.f32 %v2789, %v2955
    %v3068 = vadd.f32 %v2790, %v2943
    %v3069 = vadd.f32 %v2791, %v2947
    %v3070 = vadd.f32 %v2792, %v2951
    %v3071 = vadd.f32 %v2793, %v2955
    %v3072 = vadd.f32 %v2794, %v2943
    %v3073 = vadd.f32 %v2795, %v2947
    %v3074 = vadd.f32 %v2796, %v2951
    %v3075 = vadd.f32 %v2797, %v2955
    %v3076 = vadd.f32 %v2798, %v2943
    %v3077 = vadd.f32 %v2799, %v2947
    %v3078 = vadd.f32 %v2800, %v2951
    %v3079 = vadd.f32 %v2801, %v2955
    %v3080 = vadd.f32 %v2802, %v2943
    %v3081 = vadd.f32 %v2803, %v2947
    %v3082 = vadd.f32 %v2804, %v2951
    %v3083 = vadd.f32 %v2805, %v2955
    %v3084 = vadd.f32 %v2806, %v2943
    %v3085 = vadd.f32 %v2807, %v2947
    %v3086 = vadd.f32 %v2808, %v2951
    %v3087 = vadd.f32 %v2809, %v2955
    %v3088 = vadd.f32 %v2810, %v2943
    %v3089 = vadd.f32 %v2811, %v2947
    %v3090 = vadd.f32 %v2812, %v2951
    %v3091 = vadd.f32 %v2813, %v2955
    %v3092 = vadd.f32 %v2814, %v2943
    %v3093 = vadd.f32 %v2815, %v2947
    %v3094 = vadd.f32 %v2816, %v2951
    %v3095 = vadd.f32 %v2817, %v2955
    %v3096 = vadd.f32 %v2818, %v2943
    %v3097 = vadd.f32 %v2819, %v2947
    %v3098 = vadd.f32 %v2820, %v2951
    %v3099 = vadd.f32 %v2821, %v2955
    %v3100 = vadd.f32 %v2822, %v2943
    %v3101 = vadd.f32 %v2823, %v2947
    %v3102 = vadd.f32 %v2824, %v2951
    %v3103 = vadd.f32 %v2825, %v2955
    %v3104 = vadd.f32 %v2826, %v2943
    %v3105 = vadd.f32 %v2827, %v2947
    %v3106 = vadd.f32 %v2828, %v2951
    %v3107 = vadd.f32 %v2829, %v2955
    %v3108 = vadd.f32 %v2830, %v2943
    %v3109 = vadd.f32 %v2831, %v2947
    %v3110 = vadd.f32 %v2832, %v2951
    %v3111 = vadd.f32 %v2833, %v2955
    %v3112 = vadd.f32 %v2834, %v2943
    %v3113 = vadd.f32 %v2835, %v2947
    %v3114 = vadd.f32 %v2836, %v2951
    %v3115 = vadd.f32 %v2837, %v2955
    %v3116 = vadd.f32 %v2838, %v2943
    %v3117 = vadd.f32 %v2839, %v2947
    %v3118 = vadd.f32 %v2840, %v2951
    %v3119 = vadd.f32 %v2841, %v2955
    %v3120 = vadd.f32 %v2842, %v2943
    %v3121 = vadd.f32 %v2843, %v2947
    %v3122 = vadd.f32 %v2844, %v2951
    %v3123 = vadd.f32 %v2845, %v2955
    %v3124 = vadd.f32 %v2846, %v2943
    %v3125 = vadd.f32 %v2847, %v2947
    %v3126 = vadd.f32 %v2848, %v2951
    %v3127 = vadd.f32 %v2849, %v2955
    %v3128 = vadd.f32 %v2850, %v2943
    %v3129 = vadd.f32 %v2851, %v2947
    %v3130 = vadd.f32 %v2852, %v2951
    %v3131 = vadd.f32 %v2853, %v2955
    %v3132 = vadd.f32 %v2854, %v2943
    %v3133 = vadd.f32 %v2855, %v2947
    %v3134 = vadd.f32 %v2856, %v2951
    %v3135 = vadd.f32 %v2857, %v2955
    %v3136 = vadd.f32 %v2858, %v2943
    %v3137 = vadd.f32 %v2859, %v2947
    %v3138 = vadd.f32 %v2860, %v2951
    %v3139 = vadd.f32 %v2861, %v2955
    %v3140 = vadd.f32 %v2862, %v2943
    %v3141 = vadd.f32 %v2863, %v2947
    %v3142 = vadd.f32 %v2864, %v2951
    %v3143 = vadd.f32 %v2865, %v2955
    %v3144 = vadd.f32 %v2866, %v2943
    %v3145 = vadd.f32 %v2867, %v2947
    %v3146 = vadd.f32 %v2868, %v2951
    %v3147 = vadd.f32 %v2869, %v2955
    %v3148 = vadd.f32 %v2870, %v2943
    %v3149 = vadd.f32 %v2871, %v2947
    %v3150 = vadd.f32 %v2872, %v2951
    %v3151 = vadd.f32 %v2873, %v2955
    %v3152 = vadd.f32 %v2874, %v2943
    %v3153 = vadd.f32 %v2875, %v2947
    %v3154 = vadd.f32 %v2876, %v2951
    %v3155 = vadd.f32 %v2877, %v2955
    %v3156 = vadd.f32 %v2878, %v2943
    %v3157 = vadd.f32 %v2879, %v2947
    %v3158 = vadd.f32 %v2880, %v2951
    %v3159 = vadd.f32 %v2881, %v2955
    %v3160 = vadd.f32 %v2882, %v2943
    %v3161 = vadd.f32 %v2883, %v2947
    %v3162 = vadd.f32 %v2884, %v2951
    %v3163 = vadd.f32 %v2885, %v2955
    %v3164 = vadd.f32 %v2886, %v2943
    %v3165 = vadd.f32 %v2887, %v2947
    %v3166 = vadd.f32 %v2888, %v2951
    %v3167 = vadd.f32 %v2889, %v2955
    %v3168 = vadd.f32 %v2890, %v2943
    %v3169 = vadd.f32 %v2891, %v2947
    %v3170 = vadd.f32 %v2892, %v2951
    %v3171 = vadd.f32 %v2893, %v2955
    %v3172 = vadd.f32 %v2894, %v2943
    %v3173 = vadd.f32 %v2895, %v2947
    %v3174 = vadd.f32 %v2896, %v2951
    %v3175 = vadd.f32 %v2897, %v2955
    %v3176 = vadd.f32 %v2898, %v2943
    %v3177 = vadd.f32 %v2899, %v2947
    %v3178 = vadd.f32 %v2900, %v2951
    %v3179 = vadd.f32 %v2901, %v2955
    %v3180 = vadd.f32 %v2902, %v2943
    %v3181 = vadd.f32 %v2903, %v2947
    %v3182 = vadd.f32 %v2904, %v2951
    %v3183 = vadd.f32 %v2905, %v2955
    %v3184 = vadd.f32 %v2906, %v2943
    %v3185 = vadd.f32 %v2907, %v2947
    %v3186 = vadd.f32 %v2908, %v2951
    %v3187 = vadd.f32 %v2909, %v2955
    %v3188 = vadd.f32 %v2910, %v2943
    %v3189 = vadd.f32 %v2911, %v2947
    %v3190 = vadd.f32 %v2912, %v2951
    %v3191 = vadd.f32 %v2913, %v2955
    %v3192 = vadd.f32 %v2914, %v2943
    %v3193 = vadd.f32 %v2915, %v2947
    %v3194 = vadd.f32 %v2916, %v2951
    %v3195 = vadd.f32 %v2917, %v2955
    %v3196 = vadd.f32 %v2918, %v2943
    %v3197 = vadd.f32 %v2919, %v2947
    %v3198 = vadd.f32 %v2920, %v2951
    %v3199 = vadd.f32 %v2921, %v2955
    %v3200 = vadd.f32 %v2922, %v2943
    %v3201 = vadd.f32 %v2923, %v2947
    %v3202 = vadd.f32 %v2924, %v2951
    %v3203 = vadd.f32 %v2925, %v2955
    %v3204 = vadd.f32 %v2926, %v2943
    %v3205 = vadd.f32 %v2927, %v2947
    %v3206 = vadd.f32 %v2928, %v2951
    %v3207 = vadd.f32 %v2929, %v2955
    %v3208 = vadd.f32 %v2930, %v2943
    %v3209 = vadd.f32 %v2931, %v2947
    %v3210 = vadd.f32 %v2932, %v2951
    %v3211 = vadd.f32 %v2933, %v2955
    %v3212 = vadd.f32 %v2934, %v2943
    %v3213 = vadd.f32 %v2935, %v2947
    %v3214 = vadd.f32 %v2936, %v2951
    %v3215 = vadd.f32 %v2937, %v2955
    %v3216 = vld [vmem:[%s5] sm:$0xff]
    %v3217 = vld [vmem:[%s5 + $0x8] sm:$0xff]
    %v3218 = vld [vmem:[%s5 + $0x10] sm:$0xff]
    %v3219 = vld [vmem:[%s5 + $0x18] sm:$0xff]
    %v3220 = vld [vmem:[%s5 + $0x20] sm:$0xff]
    %v3221 = vld [vmem:[%s5 + $0x28] sm:$0xff]
    %v3222 = vld [vmem:[%s5 + $0x30] sm:$0xff]
    %v3223 = vld [vmem:[%s5 + $0x38] sm:$0xff]
    %v3224 = vld [vmem:[%s5 + $0x40] sm:$0xff]
    %v3225 = vld [vmem:[%s5 + $0x48] sm:$0xff]
    %v3226 = vld [vmem:[%s5 + $0x50] sm:$0xff]
    %v3227 = vld [vmem:[%s5 + $0x58] sm:$0xff]
    %v3228 = vld [vmem:[%s5 + $0x60] sm:$0xff]
    %v3229 = vld [vmem:[%s5 + $0x68] sm:$0xff]
    %v3230 = vld [vmem:[%s5 + $0x70] sm:$0xff]
    %v3231 = vld [vmem:[%s5 + $0x78] sm:$0xff]
    %v3232 = vld [vmem:[%s5 + $0x80] sm:$0xff]
    %v3233 = vld [vmem:[%s5 + $0x88] sm:$0xff]
    %v3234 = vld [vmem:[%s5 + $0x90] sm:$0xff]
    %v3235 = vld [vmem:[%s5 + $0x98] sm:$0xff]
    %v3236 = vld [vmem:[%s5 + $0xa0] sm:$0xff]
    %v3237 = vld [vmem:[%s5 + $0xa8] sm:$0xff]
    %v3238 = vld [vmem:[%s5 + $0xb0] sm:$0xff]
    %v3239 = vld [vmem:[%s5 + $0xb8] sm:$0xff]
    %v3240 = vld [vmem:[%s5 + $0xc0] sm:$0xff]
    %v3241 = vld [vmem:[%s5 + $0xc8] sm:$0xff]
    %v3242 = vld [vmem:[%s5 + $0xd0] sm:$0xff]
    %v3243 = vld [vmem:[%s5 + $0xd8] sm:$0xff]
    %v3244 = vld [vmem:[%s5 + $0xe0] sm:$0xff]
    %v3245 = vld [vmem:[%s5 + $0xe8] sm:$0xff]
    %v3246 = vld [vmem:[%s5 + $0xf0] sm:$0xff]
    %v3247 = vld [vmem:[%s5 + $0xf8] sm:$0xff]
    %v3248 = vld [vmem:[%s5 + $0x100] sm:$0xff]
    %v3249 = vld [vmem:[%s5 + $0x108] sm:$0xff]
    %v3250 = vld [vmem:[%s5 + $0x110] sm:$0xff]
    %v3251 = vld [vmem:[%s5 + $0x118] sm:$0xff]
    %v3252 = vld [vmem:[%s5 + $0x120] sm:$0xff]
    %v3253 = vld [vmem:[%s5 + $0x128] sm:$0xff]
    %v3254 = vld [vmem:[%s5 + $0x130] sm:$0xff]
    %v3255 = vld [vmem:[%s5 + $0x138] sm:$0xff]
    %v3256 = vld [vmem:[%s5 + $0x140] sm:$0xff]
    %v3257 = vld [vmem:[%s5 + $0x148] sm:$0xff]
    %v3258 = vld [vmem:[%s5 + $0x150] sm:$0xff]
    %v3259 = vld [vmem:[%s5 + $0x158] sm:$0xff]
    %v3260 = vld [vmem:[%s5 + $0x160] sm:$0xff]
    %v3261 = vld [vmem:[%s5 + $0x168] sm:$0xff]
    %v3262 = vld [vmem:[%s5 + $0x170] sm:$0xff]
    %v3263 = vld [vmem:[%s5 + $0x178] sm:$0xff]
    %v3264 = vld [vmem:[%s5 + $0x180] sm:$0xff]
    %v3265 = vld [vmem:[%s5 + $0x188] sm:$0xff]
    %v3266 = vld [vmem:[%s5 + $0x190] sm:$0xff]
    %v3267 = vld [vmem:[%s5 + $0x198] sm:$0xff]
    %v3268 = vld [vmem:[%s5 + $0x1a0] sm:$0xff]
    %v3269 = vld [vmem:[%s5 + $0x1a8] sm:$0xff]
    %v3270 = vld [vmem:[%s5 + $0x1b0] sm:$0xff]
    %v3271 = vld [vmem:[%s5 + $0x1b8] sm:$0xff]
    %v3272 = vld [vmem:[%s5 + $0x1c0] sm:$0xff]
    %v3273 = vld [vmem:[%s5 + $0x1c8] sm:$0xff]
    %v3274 = vld [vmem:[%s5 + $0x1d0] sm:$0xff]
    %v3275 = vld [vmem:[%s5 + $0x1d8] sm:$0xff]
    %v3276 = vld [vmem:[%s5 + $0x1e0] sm:$0xff]
    %v3277 = vld [vmem:[%s5 + $0x1e8] sm:$0xff]
    %v3278 = vld [vmem:[%s5 + $0x1f0] sm:$0xff]
    %v3279 = vld [vmem:[%s5 + $0x1f8] sm:$0xff]
    %v3280 = vld [vmem:[%s5 + $0x200] sm:$0xff]
    %v3281 = vld [vmem:[%s5 + $0x208] sm:$0xff]
    %v3282 = vld [vmem:[%s5 + $0x210] sm:$0xff]
    %v3283 = vld [vmem:[%s5 + $0x218] sm:$0xff]
    %v3284 = vld [vmem:[%s5 + $0x220] sm:$0xff]
    %v3285 = vld [vmem:[%s5 + $0x228] sm:$0xff]
    %v3286 = vld [vmem:[%s5 + $0x230] sm:$0xff]
    %v3287 = vld [vmem:[%s5 + $0x238] sm:$0xff]
    %v3288 = vld [vmem:[%s5 + $0x240] sm:$0xff]
    %v3289 = vld [vmem:[%s5 + $0x248] sm:$0xff]
    %v3290 = vld [vmem:[%s5 + $0x250] sm:$0xff]
    %v3291 = vld [vmem:[%s5 + $0x258] sm:$0xff]
    %v3292 = vld [vmem:[%s5 + $0x260] sm:$0xff]
    %v3293 = vld [vmem:[%s5 + $0x268] sm:$0xff]
    %v3294 = vld [vmem:[%s5 + $0x270] sm:$0xff]
    %v3295 = vld [vmem:[%s5 + $0x278] sm:$0xff]
    %v3296 = vld [vmem:[%s5 + $0x280] sm:$0xff]
    %v3297 = vld [vmem:[%s5 + $0x288] sm:$0xff]
    %v3298 = vld [vmem:[%s5 + $0x290] sm:$0xff]
    %v3299 = vld [vmem:[%s5 + $0x298] sm:$0xff]
    %v3300 = vld [vmem:[%s5 + $0x2a0] sm:$0xff]
    %v3301 = vld [vmem:[%s5 + $0x2a8] sm:$0xff]
    %v3302 = vld [vmem:[%s5 + $0x2b0] sm:$0xff]
    %v3303 = vld [vmem:[%s5 + $0x2b8] sm:$0xff]
    %v3304 = vld [vmem:[%s5 + $0x2c0] sm:$0xff]
    %v3305 = vld [vmem:[%s5 + $0x2c8] sm:$0xff]
    %v3306 = vld [vmem:[%s5 + $0x2d0] sm:$0xff]
    %v3307 = vld [vmem:[%s5 + $0x2d8] sm:$0xff]
    %v3308 = vld [vmem:[%s5 + $0x2e0] sm:$0xff]
    %v3309 = vld [vmem:[%s5 + $0x2e8] sm:$0xff]
    %v3310 = vld [vmem:[%s5 + $0x2f0] sm:$0xff]
    %v3311 = vld [vmem:[%s5 + $0x2f8] sm:$0xff]
    %v3312 = vld [vmem:[%s5 + $0x300] sm:$0xff]
    %v3313 = vld [vmem:[%s5 + $0x308] sm:$0xff]
    %v3314 = vld [vmem:[%s5 + $0x310] sm:$0xff]
    %v3315 = vld [vmem:[%s5 + $0x318] sm:$0xff]
    %v3316 = vld [vmem:[%s5 + $0x320] sm:$0xff]
    %v3317 = vld [vmem:[%s5 + $0x328] sm:$0xff]
    %v3318 = vld [vmem:[%s5 + $0x330] sm:$0xff]
    %v3319 = vld [vmem:[%s5 + $0x338] sm:$0xff]
    %v3320 = vld [vmem:[%s5 + $0x340] sm:$0xff]
    %v3321 = vld [vmem:[%s5 + $0x348] sm:$0xff]
    %v3322 = vld [vmem:[%s5 + $0x350] sm:$0xff]
    %v3323 = vld [vmem:[%s5 + $0x358] sm:$0xff]
    %v3324 = vld [vmem:[%s5 + $0x360] sm:$0xff]
    %v3325 = vld [vmem:[%s5 + $0x368] sm:$0xff]
    %v3326 = vld [vmem:[%s5 + $0x370] sm:$0xff]
    %v3327 = vld [vmem:[%s5 + $0x378] sm:$0xff]
    %v3328 = vld [vmem:[%s5 + $0x380] sm:$0xff]
    %v3329 = vld [vmem:[%s5 + $0x388] sm:$0xff]
    %v3330 = vld [vmem:[%s5 + $0x390] sm:$0xff]
    %v3331 = vld [vmem:[%s5 + $0x398] sm:$0xff]
    %v3332 = vld [vmem:[%s5 + $0x3a0] sm:$0xff]
    %v3333 = vld [vmem:[%s5 + $0x3a8] sm:$0xff]
    %v3334 = vld [vmem:[%s5 + $0x3b0] sm:$0xff]
    %v3335 = vld [vmem:[%s5 + $0x3b8] sm:$0xff]
    %v3336 = vld [vmem:[%s5 + $0x3c0] sm:$0xff]
    %v3337 = vld [vmem:[%s5 + $0x3c8] sm:$0xff]
    %v3338 = vld [vmem:[%s5 + $0x3d0] sm:$0xff]
    %v3339 = vld [vmem:[%s5 + $0x3d8] sm:$0xff]
    %v3340 = vld [vmem:[%s5 + $0x3e0] sm:$0xff]
    %v3341 = vld [vmem:[%s5 + $0x3e8] sm:$0xff]
    %v3342 = vld [vmem:[%s5 + $0x3f0] sm:$0xff]
    %v3343 = vld [vmem:[%s5 + $0x3f8] sm:$0xff]
    %v3344 = vld [vmem:[%s6] sm:$0x3]
    %v3346 = vlaneseq
    %v3347 = vshrl.u32 %v3346, 7
    %v3348 = vsub.s32 0, %v3347
    %v3349 = vrot.slane %v3344, %v3348
    %v3350 = vlaneseq
    %v3351 = vshrl.u32 %v3350, 7
    %v3352 = vsub.s32 1, %v3351
    %v3353 = vrot.slane %v3344, %v3352
    %3356 = vmatprep.subr.mxu0 %v3217
    %3357 = vmatpush1.msra.mxu0 %v3216
    %3358 = vmatprep.subr.mxu0 %v3219
    %3359 = vmatpush1.msra.mxu0 %v3218
    %3360 = vmatprep.subr.mxu0 %v3221
    %3361 = vmatpush1.msra.mxu0 %v3220
    %3362 = vmatprep.subr.mxu0 %v3223
    %3363 = vmatpush1.msra.mxu0 %v3222
    %3364 = vmatprep.subr.mxu0 %v3225
    %3365 = vmatpush1.msra.mxu0 %v3224
    %3366 = vmatprep.subr.mxu0 %v3227
    %3367 = vmatpush1.msra.mxu0 %v3226
    %3368 = vmatprep.subr.mxu0 %v3229
    %3369 = vmatpush1.msra.mxu0 %v3228
    %3370 = vmatprep.subr.mxu0 %v3231
    %3371 = vmatpush1.msra.mxu0 %v3230
    %3372 = vmatprep.subr.mxu0 %v3233
    %3373 = vmatpush1.msra.mxu0 %v3232
    %3374 = vmatprep.subr.mxu0 %v3235
    %3375 = vmatpush1.msra.mxu0 %v3234
    %3376 = vmatprep.subr.mxu0 %v3237
    %3377 = vmatpush1.msra.mxu0 %v3236
    %3378 = vmatprep.subr.mxu0 %v3239
    %3379 = vmatpush1.msra.mxu0 %v3238
    %3380 = vmatprep.subr.mxu0 %v3241
    %3381 = vmatpush1.msra.mxu0 %v3240
    %3382 = vmatprep.subr.mxu0 %v3243
    %3383 = vmatpush1.msra.mxu0 %v3242
    %3384 = vmatprep.subr.mxu0 %v3245
    %3385 = vmatpush1.msra.mxu0 %v3244
    %3386 = vmatprep.subr.mxu0 %v3247
    %3387 = vmatpush1.msra.mxu0 %v3246
    %3388 = vmatprep.subr.mxu0 %v3249
    %3389 = vmatpush1.msra.mxu0 %v3248
    %3390 = vmatprep.subr.mxu0 %v3251
    %3391 = vmatpush1.msra.mxu0 %v3250
    %3392 = vmatprep.subr.mxu0 %v3253
    %3393 = vmatpush1.msra.mxu0 %v3252
    %3394 = vmatprep.subr.mxu0 %v3255
    %3395 = vmatpush1.msra.mxu0 %v3254
    %3396 = vmatprep.subr.mxu0 %v3257
    %3397 = vmatpush1.msra.mxu0 %v3256
    %3398 = vmatprep.subr.mxu0 %v3259
    %3399 = vmatpush1.msra.mxu0 %v3258
    %3400 = vmatprep.subr.mxu0 %v3261
    %3401 = vmatpush1.msra.mxu0 %v3260
    %3402 = vmatprep.subr.mxu0 %v3263
    %3403 = vmatpush1.msra.mxu0 %v3262
    %3404 = vmatprep.subr.mxu0 %v3265
    %3405 = vmatpush1.msra.mxu0 %v3264
    %3406 = vmatprep.subr.mxu0 %v3267
    %3407 = vmatpush1.msra.mxu0 %v3266
    %3408 = vmatprep.subr.mxu0 %v3269
    %3409 = vmatpush1.msra.mxu0 %v3268
    %3410 = vmatprep.subr.mxu0 %v3271
    %3411 = vmatpush1.msra.mxu0 %v3270
    %3412 = vmatprep.subr.mxu0 %v3273
    %3413 = vmatpush1.msra.mxu0 %v3272
    %3414 = vmatprep.subr.mxu0 %v3275
    %3415 = vmatpush1.msra.mxu0 %v3274
    %3416 = vmatprep.subr.mxu0 %v3277
    %3417 = vmatpush1.msra.mxu0 %v3276
    %3418 = vmatprep.subr.mxu0 %v3279
    %3419 = vmatpush1.msra.mxu0 %v3278
    %3420 = vmatprep.mubr.f32.mxu0 %v2961
    %3421 = vmatmul.mubr.f32.gmra.mrb[0].mxu0 %v2960
    %v3422 = vpop.f32.mrb[0].mxu0
    %v3423 = vadd.f32 %v3349, %v3422
    %v3424 = vpop.f32.mrb[0].mxu0
    %v3425 = vadd.f32 %v3353, %v3424
    %3426 = vmatprep.mubr.f32.mxu0 %v2965
    %3427 = vmatmul.mubr.f32.gmra.mrb[0].mxu0 %v2964
    %v3428 = vpop.f32.mrb[0].mxu0
    %v3429 = vadd.f32 %v3349, %v3428
    %v3430 = vpop.f32.mrb[0].mxu0
    %v3431 = vadd.f32 %v3353, %v3430
    %3432 = vmatprep.mubr.f32.mxu0 %v2969
    %3433 = vmatmul.mubr.f32.gmra.mrb[0].mxu0 %v2968
    %v3434 = vpop.f32.mrb[0].mxu0
    %v3435 = vadd.f32 %v3349, %v3434
    %v3436 = vpop.f32.mrb[0].mxu0
    %v3437 = vadd.f32 %v3353, %v3436
    %3438 = vmatprep.mubr.f32.mxu0 %v2973
    %3439 = vmatmul.mubr.f32.gmra.mrb[0].mxu0 %v2972
    %v3440 = vpop.f32.mrb[0].mxu0
    %v3441 = vadd.f32 %v3349, %v3440
    %v3442 = vpop.f32.mrb[0].mxu0
    %v3443 = vadd.f32 %v3353, %v3442
    %3444 = vmatprep.mubr.f32.mxu0 %v2977
    %3445 = vmatmul.mubr.f32.gmra.mrb[0].mxu0 %v2976
    %v3446 = vpop.f32.mrb[0].mxu0
    %v3447 = vadd.f32 %v3349, %v3446
    %v3448 = vpop.f32.mrb[0].mxu0
    %v3449 = vadd.f32 %v3353, %v3448
    %3450 = vmatprep.mubr.f32.mxu0 %v2981
    %3451 = vmatmul.mubr.f32.gmra.mrb[0].mxu0 %v2980
    %v3452 = vpop.f32.mrb[0].mxu0
    %v3453 = vadd.f32 %v3349, %v3452
    %v3454 = vpop.f32.mrb[0].mxu0
    %v3455 = vadd.f32 %v3353, %v3454
    %3456 = vmatprep.mubr.f32.mxu0 %v2985
    %3457 = vmatmul.mubr.f32.gmra.mrb[0].mxu0 %v2984
    %v3458 = vpop.f32.mrb[0].mxu0
    %v3459 = vadd.f32 %v3349, %v3458
    %v3460 = vpop.f32.mrb[0].mxu0
    %v3461 = vadd.f32 %v3353, %v3460
    %3462 = vmatprep.mubr.f32.mxu0 %v2989
    %3463 = vmatmul.mubr.f32.gmra.mrb[0].mxu0 %v2988
    %v3464 = vpop.f32.mrb[0].mxu0
    %v3465 = vadd.f32 %v3349, %v3464
    %v3466 = vpop.f32.mrb[0].mxu0
    %v3467 = vadd.f32 %v3353, %v3466
    %3468 = vmatprep.mubr.f32.mxu0 %v2993
    %3469 = vmatmul.mubr.f32.gmra.mrb[0].mxu0 %v2992
    %v3470 = vpop.f32.mrb[0].mxu0
    %v3471 = vadd.f32 %v3349, %v3470
    %v3472 = vpop.f32.mrb[0].mxu0
    %v3473 = vadd.f32 %v3353, %v3472
    %3474 = vmatprep.mubr.f32.mxu0 %v2997
    %3475 = vmatmul.mubr.f32.gmra.mrb[0].mxu0 %v2996
    %v3476 = vpop.f32.mrb[0].mxu0
    %v3477 = vadd.f32 %v3349, %v3476
    %v3478 = vpop.f32.mrb[0].mxu0
    %v3479 = vadd.f32 %v3353, %v3478
    %3480 = vmatprep.mubr.f32.mxu0 %v3001
    %3481 = vmatmul.mubr.f32.gmra.mrb[0].mxu0 %v3000
    %v3482 = vpop.f32.mrb[0].mxu0
    %v3483 = vadd.f32 %v3349, %v3482
    %v3484 = vpop.f32.mrb[0].mxu0
    %v3485 = vadd.f32 %v3353, %v3484
    %3486 = vmatprep.mubr.f32.mxu0 %v3005
    %3487 = vmatmul.mubr.f32.gmra.mrb[0].mxu0 %v3004
    %v3488 = vpop.f32.mrb[0].mxu0
    %v3489 = vadd.f32 %v3349, %v3488
    %v3490 = vpop.f32.mrb[0].mxu0
    %v3491 = vadd.f32 %v3353, %v3490
    %3492 = vmatprep.mubr.f32.mxu0 %v3009
    %3493 = vmatmul.mubr.f32.gmra.mrb[0].mxu0 %v3008
    %v3494 = vpop.f32.mrb[0].mxu0
    %v3495 = vadd.f32 %v3349, %v3494
    %v3496 = vpop.f32.mrb[0].mxu0
    %v3497 = vadd.f32 %v3353, %v3496
    %3498 = vmatprep.mubr.f32.mxu0 %v3013
    %3499 = vmatmul.mubr.f32.gmra.mrb[0].mxu0 %v3012
    %v3500 = vpop.f32.mrb[0].mxu0
    %v3501 = vadd.f32 %v3349, %v3500
    %v3502 = vpop.f32.mrb[0].mxu0
    %v3503 = vadd.f32 %v3353, %v3502
    %3504 = vmatprep.mubr.f32.mxu0 %v3017
    %3505 = vmatmul.mubr.f32.gmra.mrb[0].mxu0 %v3016
    %v3506 = vpop.f32.mrb[0].mxu0
    %v3507 = vadd.f32 %v3349, %v3506
    %v3508 = vpop.f32.mrb[0].mxu0
    %v3509 = vadd.f32 %v3353, %v3508
    %3510 = vmatprep.mubr.f32.mxu0 %v3021
    %3511 = vmatmul.mubr.f32.gmra.mrb[0].mxu0 %v3020
    %v3512 = vpop.f32.mrb[0].mxu0
    %v3513 = vadd.f32 %v3349, %v3512
    %v3514 = vpop.f32.mrb[0].mxu0
    %v3515 = vadd.f32 %v3353, %v3514
    %3516 = vmatprep.mubr.f32.mxu0 %v3025
    %3517 = vmatmul.mubr.f32.gmra.mrb[0].mxu0 %v3024
    %v3518 = vpop.f32.mrb[0].mxu0
    %v3519 = vadd.f32 %v3349, %v3518
    %v3520 = vpop.f32.mrb[0].mxu0
    %v3521 = vadd.f32 %v3353, %v3520
    %3522 = vmatprep.mubr.f32.mxu0 %v3029
    %3523 = vmatmul.mubr.f32.gmra.mrb[0].mxu0 %v3028
    %v3524 = vpop.f32.mrb[0].mxu0
    %v3525 = vadd.f32 %v3349, %v3524
    %v3526 = vpop.f32.mrb[0].mxu0
    %v3527 = vadd.f32 %v3353, %v3526
    %3528 = vmatprep.mubr.f32.mxu0 %v3033
    %3529 = vmatmul.mubr.f32.gmra.mrb[0].mxu0 %v3032
    %v3530 = vpop.f32.mrb[0].mxu0
    %v3531 = vadd.f32 %v3349, %v3530
    %v3532 = vpop.f32.mrb[0].mxu0
    %v3533 = vadd.f32 %v3353, %v3532
    %3534 = vmatprep.mubr.f32.mxu0 %v3037
    %3535 = vmatmul.mubr.f32.gmra.mrb[0].mxu0 %v3036
    %v3536 = vpop.f32.mrb[0].mxu0
    %v3537 = vadd.f32 %v3349, %v3536
    %v3538 = vpop.f32.mrb[0].mxu0
    %v3539 = vadd.f32 %v3353, %v3538
    %3540 = vmatprep.mubr.f32.mxu0 %v3041
    %3541 = vmatmul.mubr.f32.gmra.mrb[0].mxu0 %v3040
    %v3542 = vpop.f32.mrb[0].mxu0
    %v3543 = vadd.f32 %v3349, %v3542
    %v3544 = vpop.f32.mrb[0].mxu0
    %v3545 = vadd.f32 %v3353, %v3544
    %3546 = vmatprep.mubr.f32.mxu0 %v3045
    %3547 = vmatmul.mubr.f32.gmra.mrb[0].mxu0 %v3044
    %v3548 = vpop.f32.mrb[0].mxu0
    %v3549 = vadd.f32 %v3349, %v3548
    %v3550 = vpop.f32.mrb[0].mxu0
    %v3551 = vadd.f32 %v3353, %v3550
    %3552 = vmatprep.mubr.f32.mxu0 %v3049
    %3553 = vmatmul.mubr.f32.gmra.mrb[0].mxu0 %v3048
    %v3554 = vpop.f32.mrb[0].mxu0
    %v3555 = vadd.f32 %v3349, %v3554
    %v3556 = vpop.f32.mrb[0].mxu0
    %v3557 = vadd.f32 %v3353, %v3556
    %3558 = vmatprep.mubr.f32.mxu0 %v3053
    %3559 = vmatmul.mubr.f32.gmra.mrb[0].mxu0 %v3052
    %v3560 = vpop.f32.mrb[0].mxu0
    %v3561 = vadd.f32 %v3349, %v3560
    %v3562 = vpop.f32.mrb[0].mxu0
    %v3563 = vadd.f32 %v3353, %v3562
    %3564 = vmatprep.mubr.f32.mxu0 %v3057
    %3565 = vmatmul.mubr.f32.gmra.mrb[0].mxu0 %v3056
    %v3566 = vpop.f32.mrb[0].mxu0
    %v3567 = vadd.f32 %v3349, %v3566
    %v3568 = vpop.f32.mrb[0].mxu0
    %v3569 = vadd.f32 %v3353, %v3568
    %3570 = vmatprep.mubr.f32.mxu0 %v3061
    %3571 = vmatmul.mubr.f32.gmra.mrb[0].mxu0 %v3060
    %v3572 = vpop.f32.mrb[0].mxu0
    %v3573 = vadd.f32 %v3349, %v3572
    %v3574 = vpop.f32.mrb[0].mxu0
    %v3575 = vadd.f32 %v3353, %v3574
    %3576 = vmatprep.mubr.f32.mxu0 %v3065
    %3577 = vmatmul.mubr.f32.gmra.mrb[0].mxu0 %v3064
    %v3578 = vpop.f32.mrb[0].mxu0
    %v3579 = vadd.f32 %v3349, %v3578
    %v3580 = vpop.f32.mrb[0].mxu0
    %v3581 = vadd.f32 %v3353, %v3580
    %3582 = vmatprep.mubr.f32.mxu0 %v3069
    %3583 = vmatmul.mubr.f32.gmra.mrb[0].mxu0 %v3068
    %v3584 = vpop.f32.mrb[0].mxu0
    %v3585 = vadd.f32 %v3349, %v3584
    %v3586 = vpop.f32.mrb[0].mxu0
    %v3587 = vadd.f32 %v3353, %v3586
    %3588 = vmatprep.mubr.f32.mxu0 %v3073
    %3589 = vmatmul.mubr.f32.gmra.mrb[0].mxu0 %v3072
    %v3590 = vpop.f32.mrb[0].mxu0
    %v3591 = vadd.f32 %v3349, %v3590
    %v3592 = vpop.f32.mrb[0].mxu0
    %v3593 = vadd.f32 %v3353, %v3592
    %3594 = vmatprep.mubr.f32.mxu0 %v3077
    %3595 = vmatmul.mubr.f32.gmra.mrb[0].mxu0 %v3076
    %v3596 = vpop.f32.mrb[0].mxu0
    %v3597 = vadd.f32 %v3349, %v3596
    %v3598 = vpop.f32.mrb[0].mxu0
    %v3599 = vadd.f32 %v3353, %v3598
    %3600 = vmatprep.mubr.f32.mxu0 %v3081
    %3601 = vmatmul.mubr.f32.gmra.mrb[0].mxu0 %v3080
    %v3602 = vpop.f32.mrb[0].mxu0
    %v3603 = vadd.f32 %v3349, %v3602
    %v3604 = vpop.f32.mrb[0].mxu0
    %v3605 = vadd.f32 %v3353, %v3604
    %3606 = vmatprep.mubr.f32.mxu0 %v3085
    %3607 = vmatmul.mubr.f32.gmra.mrb[0].mxu0 %v3084
    %v3608 = vpop.f32.mrb[0].mxu0
    %v3609 = vadd.f32 %v3349, %v3608
    %v3610 = vpop.f32.mrb[0].mxu0
    %v3611 = vadd.f32 %v3353, %v3610
    %3612 = vmatprep.mubr.f32.mxu0 %v3089
    %3613 = vmatmul.mubr.f32.gmra.mrb[0].mxu0 %v3088
    %v3614 = vpop.f32.mrb[0].mxu0
    %v3615 = vadd.f32 %v3349, %v3614
    %v3616 = vpop.f32.mrb[0].mxu0
    %v3617 = vadd.f32 %v3353, %v3616
    %3618 = vmatprep.mubr.f32.mxu0 %v3093
    %3619 = vmatmul.mubr.f32.gmra.mrb[0].mxu0 %v3092
    %v3620 = vpop.f32.mrb[0].mxu0
    %v3621 = vadd.f32 %v3349, %v3620
    %v3622 = vpop.f32.mrb[0].mxu0
    %v3623 = vadd.f32 %v3353, %v3622
    %3624 = vmatprep.mubr.f32.mxu0 %v3097
    %3625 = vmatmul.mubr.f32.gmra.mrb[0].mxu0 %v3096
    %v3626 = vpop.f32.mrb[0].mxu0
    %v3627 = vadd.f32 %v3349, %v3626
    %v3628 = vpop.f32.mrb[0].mxu0
    %v3629 = vadd.f32 %v3353, %v3628
    %3630 = vmatprep.mubr.f32.mxu0 %v3101
    %3631 = vmatmul.mubr.f32.gmra.mrb[0].mxu0 %v3100
    %v3632 = vpop.f32.mrb[0].mxu0
    %v3633 = vadd.f32 %v3349, %v3632
    %v3634 = vpop.f32.mrb[0].mxu0
    %v3635 = vadd.f32 %v3353, %v3634
    %3636 = vmatprep.mubr.f32.mxu0 %v3105
    %3637 = vmatmul.mubr.f32.gmra.mrb[0].mxu0 %v3104
    %v3638 = vpop.f32.mrb[0].mxu0
    %v3639 = vadd.f32 %v3349, %v3638
    %v3640 = vpop.f32.mrb[0].mxu0
    %v3641 = vadd.f32 %v3353, %v3640
    %3642 = vmatprep.mubr.f32.mxu0 %v3109
    %3643 = vmatmul.mubr.f32.gmra.mrb[0].mxu0 %v3108
    %v3644 = vpop.f32.mrb[0].mxu0
    %v3645 = vadd.f32 %v3349, %v3644
    %v3646 = vpop.f32.mrb[0].mxu0
    %v3647 = vadd.f32 %v3353, %v3646
    %3648 = vmatprep.mubr.f32.mxu0 %v3113
    %3649 = vmatmul.mubr.f32.gmra.mrb[0].mxu0 %v3112
    %v3650 = vpop.f32.mrb[0].mxu0
    %v3651 = vadd.f32 %v3349, %v3650
    %v3652 = vpop.f32.mrb[0].mxu0
    %v3653 = vadd.f32 %v3353, %v3652
    %3654 = vmatprep.mubr.f32.mxu0 %v3117
    %3655 = vmatmul.mubr.f32.gmra.mrb[0].mxu0 %v3116
    %v3656 = vpop.f32.mrb[0].mxu0
    %v3657 = vadd.f32 %v3349, %v3656
    %v3658 = vpop.f32.mrb[0].mxu0
    %v3659 = vadd.f32 %v3353, %v3658
    %3660 = vmatprep.mubr.f32.mxu0 %v3121
    %3661 = vmatmul.mubr.f32.gmra.mrb[0].mxu0 %v3120
    %v3662 = vpop.f32.mrb[0].mxu0
    %v3663 = vadd.f32 %v3349, %v3662
    %v3664 = vpop.f32.mrb[0].mxu0
    %v3665 = vadd.f32 %v3353, %v3664
    %3666 = vmatprep.mubr.f32.mxu0 %v3125
    %3667 = vmatmul.mubr.f32.gmra.mrb[0].mxu0 %v3124
    %v3668 = vpop.f32.mrb[0].mxu0
    %v3669 = vadd.f32 %v3349, %v3668
    %v3670 = vpop.f32.mrb[0].mxu0
    %v3671 = vadd.f32 %v3353, %v3670
    %3672 = vmatprep.mubr.f32.mxu0 %v3129
    %3673 = vmatmul.mubr.f32.gmra.mrb[0].mxu0 %v3128
    %v3674 = vpop.f32.mrb[0].mxu0
    %v3675 = vadd.f32 %v3349, %v3674
    %v3676 = vpop.f32.mrb[0].mxu0
    %v3677 = vadd.f32 %v3353, %v3676
    %3678 = vmatprep.mubr.f32.mxu0 %v3133
    %3679 = vmatmul.mubr.f32.gmra.mrb[0].mxu0 %v3132
    %v3680 = vpop.f32.mrb[0].mxu0
    %v3681 = vadd.f32 %v3349, %v3680
    %v3682 = vpop.f32.mrb[0].mxu0
    %v3683 = vadd.f32 %v3353, %v3682
    %3684 = vmatprep.mubr.f32.mxu0 %v3137
    %3685 = vmatmul.mubr.f32.gmra.mrb[0].mxu0 %v3136
    %v3686 = vpop.f32.mrb[0].mxu0
    %v3687 = vadd.f32 %v3349, %v3686
    %v3688 = vpop.f32.mrb[0].mxu0
    %v3689 = vadd.f32 %v3353, %v3688
    %3690 = vmatprep.mubr.f32.mxu0 %v3141
    %3691 = vmatmul.mubr.f32.gmra.mrb[0].mxu0 %v3140
    %v3692 = vpop.f32.mrb[0].mxu0
    %v3693 = vadd.f32 %v3349, %v3692
    %v3694 = vpop.f32.mrb[0].mxu0
    %v3695 = vadd.f32 %v3353, %v3694
    %3696 = vmatprep.mubr.f32.mxu0 %v3145
    %3697 = vmatmul.mubr.f32.gmra.mrb[0].mxu0 %v3144
    %v3698 = vpop.f32.mrb[0].mxu0
    %v3699 = vadd.f32 %v3349, %v3698
    %v3700 = vpop.f32.mrb[0].mxu0
    %v3701 = vadd.f32 %v3353, %v3700
    %3702 = vmatprep.mubr.f32.mxu0 %v3149
    %3703 = vmatmul.mubr.f32.gmra.mrb[0].mxu0 %v3148
    %v3704 = vpop.f32.mrb[0].mxu0
    %v3705 = vadd.f32 %v3349, %v3704
    %v3706 = vpop.f32.mrb[0].mxu0
    %v3707 = vadd.f32 %v3353, %v3706
    %3708 = vmatprep.mubr.f32.mxu0 %v3153
    %3709 = vmatmul.mubr.f32.gmra.mrb[0].mxu0 %v3152
    %v3710 = vpop.f32.mrb[0].mxu0
    %v3711 = vadd.f32 %v3349, %v3710
    %v3712 = vpop.f32.mrb[0].mxu0
    %v3713 = vadd.f32 %v3353, %v3712
    %3714 = vmatprep.mubr.f32.mxu0 %v3157
    %3715 = vmatmul.mubr.f32.gmra.mrb[0].mxu0 %v3156
    %v3716 = vpop.f32.mrb[0].mxu0
    %v3717 = vadd.f32 %v3349, %v3716
    %v3718 = vpop.f32.mrb[0].mxu0
    %v3719 = vadd.f32 %v3353, %v3718
    %3720 = vmatprep.mubr.f32.mxu0 %v3161
    %3721 = vmatmul.mubr.f32.gmra.mrb[0].mxu0 %v3160
    %v3722 = vpop.f32.mrb[0].mxu0
    %v3723 = vadd.f32 %v3349, %v3722
    %v3724 = vpop.f32.mrb[0].mxu0
    %v3725 = vadd.f32 %v3353, %v3724
    %3726 = vmatprep.mubr.f32.mxu0 %v3165
    %3727 = vmatmul.mubr.f32.gmra.mrb[0].mxu0 %v3164
    %v3728 = vpop.f32.mrb[0].mxu0
    %v3729 = vadd.f32 %v3349, %v3728
    %v3730 = vpop.f32.mrb[0].mxu0
    %v3731 = vadd.f32 %v3353, %v3730
    %3732 = vmatprep.mubr.f32.mxu0 %v3169
    %3733 = vmatmul.mubr.f32.gmra.mrb[0].mxu0 %v3168
    %v3734 = vpop.f32.mrb[0].mxu0
    %v3735 = vadd.f32 %v3349, %v3734
    %v3736 = vpop.f32.mrb[0].mxu0
    %v3737 = vadd.f32 %v3353, %v3736
    %3738 = vmatprep.mubr.f32.mxu0 %v3173
    %3739 = vmatmul.mubr.f32.gmra.mrb[0].mxu0 %v3172
    %v3740 = vpop.f32.mrb[0].mxu0
    %v3741 = vadd.f32 %v3349, %v3740
    %v3742 = vpop.f32.mrb[0].mxu0
    %v3743 = vadd.f32 %v3353, %v3742
    %3744 = vmatprep.mubr.f32.mxu0 %v3177
    %3745 = vmatmul.mubr.f32.gmra.mrb[0].mxu0 %v3176
    %v3746 = vpop.f32.mrb[0].mxu0
    %v3747 = vadd.f32 %v3349, %v3746
    %v3748 = vpop.f32.mrb[0].mxu0
    %v3749 = vadd.f32 %v3353, %v3748
    %3750 = vmatprep.mubr.f32.mxu0 %v3181
    %3751 = vmatmul.mubr.f32.gmra.mrb[0].mxu0 %v3180
    %v3752 = vpop.f32.mrb[0].mxu0
    %v3753 = vadd.f32 %v3349, %v3752
    %v3754 = vpop.f32.mrb[0].mxu0
    %v3755 = vadd.f32 %v3353, %v3754
    %3756 = vmatprep.mubr.f32.mxu0 %v3185
    %3757 = vmatmul.mubr.f32.gmra.mrb[0].mxu0 %v3184
    %v3758 = vpop.f32.mrb[0].mxu0
    %v3759 = vadd.f32 %v3349, %v3758
    %v3760 = vpop.f32.mrb[0].mxu0
    %v3761 = vadd.f32 %v3353, %v3760
    %3762 = vmatprep.mubr.f32.mxu0 %v3189
    %3763 = vmatmul.mubr.f32.gmra.mrb[0].mxu0 %v3188
    %v3764 = vpop.f32.mrb[0].mxu0
    %v3765 = vadd.f32 %v3349, %v3764
    %v3766 = vpop.f32.mrb[0].mxu0
    %v3767 = vadd.f32 %v3353, %v3766
    %3768 = vmatprep.mubr.f32.mxu0 %v3193
    %3769 = vmatmul.mubr.f32.gmra.mrb[0].mxu0 %v3192
    %v3770 = vpop.f32.mrb[0].mxu0
    %v3771 = vadd.f32 %v3349, %v3770
    %v3772 = vpop.f32.mrb[0].mxu0
    %v3773 = vadd.f32 %v3353, %v3772
    %3774 = vmatprep.mubr.f32.mxu0 %v3197
    %3775 = vmatmul.mubr.f32.gmra.mrb[0].mxu0 %v3196
    %v3776 = vpop.f32.mrb[0].mxu0
    %v3777 = vadd.f32 %v3349, %v3776
    %v3778 = vpop.f32.mrb[0].mxu0
    %v3779 = vadd.f32 %v3353, %v3778
    %3780 = vmatprep.mubr.f32.mxu0 %v3201
    %3781 = vmatmul.mubr.f32.gmra.mrb[0].mxu0 %v3200
    %v3782 = vpop.f32.mrb[0].mxu0
    %v3783 = vadd.f32 %v3349, %v3782
    %v3784 = vpop.f32.mrb[0].mxu0
    %v3785 = vadd.f32 %v3353, %v3784
    %3786 = vmatprep.mubr.f32.mxu0 %v3205
    %3787 = vmatmul.mubr.f32.gmra.mrb[0].mxu0 %v3204
    %v3788 = vpop.f32.mrb[0].mxu0
    %v3789 = vadd.f32 %v3349, %v3788
    %v3790 = vpop.f32.mrb[0].mxu0
    %v3791 = vadd.f32 %v3353, %v3790
    %3792 = vmatprep.mubr.f32.mxu0 %v3209
    %3793 = vmatmul.mubr.f32.gmra.mrb[0].mxu0 %v3208
    %v3794 = vpop.f32.mrb[0].mxu0
    %v3795 = vadd.f32 %v3349, %v3794
    %v3796 = vpop.f32.mrb[0].mxu0
    %v3797 = vadd.f32 %v3353, %v3796
    %3798 = vmatprep.mubr.f32.mxu0 %v3213
    %3799 = vmatmul.mubr.f32.gmra.mrb[0].mxu0 %v3212
    %v3800 = vpop.f32.mrb[0].mxu0
    %v3801 = vadd.f32 %v3349, %v3800
    %v3802 = vpop.f32.mrb[0].mxu0
    %v3803 = vadd.f32 %v3353, %v3802
    %3804 = vdwg.mxu0
    %3805 = vmatprep.subr.mxu0 %v3281
    %3806 = vmatpush1.msra.mxu0 %v3280
    %3807 = vmatprep.subr.mxu0 %v3283
    %3808 = vmatpush1.msra.mxu0 %v3282
    %3809 = vmatprep.subr.mxu0 %v3285
    %3810 = vmatpush1.msra.mxu0 %v3284
    %3811 = vmatprep.subr.mxu0 %v3287
    %3812 = vmatpush1.msra.mxu0 %v3286
    %3813 = vmatprep.subr.mxu0 %v3289
    %3814 = vmatpush1.msra.mxu0 %v3288
    %3815 = vmatprep.subr.mxu0 %v3291
    %3816 = vmatpush1.msra.mxu0 %v3290
    %3817 = vmatprep.subr.mxu0 %v3293
    %3818 = vmatpush1.msra.mxu0 %v3292
    %3819 = vmatprep.subr.mxu0 %v3295
    %3820 = vmatpush1.msra.mxu0 %v3294
    %3821 = vmatprep.subr.mxu0 %v3297
    %3822 = vmatpush1.msra.mxu0 %v3296
    %3823 = vmatprep.subr.mxu0 %v3299
    %3824 = vmatpush1.msra.mxu0 %v3298
    %3825 = vmatprep.subr.mxu0 %v3301
    %3826 = vmatpush1.msra.mxu0 %v3300
    %3827 = vmatprep.subr.mxu0 %v3303
    %3828 = vmatpush1.msra.mxu0 %v3302
    %3829 = vmatprep.subr.mxu0 %v3305
    %3830 = vmatpush1.msra.mxu0 %v3304
    %3831 = vmatprep.subr.mxu0 %v3307
    %3832 = vmatpush1.msra.mxu0 %v3306
    %3833 = vmatprep.subr.mxu0 %v3309
    %3834 = vmatpush1.msra.mxu0 %v3308
    %3835 = vmatprep.subr.mxu0 %v3311
    %3836 = vmatpush1.msra.mxu0 %v3310
    %3837 = vmatprep.subr.mxu0 %v3313
    %3838 = vmatpush1.msra.mxu0 %v3312
    %3839 = vmatprep.subr.mxu0 %v3315
    %3840 = vmatpush1.msra.mxu0 %v3314
    %3841 = vmatprep.subr.mxu0 %v3317
    %3842 = vmatpush1.msra.mxu0 %v3316
    %3843 = vmatprep.subr.mxu0 %v3319
    %3844 = vmatpush1.msra.mxu0 %v3318
    %3845 = vmatprep.subr.mxu0 %v3321
    %3846 = vmatpush1.msra.mxu0 %v3320
    %3847 = vmatprep.subr.mxu0 %v3323
    %3848 = vmatpush1.msra.mxu0 %v3322
    %3849 = vmatprep.subr.mxu0 %v3325
    %3850 = vmatpush1.msra.mxu0 %v3324
    %3851 = vmatprep.subr.mxu0 %v3327
    %3852 = vmatpush1.msra.mxu0 %v3326
    %3853 = vmatprep.subr.mxu0 %v3329
    %3854 = vmatpush1.msra.mxu0 %v3328
    %3855 = vmatprep.subr.mxu0 %v3331
    %3856 = vmatpush1.msra.mxu0 %v3330
    %3857 = vmatprep.subr.mxu0 %v3333
    %3858 = vmatpush1.msra.mxu0 %v3332
    %3859 = vmatprep.subr.mxu0 %v3335
    %3860 = vmatpush1.msra.mxu0 %v3334
    %3861 = vmatprep.subr.mxu0 %v3337
    %3862 = vmatpush1.msra.mxu0 %v3336
    %3863 = vmatprep.subr.mxu0 %v3339
    %3864 = vmatpush1.msra.mxu0 %v3338
    %3865 = vmatprep.subr.mxu0 %v3341
    %3866 = vmatpush1.msra.mxu0 %v3340
    %3867 = vmatprep.subr.mxu0 %v3343
    %3868 = vmatpush1.msra.mxu0 %v3342
    %3869 = vmatprep.mubr.f32.mxu0 %v2963
    %3870 = vmatmul.mubr.f32.gmra.mrb[0].mxu0 %v2962
    %v3871 = vpop.f32.mrb[0].mxu0
    %v3872 = vadd.f32 %v3423, %v3871
    %v3873 = vpop.f32.mrb[0].mxu0
    %v3874 = vadd.f32 %v3425, %v3873
    %3875 = vmatprep.mubr.f32.mxu0 %v2967
    %3876 = vmatmul.mubr.f32.gmra.mrb[0].mxu0 %v2966
    %v3877 = vpop.f32.mrb[0].mxu0
    %v3878 = vadd.f32 %v3429, %v3877
    %v3879 = vpop.f32.mrb[0].mxu0
    %v3880 = vadd.f32 %v3431, %v3879
    %3881 = vmatprep.mubr.f32.mxu0 %v2971
    %3882 = vmatmul.mubr.f32.gmra.mrb[0].mxu0 %v2970
    %v3883 = vpop.f32.mrb[0].mxu0
    %v3884 = vadd.f32 %v3435, %v3883
    %v3885 = vpop.f32.mrb[0].mxu0
    %v3886 = vadd.f32 %v3437, %v3885
    %3887 = vmatprep.mubr.f32.mxu0 %v2975
    %3888 = vmatmul.mubr.f32.gmra.mrb[0].mxu0 %v2974
    %v3889 = vpop.f32.mrb[0].mxu0
    %v3890 = vadd.f32 %v3441, %v3889
    %v3891 = vpop.f32.mrb[0].mxu0
    %v3892 = vadd.f32 %v3443, %v3891
    %3893 = vmatprep.mubr.f32.mxu0 %v2979
    %3894 = vmatmul.mubr.f32.gmra.mrb[0].mxu0 %v2978
    %v3895 = vpop.f32.mrb[0].mxu0
    %v3896 = vadd.f32 %v3447, %v3895
    %v3897 = vpop.f32.mrb[0].mxu0
    %v3898 = vadd.f32 %v3449, %v3897
    %3899 = vmatprep.mubr.f32.mxu0 %v2983
    %3900 = vmatmul.mubr.f32.gmra.mrb[0].mxu0 %v2982
    %v3901 = vpop.f32.mrb[0].mxu0
    %v3902 = vadd.f32 %v3453, %v3901
    %v3903 = vpop.f32.mrb[0].mxu0
    %v3904 = vadd.f32 %v3455, %v3903
    %3905 = vmatprep.mubr.f32.mxu0 %v2987
    %3906 = vmatmul.mubr.f32.gmra.mrb[0].mxu0 %v2986
    %v3907 = vpop.f32.mrb[0].mxu0
    %v3908 = vadd.f32 %v3459, %v3907
    %v3909 = vpop.f32.mrb[0].mxu0
    %v3910 = vadd.f32 %v3461, %v3909
    %3911 = vmatprep.mubr.f32.mxu0 %v2991
    %3912 = vmatmul.mubr.f32.gmra.mrb[0].mxu0 %v2990
    %v3913 = vpop.f32.mrb[0].mxu0
    %v3914 = vadd.f32 %v3465, %v3913
    %v3915 = vpop.f32.mrb[0].mxu0
    %v3916 = vadd.f32 %v3467, %v3915
    %3917 = vmatprep.mubr.f32.mxu0 %v2995
    %3918 = vmatmul.mubr.f32.gmra.mrb[0].mxu0 %v2994
    %v3919 = vpop.f32.mrb[0].mxu0
    %v3920 = vadd.f32 %v3471, %v3919
    %v3921 = vpop.f32.mrb[0].mxu0
    %v3922 = vadd.f32 %v3473, %v3921
    %3923 = vmatprep.mubr.f32.mxu0 %v2999
    %3924 = vmatmul.mubr.f32.gmra.mrb[0].mxu0 %v2998
    %v3925 = vpop.f32.mrb[0].mxu0
    %v3926 = vadd.f32 %v3477, %v3925
    %v3927 = vpop.f32.mrb[0].mxu0
    %v3928 = vadd.f32 %v3479, %v3927
    %3929 = vmatprep.mubr.f32.mxu0 %v3003
    %3930 = vmatmul.mubr.f32.gmra.mrb[0].mxu0 %v3002
    %v3931 = vpop.f32.mrb[0].mxu0
    %v3932 = vadd.f32 %v3483, %v3931
    %v3933 = vpop.f32.mrb[0].mxu0
    %v3934 = vadd.f32 %v3485, %v3933
    %3935 = vmatprep.mubr.f32.mxu0 %v3007
    %3936 = vmatmul.mubr.f32.gmra.mrb[0].mxu0 %v3006
    %v3937 = vpop.f32.mrb[0].mxu0
    %v3938 = vadd.f32 %v3489, %v3937
    %v3939 = vpop.f32.mrb[0].mxu0
    %v3940 = vadd.f32 %v3491, %v3939
    %3941 = vmatprep.mubr.f32.mxu0 %v3011
    %3942 = vmatmul.mubr.f32.gmra.mrb[0].mxu0 %v3010
    %v3943 = vpop.f32.mrb[0].mxu0
    %v3944 = vadd.f32 %v3495, %v3943
    %v3945 = vpop.f32.mrb[0].mxu0
    %v3946 = vadd.f32 %v3497, %v3945
    %3947 = vmatprep.mubr.f32.mxu0 %v3015
    %3948 = vmatmul.mubr.f32.gmra.mrb[0].mxu0 %v3014
    %v3949 = vpop.f32.mrb[0].mxu0
    %v3950 = vadd.f32 %v3501, %v3949
    %v3951 = vpop.f32.mrb[0].mxu0
    %v3952 = vadd.f32 %v3503, %v3951
    %3953 = vmatprep.mubr.f32.mxu0 %v3019
    %3954 = vmatmul.mubr.f32.gmra.mrb[0].mxu0 %v3018
    %v3955 = vpop.f32.mrb[0].mxu0
    %v3956 = vadd.f32 %v3507, %v3955
    %v3957 = vpop.f32.mrb[0].mxu0
    %v3958 = vadd.f32 %v3509, %v3957
    %3959 = vmatprep.mubr.f32.mxu0 %v3023
    %3960 = vmatmul.mubr.f32.gmra.mrb[0].mxu0 %v3022
    %v3961 = vpop.f32.mrb[0].mxu0
    %v3962 = vadd.f32 %v3513, %v3961
    %v3963 = vpop.f32.mrb[0].mxu0
    %v3964 = vadd.f32 %v3515, %v3963
    %3965 = vmatprep.mubr.f32.mxu0 %v3027
    %3966 = vmatmul.mubr.f32.gmra.mrb[0].mxu0 %v3026
    %v3967 = vpop.f32.mrb[0].mxu0
    %v3968 = vadd.f32 %v3519, %v3967
    %v3969 = vpop.f32.mrb[0].mxu0
    %v3970 = vadd.f32 %v3521, %v3969
    %3971 = vmatprep.mubr.f32.mxu0 %v3031
    %3972 = vmatmul.mubr.f32.gmra.mrb[0].mxu0 %v3030
    %v3973 = vpop.f32.mrb[0].mxu0
    %v3974 = vadd.f32 %v3525, %v3973
    %v3975 = vpop.f32.mrb[0].mxu0
    %v3976 = vadd.f32 %v3527, %v3975
    %3977 = vmatprep.mubr.f32.mxu0 %v3035
    %3978 = vmatmul.mubr.f32.gmra.mrb[0].mxu0 %v3034
    %v3979 = vpop.f32.mrb[0].mxu0
    %v3980 = vadd.f32 %v3531, %v3979
    %v3981 = vpop.f32.mrb[0].mxu0
    %v3982 = vadd.f32 %v3533, %v3981
    %3983 = vmatprep.mubr.f32.mxu0 %v3039
    %3984 = vmatmul.mubr.f32.gmra.mrb[0].mxu0 %v3038
    %v3985 = vpop.f32.mrb[0].mxu0
    %v3986 = vadd.f32 %v3537, %v3985
    %v3987 = vpop.f32.mrb[0].mxu0
    %v3988 = vadd.f32 %v3539, %v3987
    %3989 = vmatprep.mubr.f32.mxu0 %v3043
    %3990 = vmatmul.mubr.f32.gmra.mrb[0].mxu0 %v3042
    %v3991 = vpop.f32.mrb[0].mxu0
    %v3992 = vadd.f32 %v3543, %v3991
    %v3993 = vpop.f32.mrb[0].mxu0
    %v3994 = vadd.f32 %v3545, %v3993
    %3995 = vmatprep.mubr.f32.mxu0 %v3047
    %3996 = vmatmul.mubr.f32.gmra.mrb[0].mxu0 %v3046
    %v3997 = vpop.f32.mrb[0].mxu0
    %v3998 = vadd.f32 %v3549, %v3997
    %v3999 = vpop.f32.mrb[0].mxu0
    %v4000 = vadd.f32 %v3551, %v3999
    %4001 = vmatprep.mubr.f32.mxu0 %v3051
    %4002 = vmatmul.mubr.f32.gmra.mrb[0].mxu0 %v3050
    %v4003 = vpop.f32.mrb[0].mxu0
    %v4004 = vadd.f32 %v3555, %v4003
    %v4005 = vpop.f32.mrb[0].mxu0
    %v4006 = vadd.f32 %v3557, %v4005
    %4007 = vmatprep.mubr.f32.mxu0 %v3055
    %4008 = vmatmul.mubr.f32.gmra.mrb[0].mxu0 %v3054
    %v4009 = vpop.f32.mrb[0].mxu0
    %v4010 = vadd.f32 %v3561, %v4009
    %v4011 = vpop.f32.mrb[0].mxu0
    %v4012 = vadd.f32 %v3563, %v4011
    %4013 = vmatprep.mubr.f32.mxu0 %v3059
    %4014 = vmatmul.mubr.f32.gmra.mrb[0].mxu0 %v3058
    %v4015 = vpop.f32.mrb[0].mxu0
    %v4016 = vadd.f32 %v3567, %v4015
    %v4017 = vpop.f32.mrb[0].mxu0
    %v4018 = vadd.f32 %v3569, %v4017
    %4019 = vmatprep.mubr.f32.mxu0 %v3063
    %4020 = vmatmul.mubr.f32.gmra.mrb[0].mxu0 %v3062
    %v4021 = vpop.f32.mrb[0].mxu0
    %v4022 = vadd.f32 %v3573, %v4021
    %v4023 = vpop.f32.mrb[0].mxu0
    %v4024 = vadd.f32 %v3575, %v4023
    %4025 = vmatprep.mubr.f32.mxu0 %v3067
    %4026 = vmatmul.mubr.f32.gmra.mrb[0].mxu0 %v3066
    %v4027 = vpop.f32.mrb[0].mxu0
    %v4028 = vadd.f32 %v3579, %v4027
    %v4029 = vpop.f32.mrb[0].mxu0
    %v4030 = vadd.f32 %v3581, %v4029
    %4031 = vmatprep.mubr.f32.mxu0 %v3071
    %4032 = vmatmul.mubr.f32.gmra.mrb[0].mxu0 %v3070
    %v4033 = vpop.f32.mrb[0].mxu0
    %v4034 = vadd.f32 %v3585, %v4033
    %v4035 = vpop.f32.mrb[0].mxu0
    %v4036 = vadd.f32 %v3587, %v4035
    %4037 = vmatprep.mubr.f32.mxu0 %v3075
    %4038 = vmatmul.mubr.f32.gmra.mrb[0].mxu0 %v3074
    %v4039 = vpop.f32.mrb[0].mxu0
    %v4040 = vadd.f32 %v3591, %v4039
    %v4041 = vpop.f32.mrb[0].mxu0
    %v4042 = vadd.f32 %v3593, %v4041
    %4043 = vmatprep.mubr.f32.mxu0 %v3079
    %4044 = vmatmul.mubr.f32.gmra.mrb[0].mxu0 %v3078
    %v4045 = vpop.f32.mrb[0].mxu0
    %v4046 = vadd.f32 %v3597, %v4045
    %v4047 = vpop.f32.mrb[0].mxu0
    %v4048 = vadd.f32 %v3599, %v4047
    %4049 = vmatprep.mubr.f32.mxu0 %v3083
    %4050 = vmatmul.mubr.f32.gmra.mrb[0].mxu0 %v3082
    %v4051 = vpop.f32.mrb[0].mxu0
    %v4052 = vadd.f32 %v3603, %v4051
    %v4053 = vpop.f32.mrb[0].mxu0
    %v4054 = vadd.f32 %v3605, %v4053
    %4055 = vmatprep.mubr.f32.mxu0 %v3087
    %4056 = vmatmul.mubr.f32.gmra.mrb[0].mxu0 %v3086
    %v4057 = vpop.f32.mrb[0].mxu0
    %v4058 = vadd.f32 %v3609, %v4057
    %v4059 = vpop.f32.mrb[0].mxu0
    %v4060 = vadd.f32 %v3611, %v4059
    %4061 = vmatprep.mubr.f32.mxu0 %v3091
    %4062 = vmatmul.mubr.f32.gmra.mrb[0].mxu0 %v3090
    %v4063 = vpop.f32.mrb[0].mxu0
    %v4064 = vadd.f32 %v3615, %v4063
    %v4065 = vpop.f32.mrb[0].mxu0
    %v4066 = vadd.f32 %v3617, %v4065
    %4067 = vmatprep.mubr.f32.mxu0 %v3095
    %4068 = vmatmul.mubr.f32.gmra.mrb[0].mxu0 %v3094
    %v4069 = vpop.f32.mrb[0].mxu0
    %v4070 = vadd.f32 %v3621, %v4069
    %v4071 = vpop.f32.mrb[0].mxu0
    %v4072 = vadd.f32 %v3623, %v4071
    %4073 = vmatprep.mubr.f32.mxu0 %v3099
    %4074 = vmatmul.mubr.f32.gmra.mrb[0].mxu0 %v3098
    %v4075 = vpop.f32.mrb[0].mxu0
    %v4076 = vadd.f32 %v3627, %v4075
    %v4077 = vpop.f32.mrb[0].mxu0
    %v4078 = vadd.f32 %v3629, %v4077
    %4079 = vmatprep.mubr.f32.mxu0 %v3103
    %4080 = vmatmul.mubr.f32.gmra.mrb[0].mxu0 %v3102
    %v4081 = vpop.f32.mrb[0].mxu0
    %v4082 = vadd.f32 %v3633, %v4081
    %v4083 = vpop.f32.mrb[0].mxu0
    %v4084 = vadd.f32 %v3635, %v4083
    %4085 = vmatprep.mubr.f32.mxu0 %v3107
    %4086 = vmatmul.mubr.f32.gmra.mrb[0].mxu0 %v3106
    %v4087 = vpop.f32.mrb[0].mxu0
    %v4088 = vadd.f32 %v3639, %v4087
    %v4089 = vpop.f32.mrb[0].mxu0
    %v4090 = vadd.f32 %v3641, %v4089
    %4091 = vmatprep.mubr.f32.mxu0 %v3111
    %4092 = vmatmul.mubr.f32.gmra.mrb[0].mxu0 %v3110
    %v4093 = vpop.f32.mrb[0].mxu0
    %v4094 = vadd.f32 %v3645, %v4093
    %v4095 = vpop.f32.mrb[0].mxu0
    %v4096 = vadd.f32 %v3647, %v4095
    %4097 = vmatprep.mubr.f32.mxu0 %v3115
    %4098 = vmatmul.mubr.f32.gmra.mrb[0].mxu0 %v3114
    %v4099 = vpop.f32.mrb[0].mxu0
    %v4100 = vadd.f32 %v3651, %v4099
    %v4101 = vpop.f32.mrb[0].mxu0
    %v4102 = vadd.f32 %v3653, %v4101
    %4103 = vmatprep.mubr.f32.mxu0 %v3119
    %4104 = vmatmul.mubr.f32.gmra.mrb[0].mxu0 %v3118
    %v4105 = vpop.f32.mrb[0].mxu0
    %v4106 = vadd.f32 %v3657, %v4105
    %v4107 = vpop.f32.mrb[0].mxu0
    %v4108 = vadd.f32 %v3659, %v4107
    %4109 = vmatprep.mubr.f32.mxu0 %v3123
    %4110 = vmatmul.mubr.f32.gmra.mrb[0].mxu0 %v3122
    %v4111 = vpop.f32.mrb[0].mxu0
    %v4112 = vadd.f32 %v3663, %v4111
    %v4113 = vpop.f32.mrb[0].mxu0
    %v4114 = vadd.f32 %v3665, %v4113
    %4115 = vmatprep.mubr.f32.mxu0 %v3127
    %4116 = vmatmul.mubr.f32.gmra.mrb[0].mxu0 %v3126
    %v4117 = vpop.f32.mrb[0].mxu0
    %v4118 = vadd.f32 %v3669, %v4117
    %v4119 = vpop.f32.mrb[0].mxu0
    %v4120 = vadd.f32 %v3671, %v4119
    %4121 = vmatprep.mubr.f32.mxu0 %v3131
    %4122 = vmatmul.mubr.f32.gmra.mrb[0].mxu0 %v3130
    %v4123 = vpop.f32.mrb[0].mxu0
    %v4124 = vadd.f32 %v3675, %v4123
    %v4125 = vpop.f32.mrb[0].mxu0
    %v4126 = vadd.f32 %v3677, %v4125
    %4127 = vmatprep.mubr.f32.mxu0 %v3135
    %4128 = vmatmul.mubr.f32.gmra.mrb[0].mxu0 %v3134
    %v4129 = vpop.f32.mrb[0].mxu0
    %v4130 = vadd.f32 %v3681, %v4129
    %v4131 = vpop.f32.mrb[0].mxu0
    %v4132 = vadd.f32 %v3683, %v4131
    %4133 = vmatprep.mubr.f32.mxu0 %v3139
    %4134 = vmatmul.mubr.f32.gmra.mrb[0].mxu0 %v3138
    %v4135 = vpop.f32.mrb[0].mxu0
    %v4136 = vadd.f32 %v3687, %v4135
    %v4137 = vpop.f32.mrb[0].mxu0
    %v4138 = vadd.f32 %v3689, %v4137
    %4139 = vmatprep.mubr.f32.mxu0 %v3143
    %4140 = vmatmul.mubr.f32.gmra.mrb[0].mxu0 %v3142
    %v4141 = vpop.f32.mrb[0].mxu0
    %v4142 = vadd.f32 %v3693, %v4141
    %v4143 = vpop.f32.mrb[0].mxu0
    %v4144 = vadd.f32 %v3695, %v4143
    %4145 = vmatprep.mubr.f32.mxu0 %v3147
    %4146 = vmatmul.mubr.f32.gmra.mrb[0].mxu0 %v3146
    %v4147 = vpop.f32.mrb[0].mxu0
    %v4148 = vadd.f32 %v3699, %v4147
    %v4149 = vpop.f32.mrb[0].mxu0
    %v4150 = vadd.f32 %v3701, %v4149
    %4151 = vmatprep.mubr.f32.mxu0 %v3151
    %4152 = vmatmul.mubr.f32.gmra.mrb[0].mxu0 %v3150
    %v4153 = vpop.f32.mrb[0].mxu0
    %v4154 = vadd.f32 %v3705, %v4153
    %v4155 = vpop.f32.mrb[0].mxu0
    %v4156 = vadd.f32 %v3707, %v4155
    %4157 = vmatprep.mubr.f32.mxu0 %v3155
    %4158 = vmatmul.mubr.f32.gmra.mrb[0].mxu0 %v3154
    %v4159 = vpop.f32.mrb[0].mxu0
    %v4160 = vadd.f32 %v3711, %v4159
    %v4161 = vpop.f32.mrb[0].mxu0
    %v4162 = vadd.f32 %v3713, %v4161
    %4163 = vmatprep.mubr.f32.mxu0 %v3159
    %4164 = vmatmul.mubr.f32.gmra.mrb[0].mxu0 %v3158
    %v4165 = vpop.f32.mrb[0].mxu0
    %v4166 = vadd.f32 %v3717, %v4165
    %v4167 = vpop.f32.mrb[0].mxu0
    %v4168 = vadd.f32 %v3719, %v4167
    %4169 = vmatprep.mubr.f32.mxu0 %v3163
    %4170 = vmatmul.mubr.f32.gmra.mrb[0].mxu0 %v3162
    %v4171 = vpop.f32.mrb[0].mxu0
    %v4172 = vadd.f32 %v3723, %v4171
    %v4173 = vpop.f32.mrb[0].mxu0
    %v4174 = vadd.f32 %v3725, %v4173
    %4175 = vmatprep.mubr.f32.mxu0 %v3167
    %4176 = vmatmul.mubr.f32.gmra.mrb[0].mxu0 %v3166
    %v4177 = vpop.f32.mrb[0].mxu0
    %v4178 = vadd.f32 %v3729, %v4177
    %v4179 = vpop.f32.mrb[0].mxu0
    %v4180 = vadd.f32 %v3731, %v4179
    %4181 = vmatprep.mubr.f32.mxu0 %v3171
    %4182 = vmatmul.mubr.f32.gmra.mrb[0].mxu0 %v3170
    %v4183 = vpop.f32.mrb[0].mxu0
    %v4184 = vadd.f32 %v3735, %v4183
    %v4185 = vpop.f32.mrb[0].mxu0
    %v4186 = vadd.f32 %v3737, %v4185
    %4187 = vmatprep.mubr.f32.mxu0 %v3175
    %4188 = vmatmul.mubr.f32.gmra.mrb[0].mxu0 %v3174
    %v4189 = vpop.f32.mrb[0].mxu0
    %v4190 = vadd.f32 %v3741, %v4189
    %v4191 = vpop.f32.mrb[0].mxu0
    %v4192 = vadd.f32 %v3743, %v4191
    %4193 = vmatprep.mubr.f32.mxu0 %v3179
    %4194 = vmatmul.mubr.f32.gmra.mrb[0].mxu0 %v3178
    %v4195 = vpop.f32.mrb[0].mxu0
    %v4196 = vadd.f32 %v3747, %v4195
    %v4197 = vpop.f32.mrb[0].mxu0
    %v4198 = vadd.f32 %v3749, %v4197
    %4199 = vmatprep.mubr.f32.mxu0 %v3183
    %4200 = vmatmul.mubr.f32.gmra.mrb[0].mxu0 %v3182
    %v4201 = vpop.f32.mrb[0].mxu0
    %v4202 = vadd.f32 %v3753, %v4201
    %v4203 = vpop.f32.mrb[0].mxu0
    %v4204 = vadd.f32 %v3755, %v4203
    %4205 = vmatprep.mubr.f32.mxu0 %v3187
    %4206 = vmatmul.mubr.f32.gmra.mrb[0].mxu0 %v3186
    %v4207 = vpop.f32.mrb[0].mxu0
    %v4208 = vadd.f32 %v3759, %v4207
    %v4209 = vpop.f32.mrb[0].mxu0
    %v4210 = vadd.f32 %v3761, %v4209
    %4211 = vmatprep.mubr.f32.mxu0 %v3191
    %4212 = vmatmul.mubr.f32.gmra.mrb[0].mxu0 %v3190
    %v4213 = vpop.f32.mrb[0].mxu0
    %v4214 = vadd.f32 %v3765, %v4213
    %v4215 = vpop.f32.mrb[0].mxu0
    %v4216 = vadd.f32 %v3767, %v4215
    %4217 = vmatprep.mubr.f32.mxu0 %v3195
    %4218 = vmatmul.mubr.f32.gmra.mrb[0].mxu0 %v3194
    %v4219 = vpop.f32.mrb[0].mxu0
    %v4220 = vadd.f32 %v3771, %v4219
    %v4221 = vpop.f32.mrb[0].mxu0
    %v4222 = vadd.f32 %v3773, %v4221
    %4223 = vmatprep.mubr.f32.mxu0 %v3199
    %4224 = vmatmul.mubr.f32.gmra.mrb[0].mxu0 %v3198
    %v4225 = vpop.f32.mrb[0].mxu0
    %v4226 = vadd.f32 %v3777, %v4225
    %v4227 = vpop.f32.mrb[0].mxu0
    %v4228 = vadd.f32 %v3779, %v4227
    %4229 = vmatprep.mubr.f32.mxu0 %v3203
    %4230 = vmatmul.mubr.f32.gmra.mrb[0].mxu0 %v3202
    %v4231 = vpop.f32.mrb[0].mxu0
    %v4232 = vadd.f32 %v3783, %v4231
    %v4233 = vpop.f32.mrb[0].mxu0
    %v4234 = vadd.f32 %v3785, %v4233
    %4235 = vmatprep.mubr.f32.mxu0 %v3207
    %4236 = vmatmul.mubr.f32.gmra.mrb[0].mxu0 %v3206
    %v4237 = vpop.f32.mrb[0].mxu0
    %v4238 = vadd.f32 %v3789, %v4237
    %v4239 = vpop.f32.mrb[0].mxu0
    %v4240 = vadd.f32 %v3791, %v4239
    %4241 = vmatprep.mubr.f32.mxu0 %v3211
    %4242 = vmatmul.mubr.f32.gmra.mrb[0].mxu0 %v3210
    %v4243 = vpop.f32.mrb[0].mxu0
    %v4244 = vadd.f32 %v3795, %v4243
    %v4245 = vpop.f32.mrb[0].mxu0
    %v4246 = vadd.f32 %v3797, %v4245
    %4247 = vmatprep.mubr.f32.mxu0 %v3215
    %4248 = vmatmul.mubr.f32.gmra.mrb[0].mxu0 %v3214
    %v4249 = vpop.f32.mrb[0].mxu0
    %v4250 = vadd.f32 %v3801, %v4249
    %v4251 = vpop.f32.mrb[0].mxu0
    %v4252 = vadd.f32 %v3803, %v4251
    %4253 = vdwg.mxu0
    %v4254 = vmax.f32 %v3872, 0.0
    %v4255 = vmax.f32 %v3874, 0.0
    %v4256 = vmax.f32 %v3878, 0.0
    %v4257 = vmax.f32 %v3880, 0.0
    %v4258 = vmax.f32 %v3884, 0.0
    %v4259 = vmax.f32 %v3886, 0.0
    %v4260 = vmax.f32 %v3890, 0.0
    %v4261 = vmax.f32 %v3892, 0.0
    %v4262 = vmax.f32 %v3896, 0.0
    %v4263 = vmax.f32 %v3898, 0.0
    %v4264 = vmax.f32 %v3902, 0.0
    %v4265 = vmax.f32 %v3904, 0.0
    %v4266 = vmax.f32 %v3908, 0.0
    %v4267 = vmax.f32 %v3910, 0.0
    %v4268 = vmax.f32 %v3914, 0.0
    %v4269 = vmax.f32 %v3916, 0.0
    %v4270 = vmax.f32 %v3920, 0.0
    %v4271 = vmax.f32 %v3922, 0.0
    %v4272 = vmax.f32 %v3926, 0.0
    %v4273 = vmax.f32 %v3928, 0.0
    %v4274 = vmax.f32 %v3932, 0.0
    %v4275 = vmax.f32 %v3934, 0.0
    %v4276 = vmax.f32 %v3938, 0.0
    %v4277 = vmax.f32 %v3940, 0.0
    %v4278 = vmax.f32 %v3944, 0.0
    %v4279 = vmax.f32 %v3946, 0.0
    %v4280 = vmax.f32 %v3950, 0.0
    %v4281 = vmax.f32 %v3952, 0.0
    %v4282 = vmax.f32 %v3956, 0.0
    %v4283 = vmax.f32 %v3958, 0.0
    %v4284 = vmax.f32 %v3962, 0.0
    %v4285 = vmax.f32 %v3964, 0.0
    %v4286 = vmax.f32 %v3968, 0.0
    %v4287 = vmax.f32 %v3970, 0.0
    %v4288 = vmax.f32 %v3974, 0.0
    %v4289 = vmax.f32 %v3976, 0.0
    %v4290 = vmax.f32 %v3980, 0.0
    %v4291 = vmax.f32 %v3982, 0.0
    %v4292 = vmax.f32 %v3986, 0.0
    %v4293 = vmax.f32 %v3988, 0.0
    %v4294 = vmax.f32 %v3992, 0.0
    %v4295 = vmax.f32 %v3994, 0.0
    %v4296 = vmax.f32 %v3998, 0.0
    %v4297 = vmax.f32 %v4000, 0.0
    %v4298 = vmax.f32 %v4004, 0.0
    %v4299 = vmax.f32 %v4006, 0.0
    %v4300 = vmax.f32 %v4010, 0.0
    %v4301 = vmax.f32 %v4012, 0.0
    %v4302 = vmax.f32 %v4016, 0.0
    %v4303 = vmax.f32 %v4018, 0.0
    %v4304 = vmax.f32 %v4022, 0.0
    %v4305 = vmax.f32 %v4024, 0.0
    %v4306 = vmax.f32 %v4028, 0.0
    %v4307 = vmax.f32 %v4030, 0.0
    %v4308 = vmax.f32 %v4034, 0.0
    %v4309 = vmax.f32 %v4036, 0.0
    %v4310 = vmax.f32 %v4040, 0.0
    %v4311 = vmax.f32 %v4042, 0.0
    %v4312 = vmax.f32 %v4046, 0.0
    %v4313 = vmax.f32 %v4048, 0.0
    %v4314 = vmax.f32 %v4052, 0.0
    %v4315 = vmax.f32 %v4054, 0.0
    %v4316 = vmax.f32 %v4058, 0.0
    %v4317 = vmax.f32 %v4060, 0.0
    %v4318 = vmax.f32 %v4064, 0.0
    %v4319 = vmax.f32 %v4066, 0.0
    %v4320 = vmax.f32 %v4070, 0.0
    %v4321 = vmax.f32 %v4072, 0.0
    %v4322 = vmax.f32 %v4076, 0.0
    %v4323 = vmax.f32 %v4078, 0.0
    %v4324 = vmax.f32 %v4082, 0.0
    %v4325 = vmax.f32 %v4084, 0.0
    %v4326 = vmax.f32 %v4088, 0.0
    %v4327 = vmax.f32 %v4090, 0.0
    %v4328 = vmax.f32 %v4094, 0.0
    %v4329 = vmax.f32 %v4096, 0.0
    %v4330 = vmax.f32 %v4100, 0.0
    %v4331 = vmax.f32 %v4102, 0.0
    %v4332 = vmax.f32 %v4106, 0.0
    %v4333 = vmax.f32 %v4108, 0.0
    %v4334 = vmax.f32 %v4112, 0.0
    %v4335 = vmax.f32 %v4114, 0.0
    %v4336 = vmax.f32 %v4118, 0.0
    %v4337 = vmax.f32 %v4120, 0.0
    %v4338 = vmax.f32 %v4124, 0.0
    %v4339 = vmax.f32 %v4126, 0.0
    %v4340 = vmax.f32 %v4130, 0.0
    %v4341 = vmax.f32 %v4132, 0.0
    %v4342 = vmax.f32 %v4136, 0.0
    %v4343 = vmax.f32 %v4138, 0.0
    %v4344 = vmax.f32 %v4142, 0.0
    %v4345 = vmax.f32 %v4144, 0.0
    %v4346 = vmax.f32 %v4148, 0.0
    %v4347 = vmax.f32 %v4150, 0.0
    %v4348 = vmax.f32 %v4154, 0.0
    %v4349 = vmax.f32 %v4156, 0.0
    %v4350 = vmax.f32 %v4160, 0.0
    %v4351 = vmax.f32 %v4162, 0.0
    %v4352 = vmax.f32 %v4166, 0.0
    %v4353 = vmax.f32 %v4168, 0.0
    %v4354 = vmax.f32 %v4172, 0.0
    %v4355 = vmax.f32 %v4174, 0.0
    %v4356 = vmax.f32 %v4178, 0.0
    %v4357 = vmax.f32 %v4180, 0.0
    %v4358 = vmax.f32 %v4184, 0.0
    %v4359 = vmax.f32 %v4186, 0.0
    %v4360 = vmax.f32 %v4190, 0.0
    %v4361 = vmax.f32 %v4192, 0.0
    %v4362 = vmax.f32 %v4196, 0.0
    %v4363 = vmax.f32 %v4198, 0.0
    %v4364 = vmax.f32 %v4202, 0.0
    %v4365 = vmax.f32 %v4204, 0.0
    %v4366 = vmax.f32 %v4208, 0.0
    %v4367 = vmax.f32 %v4210, 0.0
    %v4368 = vmax.f32 %v4214, 0.0
    %v4369 = vmax.f32 %v4216, 0.0
    %v4370 = vmax.f32 %v4220, 0.0
    %v4371 = vmax.f32 %v4222, 0.0
    %v4372 = vmax.f32 %v4226, 0.0
    %v4373 = vmax.f32 %v4228, 0.0
    %v4374 = vmax.f32 %v4232, 0.0
    %v4375 = vmax.f32 %v4234, 0.0
    %v4376 = vmax.f32 %v4238, 0.0
    %v4377 = vmax.f32 %v4240, 0.0
    %v4378 = vmax.f32 %v4244, 0.0
    %v4379 = vmax.f32 %v4246, 0.0
    %v4380 = vmax.f32 %v4250, 0.0
    %v4381 = vmax.f32 %v4252, 0.0
    %v4382 = vld [vmem:[#allocation4] sm:$0xff]
    %v4383 = vld [vmem:[#allocation4 + $0x8] sm:$0xff]
    %v4384 = vld [vmem:[#allocation4 + $0x10] sm:$0xff]
    %v4385 = vld [vmem:[#allocation4 + $0x18] sm:$0xff]
    %v4386 = vld [vmem:[#allocation4 + $0x20] sm:$0xff]
    %v4387 = vld [vmem:[#allocation4 + $0x28] sm:$0xff]
    %v4388 = vld [vmem:[#allocation4 + $0x30] sm:$0xff]
    %v4389 = vld [vmem:[#allocation4 + $0x38] sm:$0xff]
    %v4390 = vld [vmem:[#allocation4 + $0x40] sm:$0xff]
    %v4391 = vld [vmem:[#allocation4 + $0x48] sm:$0xff]
    %v4392 = vld [vmem:[#allocation4 + $0x50] sm:$0xff]
    %v4393 = vld [vmem:[#allocation4 + $0x58] sm:$0xff]
    %v4394 = vld [vmem:[#allocation4 + $0x60] sm:$0xff]
    %v4395 = vld [vmem:[#allocation4 + $0x68] sm:$0xff]
    %v4396 = vld [vmem:[#allocation4 + $0x70] sm:$0xff]
    %v4397 = vld [vmem:[#allocation4 + $0x78] sm:$0xff]
    %v4398 = vld [vmem:[#allocation4 + $0x80] sm:$0xff]
    %v4399 = vld [vmem:[#allocation4 + $0x88] sm:$0xff]
    %v4400 = vld [vmem:[#allocation4 + $0x90] sm:$0xff]
    %v4401 = vld [vmem:[#allocation4 + $0x98] sm:$0xff]
    %v4402 = vld [vmem:[#allocation4 + $0xa0] sm:$0xff]
    %v4403 = vld [vmem:[#allocation4 + $0xa8] sm:$0xff]
    %v4404 = vld [vmem:[#allocation4 + $0xb0] sm:$0xff]
    %v4405 = vld [vmem:[#allocation4 + $0xb8] sm:$0xff]
    %v4406 = vld [vmem:[#allocation4 + $0xc0] sm:$0xff]
    %v4407 = vld [vmem:[#allocation4 + $0xc8] sm:$0xff]
    %v4408 = vld [vmem:[#allocation4 + $0xd0] sm:$0xff]
    %v4409 = vld [vmem:[#allocation4 + $0xd8] sm:$0xff]
    %v4410 = vld [vmem:[#allocation4 + $0xe0] sm:$0xff]
    %v4411 = vld [vmem:[#allocation4 + $0xe8] sm:$0xff]
    %v4412 = vld [vmem:[#allocation4 + $0xf0] sm:$0xff]
    %v4413 = vld [vmem:[#allocation4 + $0xf8] sm:$0xff]
    %v4414 = vld [vmem:[#allocation4 + $0x100] sm:$0xff]
    %v4415 = vld [vmem:[#allocation4 + $0x108] sm:$0xff]
    %v4416 = vld [vmem:[#allocation4 + $0x110] sm:$0xff]
    %v4417 = vld [vmem:[#allocation4 + $0x118] sm:$0xff]
    %v4418 = vld [vmem:[#allocation4 + $0x120] sm:$0xff]
    %v4419 = vld [vmem:[#allocation4 + $0x128] sm:$0xff]
    %v4420 = vld [vmem:[#allocation4 + $0x130] sm:$0xff]
    %v4421 = vld [vmem:[#allocation4 + $0x138] sm:$0xff]
    %v4422 = vld [vmem:[#allocation4 + $0x140] sm:$0xff]
    %v4423 = vld [vmem:[#allocation4 + $0x148] sm:$0xff]
    %v4424 = vld [vmem:[#allocation4 + $0x150] sm:$0xff]
    %v4425 = vld [vmem:[#allocation4 + $0x158] sm:$0xff]
    %v4426 = vld [vmem:[#allocation4 + $0x160] sm:$0xff]
    %v4427 = vld [vmem:[#allocation4 + $0x168] sm:$0xff]
    %v4428 = vld [vmem:[#allocation4 + $0x170] sm:$0xff]
    %v4429 = vld [vmem:[#allocation4 + $0x178] sm:$0xff]
    %v4430 = vld [vmem:[#allocation4 + $0x180] sm:$0xff]
    %v4431 = vld [vmem:[#allocation4 + $0x188] sm:$0xff]
    %v4432 = vld [vmem:[#allocation4 + $0x190] sm:$0xff]
    %v4433 = vld [vmem:[#allocation4 + $0x198] sm:$0xff]
    %v4434 = vld [vmem:[#allocation4 + $0x1a0] sm:$0xff]
    %v4435 = vld [vmem:[#allocation4 + $0x1a8] sm:$0xff]
    %v4436 = vld [vmem:[#allocation4 + $0x1b0] sm:$0xff]
    %v4437 = vld [vmem:[#allocation4 + $0x1b8] sm:$0xff]
    %v4438 = vld [vmem:[#allocation4 + $0x1c0] sm:$0xff]
    %v4439 = vld [vmem:[#allocation4 + $0x1c8] sm:$0xff]
    %v4440 = vld [vmem:[#allocation4 + $0x1d0] sm:$0xff]
    %v4441 = vld [vmem:[#allocation4 + $0x1d8] sm:$0xff]
    %v4442 = vld [vmem:[#allocation4 + $0x1e0] sm:$0xff]
    %v4443 = vld [vmem:[#allocation4 + $0x1e8] sm:$0xff]
    %v4444 = vld [vmem:[#allocation4 + $0x1f0] sm:$0xff]
    %v4445 = vld [vmem:[#allocation4 + $0x1f8] sm:$0xff]
    %v4446 = vld [vmem:[%s8] sm:$0x3]
    %v4448 = vlaneseq
    %v4449 = vshrl.u32 %v4448, 7
    %v4450 = vsub.s32 0, %v4449
    %v4451 = vrot.slane %v4446, %v4450
    %v4452 = vlaneseq
    %v4453 = vshrl.u32 %v4452, 7
    %v4454 = vsub.s32 1, %v4453
    %v4455 = vrot.slane %v4446, %v4454
    %4458 = vmatprep.subr.mxu0 %v4383
    %4459 = vmatpush1.msra.mxu0 %v4382
    %4460 = vmatprep.subr.mxu0 %v4385
    %4461 = vmatpush1.msra.mxu0 %v4384
    %4462 = vmatprep.subr.mxu0 %v4387
    %4463 = vmatpush1.msra.mxu0 %v4386
    %4464 = vmatprep.subr.mxu0 %v4389
    %4465 = vmatpush1.msra.mxu0 %v4388
    %4466 = vmatprep.subr.mxu0 %v4391
    %4467 = vmatpush1.msra.mxu0 %v4390
    %4468 = vmatprep.subr.mxu0 %v4393
    %4469 = vmatpush1.msra.mxu0 %v4392
    %4470 = vmatprep.subr.mxu0 %v4395
    %4471 = vmatpush1.msra.mxu0 %v4394
    %4472 = vmatprep.subr.mxu0 %v4397
    %4473 = vmatpush1.msra.mxu0 %v4396
    %4474 = vmatprep.subr.mxu0 %v4399
    %4475 = vmatpush1.msra.mxu0 %v4398
    %4476 = vmatprep.subr.mxu0 %v4401
    %4477 = vmatpush1.msra.mxu0 %v4400
    %4478 = vmatprep.subr.mxu0 %v4403
    %4479 = vmatpush1.msra.mxu0 %v4402
    %4480 = vmatprep.subr.mxu0 %v4405
    %4481 = vmatpush1.msra.mxu0 %v4404
    %4482 = vmatprep.subr.mxu0 %v4407
    %4483 = vmatpush1.msra.mxu0 %v4406
    %4484 = vmatprep.subr.mxu0 %v4409
    %4485 = vmatpush1.msra.mxu0 %v4408
    %4486 = vmatprep.subr.mxu0 %v4411
    %4487 = vmatpush1.msra.mxu0 %v4410
    %4488 = vmatprep.subr.mxu0 %v4413
    %4489 = vmatpush1.msra.mxu0 %v4412
    %4490 = vmatprep.subr.mxu0 %v4415
    %4491 = vmatpush1.msra.mxu0 %v4414
    %4492 = vmatprep.subr.mxu0 %v4417
    %4493 = vmatpush1.msra.mxu0 %v4416
    %4494 = vmatprep.subr.mxu0 %v4419
    %4495 = vmatpush1.msra.mxu0 %v4418
    %4496 = vmatprep.subr.mxu0 %v4421
    %4497 = vmatpush1.msra.mxu0 %v4420
    %4498 = vmatprep.subr.mxu0 %v4423
    %4499 = vmatpush1.msra.mxu0 %v4422
    %4500 = vmatprep.subr.mxu0 %v4425
    %4501 = vmatpush1.msra.mxu0 %v4424
    %4502 = vmatprep.subr.mxu0 %v4427
    %4503 = vmatpush1.msra.mxu0 %v4426
    %4504 = vmatprep.subr.mxu0 %v4429
    %4505 = vmatpush1.msra.mxu0 %v4428
    %4506 = vmatprep.subr.mxu0 %v4431
    %4507 = vmatpush1.msra.mxu0 %v4430
    %4508 = vmatprep.subr.mxu0 %v4433
    %4509 = vmatpush1.msra.mxu0 %v4432
    %4510 = vmatprep.subr.mxu0 %v4435
    %4511 = vmatpush1.msra.mxu0 %v4434
    %4512 = vmatprep.subr.mxu0 %v4437
    %4513 = vmatpush1.msra.mxu0 %v4436
    %4514 = vmatprep.subr.mxu0 %v4439
    %4515 = vmatpush1.msra.mxu0 %v4438
    %4516 = vmatprep.subr.mxu0 %v4441
    %4517 = vmatpush1.msra.mxu0 %v4440
    %4518 = vmatprep.subr.mxu0 %v4443
    %4519 = vmatpush1.msra.mxu0 %v4442
    %4520 = vmatprep.subr.mxu0 %v4445
    %4521 = vmatpush1.msra.mxu0 %v4444
    %4522 = vmatprep.mubr.f32.mxu0 %v4255
    %4523 = vmatmul.mubr.f32.gmra.mrb[0].mxu0 %v4254
    %v4524 = vpop.f32.mrb[0].mxu0
    %v4525 = vadd.f32 %v4451, %v4524
    %v4526 = vpop.f32.mrb[0].mxu0
    %v4527 = vadd.f32 %v4455, %v4526
    %4528 = vmatprep.mubr.f32.mxu0 %v4257
    %4529 = vmatmul.mubr.f32.gmra.mrb[0].mxu0 %v4256
    %v4530 = vpop.f32.mrb[0].mxu0
    %v4531 = vadd.f32 %v4451, %v4530
    %v4532 = vpop.f32.mrb[0].mxu0
    %v4533 = vadd.f32 %v4455, %v4532
    %4534 = vmatprep.mubr.f32.mxu0 %v4259
    %4535 = vmatmul.mubr.f32.gmra.mrb[0].mxu0 %v4258
    %v4536 = vpop.f32.mrb[0].mxu0
    %v4537 = vadd.f32 %v4451, %v4536
    %v4538 = vpop.f32.mrb[0].mxu0
    %v4539 = vadd.f32 %v4455, %v4538
    %4540 = vmatprep.mubr.f32.mxu0 %v4261
    %4541 = vmatmul.mubr.f32.gmra.mrb[0].mxu0 %v4260
    %v4542 = vpop.f32.mrb[0].mxu0
    %v4543 = vadd.f32 %v4451, %v4542
    %v4544 = vpop.f32.mrb[0].mxu0
    %v4545 = vadd.f32 %v4455, %v4544
    %4546 = vmatprep.mubr.f32.mxu0 %v4263
    %4547 = vmatmul.mubr.f32.gmra.mrb[0].mxu0 %v4262
    %v4548 = vpop.f32.mrb[0].mxu0
    %v4549 = vadd.f32 %v4451, %v4548
    %v4550 = vpop.f32.mrb[0].mxu0
    %v4551 = vadd.f32 %v4455, %v4550
    %4552 = vmatprep.mubr.f32.mxu0 %v4265
    %4553 = vmatmul.mubr.f32.gmra.mrb[0].mxu0 %v4264
    %v4554 = vpop.f32.mrb[0].mxu0
    %v4555 = vadd.f32 %v4451, %v4554
    %v4556 = vpop.f32.mrb[0].mxu0
    %v4557 = vadd.f32 %v4455, %v4556
    %4558 = vmatprep.mubr.f32.mxu0 %v4267
    %4559 = vmatmul.mubr.f32.gmra.mrb[0].mxu0 %v4266
    %v4560 = vpop.f32.mrb[0].mxu0
    %v4561 = vadd.f32 %v4451, %v4560
    %v4562 = vpop.f32.mrb[0].mxu0
    %v4563 = vadd.f32 %v4455, %v4562
    %4564 = vmatprep.mubr.f32.mxu0 %v4269
    %4565 = vmatmul.mubr.f32.gmra.mrb[0].mxu0 %v4268
    %v4566 = vpop.f32.mrb[0].mxu0
    %v4567 = vadd.f32 %v4451, %v4566
    %v4568 = vpop.f32.mrb[0].mxu0
    %v4569 = vadd.f32 %v4455, %v4568
    %4570 = vmatprep.mubr.f32.mxu0 %v4271
    %4571 = vmatmul.mubr.f32.gmra.mrb[0].mxu0 %v4270
    %v4572 = vpop.f32.mrb[0].mxu0
    %v4573 = vadd.f32 %v4451, %v4572
    %v4574 = vpop.f32.mrb[0].mxu0
    %v4575 = vadd.f32 %v4455, %v4574
    %4576 = vmatprep.mubr.f32.mxu0 %v4273
    %4577 = vmatmul.mubr.f32.gmra.mrb[0].mxu0 %v4272
    %v4578 = vpop.f32.mrb[0].mxu0
    %v4579 = vadd.f32 %v4451, %v4578
    %v4580 = vpop.f32.mrb[0].mxu0
    %v4581 = vadd.f32 %v4455, %v4580
    %4582 = vmatprep.mubr.f32.mxu0 %v4275
    %4583 = vmatmul.mubr.f32.gmra.mrb[0].mxu0 %v4274
    %v4584 = vpop.f32.mrb[0].mxu0
    %v4585 = vadd.f32 %v4451, %v4584
    %v4586 = vpop.f32.mrb[0].mxu0
    %v4587 = vadd.f32 %v4455, %v4586
    %4588 = vmatprep.mubr.f32.mxu0 %v4277
    %4589 = vmatmul.mubr.f32.gmra.mrb[0].mxu0 %v4276
    %v4590 = vpop.f32.mrb[0].mxu0
    %v4591 = vadd.f32 %v4451, %v4590
    %v4592 = vpop.f32.mrb[0].mxu0
    %v4593 = vadd.f32 %v4455, %v4592
    %4594 = vmatprep.mubr.f32.mxu0 %v4279
    %4595 = vmatmul.mubr.f32.gmra.mrb[0].mxu0 %v4278
    %v4596 = vpop.f32.mrb[0].mxu0
    %v4597 = vadd.f32 %v4451, %v4596
    %v4598 = vpop.f32.mrb[0].mxu0
    %v4599 = vadd.f32 %v4455, %v4598
    %4600 = vmatprep.mubr.f32.mxu0 %v4281
    %4601 = vmatmul.mubr.f32.gmra.mrb[0].mxu0 %v4280
    %v4602 = vpop.f32.mrb[0].mxu0
    %v4603 = vadd.f32 %v4451, %v4602
    %v4604 = vpop.f32.mrb[0].mxu0
    %v4605 = vadd.f32 %v4455, %v4604
    %4606 = vmatprep.mubr.f32.mxu0 %v4283
    %4607 = vmatmul.mubr.f32.gmra.mrb[0].mxu0 %v4282
    %v4608 = vpop.f32.mrb[0].mxu0
    %v4609 = vadd.f32 %v4451, %v4608
    %v4610 = vpop.f32.mrb[0].mxu0
    %v4611 = vadd.f32 %v4455, %v4610
    %4612 = vmatprep.mubr.f32.mxu0 %v4285
    %4613 = vmatmul.mubr.f32.gmra.mrb[0].mxu0 %v4284
    %v4614 = vpop.f32.mrb[0].mxu0
    %v4615 = vadd.f32 %v4451, %v4614
    %v4616 = vpop.f32.mrb[0].mxu0
    %v4617 = vadd.f32 %v4455, %v4616
    %4618 = vmatprep.mubr.f32.mxu0 %v4287
    %4619 = vmatmul.mubr.f32.gmra.mrb[0].mxu0 %v4286
    %v4620 = vpop.f32.mrb[0].mxu0
    %v4621 = vadd.f32 %v4451, %v4620
    %v4622 = vpop.f32.mrb[0].mxu0
    %v4623 = vadd.f32 %v4455, %v4622
    %4624 = vmatprep.mubr.f32.mxu0 %v4289
    %4625 = vmatmul.mubr.f32.gmra.mrb[0].mxu0 %v4288
    %v4626 = vpop.f32.mrb[0].mxu0
    %v4627 = vadd.f32 %v4451, %v4626
    %v4628 = vpop.f32.mrb[0].mxu0
    %v4629 = vadd.f32 %v4455, %v4628
    %4630 = vmatprep.mubr.f32.mxu0 %v4291
    %4631 = vmatmul.mubr.f32.gmra.mrb[0].mxu0 %v4290
    %v4632 = vpop.f32.mrb[0].mxu0
    %v4633 = vadd.f32 %v4451, %v4632
    %v4634 = vpop.f32.mrb[0].mxu0
    %v4635 = vadd.f32 %v4455, %v4634
    %4636 = vmatprep.mubr.f32.mxu0 %v4293
    %4637 = vmatmul.mubr.f32.gmra.mrb[0].mxu0 %v4292
    %v4638 = vpop.f32.mrb[0].mxu0
    %v4639 = vadd.f32 %v4451, %v4638
    %v4640 = vpop.f32.mrb[0].mxu0
    %v4641 = vadd.f32 %v4455, %v4640
    %4642 = vmatprep.mubr.f32.mxu0 %v4295
    %4643 = vmatmul.mubr.f32.gmra.mrb[0].mxu0 %v4294
    %v4644 = vpop.f32.mrb[0].mxu0
    %v4645 = vadd.f32 %v4451, %v4644
    %v4646 = vpop.f32.mrb[0].mxu0
    %v4647 = vadd.f32 %v4455, %v4646
    %4648 = vmatprep.mubr.f32.mxu0 %v4297
    %4649 = vmatmul.mubr.f32.gmra.mrb[0].mxu0 %v4296
    %v4650 = vpop.f32.mrb[0].mxu0
    %v4651 = vadd.f32 %v4451, %v4650
    %v4652 = vpop.f32.mrb[0].mxu0
    %v4653 = vadd.f32 %v4455, %v4652
    %4654 = vmatprep.mubr.f32.mxu0 %v4299
    %4655 = vmatmul.mubr.f32.gmra.mrb[0].mxu0 %v4298
    %v4656 = vpop.f32.mrb[0].mxu0
    %v4657 = vadd.f32 %v4451, %v4656
    %v4658 = vpop.f32.mrb[0].mxu0
    %v4659 = vadd.f32 %v4455, %v4658
    %4660 = vmatprep.mubr.f32.mxu0 %v4301
    %4661 = vmatmul.mubr.f32.gmra.mrb[0].mxu0 %v4300
    %v4662 = vpop.f32.mrb[0].mxu0
    %v4663 = vadd.f32 %v4451, %v4662
    %v4664 = vpop.f32.mrb[0].mxu0
    %v4665 = vadd.f32 %v4455, %v4664
    %4666 = vmatprep.mubr.f32.mxu0 %v4303
    %4667 = vmatmul.mubr.f32.gmra.mrb[0].mxu0 %v4302
    %v4668 = vpop.f32.mrb[0].mxu0
    %v4669 = vadd.f32 %v4451, %v4668
    %v4670 = vpop.f32.mrb[0].mxu0
    %v4671 = vadd.f32 %v4455, %v4670
    %4672 = vmatprep.mubr.f32.mxu0 %v4305
    %4673 = vmatmul.mubr.f32.gmra.mrb[0].mxu0 %v4304
    %v4674 = vpop.f32.mrb[0].mxu0
    %v4675 = vadd.f32 %v4451, %v4674
    %v4676 = vpop.f32.mrb[0].mxu0
    %v4677 = vadd.f32 %v4455, %v4676
    %4678 = vmatprep.mubr.f32.mxu0 %v4307
    %4679 = vmatmul.mubr.f32.gmra.mrb[0].mxu0 %v4306
    %v4680 = vpop.f32.mrb[0].mxu0
    %v4681 = vadd.f32 %v4451, %v4680
    %v4682 = vpop.f32.mrb[0].mxu0
    %v4683 = vadd.f32 %v4455, %v4682
    %4684 = vmatprep.mubr.f32.mxu0 %v4309
    %4685 = vmatmul.mubr.f32.gmra.mrb[0].mxu0 %v4308
    %v4686 = vpop.f32.mrb[0].mxu0
    %v4687 = vadd.f32 %v4451, %v4686
    %v4688 = vpop.f32.mrb[0].mxu0
    %v4689 = vadd.f32 %v4455, %v4688
    %4690 = vmatprep.mubr.f32.mxu0 %v4311
    %4691 = vmatmul.mubr.f32.gmra.mrb[0].mxu0 %v4310
    %v4692 = vpop.f32.mrb[0].mxu0
    %v4693 = vadd.f32 %v4451, %v4692
    %v4694 = vpop.f32.mrb[0].mxu0
    %v4695 = vadd.f32 %v4455, %v4694
    %4696 = vmatprep.mubr.f32.mxu0 %v4313
    %4697 = vmatmul.mubr.f32.gmra.mrb[0].mxu0 %v4312
    %v4698 = vpop.f32.mrb[0].mxu0
    %v4699 = vadd.f32 %v4451, %v4698
    %v4700 = vpop.f32.mrb[0].mxu0
    %v4701 = vadd.f32 %v4455, %v4700
    %4702 = vmatprep.mubr.f32.mxu0 %v4315
    %4703 = vmatmul.mubr.f32.gmra.mrb[0].mxu0 %v4314
    %v4704 = vpop.f32.mrb[0].mxu0
    %v4705 = vadd.f32 %v4451, %v4704
    %v4706 = vpop.f32.mrb[0].mxu0
    %v4707 = vadd.f32 %v4455, %v4706
    %4708 = vmatprep.mubr.f32.mxu0 %v4317
    %4709 = vmatmul.mubr.f32.gmra.mrb[0].mxu0 %v4316
    %v4710 = vpop.f32.mrb[0].mxu0
    %v4711 = vadd.f32 %v4451, %v4710
    %v4712 = vpop.f32.mrb[0].mxu0
    %v4713 = vadd.f32 %v4455, %v4712
    %4714 = vmatprep.mubr.f32.mxu0 %v4319
    %4715 = vmatmul.mubr.f32.gmra.mrb[0].mxu0 %v4318
    %v4716 = vpop.f32.mrb[0].mxu0
    %v4717 = vadd.f32 %v4451, %v4716
    %v4718 = vpop.f32.mrb[0].mxu0
    %v4719 = vadd.f32 %v4455, %v4718
    %4720 = vmatprep.mubr.f32.mxu0 %v4321
    %4721 = vmatmul.mubr.f32.gmra.mrb[0].mxu0 %v4320
    %v4722 = vpop.f32.mrb[0].mxu0
    %v4723 = vadd.f32 %v4451, %v4722
    %v4724 = vpop.f32.mrb[0].mxu0
    %v4725 = vadd.f32 %v4455, %v4724
    %4726 = vmatprep.mubr.f32.mxu0 %v4323
    %4727 = vmatmul.mubr.f32.gmra.mrb[0].mxu0 %v4322
    %v4728 = vpop.f32.mrb[0].mxu0
    %v4729 = vadd.f32 %v4451, %v4728
    %v4730 = vpop.f32.mrb[0].mxu0
    %v4731 = vadd.f32 %v4455, %v4730
    %4732 = vmatprep.mubr.f32.mxu0 %v4325
    %4733 = vmatmul.mubr.f32.gmra.mrb[0].mxu0 %v4324
    %v4734 = vpop.f32.mrb[0].mxu0
    %v4735 = vadd.f32 %v4451, %v4734
    %v4736 = vpop.f32.mrb[0].mxu0
    %v4737 = vadd.f32 %v4455, %v4736
    %4738 = vmatprep.mubr.f32.mxu0 %v4327
    %4739 = vmatmul.mubr.f32.gmra.mrb[0].mxu0 %v4326
    %v4740 = vpop.f32.mrb[0].mxu0
    %v4741 = vadd.f32 %v4451, %v4740
    %v4742 = vpop.f32.mrb[0].mxu0
    %v4743 = vadd.f32 %v4455, %v4742
    %4744 = vmatprep.mubr.f32.mxu0 %v4329
    %4745 = vmatmul.mubr.f32.gmra.mrb[0].mxu0 %v4328
    %v4746 = vpop.f32.mrb[0].mxu0
    %v4747 = vadd.f32 %v4451, %v4746
    %v4748 = vpop.f32.mrb[0].mxu0
    %v4749 = vadd.f32 %v4455, %v4748
    %4750 = vmatprep.mubr.f32.mxu0 %v4331
    %4751 = vmatmul.mubr.f32.gmra.mrb[0].mxu0 %v4330
    %v4752 = vpop.f32.mrb[0].mxu0
    %v4753 = vadd.f32 %v4451, %v4752
    %v4754 = vpop.f32.mrb[0].mxu0
    %v4755 = vadd.f32 %v4455, %v4754
    %4756 = vmatprep.mubr.f32.mxu0 %v4333
    %4757 = vmatmul.mubr.f32.gmra.mrb[0].mxu0 %v4332
    %v4758 = vpop.f32.mrb[0].mxu0
    %v4759 = vadd.f32 %v4451, %v4758
    %v4760 = vpop.f32.mrb[0].mxu0
    %v4761 = vadd.f32 %v4455, %v4760
    %4762 = vmatprep.mubr.f32.mxu0 %v4335
    %4763 = vmatmul.mubr.f32.gmra.mrb[0].mxu0 %v4334
    %v4764 = vpop.f32.mrb[0].mxu0
    %v4765 = vadd.f32 %v4451, %v4764
    %v4766 = vpop.f32.mrb[0].mxu0
    %v4767 = vadd.f32 %v4455, %v4766
    %4768 = vmatprep.mubr.f32.mxu0 %v4337
    %4769 = vmatmul.mubr.f32.gmra.mrb[0].mxu0 %v4336
    %v4770 = vpop.f32.mrb[0].mxu0
    %v4771 = vadd.f32 %v4451, %v4770
    %v4772 = vpop.f32.mrb[0].mxu0
    %v4773 = vadd.f32 %v4455, %v4772
    %4774 = vmatprep.mubr.f32.mxu0 %v4339
    %4775 = vmatmul.mubr.f32.gmra.mrb[0].mxu0 %v4338
    %v4776 = vpop.f32.mrb[0].mxu0
    %v4777 = vadd.f32 %v4451, %v4776
    %v4778 = vpop.f32.mrb[0].mxu0
    %v4779 = vadd.f32 %v4455, %v4778
    %4780 = vmatprep.mubr.f32.mxu0 %v4341
    %4781 = vmatmul.mubr.f32.gmra.mrb[0].mxu0 %v4340
    %v4782 = vpop.f32.mrb[0].mxu0
    %v4783 = vadd.f32 %v4451, %v4782
    %v4784 = vpop.f32.mrb[0].mxu0
    %v4785 = vadd.f32 %v4455, %v4784
    %4786 = vmatprep.mubr.f32.mxu0 %v4343
    %4787 = vmatmul.mubr.f32.gmra.mrb[0].mxu0 %v4342
    %v4788 = vpop.f32.mrb[0].mxu0
    %v4789 = vadd.f32 %v4451, %v4788
    %v4790 = vpop.f32.mrb[0].mxu0
    %v4791 = vadd.f32 %v4455, %v4790
    %4792 = vmatprep.mubr.f32.mxu0 %v4345
    %4793 = vmatmul.mubr.f32.gmra.mrb[0].mxu0 %v4344
    %v4794 = vpop.f32.mrb[0].mxu0
    %v4795 = vadd.f32 %v4451, %v4794
    %v4796 = vpop.f32.mrb[0].mxu0
    %v4797 = vadd.f32 %v4455, %v4796
    %4798 = vmatprep.mubr.f32.mxu0 %v4347
    %4799 = vmatmul.mubr.f32.gmra.mrb[0].mxu0 %v4346
    %v4800 = vpop.f32.mrb[0].mxu0
    %v4801 = vadd.f32 %v4451, %v4800
    %v4802 = vpop.f32.mrb[0].mxu0
    %v4803 = vadd.f32 %v4455, %v4802
    %4804 = vmatprep.mubr.f32.mxu0 %v4349
    %4805 = vmatmul.mubr.f32.gmra.mrb[0].mxu0 %v4348
    %v4806 = vpop.f32.mrb[0].mxu0
    %v4807 = vadd.f32 %v4451, %v4806
    %v4808 = vpop.f32.mrb[0].mxu0
    %v4809 = vadd.f32 %v4455, %v4808
    %4810 = vmatprep.mubr.f32.mxu0 %v4351
    %4811 = vmatmul.mubr.f32.gmra.mrb[0].mxu0 %v4350
    %v4812 = vpop.f32.mrb[0].mxu0
    %v4813 = vadd.f32 %v4451, %v4812
    %v4814 = vpop.f32.mrb[0].mxu0
    %v4815 = vadd.f32 %v4455, %v4814
    %4816 = vmatprep.mubr.f32.mxu0 %v4353
    %4817 = vmatmul.mubr.f32.gmra.mrb[0].mxu0 %v4352
    %v4818 = vpop.f32.mrb[0].mxu0
    %v4819 = vadd.f32 %v4451, %v4818
    %v4820 = vpop.f32.mrb[0].mxu0
    %v4821 = vadd.f32 %v4455, %v4820
    %4822 = vmatprep.mubr.f32.mxu0 %v4355
    %4823 = vmatmul.mubr.f32.gmra.mrb[0].mxu0 %v4354
    %v4824 = vpop.f32.mrb[0].mxu0
    %v4825 = vadd.f32 %v4451, %v4824
    %v4826 = vpop.f32.mrb[0].mxu0
    %v4827 = vadd.f32 %v4455, %v4826
    %4828 = vmatprep.mubr.f32.mxu0 %v4357
    %4829 = vmatmul.mubr.f32.gmra.mrb[0].mxu0 %v4356
    %v4830 = vpop.f32.mrb[0].mxu0
    %v4831 = vadd.f32 %v4451, %v4830
    %v4832 = vpop.f32.mrb[0].mxu0
    %v4833 = vadd.f32 %v4455, %v4832
    %4834 = vmatprep.mubr.f32.mxu0 %v4359
    %4835 = vmatmul.mubr.f32.gmra.mrb[0].mxu0 %v4358
    %v4836 = vpop.f32.mrb[0].mxu0
    %v4837 = vadd.f32 %v4451, %v4836
    %v4838 = vpop.f32.mrb[0].mxu0
    %v4839 = vadd.f32 %v4455, %v4838
    %4840 = vmatprep.mubr.f32.mxu0 %v4361
    %4841 = vmatmul.mubr.f32.gmra.mrb[0].mxu0 %v4360
    %v4842 = vpop.f32.mrb[0].mxu0
    %v4843 = vadd.f32 %v4451, %v4842
    %v4844 = vpop.f32.mrb[0].mxu0
    %v4845 = vadd.f32 %v4455, %v4844
    %4846 = vmatprep.mubr.f32.mxu0 %v4363
    %4847 = vmatmul.mubr.f32.gmra.mrb[0].mxu0 %v4362
    %v4848 = vpop.f32.mrb[0].mxu0
    %v4849 = vadd.f32 %v4451, %v4848
    %v4850 = vpop.f32.mrb[0].mxu0
    %v4851 = vadd.f32 %v4455, %v4850
    %4852 = vmatprep.mubr.f32.mxu0 %v4365
    %4853 = vmatmul.mubr.f32.gmra.mrb[0].mxu0 %v4364
    %v4854 = vpop.f32.mrb[0].mxu0
    %v4855 = vadd.f32 %v4451, %v4854
    %v4856 = vpop.f32.mrb[0].mxu0
    %v4857 = vadd.f32 %v4455, %v4856
    %4858 = vmatprep.mubr.f32.mxu0 %v4367
    %4859 = vmatmul.mubr.f32.gmra.mrb[0].mxu0 %v4366
    %v4860 = vpop.f32.mrb[0].mxu0
    %v4861 = vadd.f32 %v4451, %v4860
    %v4862 = vpop.f32.mrb[0].mxu0
    %v4863 = vadd.f32 %v4455, %v4862
    %4864 = vmatprep.mubr.f32.mxu0 %v4369
    %4865 = vmatmul.mubr.f32.gmra.mrb[0].mxu0 %v4368
    %v4866 = vpop.f32.mrb[0].mxu0
    %v4867 = vadd.f32 %v4451, %v4866
    %v4868 = vpop.f32.mrb[0].mxu0
    %v4869 = vadd.f32 %v4455, %v4868
    %4870 = vmatprep.mubr.f32.mxu0 %v4371
    %4871 = vmatmul.mubr.f32.gmra.mrb[0].mxu0 %v4370
    %v4872 = vpop.f32.mrb[0].mxu0
    %v4873 = vadd.f32 %v4451, %v4872
    %v4874 = vpop.f32.mrb[0].mxu0
    %v4875 = vadd.f32 %v4455, %v4874
    %4876 = vmatprep.mubr.f32.mxu0 %v4373
    %4877 = vmatmul.mubr.f32.gmra.mrb[0].mxu0 %v4372
    %v4878 = vpop.f32.mrb[0].mxu0
    %v4879 = vadd.f32 %v4451, %v4878
    %v4880 = vpop.f32.mrb[0].mxu0
    %v4881 = vadd.f32 %v4455, %v4880
    %4882 = vmatprep.mubr.f32.mxu0 %v4375
    %4883 = vmatmul.mubr.f32.gmra.mrb[0].mxu0 %v4374
    %v4884 = vpop.f32.mrb[0].mxu0
    %v4885 = vadd.f32 %v4451, %v4884
    %v4886 = vpop.f32.mrb[0].mxu0
    %v4887 = vadd.f32 %v4455, %v4886
    %4888 = vmatprep.mubr.f32.mxu0 %v4377
    %4889 = vmatmul.mubr.f32.gmra.mrb[0].mxu0 %v4376
    %v4890 = vpop.f32.mrb[0].mxu0
    %v4891 = vadd.f32 %v4451, %v4890
    %v4892 = vpop.f32.mrb[0].mxu0
    %v4893 = vadd.f32 %v4455, %v4892
    %4894 = vmatprep.mubr.f32.mxu0 %v4379
    %4895 = vmatmul.mubr.f32.gmra.mrb[0].mxu0 %v4378
    %v4896 = vpop.f32.mrb[0].mxu0
    %v4897 = vadd.f32 %v4451, %v4896
    %v4898 = vpop.f32.mrb[0].mxu0
    %v4899 = vadd.f32 %v4455, %v4898
    %4900 = vmatprep.mubr.f32.mxu0 %v4381
    %4901 = vmatmul.mubr.f32.gmra.mrb[0].mxu0 %v4380
    %v4902 = vpop.f32.mrb[0].mxu0
    %v4903 = vadd.f32 %v4451, %v4902
    %v4904 = vpop.f32.mrb[0].mxu0
    %v4905 = vadd.f32 %v4455, %v4904
    %4906 = vdwg.mxu0
    %v4907 = vmax.f32 %v4525, 0.0
    %v4908 = vmax.f32 %v4527, 0.0
    %v4909 = vmax.f32 %v4531, 0.0
    %v4910 = vmax.f32 %v4533, 0.0
    %v4911 = vmax.f32 %v4537, 0.0
    %v4912 = vmax.f32 %v4539, 0.0
    %v4913 = vmax.f32 %v4543, 0.0
    %v4914 = vmax.f32 %v4545, 0.0
    %v4915 = vmax.f32 %v4549, 0.0
    %v4916 = vmax.f32 %v4551, 0.0
    %v4917 = vmax.f32 %v4555, 0.0
    %v4918 = vmax.f32 %v4557, 0.0
    %v4919 = vmax.f32 %v4561, 0.0
    %v4920 = vmax.f32 %v4563, 0.0
    %v4921 = vmax.f32 %v4567, 0.0
    %v4922 = vmax.f32 %v4569, 0.0
    %v4923 = vmax.f32 %v4573, 0.0
    %v4924 = vmax.f32 %v4575, 0.0
    %v4925 = vmax.f32 %v4579, 0.0
    %v4926 = vmax.f32 %v4581, 0.0
    %v4927 = vmax.f32 %v4585, 0.0
    %v4928 = vmax.f32 %v4587, 0.0
    %v4929 = vmax.f32 %v4591, 0.0
    %v4930 = vmax.f32 %v4593, 0.0
    %v4931 = vmax.f32 %v4597, 0.0
    %v4932 = vmax.f32 %v4599, 0.0
    %v4933 = vmax.f32 %v4603, 0.0
    %v4934 = vmax.f32 %v4605, 0.0
    %v4935 = vmax.f32 %v4609, 0.0
    %v4936 = vmax.f32 %v4611, 0.0
    %v4937 = vmax.f32 %v4615, 0.0
    %v4938 = vmax.f32 %v4617, 0.0
    %v4939 = vmax.f32 %v4621, 0.0
    %v4940 = vmax.f32 %v4623, 0.0
    %v4941 = vmax.f32 %v4627, 0.0
    %v4942 = vmax.f32 %v4629, 0.0
    %v4943 = vmax.f32 %v4633, 0.0
    %v4944 = vmax.f32 %v4635, 0.0
    %v4945 = vmax.f32 %v4639, 0.0
    %v4946 = vmax.f32 %v4641, 0.0
    %v4947 = vmax.f32 %v4645, 0.0
    %v4948 = vmax.f32 %v4647, 0.0
    %v4949 = vmax.f32 %v4651, 0.0
    %v4950 = vmax.f32 %v4653, 0.0
    %v4951 = vmax.f32 %v4657, 0.0
    %v4952 = vmax.f32 %v4659, 0.0
    %v4953 = vmax.f32 %v4663, 0.0
    %v4954 = vmax.f32 %v4665, 0.0
    %v4955 = vmax.f32 %v4669, 0.0
    %v4956 = vmax.f32 %v4671, 0.0
    %v4957 = vmax.f32 %v4675, 0.0
    %v4958 = vmax.f32 %v4677, 0.0
    %v4959 = vmax.f32 %v4681, 0.0
    %v4960 = vmax.f32 %v4683, 0.0
    %v4961 = vmax.f32 %v4687, 0.0
    %v4962 = vmax.f32 %v4689, 0.0
    %v4963 = vmax.f32 %v4693, 0.0
    %v4964 = vmax.f32 %v4695, 0.0
    %v4965 = vmax.f32 %v4699, 0.0
    %v4966 = vmax.f32 %v4701, 0.0
    %v4967 = vmax.f32 %v4705, 0.0
    %v4968 = vmax.f32 %v4707, 0.0
    %v4969 = vmax.f32 %v4711, 0.0
    %v4970 = vmax.f32 %v4713, 0.0
    %v4971 = vmax.f32 %v4717, 0.0
    %v4972 = vmax.f32 %v4719, 0.0
    %v4973 = vmax.f32 %v4723, 0.0
    %v4974 = vmax.f32 %v4725, 0.0
    %v4975 = vmax.f32 %v4729, 0.0
    %v4976 = vmax.f32 %v4731, 0.0
    %v4977 = vmax.f32 %v4735, 0.0
    %v4978 = vmax.f32 %v4737, 0.0
    %v4979 = vmax.f32 %v4741, 0.0
    %v4980 = vmax.f32 %v4743, 0.0
    %v4981 = vmax.f32 %v4747, 0.0
    %v4982 = vmax.f32 %v4749, 0.0
    %v4983 = vmax.f32 %v4753, 0.0
    %v4984 = vmax.f32 %v4755, 0.0
    %v4985 = vmax.f32 %v4759, 0.0
    %v4986 = vmax.f32 %v4761, 0.0
    %v4987 = vmax.f32 %v4765, 0.0
    %v4988 = vmax.f32 %v4767, 0.0
    %v4989 = vmax.f32 %v4771, 0.0
    %v4990 = vmax.f32 %v4773, 0.0
    %v4991 = vmax.f32 %v4777, 0.0
    %v4992 = vmax.f32 %v4779, 0.0
    %v4993 = vmax.f32 %v4783, 0.0
    %v4994 = vmax.f32 %v4785, 0.0
    %v4995 = vmax.f32 %v4789, 0.0
    %v4996 = vmax.f32 %v4791, 0.0
    %v4997 = vmax.f32 %v4795, 0.0
    %v4998 = vmax.f32 %v4797, 0.0
    %v4999 = vmax.f32 %v4801, 0.0
    %v5000 = vmax.f32 %v4803, 0.0
    %v5001 = vmax.f32 %v4807, 0.0
    %v5002 = vmax.f32 %v4809, 0.0
    %v5003 = vmax.f32 %v4813, 0.0
    %v5004 = vmax.f32 %v4815, 0.0
    %v5005 = vmax.f32 %v4819, 0.0
    %v5006 = vmax.f32 %v4821, 0.0
    %v5007 = vmax.f32 %v4825, 0.0
    %v5008 = vmax.f32 %v4827, 0.0
    %v5009 = vmax.f32 %v4831, 0.0
    %v5010 = vmax.f32 %v4833, 0.0
    %v5011 = vmax.f32 %v4837, 0.0
    %v5012 = vmax.f32 %v4839, 0.0
    %v5013 = vmax.f32 %v4843, 0.0
    %v5014 = vmax.f32 %v4845, 0.0
    %v5015 = vmax.f32 %v4849, 0.0
    %v5016 = vmax.f32 %v4851, 0.0
    %v5017 = vmax.f32 %v4855, 0.0
    %v5018 = vmax.f32 %v4857, 0.0
    %v5019 = vmax.f32 %v4861, 0.0
    %v5020 = vmax.f32 %v4863, 0.0
    %v5021 = vmax.f32 %v4867, 0.0
    %v5022 = vmax.f32 %v4869, 0.0
    %v5023 = vmax.f32 %v4873, 0.0
    %v5024 = vmax.f32 %v4875, 0.0
    %v5025 = vmax.f32 %v4879, 0.0
    %v5026 = vmax.f32 %v4881, 0.0
    %v5027 = vmax.f32 %v4885, 0.0
    %v5028 = vmax.f32 %v4887, 0.0
    %v5029 = vmax.f32 %v4891, 0.0
    %v5030 = vmax.f32 %v4893, 0.0
    %v5031 = vmax.f32 %v4897, 0.0
    %v5032 = vmax.f32 %v4899, 0.0
    %v5033 = vmax.f32 %v4903, 0.0
    %v5034 = vmax.f32 %v4905, 0.0
    %v5035 = vadd.f32 %v4907, %v4909
    %v5036 = vadd.f32 %v5035, %v4911
    %v5037 = vadd.f32 %v5036, %v4913
    %v5038 = vadd.f32 %v5037, %v4915
    %v5039 = vadd.f32 %v5038, %v4917
    %v5040 = vadd.f32 %v5039, %v4919
    %v5041 = vadd.f32 %v5040, %v4921
    %v5042 = vadd.f32 %v5041, %v4923
    %v5043 = vadd.f32 %v5042, %v4925
    %v5044 = vadd.f32 %v5043, %v4927
    %v5045 = vadd.f32 %v5044, %v4929
    %v5046 = vadd.f32 %v5045, %v4931
    %v5047 = vadd.f32 %v5046, %v4933
    %v5048 = vadd.f32 %v5047, %v4935
    %v5049 = vadd.f32 %v5048, %v4937
    %v5050 = vadd.f32 %v5049, %v4939
    %v5051 = vadd.f32 %v5050, %v4941
    %v5052 = vadd.f32 %v5051, %v4943
    %v5053 = vadd.f32 %v5052, %v4945
    %v5054 = vadd.f32 %v5053, %v4947
    %v5055 = vadd.f32 %v5054, %v4949
    %v5056 = vadd.f32 %v5055, %v4951
    %v5057 = vadd.f32 %v5056, %v4953
    %v5058 = vadd.f32 %v5057, %v4955
    %v5059 = vadd.f32 %v5058, %v4957
    %v5060 = vadd.f32 %v5059, %v4959
    %v5061 = vadd.f32 %v5060, %v4961
    %v5062 = vadd.f32 %v5061, %v4963
    %v5063 = vadd.f32 %v5062, %v4965
    %v5064 = vadd.f32 %v5063, %v4967
    %v5065 = vadd.f32 %v5064, %v4969
    %v5066 = vadd.f32 %v5065, %v4971
    %v5067 = vadd.f32 %v5066, %v4973
    %v5068 = vadd.f32 %v5067, %v4975
    %v5069 = vadd.f32 %v5068, %v4977
    %v5070 = vadd.f32 %v5069, %v4979
    %v5071 = vadd.f32 %v5070, %v4981
    %v5072 = vadd.f32 %v5071, %v4983
    %v5073 = vadd.f32 %v5072, %v4985
    %v5074 = vadd.f32 %v5073, %v4987
    %v5075 = vadd.f32 %v5074, %v4989
    %v5076 = vadd.f32 %v5075, %v4991
    %v5077 = vadd.f32 %v5076, %v4993
    %v5078 = vadd.f32 %v5077, %v4995
    %v5079 = vadd.f32 %v5078, %v4997
    %v5080 = vadd.f32 %v5079, %v4999
    %v5081 = vadd.f32 %v5080, %v5001
    %v5082 = vadd.f32 %v5081, %v5003
    %v5083 = vadd.f32 %v5082, %v5005
    %v5084 = vadd.f32 %v5083, %v5007
    %v5085 = vadd.f32 %v5084, %v5009
    %v5086 = vadd.f32 %v5085, %v5011
    %v5087 = vadd.f32 %v5086, %v5013
    %v5088 = vadd.f32 %v5087, %v5015
    %v5089 = vadd.f32 %v5088, %v5017
    %v5090 = vadd.f32 %v5089, %v5019
    %v5091 = vadd.f32 %v5090, %v5021
    %v5092 = vadd.f32 %v5091, %v5023
    %v5093 = vadd.f32 %v5092, %v5025
    %v5094 = vadd.f32 %v5093, %v5027
    %v5095 = vadd.f32 %v5094, %v5029
    %v5096 = vadd.f32 %v5095, %v5031
    %v5097 = vadd.f32 %v5096, %v5033
    %v5098 = vrot.slane %v5097, 4
    %v5099 = vadd.f32 %v5097, %v5098
    %v5100 = vrot.slane %v5099, 2
    %v5101 = vadd.f32 %v5099, %v5100
    %v5102 = vrot.slane %v5101, 1
    %v5103 = vadd.f32 %v5101, %v5102
    %v5104 = vadd.f32 %v4908, %v4910
    %v5105 = vadd.f32 %v5104, %v4912
    %v5106 = vadd.f32 %v5105, %v4914
    %v5107 = vadd.f32 %v5106, %v4916
    %v5108 = vadd.f32 %v5107, %v4918
    %v5109 = vadd.f32 %v5108, %v4920
    %v5110 = vadd.f32 %v5109, %v4922
    %v5111 = vadd.f32 %v5110, %v4924
    %v5112 = vadd.f32 %v5111, %v4926
    %v5113 = vadd.f32 %v5112, %v4928
    %v5114 = vadd.f32 %v5113, %v4930
    %v5115 = vadd.f32 %v5114, %v4932
    %v5116 = vadd.f32 %v5115, %v4934
    %v5117 = vadd.f32 %v5116, %v4936
    %v5118 = vadd.f32 %v5117, %v4938
    %v5119 = vadd.f32 %v5118, %v4940
    %v5120 = vadd.f32 %v5119, %v4942
    %v5121 = vadd.f32 %v5120, %v4944
    %v5122 = vadd.f32 %v5121, %v4946
    %v5123 = vadd.f32 %v5122, %v4948
    %v5124 = vadd.f32 %v5123, %v4950
    %v5125 = vadd.f32 %v5124, %v4952
    %v5126 = vadd.f32 %v5125, %v4954
    %v5127 = vadd.f32 %v5126, %v4956
    %v5128 = vadd.f32 %v5127, %v4958
    %v5129 = vadd.f32 %v5128, %v4960
    %v5130 = vadd.f32 %v5129, %v4962
    %v5131 = vadd.f32 %v5130, %v4964
    %v5132 = vadd.f32 %v5131, %v4966
    %v5133 = vadd.f32 %v5132, %v4968
    %v5134 = vadd.f32 %v5133, %v4970
    %v5135 = vadd.f32 %v5134, %v4972
    %v5136 = vadd.f32 %v5135, %v4974
    %v5137 = vadd.f32 %v5136, %v4976
    %v5138 = vadd.f32 %v5137, %v4978
    %v5139 = vadd.f32 %v5138, %v4980
    %v5140 = vadd.f32 %v5139, %v4982
    %v5141 = vadd.f32 %v5140, %v4984
    %v5142 = vadd.f32 %v5141, %v4986
    %v5143 = vadd.f32 %v5142, %v4988
    %v5144 = vadd.f32 %v5143, %v4990
    %v5145 = vadd.f32 %v5144, %v4992
    %v5146 = vadd.f32 %v5145, %v4994
    %v5147 = vadd.f32 %v5146, %v4996
    %v5148 = vadd.f32 %v5147, %v4998
    %v5149 = vadd.f32 %v5148, %v5000
    %v5150 = vadd.f32 %v5149, %v5002
    %v5151 = vadd.f32 %v5150, %v5004
    %v5152 = vadd.f32 %v5151, %v5006
    %v5153 = vadd.f32 %v5152, %v5008
    %v5154 = vadd.f32 %v5153, %v5010
    %v5155 = vadd.f32 %v5154, %v5012
    %v5156 = vadd.f32 %v5155, %v5014
    %v5157 = vadd.f32 %v5156, %v5016
    %v5158 = vadd.f32 %v5157, %v5018
    %v5159 = vadd.f32 %v5158, %v5020
    %v5160 = vadd.f32 %v5159, %v5022
    %v5161 = vadd.f32 %v5160, %v5024
    %v5162 = vadd.f32 %v5161, %v5026
    %v5163 = vadd.f32 %v5162, %v5028
    %v5164 = vadd.f32 %v5163, %v5030
    %v5165 = vadd.f32 %v5164, %v5032
    %v5166 = vadd.f32 %v5165, %v5034
    %v5167 = vrot.slane %v5166, 4
    %v5168 = vadd.f32 %v5166, %v5167
    %v5169 = vrot.slane %v5168, 2
    %v5170 = vadd.f32 %v5168, %v5169
    %v5171 = vrot.slane %v5170, 1
    %v5172 = vadd.f32 %v5170, %v5171
    %v5173 = vmul.f32 %v5103, %v1825
    %v5174 = vmul.f32 %v5172, %v1825
    %v5175 = vsub.f32 %v4907, %v5173
    %v5176 = vsub.f32 %v4908, %v5174
    %v5177 = vsub.f32 %v4909, %v5173
    %v5178 = vsub.f32 %v4910, %v5174
    %v5179 = vsub.f32 %v4911, %v5173
    %v5180 = vsub.f32 %v4912, %v5174
    %v5181 = vsub.f32 %v4913, %v5173
    %v5182 = vsub.f32 %v4914, %v5174
    %v5183 = vsub.f32 %v4915, %v5173
    %v5184 = vsub.f32 %v4916, %v5174
    %v5185 = vsub.f32 %v4917, %v5173
    %v5186 = vsub.f32 %v4918, %v5174
    %v5187 = vsub.f32 %v4919, %v5173
    %v5188 = vsub.f32 %v4920, %v5174
    %v5189 = vsub.f32 %v4921, %v5173
    %v5190 = vsub.f32 %v4922, %v5174
    %v5191 = vsub.f32 %v4923, %v5173
    %v5192 = vsub.f32 %v4924, %v5174
    %v5193 = vsub.f32 %v4925, %v5173
    %v5194 = vsub.f32 %v4926, %v5174
    %v5195 = vsub.f32 %v4927, %v5173
    %v5196 = vsub.f32 %v4928, %v5174
    %v5197 = vsub.f32 %v4929, %v5173
    %v5198 = vsub.f32 %v4930, %v5174
    %v5199 = vsub.f32 %v4931, %v5173
    %v5200 = vsub.f32 %v4932, %v5174
    %v5201 = vsub.f32 %v4933, %v5173
    %v5202 = vsub.f32 %v4934, %v5174
    %v5203 = vsub.f32 %v4935, %v5173
    %v5204 = vsub.f32 %v4936, %v5174
    %v5205 = vsub.f32 %v4937, %v5173
    %v5206 = vsub.f32 %v4938, %v5174
    %v5207 = vsub.f32 %v4939, %v5173
    %v5208 = vsub.f32 %v4940, %v5174
    %v5209 = vsub.f32 %v4941, %v5173
    %v5210 = vsub.f32 %v4942, %v5174
    %v5211 = vsub.f32 %v4943, %v5173
    %v5212 = vsub.f32 %v4944, %v5174
    %v5213 = vsub.f32 %v4945, %v5173
    %v5214 = vsub.f32 %v4946, %v5174
    %v5215 = vsub.f32 %v4947, %v5173
    %v5216 = vsub.f32 %v4948, %v5174
    %v5217 = vsub.f32 %v4949, %v5173
    %v5218 = vsub.f32 %v4950, %v5174
    %v5219 = vsub.f32 %v4951, %v5173
    %v5220 = vsub.f32 %v4952, %v5174
    %v5221 = vsub.f32 %v4953, %v5173
    %v5222 = vsub.f32 %v4954, %v5174
    %v5223 = vsub.f32 %v4955, %v5173
    %v5224 = vsub.f32 %v4956, %v5174
    %v5225 = vsub.f32 %v4957, %v5173
    %v5226 = vsub.f32 %v4958, %v5174
    %v5227 = vsub.f32 %v4959, %v5173
    %v5228 = vsub.f32 %v4960, %v5174
    %v5229 = vsub.f32 %v4961, %v5173
    %v5230 = vsub.f32 %v4962, %v5174
    %v5231 = vsub.f32 %v4963, %v5173
    %v5232 = vsub.f32 %v4964, %v5174
    %v5233 = vsub.f32 %v4965, %v5173
    %v5234 = vsub.f32 %v4966, %v5174
    %v5235 = vsub.f32 %v4967, %v5173
    %v5236 = vsub.f32 %v4968, %v5174
    %v5237 = vsub.f32 %v4969, %v5173
    %v5238 = vsub.f32 %v4970, %v5174
    %v5239 = vsub.f32 %v4971, %v5173
    %v5240 = vsub.f32 %v4972, %v5174
    %v5241 = vsub.f32 %v4973, %v5173
    %v5242 = vsub.f32 %v4974, %v5174
    %v5243 = vsub.f32 %v4975, %v5173
    %v5244 = vsub.f32 %v4976, %v5174
    %v5245 = vsub.f32 %v4977, %v5173
    %v5246 = vsub.f32 %v4978, %v5174
    %v5247 = vsub.f32 %v4979, %v5173
    %v5248 = vsub.f32 %v4980, %v5174
    %v5249 = vsub.f32 %v4981, %v5173
    %v5250 = vsub.f32 %v4982, %v5174
    %v5251 = vsub.f32 %v4983, %v5173
    %v5252 = vsub.f32 %v4984, %v5174
    %v5253 = vsub.f32 %v4985, %v5173
    %v5254 = vsub.f32 %v4986, %v5174
    %v5255 = vsub.f32 %v4987, %v5173
    %v5256 = vsub.f32 %v4988, %v5174
    %v5257 = vsub.f32 %v4989, %v5173
    %v5258 = vsub.f32 %v4990, %v5174
    %v5259 = vsub.f32 %v4991, %v5173
    %v5260 = vsub.f32 %v4992, %v5174
    %v5261 = vsub.f32 %v4993, %v5173
    %v5262 = vsub.f32 %v4994, %v5174
    %v5263 = vsub.f32 %v4995, %v5173
    %v5264 = vsub.f32 %v4996, %v5174
    %v5265 = vsub.f32 %v4997, %v5173
    %v5266 = vsub.f32 %v4998, %v5174
    %v5267 = vsub.f32 %v4999, %v5173
    %v5268 = vsub.f32 %v5000, %v5174
    %v5269 = vsub.f32 %v5001, %v5173
    %v5270 = vsub.f32 %v5002, %v5174
    %v5271 = vsub.f32 %v5003, %v5173
    %v5272 = vsub.f32 %v5004, %v5174
    %v5273 = vsub.f32 %v5005, %v5173
    %v5274 = vsub.f32 %v5006, %v5174
    %v5275 = vsub.f32 %v5007, %v5173
    %v5276 = vsub.f32 %v5008, %v5174
    %v5277 = vsub.f32 %v5009, %v5173
    %v5278 = vsub.f32 %v5010, %v5174
    %v5279 = vsub.f32 %v5011, %v5173
    %v5280 = vsub.f32 %v5012, %v5174
    %v5281 = vsub.f32 %v5013, %v5173
    %v5282 = vsub.f32 %v5014, %v5174
    %v5283 = vsub.f32 %v5015, %v5173
    %v5284 = vsub.f32 %v5016, %v5174
    %v5285 = vsub.f32 %v5017, %v5173
    %v5286 = vsub.f32 %v5018, %v5174
    %v5287 = vsub.f32 %v5019, %v5173
    %v5288 = vsub.f32 %v5020, %v5174
    %v5289 = vsub.f32 %v5021, %v5173
    %v5290 = vsub.f32 %v5022, %v5174
    %v5291 = vsub.f32 %v5023, %v5173
    %v5292 = vsub.f32 %v5024, %v5174
    %v5293 = vsub.f32 %v5025, %v5173
    %v5294 = vsub.f32 %v5026, %v5174
    %v5295 = vsub.f32 %v5027, %v5173
    %v5296 = vsub.f32 %v5028, %v5174
    %v5297 = vsub.f32 %v5029, %v5173
    %v5298 = vsub.f32 %v5030, %v5174
    %v5299 = vsub.f32 %v5031, %v5173
    %v5300 = vsub.f32 %v5032, %v5174
    %v5301 = vsub.f32 %v5033, %v5173
    %v5302 = vsub.f32 %v5034, %v5174
    %v5303 = vmul.f32 %v5175, %v5175
    %v5304 = vmul.f32 %v5176, %v5176
    %v5305 = vmul.f32 %v5177, %v5177
    %v5306 = vmul.f32 %v5178, %v5178
    %v5307 = vmul.f32 %v5179, %v5179
    %v5308 = vmul.f32 %v5180, %v5180
    %v5309 = vmul.f32 %v5181, %v5181
    %v5310 = vmul.f32 %v5182, %v5182
    %v5311 = vmul.f32 %v5183, %v5183
    %v5312 = vmul.f32 %v5184, %v5184
    %v5313 = vmul.f32 %v5185, %v5185
    %v5314 = vmul.f32 %v5186, %v5186
    %v5315 = vmul.f32 %v5187, %v5187
    %v5316 = vmul.f32 %v5188, %v5188
    %v5317 = vmul.f32 %v5189, %v5189
    %v5318 = vmul.f32 %v5190, %v5190
    %v5319 = vmul.f32 %v5191, %v5191
    %v5320 = vmul.f32 %v5192, %v5192
    %v5321 = vmul.f32 %v5193, %v5193
    %v5322 = vmul.f32 %v5194, %v5194
    %v5323 = vmul.f32 %v5195, %v5195
    %v5324 = vmul.f32 %v5196, %v5196
    %v5325 = vmul.f32 %v5197, %v5197
    %v5326 = vmul.f32 %v5198, %v5198
    %v5327 = vmul.f32 %v5199, %v5199
    %v5328 = vmul.f32 %v5200, %v5200
    %v5329 = vmul.f32 %v5201, %v5201
    %v5330 = vmul.f32 %v5202, %v5202
    %v5331 = vmul.f32 %v5203, %v5203
    %v5332 = vmul.f32 %v5204, %v5204
    %v5333 = vmul.f32 %v5205, %v5205
    %v5334 = vmul.f32 %v5206, %v5206
    %v5335 = vmul.f32 %v5207, %v5207
    %v5336 = vmul.f32 %v5208, %v5208
    %v5337 = vmul.f32 %v5209, %v5209
    %v5338 = vmul.f32 %v5210, %v5210
    %v5339 = vmul.f32 %v5211, %v5211
    %v5340 = vmul.f32 %v5212, %v5212
    %v5341 = vmul.f32 %v5213, %v5213
    %v5342 = vmul.f32 %v5214, %v5214
    %v5343 = vmul.f32 %v5215, %v5215
    %v5344 = vmul.f32 %v5216, %v5216
    %v5345 = vmul.f32 %v5217, %v5217
    %v5346 = vmul.f32 %v5218, %v5218
    %v5347 = vmul.f32 %v5219, %v5219
    %v5348 = vmul.f32 %v5220, %v5220
    %v5349 = vmul.f32 %v5221, %v5221
    %v5350 = vmul.f32 %v5222, %v5222
    %v5351 = vmul.f32 %v5223, %v5223
    %v5352 = vmul.f32 %v5224, %v5224
    %v5353 = vmul.f32 %v5225, %v5225
    %v5354 = vmul.f32 %v5226, %v5226
    %v5355 = vmul.f32 %v5227, %v5227
    %v5356 = vmul.f32 %v5228, %v5228
    %v5357 = vmul.f32 %v5229, %v5229
    %v5358 = vmul.f32 %v5230, %v5230
    %v5359 = vmul.f32 %v5231, %v5231
    %v5360 = vmul.f32 %v5232, %v5232
    %v5361 = vmul.f32 %v5233, %v5233
    %v5362 = vmul.f32 %v5234, %v5234
    %v5363 = vmul.f32 %v5235, %v5235
    %v5364 = vmul.f32 %v5236, %v5236
    %v5365 = vmul.f32 %v5237, %v5237
    %v5366 = vmul.f32 %v5238, %v5238
    %v5367 = vmul.f32 %v5239, %v5239
    %v5368 = vmul.f32 %v5240, %v5240
    %v5369 = vmul.f32 %v5241, %v5241
    %v5370 = vmul.f32 %v5242, %v5242
    %v5371 = vmul.f32 %v5243, %v5243
    %v5372 = vmul.f32 %v5244, %v5244
    %v5373 = vmul.f32 %v5245, %v5245
    %v5374 = vmul.f32 %v5246, %v5246
    %v5375 = vmul.f32 %v5247, %v5247
    %v5376 = vmul.f32 %v5248, %v5248
    %v5377 = vmul.f32 %v5249, %v5249
    %v5378 = vmul.f32 %v5250, %v5250
    %v5379 = vmul.f32 %v5251, %v5251
    %v5380 = vmul.f32 %v5252, %v5252
    %v5381 = vmul.f32 %v5253, %v5253
    %v5382 = vmul.f32 %v5254, %v5254
    %v5383 = vmul.f32 %v5255, %v5255
    %v5384 = vmul.f32 %v5256, %v5256
    %v5385 = vmul.f32 %v5257, %v5257
    %v5386 = vmul.f32 %v5258, %v5258
    %v5387 = vmul.f32 %v5259, %v5259
    %v5388 = vmul.f32 %v5260, %v5260
    %v5389 = vmul.f32 %v5261, %v5261
    %v5390 = vmul.f32 %v5262, %v5262
    %v5391 = vmul.f32 %v5263, %v5263
    %v5392 = vmul.f32 %v5264, %v5264
    %v5393 = vmul.f32 %v5265, %v5265
    %v5394 = vmul.f32 %v5266, %v5266
    %v5395 = vmul.f32 %v5267, %v5267
    %v5396 = vmul.f32 %v5268, %v5268
    %v5397 = vmul.f32 %v5269, %v5269
    %v5398 = vmul.f32 %v5270, %v5270
    %v5399 = vmul.f32 %v5271, %v5271
    %v5400 = vmul.f32 %v5272, %v5272
    %v5401 = vmul.f32 %v5273, %v5273
    %v5402 = vmul.f32 %v5274, %v5274
    %v5403 = vmul.f32 %v5275, %v5275
    %v5404 = vmul.f32 %v5276, %v5276
    %v5405 = vmul.f32 %v5277, %v5277
    %v5406 = vmul.f32 %v5278, %v5278
    %v5407 = vmul.f32 %v5279, %v5279
    %v5408 = vmul.f32 %v5280, %v5280
    %v5409 = vmul.f32 %v5281, %v5281
    %v5410 = vmul.f32 %v5282, %v5282
    %v5411 = vmul.f32 %v5283, %v5283
    %v5412 = vmul.f32 %v5284, %v5284
    %v5413 = vmul.f32 %v5285, %v5285
    %v5414 = vmul.f32 %v5286, %v5286
    %v5415 = vmul.f32 %v5287, %v5287
    %v5416 = vmul.f32 %v5288, %v5288
    %v5417 = vmul.f32 %v5289, %v5289
    %v5418 = vmul.f32 %v5290, %v5290
    %v5419 = vmul.f32 %v5291, %v5291
    %v5420 = vmul.f32 %v5292, %v5292
    %v5421 = vmul.f32 %v5293, %v5293
    %v5422 = vmul.f32 %v5294, %v5294
    %v5423 = vmul.f32 %v5295, %v5295
    %v5424 = vmul.f32 %v5296, %v5296
    %v5425 = vmul.f32 %v5297, %v5297
    %v5426 = vmul.f32 %v5298, %v5298
    %v5427 = vmul.f32 %v5299, %v5299
    %v5428 = vmul.f32 %v5300, %v5300
    %v5429 = vmul.f32 %v5301, %v5301
    %v5430 = vmul.f32 %v5302, %v5302
    %v5431 = vadd.f32 %v5303, %v5305
    %v5432 = vadd.f32 %v5431, %v5307
    %v5433 = vadd.f32 %v5432, %v5309
    %v5434 = vadd.f32 %v5433, %v5311
    %v5435 = vadd.f32 %v5434, %v5313
    %v5436 = vadd.f32 %v5435, %v5315
    %v5437 = vadd.f32 %v5436, %v5317
    %v5438 = vadd.f32 %v5437, %v5319
    %v5439 = vadd.f32 %v5438, %v5321
    %v5440 = vadd.f32 %v5439, %v5323
    %v5441 = vadd.f32 %v5440, %v5325
    %v5442 = vadd.f32 %v5441, %v5327
    %v5443 = vadd.f32 %v5442, %v5329
    %v5444 = vadd.f32 %v5443, %v5331
    %v5445 = vadd.f32 %v5444, %v5333
    %v5446 = vadd.f32 %v5445, %v5335
    %v5447 = vadd.f32 %v5446, %v5337
    %v5448 = vadd.f32 %v5447, %v5339
    %v5449 = vadd.f32 %v5448, %v5341
    %v5450 = vadd.f32 %v5449, %v5343
    %v5451 = vadd.f32 %v5450, %v5345
    %v5452 = vadd.f32 %v5451, %v5347
    %v5453 = vadd.f32 %v5452, %v5349
    %v5454 = vadd.f32 %v5453, %v5351
    %v5455 = vadd.f32 %v5454, %v5353
    %v5456 = vadd.f32 %v5455, %v5355
    %v5457 = vadd.f32 %v5456, %v5357
    %v5458 = vadd.f32 %v5457, %v5359
    %v5459 = vadd.f32 %v5458, %v5361
    %v5460 = vadd.f32 %v5459, %v5363
    %v5461 = vadd.f32 %v5460, %v5365
    %v5462 = vadd.f32 %v5461, %v5367
    %v5463 = vadd.f32 %v5462, %v5369
    %v5464 = vadd.f32 %v5463, %v5371
    %v5465 = vadd.f32 %v5464, %v5373
    %v5466 = vadd.f32 %v5465, %v5375
    %v5467 = vadd.f32 %v5466, %v5377
    %v5468 = vadd.f32 %v5467, %v5379
    %v5469 = vadd.f32 %v5468, %v5381
    %v5470 = vadd.f32 %v5469, %v5383
    %v5471 = vadd.f32 %v5470, %v5385
    %v5472 = vadd.f32 %v5471, %v5387
    %v5473 = vadd.f32 %v5472, %v5389
    %v5474 = vadd.f32 %v5473, %v5391
    %v5475 = vadd.f32 %v5474, %v5393
    %v5476 = vadd.f32 %v5475, %v5395
    %v5477 = vadd.f32 %v5476, %v5397
    %v5478 = vadd.f32 %v5477, %v5399
    %v5479 = vadd.f32 %v5478, %v5401
    %v5480 = vadd.f32 %v5479, %v5403
    %v5481 = vadd.f32 %v5480, %v5405
    %v5482 = vadd.f32 %v5481, %v5407
    %v5483 = vadd.f32 %v5482, %v5409
    %v5484 = vadd.f32 %v5483, %v5411
    %v5485 = vadd.f32 %v5484, %v5413
    %v5486 = vadd.f32 %v5485, %v5415
    %v5487 = vadd.f32 %v5486, %v5417
    %v5488 = vadd.f32 %v5487, %v5419
    %v5489 = vadd.f32 %v5488, %v5421
    %v5490 = vadd.f32 %v5489, %v5423
    %v5491 = vadd.f32 %v5490, %v5425
    %v5492 = vadd.f32 %v5491, %v5427
    %v5493 = vadd.f32 %v5492, %v5429
    %v5494 = vrot.slane %v5493, 4
    %v5495 = vadd.f32 %v5493, %v5494
    %v5496 = vrot.slane %v5495, 2
    %v5497 = vadd.f32 %v5495, %v5496
    %v5498 = vrot.slane %v5497, 1
    %v5499 = vadd.f32 %v5497, %v5498
    %v5500 = vadd.f32 %v5304, %v5306
    %v5501 = vadd.f32 %v5500, %v5308
    %v5502 = vadd.f32 %v5501, %v5310
    %v5503 = vadd.f32 %v5502, %v5312
    %v5504 = vadd.f32 %v5503, %v5314
    %v5505 = vadd.f32 %v5504, %v5316
    %v5506 = vadd.f32 %v5505, %v5318
    %v5507 = vadd.f32 %v5506, %v5320
    %v5508 = vadd.f32 %v5507, %v5322
    %v5509 = vadd.f32 %v5508, %v5324
    %v5510 = vadd.f32 %v5509, %v5326
    %v5511 = vadd.f32 %v5510, %v5328
    %v5512 = vadd.f32 %v5511, %v5330
    %v5513 = vadd.f32 %v5512, %v5332
    %v5514 = vadd.f32 %v5513, %v5334
    %v5515 = vadd.f32 %v5514, %v5336
    %v5516 = vadd.f32 %v5515, %v5338
    %v5517 = vadd.f32 %v5516, %v5340
    %v5518 = vadd.f32 %v5517, %v5342
    %v5519 = vadd.f32 %v5518, %v5344
    %v5520 = vadd.f32 %v5519, %v5346
    %v5521 = vadd.f32 %v5520, %v5348
    %v5522 = vadd.f32 %v5521, %v5350
    %v5523 = vadd.f32 %v5522, %v5352
    %v5524 = vadd.f32 %v5523, %v5354
    %v5525 = vadd.f32 %v5524, %v5356
    %v5526 = vadd.f32 %v5525, %v5358
    %v5527 = vadd.f32 %v5526, %v5360
    %v5528 = vadd.f32 %v5527, %v5362
    %v5529 = vadd.f32 %v5528, %v5364
    %v5530 = vadd.f32 %v5529, %v5366
    %v5531 = vadd.f32 %v5530, %v5368
    %v5532 = vadd.f32 %v5531, %v5370
    %v5533 = vadd.f32 %v5532, %v5372
    %v5534 = vadd.f32 %v5533, %v5374
    %v5535 = vadd.f32 %v5534, %v5376
    %v5536 = vadd.f32 %v5535, %v5378
    %v5537 = vadd.f32 %v5536, %v5380
    %v5538 = vadd.f32 %v5537, %v5382
    %v5539 = vadd.f32 %v5538, %v5384
    %v5540 = vadd.f32 %v5539, %v5386
    %v5541 = vadd.f32 %v5540, %v5388
    %v5542 = vadd.f32 %v5541, %v5390
    %v5543 = vadd.f32 %v5542, %v5392
    %v5544 = vadd.f32 %v5543, %v5394
    %v5545 = vadd.f32 %v5544, %v5396
    %v5546 = vadd.f32 %v5545, %v5398
    %v5547 = vadd.f32 %v5546, %v5400
    %v5548 = vadd.f32 %v5547, %v5402
    %v5549 = vadd.f32 %v5548, %v5404
    %v5550 = vadd.f32 %v5549, %v5406
    %v5551 = vadd.f32 %v5550, %v5408
    %v5552 = vadd.f32 %v5551, %v5410
    %v5553 = vadd.f32 %v5552, %v5412
    %v5554 = vadd.f32 %v5553, %v5414
    %v5555 = vadd.f32 %v5554, %v5416
    %v5556 = vadd.f32 %v5555, %v5418
    %v5557 = vadd.f32 %v5556, %v5420
    %v5558 = vadd.f32 %v5557, %v5422
    %v5559 = vadd.f32 %v5558, %v5424
    %v5560 = vadd.f32 %v5559, %v5426
    %v5561 = vadd.f32 %v5560, %v5428
    %v5562 = vadd.f32 %v5561, %v5430
    %v5563 = vrot.slane %v5562, 4
    %v5564 = vadd.f32 %v5562, %v5563
    %v5565 = vrot.slane %v5564, 2
    %v5566 = vadd.f32 %v5564, %v5565
    %v5567 = vrot.slane %v5566, 1
    %v5568 = vadd.f32 %v5566, %v5567
    %v5569 = vmul.f32 %v5499, %v1825
    %v5570 = vmul.f32 %v5568, %v1825
    %v5571 = vld [vmem:[%s9] sm:$0x3]
    %v5572 = vadd.f32 %v5569, 1e-05
    %v5573 = vadd.f32 %v5570, 1e-05
    %v5574 = vrsqrt.pop %v5572
    %v5575 = vrsqrt.pop %v5573
    %v5578 = vcombine.low %v5574, %v5575
    %v5580 = vunpack.c.l.s4 1966171168
    %v5581 = vunpack.c.0.s8 %v5580
    %v5582 = vlaneseq
    %v5583 = vshrl.u32 %v5582, 7
    %v5584 = vsub.s32 %v5581, %v5583
    %v5585 = vrot.slane %v5578, %v5584
    %v5587 = vunpack.c.l.s4 1966171168
    %v5588 = vunpack.c.0.s8 %v5587
    %v5589 = vlaneseq
    %v5590 = vshrl.u32 %v5589, 7
    %v5591 = vsub.s32 %v5588, %v5590
    %v5592 = vrot.slane %v5585, %v5591
    %v5594 = vmul.f32 %v5571, %v5592
    %v5596 = vlaneseq
    %v5597 = vshrl.u32 %v5596, 7
    %v5598 = vsub.s32 0, %v5597
    %v5599 = vrot.slane %v5594, %v5598
    %v5600 = vlaneseq
    %v5601 = vshrl.u32 %v5600, 7
    %v5602 = vsub.s32 1, %v5601
    %v5603 = vrot.slane %v5594, %v5602
    %v5606 = vmul.f32 %v5175, %v5599
    %v5607 = vmul.f32 %v5176, %v5603
    %v5608 = vmul.f32 %v5177, %v5599
    %v5609 = vmul.f32 %v5178, %v5603
    %v5610 = vmul.f32 %v5179, %v5599
    %v5611 = vmul.f32 %v5180, %v5603
    %v5612 = vmul.f32 %v5181, %v5599
    %v5613 = vmul.f32 %v5182, %v5603
    %v5614 = vmul.f32 %v5183, %v5599
    %v5615 = vmul.f32 %v5184, %v5603
    %v5616 = vmul.f32 %v5185, %v5599
    %v5617 = vmul.f32 %v5186, %v5603
    %v5618 = vmul.f32 %v5187, %v5599
    %v5619 = vmul.f32 %v5188, %v5603
    %v5620 = vmul.f32 %v5189, %v5599
    %v5621 = vmul.f32 %v5190, %v5603
    %v5622 = vmul.f32 %v5191, %v5599
    %v5623 = vmul.f32 %v5192, %v5603
    %v5624 = vmul.f32 %v5193, %v5599
    %v5625 = vmul.f32 %v5194, %v5603
    %v5626 = vmul.f32 %v5195, %v5599
    %v5627 = vmul.f32 %v5196, %v5603
    %v5628 = vmul.f32 %v5197, %v5599
    %v5629 = vmul.f32 %v5198, %v5603
    %v5630 = vmul.f32 %v5199, %v5599
    %v5631 = vmul.f32 %v5200, %v5603
    %v5632 = vmul.f32 %v5201, %v5599
    %v5633 = vmul.f32 %v5202, %v5603
    %v5634 = vmul.f32 %v5203, %v5599
    %v5635 = vmul.f32 %v5204, %v5603
    %v5636 = vmul.f32 %v5205, %v5599
    %v5637 = vmul.f32 %v5206, %v5603
    %v5638 = vmul.f32 %v5207, %v5599
    %v5639 = vmul.f32 %v5208, %v5603
    %v5640 = vmul.f32 %v5209, %v5599
    %v5641 = vmul.f32 %v5210, %v5603
    %v5642 = vmul.f32 %v5211, %v5599
    %v5643 = vmul.f32 %v5212, %v5603
    %v5644 = vmul.f32 %v5213, %v5599
    %v5645 = vmul.f32 %v5214, %v5603
    %v5646 = vmul.f32 %v5215, %v5599
    %v5647 = vmul.f32 %v5216, %v5603
    %v5648 = vmul.f32 %v5217, %v5599
    %v5649 = vmul.f32 %v5218, %v5603
    %v5650 = vmul.f32 %v5219, %v5599
    %v5651 = vmul.f32 %v5220, %v5603
    %v5652 = vmul.f32 %v5221, %v5599
    %v5653 = vmul.f32 %v5222, %v5603
    %v5654 = vmul.f32 %v5223, %v5599
    %v5655 = vmul.f32 %v5224, %v5603
    %v5656 = vmul.f32 %v5225, %v5599
    %v5657 = vmul.f32 %v5226, %v5603
    %v5658 = vmul.f32 %v5227, %v5599
    %v5659 = vmul.f32 %v5228, %v5603
    %v5660 = vmul.f32 %v5229, %v5599
    %v5661 = vmul.f32 %v5230, %v5603
    %v5662 = vmul.f32 %v5231, %v5599
    %v5663 = vmul.f32 %v5232, %v5603
    %v5664 = vmul.f32 %v5233, %v5599
    %v5665 = vmul.f32 %v5234, %v5603
    %v5666 = vmul.f32 %v5235, %v5599
    %v5667 = vmul.f32 %v5236, %v5603
    %v5668 = vmul.f32 %v5237, %v5599
    %v5669 = vmul.f32 %v5238, %v5603
    %v5670 = vmul.f32 %v5239, %v5599
    %v5671 = vmul.f32 %v5240, %v5603
    %v5672 = vmul.f32 %v5241, %v5599
    %v5673 = vmul.f32 %v5242, %v5603
    %v5674 = vmul.f32 %v5243, %v5599
    %v5675 = vmul.f32 %v5244, %v5603
    %v5676 = vmul.f32 %v5245, %v5599
    %v5677 = vmul.f32 %v5246, %v5603
    %v5678 = vmul.f32 %v5247, %v5599
    %v5679 = vmul.f32 %v5248, %v5603
    %v5680 = vmul.f32 %v5249, %v5599
    %v5681 = vmul.f32 %v5250, %v5603
    %v5682 = vmul.f32 %v5251, %v5599
    %v5683 = vmul.f32 %v5252, %v5603
    %v5684 = vmul.f32 %v5253, %v5599
    %v5685 = vmul.f32 %v5254, %v5603
    %v5686 = vmul.f32 %v5255, %v5599
    %v5687 = vmul.f32 %v5256, %v5603
    %v5688 = vmul.f32 %v5257, %v5599
    %v5689 = vmul.f32 %v5258, %v5603
    %v5690 = vmul.f32 %v5259, %v5599
    %v5691 = vmul.f32 %v5260, %v5603
    %v5692 = vmul.f32 %v5261, %v5599
    %v5693 = vmul.f32 %v5262, %v5603
    %v5694 = vmul.f32 %v5263, %v5599
    %v5695 = vmul.f32 %v5264, %v5603
    %v5696 = vmul.f32 %v5265, %v5599
    %v5697 = vmul.f32 %v5266, %v5603
    %v5698 = vmul.f32 %v5267, %v5599
    %v5699 = vmul.f32 %v5268, %v5603
    %v5700 = vmul.f32 %v5269, %v5599
    %v5701 = vmul.f32 %v5270, %v5603
    %v5702 = vmul.f32 %v5271, %v5599
    %v5703 = vmul.f32 %v5272, %v5603
    %v5704 = vmul.f32 %v5273, %v5599
    %v5705 = vmul.f32 %v5274, %v5603
    %v5706 = vmul.f32 %v5275, %v5599
    %v5707 = vmul.f32 %v5276, %v5603
    %v5708 = vmul.f32 %v5277, %v5599
    %v5709 = vmul.f32 %v5278, %v5603
    %v5710 = vmul.f32 %v5279, %v5599
    %v5711 = vmul.f32 %v5280, %v5603
    %v5712 = vmul.f32 %v5281, %v5599
    %v5713 = vmul.f32 %v5282, %v5603
    %v5714 = vmul.f32 %v5283, %v5599
    %v5715 = vmul.f32 %v5284, %v5603
    %v5716 = vmul.f32 %v5285, %v5599
    %v5717 = vmul.f32 %v5286, %v5603
    %v5718 = vmul.f32 %v5287, %v5599
    %v5719 = vmul.f32 %v5288, %v5603
    %v5720 = vmul.f32 %v5289, %v5599
    %v5721 = vmul.f32 %v5290, %v5603
    %v5722 = vmul.f32 %v5291, %v5599
    %v5723 = vmul.f32 %v5292, %v5603
    %v5724 = vmul.f32 %v5293, %v5599
    %v5725 = vmul.f32 %v5294, %v5603
    %v5726 = vmul.f32 %v5295, %v5599
    %v5727 = vmul.f32 %v5296, %v5603
    %v5728 = vmul.f32 %v5297, %v5599
    %v5729 = vmul.f32 %v5298, %v5603
    %v5730 = vmul.f32 %v5299, %v5599
    %v5731 = vmul.f32 %v5300, %v5603
    %v5732 = vmul.f32 %v5301, %v5599
    %v5733 = vmul.f32 %v5302, %v5603
    %v5734 = vld [vmem:[%s10] sm:$0x3]
    %v5736 = vlaneseq
    %v5737 = vshrl.u32 %v5736, 7
    %v5738 = vsub.s32 0, %v5737
    %v5739 = vrot.slane %v5734, %v5738
    %v5740 = vlaneseq
    %v5741 = vshrl.u32 %v5740, 7
    %v5742 = vsub.s32 1, %v5741
    %v5743 = vrot.slane %v5734, %v5742
    %v5746 = vadd.f32 %v5606, %v5739
    %v5747 = vadd.f32 %v5607, %v5743
    %v5748 = vadd.f32 %v5608, %v5739
    %v5749 = vadd.f32 %v5609, %v5743
    %v5750 = vadd.f32 %v5610, %v5739
    %v5751 = vadd.f32 %v5611, %v5743
    %v5752 = vadd.f32 %v5612, %v5739
    %v5753 = vadd.f32 %v5613, %v5743
    %v5754 = vadd.f32 %v5614, %v5739
    %v5755 = vadd.f32 %v5615, %v5743
    %v5756 = vadd.f32 %v5616, %v5739
    %v5757 = vadd.f32 %v5617, %v5743
    %v5758 = vadd.f32 %v5618, %v5739
    %v5759 = vadd.f32 %v5619, %v5743
    %v5760 = vadd.f32 %v5620, %v5739
    %v5761 = vadd.f32 %v5621, %v5743
    %v5762 = vadd.f32 %v5622, %v5739
    %v5763 = vadd.f32 %v5623, %v5743
    %v5764 = vadd.f32 %v5624, %v5739
    %v5765 = vadd.f32 %v5625, %v5743
    %v5766 = vadd.f32 %v5626, %v5739
    %v5767 = vadd.f32 %v5627, %v5743
    %v5768 = vadd.f32 %v5628, %v5739
    %v5769 = vadd.f32 %v5629, %v5743
    %v5770 = vadd.f32 %v5630, %v5739
    %v5771 = vadd.f32 %v5631, %v5743
    %v5772 = vadd.f32 %v5632, %v5739
    %v5773 = vadd.f32 %v5633, %v5743
    %v5774 = vadd.f32 %v5634, %v5739
    %v5775 = vadd.f32 %v5635, %v5743
    %v5776 = vadd.f32 %v5636, %v5739
    %v5777 = vadd.f32 %v5637, %v5743
    %v5778 = vadd.f32 %v5638, %v5739
    %v5779 = vadd.f32 %v5639, %v5743
    %v5780 = vadd.f32 %v5640, %v5739
    %v5781 = vadd.f32 %v5641, %v5743
    %v5782 = vadd.f32 %v5642, %v5739
    %v5783 = vadd.f32 %v5643, %v5743
    %v5784 = vadd.f32 %v5644, %v5739
    %v5785 = vadd.f32 %v5645, %v5743
    %v5786 = vadd.f32 %v5646, %v5739
    %v5787 = vadd.f32 %v5647, %v5743
    %v5788 = vadd.f32 %v5648, %v5739
    %v5789 = vadd.f32 %v5649, %v5743
    %v5790 = vadd.f32 %v5650, %v5739
    %v5791 = vadd.f32 %v5651, %v5743
    %v5792 = vadd.f32 %v5652, %v5739
    %v5793 = vadd.f32 %v5653, %v5743
    %v5794 = vadd.f32 %v5654, %v5739
    %v5795 = vadd.f32 %v5655, %v5743
    %v5796 = vadd.f32 %v5656, %v5739
    %v5797 = vadd.f32 %v5657, %v5743
    %v5798 = vadd.f32 %v5658, %v5739
    %v5799 = vadd.f32 %v5659, %v5743
    %v5800 = vadd.f32 %v5660, %v5739
    %v5801 = vadd.f32 %v5661, %v5743
    %v5802 = vadd.f32 %v5662, %v5739
    %v5803 = vadd.f32 %v5663, %v5743
    %v5804 = vadd.f32 %v5664, %v5739
    %v5805 = vadd.f32 %v5665, %v5743
    %v5806 = vadd.f32 %v5666, %v5739
    %v5807 = vadd.f32 %v5667, %v5743
    %v5808 = vadd.f32 %v5668, %v5739
    %v5809 = vadd.f32 %v5669, %v5743
    %v5810 = vadd.f32 %v5670, %v5739
    %v5811 = vadd.f32 %v5671, %v5743
    %v5812 = vadd.f32 %v5672, %v5739
    %v5813 = vadd.f32 %v5673, %v5743
    %v5814 = vadd.f32 %v5674, %v5739
    %v5815 = vadd.f32 %v5675, %v5743
    %v5816 = vadd.f32 %v5676, %v5739
    %v5817 = vadd.f32 %v5677, %v5743
    %v5818 = vadd.f32 %v5678, %v5739
    %v5819 = vadd.f32 %v5679, %v5743
    %v5820 = vadd.f32 %v5680, %v5739
    %v5821 = vadd.f32 %v5681, %v5743
    %v5822 = vadd.f32 %v5682, %v5739
    %v5823 = vadd.f32 %v5683, %v5743
    %v5824 = vadd.f32 %v5684, %v5739
    %v5825 = vadd.f32 %v5685, %v5743
    %v5826 = vadd.f32 %v5686, %v5739
    %v5827 = vadd.f32 %v5687, %v5743
    %v5828 = vadd.f32 %v5688, %v5739
    %v5829 = vadd.f32 %v5689, %v5743
    %v5830 = vadd.f32 %v5690, %v5739
    %v5831 = vadd.f32 %v5691, %v5743
    %v5832 = vadd.f32 %v5692, %v5739
    %v5833 = vadd.f32 %v5693, %v5743
    %v5834 = vadd.f32 %v5694, %v5739
    %v5835 = vadd.f32 %v5695, %v5743
    %v5836 = vadd.f32 %v5696, %v5739
    %v5837 = vadd.f32 %v5697, %v5743
    %v5838 = vadd.f32 %v5698, %v5739
    %v5839 = vadd.f32 %v5699, %v5743
    %v5840 = vadd.f32 %v5700, %v5739
    %v5841 = vadd.f32 %v5701, %v5743
    %v5842 = vadd.f32 %v5702, %v5739
    %v5843 = vadd.f32 %v5703, %v5743
    %v5844 = vadd.f32 %v5704, %v5739
    %v5845 = vadd.f32 %v5705, %v5743
    %v5846 = vadd.f32 %v5706, %v5739
    %v5847 = vadd.f32 %v5707, %v5743
    %v5848 = vadd.f32 %v5708, %v5739
    %v5849 = vadd.f32 %v5709, %v5743
    %v5850 = vadd.f32 %v5710, %v5739
    %v5851 = vadd.f32 %v5711, %v5743
    %v5852 = vadd.f32 %v5712, %v5739
    %v5853 = vadd.f32 %v5713, %v5743
    %v5854 = vadd.f32 %v5714, %v5739
    %v5855 = vadd.f32 %v5715, %v5743
    %v5856 = vadd.f32 %v5716, %v5739
    %v5857 = vadd.f32 %v5717, %v5743
    %v5858 = vadd.f32 %v5718, %v5739
    %v5859 = vadd.f32 %v5719, %v5743
    %v5860 = vadd.f32 %v5720, %v5739
    %v5861 = vadd.f32 %v5721, %v5743
    %v5862 = vadd.f32 %v5722, %v5739
    %v5863 = vadd.f32 %v5723, %v5743
    %v5864 = vadd.f32 %v5724, %v5739
    %v5865 = vadd.f32 %v5725, %v5743
    %v5866 = vadd.f32 %v5726, %v5739
    %v5867 = vadd.f32 %v5727, %v5743
    %v5868 = vadd.f32 %v5728, %v5739
    %v5869 = vadd.f32 %v5729, %v5743
    %v5870 = vadd.f32 %v5730, %v5739
    %v5871 = vadd.f32 %v5731, %v5743
    %v5872 = vadd.f32 %v5732, %v5739
    %v5873 = vadd.f32 %v5733, %v5743
    %v5874 = vld [vmem:[%s11] sm:$0xff]
    %v5875 = vld [vmem:[%s11 + $0x8] sm:$0xff]
    %v5876 = vld [vmem:[%s11 + $0x10] sm:$0xff]
    %v5877 = vld [vmem:[%s11 + $0x18] sm:$0xff]
    %v5878 = vld [vmem:[%s11 + $0x20] sm:$0xff]
    %v5879 = vld [vmem:[%s11 + $0x28] sm:$0xff]
    %v5880 = vld [vmem:[%s11 + $0x30] sm:$0xff]
    %v5881 = vld [vmem:[%s11 + $0x38] sm:$0xff]
    %v5882 = vld [vmem:[%s11 + $0x40] sm:$0xff]
    %v5883 = vld [vmem:[%s11 + $0x48] sm:$0xff]
    %v5884 = vld [vmem:[%s11 + $0x50] sm:$0xff]
    %v5885 = vld [vmem:[%s11 + $0x58] sm:$0xff]
    %v5886 = vld [vmem:[%s11 + $0x60] sm:$0xff]
    %v5887 = vld [vmem:[%s11 + $0x68] sm:$0xff]
    %v5888 = vld [vmem:[%s11 + $0x70] sm:$0xff]
    %v5889 = vld [vmem:[%s11 + $0x78] sm:$0xff]
    %v5890 = vld [vmem:[%s11 + $0x80] sm:$0xff]
    %v5891 = vld [vmem:[%s11 + $0x88] sm:$0xff]
    %v5892 = vld [vmem:[%s11 + $0x90] sm:$0xff]
    %v5893 = vld [vmem:[%s11 + $0x98] sm:$0xff]
    %v5894 = vld [vmem:[%s11 + $0xa0] sm:$0xff]
    %v5895 = vld [vmem:[%s11 + $0xa8] sm:$0xff]
    %v5896 = vld [vmem:[%s11 + $0xb0] sm:$0xff]
    %v5897 = vld [vmem:[%s11 + $0xb8] sm:$0xff]
    %v5898 = vld [vmem:[%s11 + $0xc0] sm:$0xff]
    %v5899 = vld [vmem:[%s11 + $0xc8] sm:$0xff]
    %v5900 = vld [vmem:[%s11 + $0xd0] sm:$0xff]
    %v5901 = vld [vmem:[%s11 + $0xd8] sm:$0xff]
    %v5902 = vld [vmem:[%s11 + $0xe0] sm:$0xff]
    %v5903 = vld [vmem:[%s11 + $0xe8] sm:$0xff]
    %v5904 = vld [vmem:[%s11 + $0xf0] sm:$0xff]
    %v5905 = vld [vmem:[%s11 + $0xf8] sm:$0xff]
    %v5906 = vld [vmem:[%s12] sm:$0x1]
    %v5908 = vlaneseq
    %v5909 = vshrl.u32 %v5908, 7
    %v5910 = vsub.s32 0, %v5909
    %v5911 = vrot.slane %v5906, %v5910
    %5913 = vmatprep.subr.mxu0 0.0
    %5914 = vmatpush1.msra.mxu0 %v5874
    %5915 = vmatprep.subr.mxu0 0.0
    %5916 = vmatpush1.msra.mxu0 %v5875
    %5917 = vmatprep.subr.mxu0 0.0
    %5918 = vmatpush1.msra.mxu0 %v5876
    %5919 = vmatprep.subr.mxu0 0.0
    %5920 = vmatpush1.msra.mxu0 %v5877
    %5921 = vmatprep.subr.mxu0 0.0
    %5922 = vmatpush1.msra.mxu0 %v5878
    %5923 = vmatprep.subr.mxu0 0.0
    %5924 = vmatpush1.msra.mxu0 %v5879
    %5925 = vmatprep.subr.mxu0 0.0
    %5926 = vmatpush1.msra.mxu0 %v5880
    %5927 = vmatprep.subr.mxu0 0.0
    %5928 = vmatpush1.msra.mxu0 %v5881
    %5929 = vmatprep.subr.mxu0 0.0
    %5930 = vmatpush1.msra.mxu0 %v5882
    %5931 = vmatprep.subr.mxu0 0.0
    %5932 = vmatpush1.msra.mxu0 %v5883
    %5933 = vmatprep.subr.mxu0 0.0
    %5934 = vmatpush1.msra.mxu0 %v5884
    %5935 = vmatprep.subr.mxu0 0.0
    %5936 = vmatpush1.msra.mxu0 %v5885
    %5937 = vmatprep.subr.mxu0 0.0
    %5938 = vmatpush1.msra.mxu0 %v5886
    %5939 = vmatprep.subr.mxu0 0.0
    %5940 = vmatpush1.msra.mxu0 %v5887
    %5941 = vmatprep.subr.mxu0 0.0
    %5942 = vmatpush1.msra.mxu0 %v5888
    %5943 = vmatprep.subr.mxu0 0.0
    %5944 = vmatpush1.msra.mxu0 %v5889
    %5945 = vmatprep.subr.mxu0 0.0
    %5946 = vmatpush1.msra.mxu0 %v5890
    %5947 = vmatprep.subr.mxu0 0.0
    %5948 = vmatpush1.msra.mxu0 %v5891
    %5949 = vmatprep.subr.mxu0 0.0
    %5950 = vmatpush1.msra.mxu0 %v5892
    %5951 = vmatprep.subr.mxu0 0.0
    %5952 = vmatpush1.msra.mxu0 %v5893
    %5953 = vmatprep.subr.mxu0 0.0
    %5954 = vmatpush1.msra.mxu0 %v5894
    %5955 = vmatprep.subr.mxu0 0.0
    %5956 = vmatpush1.msra.mxu0 %v5895
    %5957 = vmatprep.subr.mxu0 0.0
    %5958 = vmatpush1.msra.mxu0 %v5896
    %5959 = vmatprep.subr.mxu0 0.0
    %5960 = vmatpush1.msra.mxu0 %v5897
    %5961 = vmatprep.subr.mxu0 0.0
    %5962 = vmatpush1.msra.mxu0 %v5898
    %5963 = vmatprep.subr.mxu0 0.0
    %5964 = vmatpush1.msra.mxu0 %v5899
    %5965 = vmatprep.subr.mxu0 0.0
    %5966 = vmatpush1.msra.mxu0 %v5900
    %5967 = vmatprep.subr.mxu0 0.0
    %5968 = vmatpush1.msra.mxu0 %v5901
    %5969 = vmatprep.subr.mxu0 0.0
    %5970 = vmatpush1.msra.mxu0 %v5902
    %5971 = vmatprep.subr.mxu0 0.0
    %5972 = vmatpush1.msra.mxu0 %v5903
    %5973 = vmatprep.subr.mxu0 0.0
    %5974 = vmatpush1.msra.mxu0 %v5904
    %5975 = vmatprep.subr.mxu0 0.0
    %5976 = vmatpush1.msra.mxu0 %v5905
    %5977 = vmatprep.mubr.f32.mxu0 %v5747
    %5978 = vmatmul.mubr.f32.gmra.mrb[0].mxu0 %v5746
    %v5979 = vpop.f32.mrb[0].mxu0
    %v5980 = vadd.f32 %v5911, %v5979
    %v5981 = vpop.f32.mrb[0].mxu0
    %5982 = vmatprep.mubr.f32.mxu0 %v5749
    %5983 = vmatmul.mubr.f32.gmra.mrb[0].mxu0 %v5748
    %v5984 = vpop.f32.mrb[0].mxu0
    %v5985 = vadd.f32 %v5911, %v5984
    %v5986 = vpop.f32.mrb[0].mxu0
    %5987 = vmatprep.mubr.f32.mxu0 %v5751
    %5988 = vmatmul.mubr.f32.gmra.mrb[0].mxu0 %v5750
    %v5989 = vpop.f32.mrb[0].mxu0
    %v5990 = vadd.f32 %v5911, %v5989
    %v5991 = vpop.f32.mrb[0].mxu0
    %5992 = vmatprep.mubr.f32.mxu0 %v5753
    %5993 = vmatmul.mubr.f32.gmra.mrb[0].mxu0 %v5752
    %v5994 = vpop.f32.mrb[0].mxu0
    %v5995 = vadd.f32 %v5911, %v5994
    %v5996 = vpop.f32.mrb[0].mxu0
    %5997 = vmatprep.mubr.f32.mxu0 %v5755
    %5998 = vmatmul.mubr.f32.gmra.mrb[0].mxu0 %v5754
    %v5999 = vpop.f32.mrb[0].mxu0
    %v6000 = vadd.f32 %v5911, %v5999
    %v6001 = vpop.f32.mrb[0].mxu0
    %6002 = vmatprep.mubr.f32.mxu0 %v5757
    %6003 = vmatmul.mubr.f32.gmra.mrb[0].mxu0 %v5756
    %v6004 = vpop.f32.mrb[0].mxu0
    %v6005 = vadd.f32 %v5911, %v6004
    %v6006 = vpop.f32.mrb[0].mxu0
    %6007 = vmatprep.mubr.f32.mxu0 %v5759
    %6008 = vmatmul.mubr.f32.gmra.mrb[0].mxu0 %v5758
    %v6009 = vpop.f32.mrb[0].mxu0
    %v6010 = vadd.f32 %v5911, %v6009
    %v6011 = vpop.f32.mrb[0].mxu0
    %6012 = vmatprep.mubr.f32.mxu0 %v5761
    %6013 = vmatmul.mubr.f32.gmra.mrb[0].mxu0 %v5760
    %v6014 = vpop.f32.mrb[0].mxu0
    %v6015 = vadd.f32 %v5911, %v6014
    %v6016 = vpop.f32.mrb[0].mxu0
    %6017 = vmatprep.mubr.f32.mxu0 %v5763
    %6018 = vmatmul.mubr.f32.gmra.mrb[0].mxu0 %v5762
    %v6019 = vpop.f32.mrb[0].mxu0
    %v6020 = vadd.f32 %v5911, %v6019
    %v6021 = vpop.f32.mrb[0].mxu0
    %6022 = vmatprep.mubr.f32.mxu0 %v5765
    %6023 = vmatmul.mubr.f32.gmra.mrb[0].mxu0 %v5764
    %v6024 = vpop.f32.mrb[0].mxu0
    %v6025 = vadd.f32 %v5911, %v6024
    %v6026 = vpop.f32.mrb[0].mxu0
    %6027 = vmatprep.mubr.f32.mxu0 %v5767
    %6028 = vmatmul.mubr.f32.gmra.mrb[0].mxu0 %v5766
    %v6029 = vpop.f32.mrb[0].mxu0
    %v6030 = vadd.f32 %v5911, %v6029
    %v6031 = vpop.f32.mrb[0].mxu0
    %6032 = vmatprep.mubr.f32.mxu0 %v5769
    %6033 = vmatmul.mubr.f32.gmra.mrb[0].mxu0 %v5768
    %v6034 = vpop.f32.mrb[0].mxu0
    %v6035 = vadd.f32 %v5911, %v6034
    %v6036 = vpop.f32.mrb[0].mxu0
    %6037 = vmatprep.mubr.f32.mxu0 %v5771
    %6038 = vmatmul.mubr.f32.gmra.mrb[0].mxu0 %v5770
    %v6039 = vpop.f32.mrb[0].mxu0
    %v6040 = vadd.f32 %v5911, %v6039
    %v6041 = vpop.f32.mrb[0].mxu0
    %6042 = vmatprep.mubr.f32.mxu0 %v5773
    %6043 = vmatmul.mubr.f32.gmra.mrb[0].mxu0 %v5772
    %v6044 = vpop.f32.mrb[0].mxu0
    %v6045 = vadd.f32 %v5911, %v6044
    %v6046 = vpop.f32.mrb[0].mxu0
    %6047 = vmatprep.mubr.f32.mxu0 %v5775
    %6048 = vmatmul.mubr.f32.gmra.mrb[0].mxu0 %v5774
    %v6049 = vpop.f32.mrb[0].mxu0
    %v6050 = vadd.f32 %v5911, %v6049
    %v6051 = vpop.f32.mrb[0].mxu0
    %6052 = vmatprep.mubr.f32.mxu0 %v5777
    %6053 = vmatmul.mubr.f32.gmra.mrb[0].mxu0 %v5776
    %v6054 = vpop.f32.mrb[0].mxu0
    %v6055 = vadd.f32 %v5911, %v6054
    %v6056 = vpop.f32.mrb[0].mxu0
    %6057 = vmatprep.mubr.f32.mxu0 %v5779
    %6058 = vmatmul.mubr.f32.gmra.mrb[0].mxu0 %v5778
    %v6059 = vpop.f32.mrb[0].mxu0
    %v6060 = vadd.f32 %v5911, %v6059
    %v6061 = vpop.f32.mrb[0].mxu0
    %6062 = vmatprep.mubr.f32.mxu0 %v5781
    %6063 = vmatmul.mubr.f32.gmra.mrb[0].mxu0 %v5780
    %v6064 = vpop.f32.mrb[0].mxu0
    %v6065 = vadd.f32 %v5911, %v6064
    %v6066 = vpop.f32.mrb[0].mxu0
    %6067 = vmatprep.mubr.f32.mxu0 %v5783
    %6068 = vmatmul.mubr.f32.gmra.mrb[0].mxu0 %v5782
    %v6069 = vpop.f32.mrb[0].mxu0
    %v6070 = vadd.f32 %v5911, %v6069
    %v6071 = vpop.f32.mrb[0].mxu0
    %6072 = vmatprep.mubr.f32.mxu0 %v5785
    %6073 = vmatmul.mubr.f32.gmra.mrb[0].mxu0 %v5784
    %v6074 = vpop.f32.mrb[0].mxu0
    %v6075 = vadd.f32 %v5911, %v6074
    %v6076 = vpop.f32.mrb[0].mxu0
    %6077 = vmatprep.mubr.f32.mxu0 %v5787
    %6078 = vmatmul.mubr.f32.gmra.mrb[0].mxu0 %v5786
    %v6079 = vpop.f32.mrb[0].mxu0
    %v6080 = vadd.f32 %v5911, %v6079
    %v6081 = vpop.f32.mrb[0].mxu0
    %6082 = vmatprep.mubr.f32.mxu0 %v5789
    %6083 = vmatmul.mubr.f32.gmra.mrb[0].mxu0 %v5788
    %v6084 = vpop.f32.mrb[0].mxu0
    %v6085 = vadd.f32 %v5911, %v6084
    %v6086 = vpop.f32.mrb[0].mxu0
    %6087 = vmatprep.mubr.f32.mxu0 %v5791
    %6088 = vmatmul.mubr.f32.gmra.mrb[0].mxu0 %v5790
    %v6089 = vpop.f32.mrb[0].mxu0
    %v6090 = vadd.f32 %v5911, %v6089
    %v6091 = vpop.f32.mrb[0].mxu0
    %6092 = vmatprep.mubr.f32.mxu0 %v5793
    %6093 = vmatmul.mubr.f32.gmra.mrb[0].mxu0 %v5792
    %v6094 = vpop.f32.mrb[0].mxu0
    %v6095 = vadd.f32 %v5911, %v6094
    %v6096 = vpop.f32.mrb[0].mxu0
    %6097 = vmatprep.mubr.f32.mxu0 %v5795
    %6098 = vmatmul.mubr.f32.gmra.mrb[0].mxu0 %v5794
    %v6099 = vpop.f32.mrb[0].mxu0
    %v6100 = vadd.f32 %v5911, %v6099
    %v6101 = vpop.f32.mrb[0].mxu0
    %6102 = vmatprep.mubr.f32.mxu0 %v5797
    %6103 = vmatmul.mubr.f32.gmra.mrb[0].mxu0 %v5796
    %v6104 = vpop.f32.mrb[0].mxu0
    %v6105 = vadd.f32 %v5911, %v6104
    %v6106 = vpop.f32.mrb[0].mxu0
    %6107 = vmatprep.mubr.f32.mxu0 %v5799
    %6108 = vmatmul.mubr.f32.gmra.mrb[0].mxu0 %v5798
    %v6109 = vpop.f32.mrb[0].mxu0
    %v6110 = vadd.f32 %v5911, %v6109
    %v6111 = vpop.f32.mrb[0].mxu0
    %6112 = vmatprep.mubr.f32.mxu0 %v5801
    %6113 = vmatmul.mubr.f32.gmra.mrb[0].mxu0 %v5800
    %v6114 = vpop.f32.mrb[0].mxu0
    %v6115 = vadd.f32 %v5911, %v6114
    %v6116 = vpop.f32.mrb[0].mxu0
    %6117 = vmatprep.mubr.f32.mxu0 %v5803
    %6118 = vmatmul.mubr.f32.gmra.mrb[0].mxu0 %v5802
    %v6119 = vpop.f32.mrb[0].mxu0
    %v6120 = vadd.f32 %v5911, %v6119
    %v6121 = vpop.f32.mrb[0].mxu0
    %6122 = vmatprep.mubr.f32.mxu0 %v5805
    %6123 = vmatmul.mubr.f32.gmra.mrb[0].mxu0 %v5804
    %v6124 = vpop.f32.mrb[0].mxu0
    %v6125 = vadd.f32 %v5911, %v6124
    %v6126 = vpop.f32.mrb[0].mxu0
    %6127 = vmatprep.mubr.f32.mxu0 %v5807
    %6128 = vmatmul.mubr.f32.gmra.mrb[0].mxu0 %v5806
    %v6129 = vpop.f32.mrb[0].mxu0
    %v6130 = vadd.f32 %v5911, %v6129
    %v6131 = vpop.f32.mrb[0].mxu0
    %6132 = vmatprep.mubr.f32.mxu0 %v5809
    %6133 = vmatmul.mubr.f32.gmra.mrb[0].mxu0 %v5808
    %v6134 = vpop.f32.mrb[0].mxu0
    %v6135 = vadd.f32 %v5911, %v6134
    %v6136 = vpop.f32.mrb[0].mxu0
    %6137 = vmatprep.mubr.f32.mxu0 %v5811
    %6138 = vmatmul.mubr.f32.gmra.mrb[0].mxu0 %v5810
    %v6139 = vpop.f32.mrb[0].mxu0
    %v6140 = vadd.f32 %v5911, %v6139
    %v6141 = vpop.f32.mrb[0].mxu0
    %6142 = vmatprep.mubr.f32.mxu0 %v5813
    %6143 = vmatmul.mubr.f32.gmra.mrb[0].mxu0 %v5812
    %v6144 = vpop.f32.mrb[0].mxu0
    %v6145 = vadd.f32 %v5911, %v6144
    %v6146 = vpop.f32.mrb[0].mxu0
    %6147 = vmatprep.mubr.f32.mxu0 %v5815
    %6148 = vmatmul.mubr.f32.gmra.mrb[0].mxu0 %v5814
    %v6149 = vpop.f32.mrb[0].mxu0
    %v6150 = vadd.f32 %v5911, %v6149
    %v6151 = vpop.f32.mrb[0].mxu0
    %6152 = vmatprep.mubr.f32.mxu0 %v5817
    %6153 = vmatmul.mubr.f32.gmra.mrb[0].mxu0 %v5816
    %v6154 = vpop.f32.mrb[0].mxu0
    %v6155 = vadd.f32 %v5911, %v6154
    %v6156 = vpop.f32.mrb[0].mxu0
    %6157 = vmatprep.mubr.f32.mxu0 %v5819
    %6158 = vmatmul.mubr.f32.gmra.mrb[0].mxu0 %v5818
    %v6159 = vpop.f32.mrb[0].mxu0
    %v6160 = vadd.f32 %v5911, %v6159
    %v6161 = vpop.f32.mrb[0].mxu0
    %6162 = vmatprep.mubr.f32.mxu0 %v5821
    %6163 = vmatmul.mubr.f32.gmra.mrb[0].mxu0 %v5820
    %v6164 = vpop.f32.mrb[0].mxu0
    %v6165 = vadd.f32 %v5911, %v6164
    %v6166 = vpop.f32.mrb[0].mxu0
    %6167 = vmatprep.mubr.f32.mxu0 %v5823
    %6168 = vmatmul.mubr.f32.gmra.mrb[0].mxu0 %v5822
    %v6169 = vpop.f32.mrb[0].mxu0
    %v6170 = vadd.f32 %v5911, %v6169
    %v6171 = vpop.f32.mrb[0].mxu0
    %6172 = vmatprep.mubr.f32.mxu0 %v5825
    %6173 = vmatmul.mubr.f32.gmra.mrb[0].mxu0 %v5824
    %v6174 = vpop.f32.mrb[0].mxu0
    %v6175 = vadd.f32 %v5911, %v6174
    %v6176 = vpop.f32.mrb[0].mxu0
    %6177 = vmatprep.mubr.f32.mxu0 %v5827
    %6178 = vmatmul.mubr.f32.gmra.mrb[0].mxu0 %v5826
    %v6179 = vpop.f32.mrb[0].mxu0
    %v6180 = vadd.f32 %v5911, %v6179
    %v6181 = vpop.f32.mrb[0].mxu0
    %6182 = vmatprep.mubr.f32.mxu0 %v5829
    %6183 = vmatmul.mubr.f32.gmra.mrb[0].mxu0 %v5828
    %v6184 = vpop.f32.mrb[0].mxu0
    %v6185 = vadd.f32 %v5911, %v6184
    %v6186 = vpop.f32.mrb[0].mxu0
    %6187 = vmatprep.mubr.f32.mxu0 %v5831
    %6188 = vmatmul.mubr.f32.gmra.mrb[0].mxu0 %v5830
    %v6189 = vpop.f32.mrb[0].mxu0
    %v6190 = vadd.f32 %v5911, %v6189
    %v6191 = vpop.f32.mrb[0].mxu0
    %6192 = vmatprep.mubr.f32.mxu0 %v5833
    %6193 = vmatmul.mubr.f32.gmra.mrb[0].mxu0 %v5832
    %v6194 = vpop.f32.mrb[0].mxu0
    %v6195 = vadd.f32 %v5911, %v6194
    %v6196 = vpop.f32.mrb[0].mxu0
    %6197 = vmatprep.mubr.f32.mxu0 %v5835
    %6198 = vmatmul.mubr.f32.gmra.mrb[0].mxu0 %v5834
    %v6199 = vpop.f32.mrb[0].mxu0
    %v6200 = vadd.f32 %v5911, %v6199
    %v6201 = vpop.f32.mrb[0].mxu0
    %6202 = vmatprep.mubr.f32.mxu0 %v5837
    %6203 = vmatmul.mubr.f32.gmra.mrb[0].mxu0 %v5836
    %v6204 = vpop.f32.mrb[0].mxu0
    %v6205 = vadd.f32 %v5911, %v6204
    %v6206 = vpop.f32.mrb[0].mxu0
    %6207 = vmatprep.mubr.f32.mxu0 %v5839
    %6208 = vmatmul.mubr.f32.gmra.mrb[0].mxu0 %v5838
    %v6209 = vpop.f32.mrb[0].mxu0
    %v6210 = vadd.f32 %v5911, %v6209
    %v6211 = vpop.f32.mrb[0].mxu0
    %6212 = vmatprep.mubr.f32.mxu0 %v5841
    %6213 = vmatmul.mubr.f32.gmra.mrb[0].mxu0 %v5840
    %v6214 = vpop.f32.mrb[0].mxu0
    %v6215 = vadd.f32 %v5911, %v6214
    %v6216 = vpop.f32.mrb[0].mxu0
    %6217 = vmatprep.mubr.f32.mxu0 %v5843
    %6218 = vmatmul.mubr.f32.gmra.mrb[0].mxu0 %v5842
    %v6219 = vpop.f32.mrb[0].mxu0
    %v6220 = vadd.f32 %v5911, %v6219
    %v6221 = vpop.f32.mrb[0].mxu0
    %6222 = vmatprep.mubr.f32.mxu0 %v5845
    %6223 = vmatmul.mubr.f32.gmra.mrb[0].mxu0 %v5844
    %v6224 = vpop.f32.mrb[0].mxu0
    %v6225 = vadd.f32 %v5911, %v6224
    %v6226 = vpop.f32.mrb[0].mxu0
    %6227 = vmatprep.mubr.f32.mxu0 %v5847
    %6228 = vmatmul.mubr.f32.gmra.mrb[0].mxu0 %v5846
    %v6229 = vpop.f32.mrb[0].mxu0
    %v6230 = vadd.f32 %v5911, %v6229
    %v6231 = vpop.f32.mrb[0].mxu0
    %6232 = vmatprep.mubr.f32.mxu0 %v5849
    %6233 = vmatmul.mubr.f32.gmra.mrb[0].mxu0 %v5848
    %v6234 = vpop.f32.mrb[0].mxu0
    %v6235 = vadd.f32 %v5911, %v6234
    %v6236 = vpop.f32.mrb[0].mxu0
    %6237 = vmatprep.mubr.f32.mxu0 %v5851
    %6238 = vmatmul.mubr.f32.gmra.mrb[0].mxu0 %v5850
    %v6239 = vpop.f32.mrb[0].mxu0
    %v6240 = vadd.f32 %v5911, %v6239
    %v6241 = vpop.f32.mrb[0].mxu0
    %6242 = vmatprep.mubr.f32.mxu0 %v5853
    %6243 = vmatmul.mubr.f32.gmra.mrb[0].mxu0 %v5852
    %v6244 = vpop.f32.mrb[0].mxu0
    %v6245 = vadd.f32 %v5911, %v6244
    %v6246 = vpop.f32.mrb[0].mxu0
    %6247 = vmatprep.mubr.f32.mxu0 %v5855
    %6248 = vmatmul.mubr.f32.gmra.mrb[0].mxu0 %v5854
    %v6249 = vpop.f32.mrb[0].mxu0
    %v6250 = vadd.f32 %v5911, %v6249
    %v6251 = vpop.f32.mrb[0].mxu0
    %6252 = vmatprep.mubr.f32.mxu0 %v5857
    %6253 = vmatmul.mubr.f32.gmra.mrb[0].mxu0 %v5856
    %v6254 = vpop.f32.mrb[0].mxu0
    %v6255 = vadd.f32 %v5911, %v6254
    %v6256 = vpop.f32.mrb[0].mxu0
    %6257 = vmatprep.mubr.f32.mxu0 %v5859
    %6258 = vmatmul.mubr.f32.gmra.mrb[0].mxu0 %v5858
    %v6259 = vpop.f32.mrb[0].mxu0
    %v6260 = vadd.f32 %v5911, %v6259
    %v6261 = vpop.f32.mrb[0].mxu0
    %6262 = vmatprep.mubr.f32.mxu0 %v5861
    %6263 = vmatmul.mubr.f32.gmra.mrb[0].mxu0 %v5860
    %v6264 = vpop.f32.mrb[0].mxu0
    %v6265 = vadd.f32 %v5911, %v6264
    %v6266 = vpop.f32.mrb[0].mxu0
    %6267 = vmatprep.mubr.f32.mxu0 %v5863
    %6268 = vmatmul.mubr.f32.gmra.mrb[0].mxu0 %v5862
    %v6269 = vpop.f32.mrb[0].mxu0
    %v6270 = vadd.f32 %v5911, %v6269
    %v6271 = vpop.f32.mrb[0].mxu0
    %6272 = vmatprep.mubr.f32.mxu0 %v5865
    %6273 = vmatmul.mubr.f32.gmra.mrb[0].mxu0 %v5864
    %v6274 = vpop.f32.mrb[0].mxu0
    %v6275 = vadd.f32 %v5911, %v6274
    %v6276 = vpop.f32.mrb[0].mxu0
    %6277 = vmatprep.mubr.f32.mxu0 %v5867
    %6278 = vmatmul.mubr.f32.gmra.mrb[0].mxu0 %v5866
    %v6279 = vpop.f32.mrb[0].mxu0
    %v6280 = vadd.f32 %v5911, %v6279
    %v6281 = vpop.f32.mrb[0].mxu0
    %6282 = vmatprep.mubr.f32.mxu0 %v5869
    %6283 = vmatmul.mubr.f32.gmra.mrb[0].mxu0 %v5868
    %v6284 = vpop.f32.mrb[0].mxu0
    %v6285 = vadd.f32 %v5911, %v6284
    %v6286 = vpop.f32.mrb[0].mxu0
    %6287 = vmatprep.mubr.f32.mxu0 %v5871
    %6288 = vmatmul.mubr.f32.gmra.mrb[0].mxu0 %v5870
    %v6289 = vpop.f32.mrb[0].mxu0
    %v6290 = vadd.f32 %v5911, %v6289
    %v6291 = vpop.f32.mrb[0].mxu0
    %6292 = vmatprep.mubr.f32.mxu0 %v5873
    %6293 = vmatmul.mubr.f32.gmra.mrb[0].mxu0 %v5872
    %v6294 = vpop.f32.mrb[0].mxu0
    %v6295 = vadd.f32 %v5911, %v6294
    %v6296 = vpop.f32.mrb[0].mxu0
    %6297 = vdwg.mxu0
    %v6298 = vmax.f32 %v5980, 0.0
    %v6299 = vmax.f32 %v5985, 0.0
    %v6300 = vmax.f32 %v5990, 0.0
    %v6301 = vmax.f32 %v5995, 0.0
    %v6302 = vmax.f32 %v6000, 0.0
    %v6303 = vmax.f32 %v6005, 0.0
    %v6304 = vmax.f32 %v6010, 0.0
    %v6305 = vmax.f32 %v6015, 0.0
    %v6306 = vmax.f32 %v6020, 0.0
    %v6307 = vmax.f32 %v6025, 0.0
    %v6308 = vmax.f32 %v6030, 0.0
    %v6309 = vmax.f32 %v6035, 0.0
    %v6310 = vmax.f32 %v6040, 0.0
    %v6311 = vmax.f32 %v6045, 0.0
    %v6312 = vmax.f32 %v6050, 0.0
    %v6313 = vmax.f32 %v6055, 0.0
    %v6314 = vmax.f32 %v6060, 0.0
    %v6315 = vmax.f32 %v6065, 0.0
    %v6316 = vmax.f32 %v6070, 0.0
    %v6317 = vmax.f32 %v6075, 0.0
    %v6318 = vmax.f32 %v6080, 0.0
    %v6319 = vmax.f32 %v6085, 0.0
    %v6320 = vmax.f32 %v6090, 0.0
    %v6321 = vmax.f32 %v6095, 0.0
    %v6322 = vmax.f32 %v6100, 0.0
    %v6323 = vmax.f32 %v6105, 0.0
    %v6324 = vmax.f32 %v6110, 0.0
    %v6325 = vmax.f32 %v6115, 0.0
    %v6326 = vmax.f32 %v6120, 0.0
    %v6327 = vmax.f32 %v6125, 0.0
    %v6328 = vmax.f32 %v6130, 0.0
    %v6329 = vmax.f32 %v6135, 0.0
    %v6330 = vmax.f32 %v6140, 0.0
    %v6331 = vmax.f32 %v6145, 0.0
    %v6332 = vmax.f32 %v6150, 0.0
    %v6333 = vmax.f32 %v6155, 0.0
    %v6334 = vmax.f32 %v6160, 0.0
    %v6335 = vmax.f32 %v6165, 0.0
    %v6336 = vmax.f32 %v6170, 0.0
    %v6337 = vmax.f32 %v6175, 0.0
    %v6338 = vmax.f32 %v6180, 0.0
    %v6339 = vmax.f32 %v6185, 0.0
    %v6340 = vmax.f32 %v6190, 0.0
    %v6341 = vmax.f32 %v6195, 0.0
    %v6342 = vmax.f32 %v6200, 0.0
    %v6343 = vmax.f32 %v6205, 0.0
    %v6344 = vmax.f32 %v6210, 0.0
    %v6345 = vmax.f32 %v6215, 0.0
    %v6346 = vmax.f32 %v6220, 0.0
    %v6347 = vmax.f32 %v6225, 0.0
    %v6348 = vmax.f32 %v6230, 0.0
    %v6349 = vmax.f32 %v6235, 0.0
    %v6350 = vmax.f32 %v6240, 0.0
    %v6351 = vmax.f32 %v6245, 0.0
    %v6352 = vmax.f32 %v6250, 0.0
    %v6353 = vmax.f32 %v6255, 0.0
    %v6354 = vmax.f32 %v6260, 0.0
    %v6355 = vmax.f32 %v6265, 0.0
    %v6356 = vmax.f32 %v6270, 0.0
    %v6357 = vmax.f32 %v6275, 0.0
    %v6358 = vmax.f32 %v6280, 0.0
    %v6359 = vmax.f32 %v6285, 0.0
    %v6360 = vmax.f32 %v6290, 0.0
    %v6361 = vmax.f32 %v6295, 0.0
    %v6362 = vld [vmem:[%s13] sm:$0xff]
    %v6363 = vld [vmem:[%s13 + $0x8] sm:$0xff]
    %v6364 = vld [vmem:[%s13 + $0x10] sm:$0xff]
    %v6365 = vld [vmem:[%s13 + $0x18] sm:$0x3f]
    %v6366 = vld [vmem:[%s14] sm:$0x1]
    %v6368 = vlaneseq
    %v6369 = vshrl.u32 %v6368, 7
    %v6370 = vsub.s32 0, %v6369
    %v6371 = vrot.slane %v6366, %v6370
    %vm6373 = vcmask 244736
    %v6375 = vsel %vm6373, %v6298, 0
    %v6378 = vsel %vm6373, %v6299, 0
    %v6381 = vsel %vm6373, %v6300, 0
    %v6384 = vsel %vm6373, %v6301, 0
    %v6387 = vsel %vm6373, %v6302, 0
    %v6390 = vsel %vm6373, %v6303, 0
    %v6393 = vsel %vm6373, %v6304, 0
    %v6396 = vsel %vm6373, %v6305, 0
    %v6399 = vsel %vm6373, %v6306, 0
    %v6402 = vsel %vm6373, %v6307, 0
    %v6405 = vsel %vm6373, %v6308, 0
    %v6408 = vsel %vm6373, %v6309, 0
    %v6411 = vsel %vm6373, %v6310, 0
    %v6414 = vsel %vm6373, %v6311, 0
    %v6417 = vsel %vm6373, %v6312, 0
    %v6420 = vsel %vm6373, %v6313, 0
    %v6423 = vsel %vm6373, %v6314, 0
    %v6426 = vsel %vm6373, %v6315, 0
    %v6429 = vsel %vm6373, %v6316, 0
    %v6432 = vsel %vm6373, %v6317, 0
    %v6435 = vsel %vm6373, %v6318, 0
    %v6438 = vsel %vm6373, %v6319, 0
    %v6441 = vsel %vm6373, %v6320, 0
    %v6444 = vsel %vm6373, %v6321, 0
    %v6447 = vsel %vm6373, %v6322, 0
    %v6450 = vsel %vm6373, %v6323, 0
    %v6453 = vsel %vm6373, %v6324, 0
    %v6456 = vsel %vm6373, %v6325, 0
    %v6459 = vsel %vm6373, %v6326, 0
    %v6462 = vsel %vm6373, %v6327, 0
    %v6465 = vsel %vm6373, %v6328, 0
    %v6468 = vsel %vm6373, %v6329, 0
    %v6471 = vsel %vm6373, %v6330, 0
    %v6474 = vsel %vm6373, %v6331, 0
    %v6477 = vsel %vm6373, %v6332, 0
    %v6480 = vsel %vm6373, %v6333, 0
    %v6483 = vsel %vm6373, %v6334, 0
    %v6486 = vsel %vm6373, %v6335, 0
    %v6489 = vsel %vm6373, %v6336, 0
    %v6492 = vsel %vm6373, %v6337, 0
    %v6495 = vsel %vm6373, %v6338, 0
    %v6498 = vsel %vm6373, %v6339, 0
    %v6501 = vsel %vm6373, %v6340, 0
    %v6504 = vsel %vm6373, %v6341, 0
    %v6507 = vsel %vm6373, %v6342, 0
    %v6510 = vsel %vm6373, %v6343, 0
    %v6513 = vsel %vm6373, %v6344, 0
    %v6516 = vsel %vm6373, %v6345, 0
    %v6519 = vsel %vm6373, %v6346, 0
    %v6522 = vsel %vm6373, %v6347, 0
    %v6525 = vsel %vm6373, %v6348, 0
    %v6528 = vsel %vm6373, %v6349, 0
    %v6531 = vsel %vm6373, %v6350, 0
    %v6534 = vsel %vm6373, %v6351, 0
    %v6537 = vsel %vm6373, %v6352, 0
    %v6540 = vsel %vm6373, %v6353, 0
    %v6543 = vsel %vm6373, %v6354, 0
    %v6546 = vsel %vm6373, %v6355, 0
    %v6549 = vsel %vm6373, %v6356, 0
    %v6552 = vsel %vm6373, %v6357, 0
    %v6555 = vsel %vm6373, %v6358, 0
    %v6558 = vsel %vm6373, %v6359, 0
    %v6561 = vsel %vm6373, %v6360, 0
    %v6564 = vsel %vm6373, %v6361, 0
    %vm6566 = vcmask 1045504
    %v6568 = vsel %vm6566, %v6365, 0
    %6570 = vmatprep.subr.mxu0 0.0
    %6571 = vmatpush1.msra.mxu0 %v6362
    %6572 = vmatprep.subr.mxu0 0.0
    %6573 = vmatpush1.msra.mxu0 %v6363
    %6574 = vmatprep.subr.mxu0 0.0
    %6575 = vmatpush1.msra.mxu0 %v6364
    %6576 = vmatprep.subr.mxu0 0.0
    %6577 = vmatpush1.msra.mxu0 %v6568
    %6578 = vmatprep.subr.mxu0 0.0
    %6579 = vmatpush1.msra.mxu0 0.0
    %6580 = vmatprep.subr.mxu0 0.0
    %6581 = vmatpush1.msra.mxu0 0.0
    %6582 = vmatprep.subr.mxu0 0.0
    %6583 = vmatpush1.msra.mxu0 0.0
    %6584 = vmatprep.subr.mxu0 0.0
    %6585 = vmatpush1.msra.mxu0 0.0
    %6586 = vmatprep.subr.mxu0 0.0
    %6587 = vmatpush1.msra.mxu0 0.0
    %6588 = vmatprep.subr.mxu0 0.0
    %6589 = vmatpush1.msra.mxu0 0.0
    %6590 = vmatprep.subr.mxu0 0.0
    %6591 = vmatpush1.msra.mxu0 0.0
    %6592 = vmatprep.subr.mxu0 0.0
    %6593 = vmatpush1.msra.mxu0 0.0
    %6594 = vmatprep.subr.mxu0 0.0
    %6595 = vmatpush1.msra.mxu0 0.0
    %6596 = vmatprep.subr.mxu0 0.0
    %6597 = vmatpush1.msra.mxu0 0.0
    %6598 = vmatprep.subr.mxu0 0.0
    %6599 = vmatpush1.msra.mxu0 0.0
    %6600 = vmatprep.subr.mxu0 0.0
    %6601 = vmatpush1.msra.mxu0 0.0
    %6602 = vmatprep.subr.mxu0 0.0
    %6603 = vmatpush1.msra.mxu0 0.0
    %6604 = vmatprep.subr.mxu0 0.0
    %6605 = vmatpush1.msra.mxu0 0.0
    %6606 = vmatprep.subr.mxu0 0.0
    %6607 = vmatpush1.msra.mxu0 0.0
    %6608 = vmatprep.subr.mxu0 0.0
    %6609 = vmatpush1.msra.mxu0 0.0
    %6610 = vmatprep.subr.mxu0 0.0
    %6611 = vmatpush1.msra.mxu0 0.0
    %6612 = vmatprep.subr.mxu0 0.0
    %6613 = vmatpush1.msra.mxu0 0.0
    %6614 = vmatprep.subr.mxu0 0.0
    %6615 = vmatpush1.msra.mxu0 0.0
    %6616 = vmatprep.subr.mxu0 0.0
    %6617 = vmatpush1.msra.mxu0 0.0
    %6618 = vmatprep.subr.mxu0 0.0
    %6619 = vmatpush1.msra.mxu0 0.0
    %6620 = vmatprep.subr.mxu0 0.0
    %6621 = vmatpush1.msra.mxu0 0.0
    %6622 = vmatprep.subr.mxu0 0.0
    %6623 = vmatpush1.msra.mxu0 0.0
    %6624 = vmatprep.subr.mxu0 0.0
    %6625 = vmatpush1.msra.mxu0 0.0
    %6626 = vmatprep.subr.mxu0 0.0
    %6627 = vmatpush1.msra.mxu0 0.0
    %6628 = vmatprep.subr.mxu0 0.0
    %6629 = vmatpush1.msra.mxu0 0.0
    %6630 = vmatprep.subr.mxu0 0.0
    %6631 = vmatpush1.msra.mxu0 0.0
    %6632 = vmatprep.subr.mxu0 0.0
    %6633 = vmatpush1.msra.mxu0 0.0
    %6634 = vmatprep.mubr.f32.mxu0 0.0
    %6635 = vmatmul.mubr.f32.gmra.mrb[0].mxu0 %v6375
    %v6636 = vpop.f32.mrb[0].mxu0
    %v6637 = vadd.f32 %v6371, %v6636
    %v6638 = vpop.f32.mrb[0].mxu0
    %6639 = vmatprep.mubr.f32.mxu0 0.0
    %6640 = vmatmul.mubr.f32.gmra.mrb[0].mxu0 %v6378
    %v6641 = vpop.f32.mrb[0].mxu0
    %v6642 = vadd.f32 %v6371, %v6641
    %v6643 = vpop.f32.mrb[0].mxu0
    %6644 = vmatprep.mubr.f32.mxu0 0.0
    %6645 = vmatmul.mubr.f32.gmra.mrb[0].mxu0 %v6381
    %v6646 = vpop.f32.mrb[0].mxu0
    %v6647 = vadd.f32 %v6371, %v6646
    %v6648 = vpop.f32.mrb[0].mxu0
    %6649 = vmatprep.mubr.f32.mxu0 0.0
    %6650 = vmatmul.mubr.f32.gmra.mrb[0].mxu0 %v6384
    %v6651 = vpop.f32.mrb[0].mxu0
    %v6652 = vadd.f32 %v6371, %v6651
    %v6653 = vpop.f32.mrb[0].mxu0
    %6654 = vmatprep.mubr.f32.mxu0 0.0
    %6655 = vmatmul.mubr.f32.gmra.mrb[0].mxu0 %v6387
    %v6656 = vpop.f32.mrb[0].mxu0
    %v6657 = vadd.f32 %v6371, %v6656
    %v6658 = vpop.f32.mrb[0].mxu0
    %6659 = vmatprep.mubr.f32.mxu0 0.0
    %6660 = vmatmul.mubr.f32.gmra.mrb[0].mxu0 %v6390
    %v6661 = vpop.f32.mrb[0].mxu0
    %v6662 = vadd.f32 %v6371, %v6661
    %v6663 = vpop.f32.mrb[0].mxu0
    %6664 = vmatprep.mubr.f32.mxu0 0.0
    %6665 = vmatmul.mubr.f32.gmra.mrb[0].mxu0 %v6393
    %v6666 = vpop.f32.mrb[0].mxu0
    %v6667 = vadd.f32 %v6371, %v6666
    %v6668 = vpop.f32.mrb[0].mxu0
    %6669 = vmatprep.mubr.f32.mxu0 0.0
    %6670 = vmatmul.mubr.f32.gmra.mrb[0].mxu0 %v6396
    %v6671 = vpop.f32.mrb[0].mxu0
    %v6672 = vadd.f32 %v6371, %v6671
    %v6673 = vpop.f32.mrb[0].mxu0
    %6674 = vmatprep.mubr.f32.mxu0 0.0
    %6675 = vmatmul.mubr.f32.gmra.mrb[0].mxu0 %v6399
    %v6676 = vpop.f32.mrb[0].mxu0
    %v6677 = vadd.f32 %v6371, %v6676
    %v6678 = vpop.f32.mrb[0].mxu0
    %6679 = vmatprep.mubr.f32.mxu0 0.0
    %6680 = vmatmul.mubr.f32.gmra.mrb[0].mxu0 %v6402
    %v6681 = vpop.f32.mrb[0].mxu0
    %v6682 = vadd.f32 %v6371, %v6681
    %v6683 = vpop.f32.mrb[0].mxu0
    %6684 = vmatprep.mubr.f32.mxu0 0.0
    %6685 = vmatmul.mubr.f32.gmra.mrb[0].mxu0 %v6405
    %v6686 = vpop.f32.mrb[0].mxu0
    %v6687 = vadd.f32 %v6371, %v6686
    %v6688 = vpop.f32.mrb[0].mxu0
    %6689 = vmatprep.mubr.f32.mxu0 0.0
    %6690 = vmatmul.mubr.f32.gmra.mrb[0].mxu0 %v6408
    %v6691 = vpop.f32.mrb[0].mxu0
    %v6692 = vadd.f32 %v6371, %v6691
    %v6693 = vpop.f32.mrb[0].mxu0
    %6694 = vmatprep.mubr.f32.mxu0 0.0
    %6695 = vmatmul.mubr.f32.gmra.mrb[0].mxu0 %v6411
    %v6696 = vpop.f32.mrb[0].mxu0
    %v6697 = vadd.f32 %v6371, %v6696
    %v6698 = vpop.f32.mrb[0].mxu0
    %6699 = vmatprep.mubr.f32.mxu0 0.0
    %6700 = vmatmul.mubr.f32.gmra.mrb[0].mxu0 %v6414
    %v6701 = vpop.f32.mrb[0].mxu0
    %v6702 = vadd.f32 %v6371, %v6701
    %v6703 = vpop.f32.mrb[0].mxu0
    %6704 = vmatprep.mubr.f32.mxu0 0.0
    %6705 = vmatmul.mubr.f32.gmra.mrb[0].mxu0 %v6417
    %v6706 = vpop.f32.mrb[0].mxu0
    %v6707 = vadd.f32 %v6371, %v6706
    %v6708 = vpop.f32.mrb[0].mxu0
    %6709 = vmatprep.mubr.f32.mxu0 0.0
    %6710 = vmatmul.mubr.f32.gmra.mrb[0].mxu0 %v6420
    %v6711 = vpop.f32.mrb[0].mxu0
    %v6712 = vadd.f32 %v6371, %v6711
    %v6713 = vpop.f32.mrb[0].mxu0
    %6714 = vmatprep.mubr.f32.mxu0 0.0
    %6715 = vmatmul.mubr.f32.gmra.mrb[0].mxu0 %v6423
    %v6716 = vpop.f32.mrb[0].mxu0
    %v6717 = vadd.f32 %v6371, %v6716
    %v6718 = vpop.f32.mrb[0].mxu0
    %6719 = vmatprep.mubr.f32.mxu0 0.0
    %6720 = vmatmul.mubr.f32.gmra.mrb[0].mxu0 %v6426
    %v6721 = vpop.f32.mrb[0].mxu0
    %v6722 = vadd.f32 %v6371, %v6721
    %v6723 = vpop.f32.mrb[0].mxu0
    %6724 = vmatprep.mubr.f32.mxu0 0.0
    %6725 = vmatmul.mubr.f32.gmra.mrb[0].mxu0 %v6429
    %v6726 = vpop.f32.mrb[0].mxu0
    %v6727 = vadd.f32 %v6371, %v6726
    %v6728 = vpop.f32.mrb[0].mxu0
    %6729 = vmatprep.mubr.f32.mxu0 0.0
    %6730 = vmatmul.mubr.f32.gmra.mrb[0].mxu0 %v6432
    %v6731 = vpop.f32.mrb[0].mxu0
    %v6732 = vadd.f32 %v6371, %v6731
    %v6733 = vpop.f32.mrb[0].mxu0
    %6734 = vmatprep.mubr.f32.mxu0 0.0
    %6735 = vmatmul.mubr.f32.gmra.mrb[0].mxu0 %v6435
    %v6736 = vpop.f32.mrb[0].mxu0
    %v6737 = vadd.f32 %v6371, %v6736
    %v6738 = vpop.f32.mrb[0].mxu0
    %6739 = vmatprep.mubr.f32.mxu0 0.0
    %6740 = vmatmul.mubr.f32.gmra.mrb[0].mxu0 %v6438
    %v6741 = vpop.f32.mrb[0].mxu0
    %v6742 = vadd.f32 %v6371, %v6741
    %v6743 = vpop.f32.mrb[0].mxu0
    %6744 = vmatprep.mubr.f32.mxu0 0.0
    %6745 = vmatmul.mubr.f32.gmra.mrb[0].mxu0 %v6441
    %v6746 = vpop.f32.mrb[0].mxu0
    %v6747 = vadd.f32 %v6371, %v6746
    %v6748 = vpop.f32.mrb[0].mxu0
    %6749 = vmatprep.mubr.f32.mxu0 0.0
    %6750 = vmatmul.mubr.f32.gmra.mrb[0].mxu0 %v6444
    %v6751 = vpop.f32.mrb[0].mxu0
    %v6752 = vadd.f32 %v6371, %v6751
    %v6753 = vpop.f32.mrb[0].mxu0
    %6754 = vmatprep.mubr.f32.mxu0 0.0
    %6755 = vmatmul.mubr.f32.gmra.mrb[0].mxu0 %v6447
    %v6756 = vpop.f32.mrb[0].mxu0
    %v6757 = vadd.f32 %v6371, %v6756
    %v6758 = vpop.f32.mrb[0].mxu0
    %6759 = vmatprep.mubr.f32.mxu0 0.0
    %6760 = vmatmul.mubr.f32.gmra.mrb[0].mxu0 %v6450
    %v6761 = vpop.f32.mrb[0].mxu0
    %v6762 = vadd.f32 %v6371, %v6761
    %v6763 = vpop.f32.mrb[0].mxu0
    %6764 = vmatprep.mubr.f32.mxu0 0.0
    %6765 = vmatmul.mubr.f32.gmra.mrb[0].mxu0 %v6453
    %v6766 = vpop.f32.mrb[0].mxu0
    %v6767 = vadd.f32 %v6371, %v6766
    %v6768 = vpop.f32.mrb[0].mxu0
    %6769 = vmatprep.mubr.f32.mxu0 0.0
    %6770 = vmatmul.mubr.f32.gmra.mrb[0].mxu0 %v6456
    %v6771 = vpop.f32.mrb[0].mxu0
    %v6772 = vadd.f32 %v6371, %v6771
    %v6773 = vpop.f32.mrb[0].mxu0
    %6774 = vmatprep.mubr.f32.mxu0 0.0
    %6775 = vmatmul.mubr.f32.gmra.mrb[0].mxu0 %v6459
    %v6776 = vpop.f32.mrb[0].mxu0
    %v6777 = vadd.f32 %v6371, %v6776
    %v6778 = vpop.f32.mrb[0].mxu0
    %6779 = vmatprep.mubr.f32.mxu0 0.0
    %6780 = vmatmul.mubr.f32.gmra.mrb[0].mxu0 %v6462
    %v6781 = vpop.f32.mrb[0].mxu0
    %v6782 = vadd.f32 %v6371, %v6781
    %v6783 = vpop.f32.mrb[0].mxu0
    %6784 = vmatprep.mubr.f32.mxu0 0.0
    %6785 = vmatmul.mubr.f32.gmra.mrb[0].mxu0 %v6465
    %v6786 = vpop.f32.mrb[0].mxu0
    %v6787 = vadd.f32 %v6371, %v6786
    %v6788 = vpop.f32.mrb[0].mxu0
    %6789 = vmatprep.mubr.f32.mxu0 0.0
    %6790 = vmatmul.mubr.f32.gmra.mrb[0].mxu0 %v6468
    %v6791 = vpop.f32.mrb[0].mxu0
    %v6792 = vadd.f32 %v6371, %v6791
    %v6793 = vpop.f32.mrb[0].mxu0
    %6794 = vmatprep.mubr.f32.mxu0 0.0
    %6795 = vmatmul.mubr.f32.gmra.mrb[0].mxu0 %v6471
    %v6796 = vpop.f32.mrb[0].mxu0
    %v6797 = vadd.f32 %v6371, %v6796
    %v6798 = vpop.f32.mrb[0].mxu0
    %6799 = vmatprep.mubr.f32.mxu0 0.0
    %6800 = vmatmul.mubr.f32.gmra.mrb[0].mxu0 %v6474
    %v6801 = vpop.f32.mrb[0].mxu0
    %v6802 = vadd.f32 %v6371, %v6801
    %v6803 = vpop.f32.mrb[0].mxu0
    %6804 = vmatprep.mubr.f32.mxu0 0.0
    %6805 = vmatmul.mubr.f32.gmra.mrb[0].mxu0 %v6477
    %v6806 = vpop.f32.mrb[0].mxu0
    %v6807 = vadd.f32 %v6371, %v6806
    %v6808 = vpop.f32.mrb[0].mxu0
    %6809 = vmatprep.mubr.f32.mxu0 0.0
    %6810 = vmatmul.mubr.f32.gmra.mrb[0].mxu0 %v6480
    %v6811 = vpop.f32.mrb[0].mxu0
    %v6812 = vadd.f32 %v6371, %v6811
    %v6813 = vpop.f32.mrb[0].mxu0
    %6814 = vmatprep.mubr.f32.mxu0 0.0
    %6815 = vmatmul.mubr.f32.gmra.mrb[0].mxu0 %v6483
    %v6816 = vpop.f32.mrb[0].mxu0
    %v6817 = vadd.f32 %v6371, %v6816
    %v6818 = vpop.f32.mrb[0].mxu0
    %6819 = vmatprep.mubr.f32.mxu0 0.0
    %6820 = vmatmul.mubr.f32.gmra.mrb[0].mxu0 %v6486
    %v6821 = vpop.f32.mrb[0].mxu0
    %v6822 = vadd.f32 %v6371, %v6821
    %v6823 = vpop.f32.mrb[0].mxu0
    %6824 = vmatprep.mubr.f32.mxu0 0.0
    %6825 = vmatmul.mubr.f32.gmra.mrb[0].mxu0 %v6489
    %v6826 = vpop.f32.mrb[0].mxu0
    %v6827 = vadd.f32 %v6371, %v6826
    %v6828 = vpop.f32.mrb[0].mxu0
    %6829 = vmatprep.mubr.f32.mxu0 0.0
    %6830 = vmatmul.mubr.f32.gmra.mrb[0].mxu0 %v6492
    %v6831 = vpop.f32.mrb[0].mxu0
    %v6832 = vadd.f32 %v6371, %v6831
    %v6833 = vpop.f32.mrb[0].mxu0
    %6834 = vmatprep.mubr.f32.mxu0 0.0
    %6835 = vmatmul.mubr.f32.gmra.mrb[0].mxu0 %v6495
    %v6836 = vpop.f32.mrb[0].mxu0
    %v6837 = vadd.f32 %v6371, %v6836
    %v6838 = vpop.f32.mrb[0].mxu0
    %6839 = vmatprep.mubr.f32.mxu0 0.0
    %6840 = vmatmul.mubr.f32.gmra.mrb[0].mxu0 %v6498
    %v6841 = vpop.f32.mrb[0].mxu0
    %v6842 = vadd.f32 %v6371, %v6841
    %v6843 = vpop.f32.mrb[0].mxu0
    %6844 = vmatprep.mubr.f32.mxu0 0.0
    %6845 = vmatmul.mubr.f32.gmra.mrb[0].mxu0 %v6501
    %v6846 = vpop.f32.mrb[0].mxu0
    %v6847 = vadd.f32 %v6371, %v6846
    %v6848 = vpop.f32.mrb[0].mxu0
    %6849 = vmatprep.mubr.f32.mxu0 0.0
    %6850 = vmatmul.mubr.f32.gmra.mrb[0].mxu0 %v6504
    %v6851 = vpop.f32.mrb[0].mxu0
    %v6852 = vadd.f32 %v6371, %v6851
    %v6853 = vpop.f32.mrb[0].mxu0
    %6854 = vmatprep.mubr.f32.mxu0 0.0
    %6855 = vmatmul.mubr.f32.gmra.mrb[0].mxu0 %v6507
    %v6856 = vpop.f32.mrb[0].mxu0
    %v6857 = vadd.f32 %v6371, %v6856
    %v6858 = vpop.f32.mrb[0].mxu0
    %6859 = vmatprep.mubr.f32.mxu0 0.0
    %6860 = vmatmul.mubr.f32.gmra.mrb[0].mxu0 %v6510
    %v6861 = vpop.f32.mrb[0].mxu0
    %v6862 = vadd.f32 %v6371, %v6861
    %v6863 = vpop.f32.mrb[0].mxu0
    %6864 = vmatprep.mubr.f32.mxu0 0.0
    %6865 = vmatmul.mubr.f32.gmra.mrb[0].mxu0 %v6513
    %v6866 = vpop.f32.mrb[0].mxu0
    %v6867 = vadd.f32 %v6371, %v6866
    %v6868 = vpop.f32.mrb[0].mxu0
    %6869 = vmatprep.mubr.f32.mxu0 0.0
    %6870 = vmatmul.mubr.f32.gmra.mrb[0].mxu0 %v6516
    %v6871 = vpop.f32.mrb[0].mxu0
    %v6872 = vadd.f32 %v6371, %v6871
    %v6873 = vpop.f32.mrb[0].mxu0
    %6874 = vmatprep.mubr.f32.mxu0 0.0
    %6875 = vmatmul.mubr.f32.gmra.mrb[0].mxu0 %v6519
    %v6876 = vpop.f32.mrb[0].mxu0
    %v6877 = vadd.f32 %v6371, %v6876
    %v6878 = vpop.f32.mrb[0].mxu0
    %6879 = vmatprep.mubr.f32.mxu0 0.0
    %6880 = vmatmul.mubr.f32.gmra.mrb[0].mxu0 %v6522
    %v6881 = vpop.f32.mrb[0].mxu0
    %v6882 = vadd.f32 %v6371, %v6881
    %v6883 = vpop.f32.mrb[0].mxu0
    %6884 = vmatprep.mubr.f32.mxu0 0.0
    %6885 = vmatmul.mubr.f32.gmra.mrb[0].mxu0 %v6525
    %v6886 = vpop.f32.mrb[0].mxu0
    %v6887 = vadd.f32 %v6371, %v6886
    %v6888 = vpop.f32.mrb[0].mxu0
    %6889 = vmatprep.mubr.f32.mxu0 0.0
    %6890 = vmatmul.mubr.f32.gmra.mrb[0].mxu0 %v6528
    %v6891 = vpop.f32.mrb[0].mxu0
    %v6892 = vadd.f32 %v6371, %v6891
    %v6893 = vpop.f32.mrb[0].mxu0
    %6894 = vmatprep.mubr.f32.mxu0 0.0
    %6895 = vmatmul.mubr.f32.gmra.mrb[0].mxu0 %v6531
    %v6896 = vpop.f32.mrb[0].mxu0
    %v6897 = vadd.f32 %v6371, %v6896
    %v6898 = vpop.f32.mrb[0].mxu0
    %6899 = vmatprep.mubr.f32.mxu0 0.0
    %6900 = vmatmul.mubr.f32.gmra.mrb[0].mxu0 %v6534
    %v6901 = vpop.f32.mrb[0].mxu0
    %v6902 = vadd.f32 %v6371, %v6901
    %v6903 = vpop.f32.mrb[0].mxu0
    %6904 = vmatprep.mubr.f32.mxu0 0.0
    %6905 = vmatmul.mubr.f32.gmra.mrb[0].mxu0 %v6537
    %v6906 = vpop.f32.mrb[0].mxu0
    %v6907 = vadd.f32 %v6371, %v6906
    %v6908 = vpop.f32.mrb[0].mxu0
    %6909 = vmatprep.mubr.f32.mxu0 0.0
    %6910 = vmatmul.mubr.f32.gmra.mrb[0].mxu0 %v6540
    %v6911 = vpop.f32.mrb[0].mxu0
    %v6912 = vadd.f32 %v6371, %v6911
    %v6913 = vpop.f32.mrb[0].mxu0
    %6914 = vmatprep.mubr.f32.mxu0 0.0
    %6915 = vmatmul.mubr.f32.gmra.mrb[0].mxu0 %v6543
    %v6916 = vpop.f32.mrb[0].mxu0
    %v6917 = vadd.f32 %v6371, %v6916
    %v6918 = vpop.f32.mrb[0].mxu0
    %6919 = vmatprep.mubr.f32.mxu0 0.0
    %6920 = vmatmul.mubr.f32.gmra.mrb[0].mxu0 %v6546
    %v6921 = vpop.f32.mrb[0].mxu0
    %v6922 = vadd.f32 %v6371, %v6921
    %v6923 = vpop.f32.mrb[0].mxu0
    %6924 = vmatprep.mubr.f32.mxu0 0.0
    %6925 = vmatmul.mubr.f32.gmra.mrb[0].mxu0 %v6549
    %v6926 = vpop.f32.mrb[0].mxu0
    %v6927 = vadd.f32 %v6371, %v6926
    %v6928 = vpop.f32.mrb[0].mxu0
    %6929 = vmatprep.mubr.f32.mxu0 0.0
    %6930 = vmatmul.mubr.f32.gmra.mrb[0].mxu0 %v6552
    %v6931 = vpop.f32.mrb[0].mxu0
    %v6932 = vadd.f32 %v6371, %v6931
    %v6933 = vpop.f32.mrb[0].mxu0
    %6934 = vmatprep.mubr.f32.mxu0 0.0
    %6935 = vmatmul.mubr.f32.gmra.mrb[0].mxu0 %v6555
    %v6936 = vpop.f32.mrb[0].mxu0
    %v6937 = vadd.f32 %v6371, %v6936
    %v6938 = vpop.f32.mrb[0].mxu0
    %6939 = vmatprep.mubr.f32.mxu0 0.0
    %6940 = vmatmul.mubr.f32.gmra.mrb[0].mxu0 %v6558
    %v6941 = vpop.f32.mrb[0].mxu0
    %v6942 = vadd.f32 %v6371, %v6941
    %v6943 = vpop.f32.mrb[0].mxu0
    %6944 = vmatprep.mubr.f32.mxu0 0.0
    %6945 = vmatmul.mubr.f32.gmra.mrb[0].mxu0 %v6561
    %v6946 = vpop.f32.mrb[0].mxu0
    %v6947 = vadd.f32 %v6371, %v6946
    %v6948 = vpop.f32.mrb[0].mxu0
    %6949 = vmatprep.mubr.f32.mxu0 0.0
    %6950 = vmatmul.mubr.f32.gmra.mrb[0].mxu0 %v6564
    %v6951 = vpop.f32.mrb[0].mxu0
    %v6952 = vadd.f32 %v6371, %v6951
    %v6953 = vpop.f32.mrb[0].mxu0
    %6954 = vdwg.mxu0
    %v6955 = vmax.f32 %v6637, 0.0
    %v6956 = vmax.f32 %v6642, 0.0
    %v6957 = vmax.f32 %v6647, 0.0
    %v6958 = vmax.f32 %v6652, 0.0
    %v6959 = vmax.f32 %v6657, 0.0
    %v6960 = vmax.f32 %v6662, 0.0
    %v6961 = vmax.f32 %v6667, 0.0
    %v6962 = vmax.f32 %v6672, 0.0
    %v6963 = vmax.f32 %v6677, 0.0
    %v6964 = vmax.f32 %v6682, 0.0
    %v6965 = vmax.f32 %v6687, 0.0
    %v6966 = vmax.f32 %v6692, 0.0
    %v6967 = vmax.f32 %v6697, 0.0
    %v6968 = vmax.f32 %v6702, 0.0
    %v6969 = vmax.f32 %v6707, 0.0
    %v6970 = vmax.f32 %v6712, 0.0
    %v6971 = vmax.f32 %v6717, 0.0
    %v6972 = vmax.f32 %v6722, 0.0
    %v6973 = vmax.f32 %v6727, 0.0
    %v6974 = vmax.f32 %v6732, 0.0
    %v6975 = vmax.f32 %v6737, 0.0
    %v6976 = vmax.f32 %v6742, 0.0
    %v6977 = vmax.f32 %v6747, 0.0
    %v6978 = vmax.f32 %v6752, 0.0
    %v6979 = vmax.f32 %v6757, 0.0
    %v6980 = vmax.f32 %v6762, 0.0
    %v6981 = vmax.f32 %v6767, 0.0
    %v6982 = vmax.f32 %v6772, 0.0
    %v6983 = vmax.f32 %v6777, 0.0
    %v6984 = vmax.f32 %v6782, 0.0
    %v6985 = vmax.f32 %v6787, 0.0
    %v6986 = vmax.f32 %v6792, 0.0
    %v6987 = vmax.f32 %v6797, 0.0
    %v6988 = vmax.f32 %v6802, 0.0
    %v6989 = vmax.f32 %v6807, 0.0
    %v6990 = vmax.f32 %v6812, 0.0
    %v6991 = vmax.f32 %v6817, 0.0
    %v6992 = vmax.f32 %v6822, 0.0
    %v6993 = vmax.f32 %v6827, 0.0
    %v6994 = vmax.f32 %v6832, 0.0
    %v6995 = vmax.f32 %v6837, 0.0
    %v6996 = vmax.f32 %v6842, 0.0
    %v6997 = vmax.f32 %v6847, 0.0
    %v6998 = vmax.f32 %v6852, 0.0
    %v6999 = vmax.f32 %v6857, 0.0
    %v7000 = vmax.f32 %v6862, 0.0
    %v7001 = vmax.f32 %v6867, 0.0
    %v7002 = vmax.f32 %v6872, 0.0
    %v7003 = vmax.f32 %v6877, 0.0
    %v7004 = vmax.f32 %v6882, 0.0
    %v7005 = vmax.f32 %v6887, 0.0
    %v7006 = vmax.f32 %v6892, 0.0
    %v7007 = vmax.f32 %v6897, 0.0
    %v7008 = vmax.f32 %v6902, 0.0
    %v7009 = vmax.f32 %v6907, 0.0
    %v7010 = vmax.f32 %v6912, 0.0
    %v7011 = vmax.f32 %v6917, 0.0
    %v7012 = vmax.f32 %v6922, 0.0
    %v7013 = vmax.f32 %v6927, 0.0
    %v7014 = vmax.f32 %v6932, 0.0
    %v7015 = vmax.f32 %v6937, 0.0
    %v7016 = vmax.f32 %v6942, 0.0
    %v7017 = vmax.f32 %v6947, 0.0
    %v7018 = vmax.f32 %v6952, 0.0
    %v7019 = vld [vmem:[%s15] sm:$0xff]
    %v7020 = vld [vmem:[%s15 + $0x8] sm:$0x3]
    %v7021 = vld [vmem:[%s16] sm:$0x1]
    %v7023 = vlaneseq
    %v7024 = vshrl.u32 %v7023, 7
    %v7025 = vsub.s32 0, %v7024
    %v7026 = vrot.slane %v7021, %v7025
    %vm7028 = vcmask 80896
    %v7030 = vsel %vm7028, %v6955, 0
    %v7033 = vsel %vm7028, %v6956, 0
    %v7036 = vsel %vm7028, %v6957, 0
    %v7039 = vsel %vm7028, %v6958, 0
    %v7042 = vsel %vm7028, %v6959, 0
    %v7045 = vsel %vm7028, %v6960, 0
    %v7048 = vsel %vm7028, %v6961, 0
    %v7051 = vsel %vm7028, %v6962, 0
    %v7054 = vsel %vm7028, %v6963, 0
    %v7057 = vsel %vm7028, %v6964, 0
    %v7060 = vsel %vm7028, %v6965, 0
    %v7063 = vsel %vm7028, %v6966, 0
    %v7066 = vsel %vm7028, %v6967, 0
    %v7069 = vsel %vm7028, %v6968, 0
    %v7072 = vsel %vm7028, %v6969, 0
    %v7075 = vsel %vm7028, %v6970, 0
    %v7078 = vsel %vm7028, %v6971, 0
    %v7081 = vsel %vm7028, %v6972, 0
    %v7084 = vsel %vm7028, %v6973, 0
    %v7087 = vsel %vm7028, %v6974, 0
    %v7090 = vsel %vm7028, %v6975, 0
    %v7093 = vsel %vm7028, %v6976, 0
    %v7096 = vsel %vm7028, %v6977, 0
    %v7099 = vsel %vm7028, %v6978, 0
    %v7102 = vsel %vm7028, %v6979, 0
    %v7105 = vsel %vm7028, %v6980, 0
    %v7108 = vsel %vm7028, %v6981, 0
    %v7111 = vsel %vm7028, %v6982, 0
    %v7114 = vsel %vm7028, %v6983, 0
    %v7117 = vsel %vm7028, %v6984, 0
    %v7120 = vsel %vm7028, %v6985, 0
    %v7123 = vsel %vm7028, %v6986, 0
    %v7126 = vsel %vm7028, %v6987, 0
    %v7129 = vsel %vm7028, %v6988, 0
    %v7132 = vsel %vm7028, %v6989, 0
    %v7135 = vsel %vm7028, %v6990, 0
    %v7138 = vsel %vm7028, %v6991, 0
    %v7141 = vsel %vm7028, %v6992, 0
    %v7144 = vsel %vm7028, %v6993, 0
    %v7147 = vsel %vm7028, %v6994, 0
    %v7150 = vsel %vm7028, %v6995, 0
    %v7153 = vsel %vm7028, %v6996, 0
    %v7156 = vsel %vm7028, %v6997, 0
    %v7159 = vsel %vm7028, %v6998, 0
    %v7162 = vsel %vm7028, %v6999, 0
    %v7165 = vsel %vm7028, %v7000, 0
    %v7168 = vsel %vm7028, %v7001, 0
    %v7171 = vsel %vm7028, %v7002, 0
    %v7174 = vsel %vm7028, %v7003, 0
    %v7177 = vsel %vm7028, %v7004, 0
    %v7180 = vsel %vm7028, %v7005, 0
    %v7183 = vsel %vm7028, %v7006, 0
    %v7186 = vsel %vm7028, %v7007, 0
    %v7189 = vsel %vm7028, %v7008, 0
    %v7192 = vsel %vm7028, %v7009, 0
    %v7195 = vsel %vm7028, %v7010, 0
    %v7198 = vsel %vm7028, %v7011, 0
    %v7201 = vsel %vm7028, %v7012, 0
    %v7204 = vsel %vm7028, %v7013, 0
    %v7207 = vsel %vm7028, %v7014, 0
    %v7210 = vsel %vm7028, %v7015, 0
    %v7213 = vsel %vm7028, %v7016, 0
    %v7216 = vsel %vm7028, %v7017, 0
    %v7219 = vsel %vm7028, %v7018, 0
    %vm7221 = vcmask 1041408
    %v7223 = vsel %vm7221, %v7020, 0
    %7225 = vmatprep.subr.mxu0 0.0
    %7226 = vmatpush1.msra.mxu0 %v7019
    %7227 = vmatprep.subr.mxu0 0.0
    %7228 = vmatpush1.msra.mxu0 %v7223
    %7229 = vmatprep.subr.mxu0 0.0
    %7230 = vmatpush1.msra.mxu0 0.0
    %7231 = vmatprep.subr.mxu0 0.0
    %7232 = vmatpush1.msra.mxu0 0.0
    %7233 = vmatprep.subr.mxu0 0.0
    %7234 = vmatpush1.msra.mxu0 0.0
    %7235 = vmatprep.subr.mxu0 0.0
    %7236 = vmatpush1.msra.mxu0 0.0
    %7237 = vmatprep.subr.mxu0 0.0
    %7238 = vmatpush1.msra.mxu0 0.0
    %7239 = vmatprep.subr.mxu0 0.0
    %7240 = vmatpush1.msra.mxu0 0.0
    %7241 = vmatprep.subr.mxu0 0.0
    %7242 = vmatpush1.msra.mxu0 0.0
    %7243 = vmatprep.subr.mxu0 0.0
    %7244 = vmatpush1.msra.mxu0 0.0
    %7245 = vmatprep.subr.mxu0 0.0
    %7246 = vmatpush1.msra.mxu0 0.0
    %7247 = vmatprep.subr.mxu0 0.0
    %7248 = vmatpush1.msra.mxu0 0.0
    %7249 = vmatprep.subr.mxu0 0.0
    %7250 = vmatpush1.msra.mxu0 0.0
    %7251 = vmatprep.subr.mxu0 0.0
    %7252 = vmatpush1.msra.mxu0 0.0
    %7253 = vmatprep.subr.mxu0 0.0
    %7254 = vmatpush1.msra.mxu0 0.0
    %7255 = vmatprep.subr.mxu0 0.0
    %7256 = vmatpush1.msra.mxu0 0.0
    %7257 = vmatprep.subr.mxu0 0.0
    %7258 = vmatpush1.msra.mxu0 0.0
    %7259 = vmatprep.subr.mxu0 0.0
    %7260 = vmatpush1.msra.mxu0 0.0
    %7261 = vmatprep.subr.mxu0 0.0
    %7262 = vmatpush1.msra.mxu0 0.0
    %7263 = vmatprep.subr.mxu0 0.0
    %7264 = vmatpush1.msra.mxu0 0.0
    %7265 = vmatprep.subr.mxu0 0.0
    %7266 = vmatpush1.msra.mxu0 0.0
    %7267 = vmatprep.subr.mxu0 0.0
    %7268 = vmatpush1.msra.mxu0 0.0
    %7269 = vmatprep.subr.mxu0 0.0
    %7270 = vmatpush1.msra.mxu0 0.0
    %7271 = vmatprep.subr.mxu0 0.0
    %7272 = vmatpush1.msra.mxu0 0.0
    %7273 = vmatprep.subr.mxu0 0.0
    %7274 = vmatpush1.msra.mxu0 0.0
    %7275 = vmatprep.subr.mxu0 0.0
    %7276 = vmatpush1.msra.mxu0 0.0
    %7277 = vmatprep.subr.mxu0 0.0
    %7278 = vmatpush1.msra.mxu0 0.0
    %7279 = vmatprep.subr.mxu0 0.0
    %7280 = vmatpush1.msra.mxu0 0.0
    %7281 = vmatprep.subr.mxu0 0.0
    %7282 = vmatpush1.msra.mxu0 0.0
    %7283 = vmatprep.subr.mxu0 0.0
    %7284 = vmatpush1.msra.mxu0 0.0
    %7285 = vmatprep.subr.mxu0 0.0
    %7286 = vmatpush1.msra.mxu0 0.0
    %7287 = vmatprep.subr.mxu0 0.0
    %7288 = vmatpush1.msra.mxu0 0.0
    %7289 = vmatprep.mubr.f32.mxu0 0.0
    %7290 = vmatmul.mubr.f32.gmra.mrb[0].mxu0 %v7030
    %v7291 = vpop.f32.mrb[0].mxu0
    %v7292 = vadd.f32 %v7026, %v7291
    %v7293 = vpop.f32.mrb[0].mxu0
    %7294 = vmatprep.mubr.f32.mxu0 0.0
    %7295 = vmatmul.mubr.f32.gmra.mrb[0].mxu0 %v7033
    %v7296 = vpop.f32.mrb[0].mxu0
    %v7297 = vadd.f32 %v7026, %v7296
    %v7298 = vpop.f32.mrb[0].mxu0
    %7299 = vmatprep.mubr.f32.mxu0 0.0
    %7300 = vmatmul.mubr.f32.gmra.mrb[0].mxu0 %v7036
    %v7301 = vpop.f32.mrb[0].mxu0
    %v7302 = vadd.f32 %v7026, %v7301
    %v7303 = vpop.f32.mrb[0].mxu0
    %7304 = vmatprep.mubr.f32.mxu0 0.0
    %7305 = vmatmul.mubr.f32.gmra.mrb[0].mxu0 %v7039
    %v7306 = vpop.f32.mrb[0].mxu0
    %v7307 = vadd.f32 %v7026, %v7306
    %v7308 = vpop.f32.mrb[0].mxu0
    %7309 = vmatprep.mubr.f32.mxu0 0.0
    %7310 = vmatmul.mubr.f32.gmra.mrb[0].mxu0 %v7042
    %v7311 = vpop.f32.mrb[0].mxu0
    %v7312 = vadd.f32 %v7026, %v7311
    %v7313 = vpop.f32.mrb[0].mxu0
    %7314 = vmatprep.mubr.f32.mxu0 0.0
    %7315 = vmatmul.mubr.f32.gmra.mrb[0].mxu0 %v7045
    %v7316 = vpop.f32.mrb[0].mxu0
    %v7317 = vadd.f32 %v7026, %v7316
    %v7318 = vpop.f32.mrb[0].mxu0
    %7319 = vmatprep.mubr.f32.mxu0 0.0
    %7320 = vmatmul.mubr.f32.gmra.mrb[0].mxu0 %v7048
    %v7321 = vpop.f32.mrb[0].mxu0
    %v7322 = vadd.f32 %v7026, %v7321
    %v7323 = vpop.f32.mrb[0].mxu0
    %7324 = vmatprep.mubr.f32.mxu0 0.0
    %7325 = vmatmul.mubr.f32.gmra.mrb[0].mxu0 %v7051
    %v7326 = vpop.f32.mrb[0].mxu0
    %v7327 = vadd.f32 %v7026, %v7326
    %v7328 = vpop.f32.mrb[0].mxu0
    %7329 = vmatprep.mubr.f32.mxu0 0.0
    %7330 = vmatmul.mubr.f32.gmra.mrb[0].mxu0 %v7054
    %v7331 = vpop.f32.mrb[0].mxu0
    %v7332 = vadd.f32 %v7026, %v7331
    %v7333 = vpop.f32.mrb[0].mxu0
    %7334 = vmatprep.mubr.f32.mxu0 0.0
    %7335 = vmatmul.mubr.f32.gmra.mrb[0].mxu0 %v7057
    %v7336 = vpop.f32.mrb[0].mxu0
    %v7337 = vadd.f32 %v7026, %v7336
    %v7338 = vpop.f32.mrb[0].mxu0
    %7339 = vmatprep.mubr.f32.mxu0 0.0
    %7340 = vmatmul.mubr.f32.gmra.mrb[0].mxu0 %v7060
    %v7341 = vpop.f32.mrb[0].mxu0
    %v7342 = vadd.f32 %v7026, %v7341
    %v7343 = vpop.f32.mrb[0].mxu0
    %7344 = vmatprep.mubr.f32.mxu0 0.0
    %7345 = vmatmul.mubr.f32.gmra.mrb[0].mxu0 %v7063
    %v7346 = vpop.f32.mrb[0].mxu0
    %v7347 = vadd.f32 %v7026, %v7346
    %v7348 = vpop.f32.mrb[0].mxu0
    %7349 = vmatprep.mubr.f32.mxu0 0.0
    %7350 = vmatmul.mubr.f32.gmra.mrb[0].mxu0 %v7066
    %v7351 = vpop.f32.mrb[0].mxu0
    %v7352 = vadd.f32 %v7026, %v7351
    %v7353 = vpop.f32.mrb[0].mxu0
    %7354 = vmatprep.mubr.f32.mxu0 0.0
    %7355 = vmatmul.mubr.f32.gmra.mrb[0].mxu0 %v7069
    %v7356 = vpop.f32.mrb[0].mxu0
    %v7357 = vadd.f32 %v7026, %v7356
    %v7358 = vpop.f32.mrb[0].mxu0
    %7359 = vmatprep.mubr.f32.mxu0 0.0
    %7360 = vmatmul.mubr.f32.gmra.mrb[0].mxu0 %v7072
    %v7361 = vpop.f32.mrb[0].mxu0
    %v7362 = vadd.f32 %v7026, %v7361
    %v7363 = vpop.f32.mrb[0].mxu0
    %7364 = vmatprep.mubr.f32.mxu0 0.0
    %7365 = vmatmul.mubr.f32.gmra.mrb[0].mxu0 %v7075
    %v7366 = vpop.f32.mrb[0].mxu0
    %v7367 = vadd.f32 %v7026, %v7366
    %v7368 = vpop.f32.mrb[0].mxu0
    %7369 = vmatprep.mubr.f32.mxu0 0.0
    %7370 = vmatmul.mubr.f32.gmra.mrb[0].mxu0 %v7078
    %v7371 = vpop.f32.mrb[0].mxu0
    %v7372 = vadd.f32 %v7026, %v7371
    %v7373 = vpop.f32.mrb[0].mxu0
    %7374 = vmatprep.mubr.f32.mxu0 0.0
    %7375 = vmatmul.mubr.f32.gmra.mrb[0].mxu0 %v7081
    %v7376 = vpop.f32.mrb[0].mxu0
    %v7377 = vadd.f32 %v7026, %v7376
    %v7378 = vpop.f32.mrb[0].mxu0
    %7379 = vmatprep.mubr.f32.mxu0 0.0
    %7380 = vmatmul.mubr.f32.gmra.mrb[0].mxu0 %v7084
    %v7381 = vpop.f32.mrb[0].mxu0
    %v7382 = vadd.f32 %v7026, %v7381
    %v7383 = vpop.f32.mrb[0].mxu0
    %7384 = vmatprep.mubr.f32.mxu0 0.0
    %7385 = vmatmul.mubr.f32.gmra.mrb[0].mxu0 %v7087
    %v7386 = vpop.f32.mrb[0].mxu0
    %v7387 = vadd.f32 %v7026, %v7386
    %v7388 = vpop.f32.mrb[0].mxu0
    %7389 = vmatprep.mubr.f32.mxu0 0.0
    %7390 = vmatmul.mubr.f32.gmra.mrb[0].mxu0 %v7090
    %v7391 = vpop.f32.mrb[0].mxu0
    %v7392 = vadd.f32 %v7026, %v7391
    %v7393 = vpop.f32.mrb[0].mxu0
    %7394 = vmatprep.mubr.f32.mxu0 0.0
    %7395 = vmatmul.mubr.f32.gmra.mrb[0].mxu0 %v7093
    %v7396 = vpop.f32.mrb[0].mxu0
    %v7397 = vadd.f32 %v7026, %v7396
    %v7398 = vpop.f32.mrb[0].mxu0
    %7399 = vmatprep.mubr.f32.mxu0 0.0
    %7400 = vmatmul.mubr.f32.gmra.mrb[0].mxu0 %v7096
    %v7401 = vpop.f32.mrb[0].mxu0
    %v7402 = vadd.f32 %v7026, %v7401
    %v7403 = vpop.f32.mrb[0].mxu0
    %7404 = vmatprep.mubr.f32.mxu0 0.0
    %7405 = vmatmul.mubr.f32.gmra.mrb[0].mxu0 %v7099
    %v7406 = vpop.f32.mrb[0].mxu0
    %v7407 = vadd.f32 %v7026, %v7406
    %v7408 = vpop.f32.mrb[0].mxu0
    %7409 = vmatprep.mubr.f32.mxu0 0.0
    %7410 = vmatmul.mubr.f32.gmra.mrb[0].mxu0 %v7102
    %v7411 = vpop.f32.mrb[0].mxu0
    %v7412 = vadd.f32 %v7026, %v7411
    %v7413 = vpop.f32.mrb[0].mxu0
    %7414 = vmatprep.mubr.f32.mxu0 0.0
    %7415 = vmatmul.mubr.f32.gmra.mrb[0].mxu0 %v7105
    %v7416 = vpop.f32.mrb[0].mxu0
    %v7417 = vadd.f32 %v7026, %v7416
    %v7418 = vpop.f32.mrb[0].mxu0
    %7419 = vmatprep.mubr.f32.mxu0 0.0
    %7420 = vmatmul.mubr.f32.gmra.mrb[0].mxu0 %v7108
    %v7421 = vpop.f32.mrb[0].mxu0
    %v7422 = vadd.f32 %v7026, %v7421
    %v7423 = vpop.f32.mrb[0].mxu0
    %7424 = vmatprep.mubr.f32.mxu0 0.0
    %7425 = vmatmul.mubr.f32.gmra.mrb[0].mxu0 %v7111
    %v7426 = vpop.f32.mrb[0].mxu0
    %v7427 = vadd.f32 %v7026, %v7426
    %v7428 = vpop.f32.mrb[0].mxu0
    %7429 = vmatprep.mubr.f32.mxu0 0.0
    %7430 = vmatmul.mubr.f32.gmra.mrb[0].mxu0 %v7114
    %v7431 = vpop.f32.mrb[0].mxu0
    %v7432 = vadd.f32 %v7026, %v7431
    %v7433 = vpop.f32.mrb[0].mxu0
    %7434 = vmatprep.mubr.f32.mxu0 0.0
    %7435 = vmatmul.mubr.f32.gmra.mrb[0].mxu0 %v7117
    %v7436 = vpop.f32.mrb[0].mxu0
    %v7437 = vadd.f32 %v7026, %v7436
    %v7438 = vpop.f32.mrb[0].mxu0
    %7439 = vmatprep.mubr.f32.mxu0 0.0
    %7440 = vmatmul.mubr.f32.gmra.mrb[0].mxu0 %v7120
    %v7441 = vpop.f32.mrb[0].mxu0
    %v7442 = vadd.f32 %v7026, %v7441
    %v7443 = vpop.f32.mrb[0].mxu0
    %7444 = vmatprep.mubr.f32.mxu0 0.0
    %7445 = vmatmul.mubr.f32.gmra.mrb[0].mxu0 %v7123
    %v7446 = vpop.f32.mrb[0].mxu0
    %v7447 = vadd.f32 %v7026, %v7446
    %v7448 = vpop.f32.mrb[0].mxu0
    %7449 = vmatprep.mubr.f32.mxu0 0.0
    %7450 = vmatmul.mubr.f32.gmra.mrb[0].mxu0 %v7126
    %v7451 = vpop.f32.mrb[0].mxu0
    %v7452 = vadd.f32 %v7026, %v7451
    %v7453 = vpop.f32.mrb[0].mxu0
    %7454 = vmatprep.mubr.f32.mxu0 0.0
    %7455 = vmatmul.mubr.f32.gmra.mrb[0].mxu0 %v7129
    %v7456 = vpop.f32.mrb[0].mxu0
    %v7457 = vadd.f32 %v7026, %v7456
    %v7458 = vpop.f32.mrb[0].mxu0
    %7459 = vmatprep.mubr.f32.mxu0 0.0
    %7460 = vmatmul.mubr.f32.gmra.mrb[0].mxu0 %v7132
    %v7461 = vpop.f32.mrb[0].mxu0
    %v7462 = vadd.f32 %v7026, %v7461
    %v7463 = vpop.f32.mrb[0].mxu0
    %7464 = vmatprep.mubr.f32.mxu0 0.0
    %7465 = vmatmul.mubr.f32.gmra.mrb[0].mxu0 %v7135
    %v7466 = vpop.f32.mrb[0].mxu0
    %v7467 = vadd.f32 %v7026, %v7466
    %v7468 = vpop.f32.mrb[0].mxu0
    %7469 = vmatprep.mubr.f32.mxu0 0.0
    %7470 = vmatmul.mubr.f32.gmra.mrb[0].mxu0 %v7138
    %v7471 = vpop.f32.mrb[0].mxu0
    %v7472 = vadd.f32 %v7026, %v7471
    %v7473 = vpop.f32.mrb[0].mxu0
    %7474 = vmatprep.mubr.f32.mxu0 0.0
    %7475 = vmatmul.mubr.f32.gmra.mrb[0].mxu0 %v7141
    %v7476 = vpop.f32.mrb[0].mxu0
    %v7477 = vadd.f32 %v7026, %v7476
    %v7478 = vpop.f32.mrb[0].mxu0
    %7479 = vmatprep.mubr.f32.mxu0 0.0
    %7480 = vmatmul.mubr.f32.gmra.mrb[0].mxu0 %v7144
    %v7481 = vpop.f32.mrb[0].mxu0
    %v7482 = vadd.f32 %v7026, %v7481
    %v7483 = vpop.f32.mrb[0].mxu0
    %7484 = vmatprep.mubr.f32.mxu0 0.0
    %7485 = vmatmul.mubr.f32.gmra.mrb[0].mxu0 %v7147
    %v7486 = vpop.f32.mrb[0].mxu0
    %v7487 = vadd.f32 %v7026, %v7486
    %v7488 = vpop.f32.mrb[0].mxu0
    %7489 = vmatprep.mubr.f32.mxu0 0.0
    %7490 = vmatmul.mubr.f32.gmra.mrb[0].mxu0 %v7150
    %v7491 = vpop.f32.mrb[0].mxu0
    %v7492 = vadd.f32 %v7026, %v7491
    %v7493 = vpop.f32.mrb[0].mxu0
    %7494 = vmatprep.mubr.f32.mxu0 0.0
    %7495 = vmatmul.mubr.f32.gmra.mrb[0].mxu0 %v7153
    %v7496 = vpop.f32.mrb[0].mxu0
    %v7497 = vadd.f32 %v7026, %v7496
    %v7498 = vpop.f32.mrb[0].mxu0
    %7499 = vmatprep.mubr.f32.mxu0 0.0
    %7500 = vmatmul.mubr.f32.gmra.mrb[0].mxu0 %v7156
    %v7501 = vpop.f32.mrb[0].mxu0
    %v7502 = vadd.f32 %v7026, %v7501
    %v7503 = vpop.f32.mrb[0].mxu0
    %7504 = vmatprep.mubr.f32.mxu0 0.0
    %7505 = vmatmul.mubr.f32.gmra.mrb[0].mxu0 %v7159
    %v7506 = vpop.f32.mrb[0].mxu0
    %v7507 = vadd.f32 %v7026, %v7506
    %v7508 = vpop.f32.mrb[0].mxu0
    %7509 = vmatprep.mubr.f32.mxu0 0.0
    %7510 = vmatmul.mubr.f32.gmra.mrb[0].mxu0 %v7162
    %v7511 = vpop.f32.mrb[0].mxu0
    %v7512 = vadd.f32 %v7026, %v7511
    %v7513 = vpop.f32.mrb[0].mxu0
    %7514 = vmatprep.mubr.f32.mxu0 0.0
    %7515 = vmatmul.mubr.f32.gmra.mrb[0].mxu0 %v7165
    %v7516 = vpop.f32.mrb[0].mxu0
    %v7517 = vadd.f32 %v7026, %v7516
    %v7518 = vpop.f32.mrb[0].mxu0
    %7519 = vmatprep.mubr.f32.mxu0 0.0
    %7520 = vmatmul.mubr.f32.gmra.mrb[0].mxu0 %v7168
    %v7521 = vpop.f32.mrb[0].mxu0
    %v7522 = vadd.f32 %v7026, %v7521
    %v7523 = vpop.f32.mrb[0].mxu0
    %7524 = vmatprep.mubr.f32.mxu0 0.0
    %7525 = vmatmul.mubr.f32.gmra.mrb[0].mxu0 %v7171
    %v7526 = vpop.f32.mrb[0].mxu0
    %v7527 = vadd.f32 %v7026, %v7526
    %v7528 = vpop.f32.mrb[0].mxu0
    %7529 = vmatprep.mubr.f32.mxu0 0.0
    %7530 = vmatmul.mubr.f32.gmra.mrb[0].mxu0 %v7174
    %v7531 = vpop.f32.mrb[0].mxu0
    %v7532 = vadd.f32 %v7026, %v7531
    %v7533 = vpop.f32.mrb[0].mxu0
    %7534 = vmatprep.mubr.f32.mxu0 0.0
    %7535 = vmatmul.mubr.f32.gmra.mrb[0].mxu0 %v7177
    %v7536 = vpop.f32.mrb[0].mxu0
    %v7537 = vadd.f32 %v7026, %v7536
    %v7538 = vpop.f32.mrb[0].mxu0
    %7539 = vmatprep.mubr.f32.mxu0 0.0
    %7540 = vmatmul.mubr.f32.gmra.mrb[0].mxu0 %v7180
    %v7541 = vpop.f32.mrb[0].mxu0
    %v7542 = vadd.f32 %v7026, %v7541
    %v7543 = vpop.f32.mrb[0].mxu0
    %7544 = vmatprep.mubr.f32.mxu0 0.0
    %7545 = vmatmul.mubr.f32.gmra.mrb[0].mxu0 %v7183
    %v7546 = vpop.f32.mrb[0].mxu0
    %v7547 = vadd.f32 %v7026, %v7546
    %v7548 = vpop.f32.mrb[0].mxu0
    %7549 = vmatprep.mubr.f32.mxu0 0.0
    %7550 = vmatmul.mubr.f32.gmra.mrb[0].mxu0 %v7186
    %v7551 = vpop.f32.mrb[0].mxu0
    %v7552 = vadd.f32 %v7026, %v7551
    %v7553 = vpop.f32.mrb[0].mxu0
    %7554 = vmatprep.mubr.f32.mxu0 0.0
    %7555 = vmatmul.mubr.f32.gmra.mrb[0].mxu0 %v7189
    %v7556 = vpop.f32.mrb[0].mxu0
    %v7557 = vadd.f32 %v7026, %v7556
    %v7558 = vpop.f32.mrb[0].mxu0
    %7559 = vmatprep.mubr.f32.mxu0 0.0
    %7560 = vmatmul.mubr.f32.gmra.mrb[0].mxu0 %v7192
    %v7561 = vpop.f32.mrb[0].mxu0
    %v7562 = vadd.f32 %v7026, %v7561
    %v7563 = vpop.f32.mrb[0].mxu0
    %7564 = vmatprep.mubr.f32.mxu0 0.0
    %7565 = vmatmul.mubr.f32.gmra.mrb[0].mxu0 %v7195
    %v7566 = vpop.f32.mrb[0].mxu0
    %v7567 = vadd.f32 %v7026, %v7566
    %v7568 = vpop.f32.mrb[0].mxu0
    %7569 = vmatprep.mubr.f32.mxu0 0.0
    %7570 = vmatmul.mubr.f32.gmra.mrb[0].mxu0 %v7198
    %v7571 = vpop.f32.mrb[0].mxu0
    %v7572 = vadd.f32 %v7026, %v7571
    %v7573 = vpop.f32.mrb[0].mxu0
    %7574 = vmatprep.mubr.f32.mxu0 0.0
    %7575 = vmatmul.mubr.f32.gmra.mrb[0].mxu0 %v7201
    %v7576 = vpop.f32.mrb[0].mxu0
    %v7577 = vadd.f32 %v7026, %v7576
    %v7578 = vpop.f32.mrb[0].mxu0
    %7579 = vmatprep.mubr.f32.mxu0 0.0
    %7580 = vmatmul.mubr.f32.gmra.mrb[0].mxu0 %v7204
    %v7581 = vpop.f32.mrb[0].mxu0
    %v7582 = vadd.f32 %v7026, %v7581
    %v7583 = vpop.f32.mrb[0].mxu0
    %7584 = vmatprep.mubr.f32.mxu0 0.0
    %7585 = vmatmul.mubr.f32.gmra.mrb[0].mxu0 %v7207
    %v7586 = vpop.f32.mrb[0].mxu0
    %v7587 = vadd.f32 %v7026, %v7586
    %v7588 = vpop.f32.mrb[0].mxu0
    %7589 = vmatprep.mubr.f32.mxu0 0.0
    %7590 = vmatmul.mubr.f32.gmra.mrb[0].mxu0 %v7210
    %v7591 = vpop.f32.mrb[0].mxu0
    %v7592 = vadd.f32 %v7026, %v7591
    %v7593 = vpop.f32.mrb[0].mxu0
    %7594 = vmatprep.mubr.f32.mxu0 0.0
    %7595 = vmatmul.mubr.f32.gmra.mrb[0].mxu0 %v7213
    %v7596 = vpop.f32.mrb[0].mxu0
    %v7597 = vadd.f32 %v7026, %v7596
    %v7598 = vpop.f32.mrb[0].mxu0
    %7599 = vmatprep.mubr.f32.mxu0 0.0
    %7600 = vmatmul.mubr.f32.gmra.mrb[0].mxu0 %v7216
    %v7601 = vpop.f32.mrb[0].mxu0
    %v7602 = vadd.f32 %v7026, %v7601
    %v7603 = vpop.f32.mrb[0].mxu0
    %7604 = vmatprep.mubr.f32.mxu0 0.0
    %7605 = vmatmul.mubr.f32.gmra.mrb[0].mxu0 %v7219
    %v7606 = vpop.f32.mrb[0].mxu0
    %v7607 = vadd.f32 %v7026, %v7606
    %v7608 = vpop.f32.mrb[0].mxu0
    %7609 = vdwg.mxu0
    %7610 = vst [vmem:[%s17] sm:$0xff] %v7292
    %7611 = vst [vmem:[%s17 + $0x8] sm:$0xff] %v7297
    %7612 = vst [vmem:[%s17 + $0x10] sm:$0xff] %v7302
    %7613 = vst [vmem:[%s17 + $0x18] sm:$0xff] %v7307
    %7614 = vst [vmem:[%s17 + $0x20] sm:$0xff] %v7312
    %7615 = vst [vmem:[%s17 + $0x28] sm:$0xff] %v7317
    %7616 = vst [vmem:[%s17 + $0x30] sm:$0xff] %v7322
    %7617 = vst [vmem:[%s17 + $0x38] sm:$0xff] %v7327
    %7618 = vst [vmem:[%s17 + $0x40] sm:$0xff] %v7332
    %7619 = vst [vmem:[%s17 + $0x48] sm:$0xff] %v7337
    %7620 = vst [vmem:[%s17 + $0x50] sm:$0xff] %v7342
    %7621 = vst [vmem:[%s17 + $0x58] sm:$0xff] %v7347
    %7622 = vst [vmem:[%s17 + $0x60] sm:$0xff] %v7352
    %7623 = vst [vmem:[%s17 + $0x68] sm:$0xff] %v7357
    %7624 = vst [vmem:[%s17 + $0x70] sm:$0xff] %v7362
    %7625 = vst [vmem:[%s17 + $0x78] sm:$0xff] %v7367
    %7626 = vst [vmem:[%s17 + $0x80] sm:$0xff] %v7372
    %7627 = vst [vmem:[%s17 + $0x88] sm:$0xff] %v7377
    %7628 = vst [vmem:[%s17 + $0x90] sm:$0xff] %v7382
    %7629 = vst [vmem:[%s17 + $0x98] sm:$0xff] %v7387
    %7630 = vst [vmem:[%s17 + $0xa0] sm:$0xff] %v7392
    %7631 = vst [vmem:[%s17 + $0xa8] sm:$0xff] %v7397
    %7632 = vst [vmem:[%s17 + $0xb0] sm:$0xff] %v7402
    %7633 = vst [vmem:[%s17 + $0xb8] sm:$0xff] %v7407
    %7634 = vst [vmem:[%s17 + $0xc0] sm:$0xff] %v7412
    %7635 = vst [vmem:[%s17 + $0xc8] sm:$0xff] %v7417
    %7636 = vst [vmem:[%s17 + $0xd0] sm:$0xff] %v7422
    %7637 = vst [vmem:[%s17 + $0xd8] sm:$0xff] %v7427
    %7638 = vst [vmem:[%s17 + $0xe0] sm:$0xff] %v7432
    %7639 = vst [vmem:[%s17 + $0xe8] sm:$0xff] %v7437
    %7640 = vst [vmem:[%s17 + $0xf0] sm:$0xff] %v7442
    %7641 = vst [vmem:[%s17 + $0xf8] sm:$0xff] %v7447
    %7642 = vst [vmem:[%s17 + $0x100] sm:$0xff] %v7452
    %7643 = vst [vmem:[%s17 + $0x108] sm:$0xff] %v7457
    %7644 = vst [vmem:[%s17 + $0x110] sm:$0xff] %v7462
    %7645 = vst [vmem:[%s17 + $0x118] sm:$0xff] %v7467
    %7646 = vst [vmem:[%s17 + $0x120] sm:$0xff] %v7472
    %7647 = vst [vmem:[%s17 + $0x128] sm:$0xff] %v7477
    %7648 = vst [vmem:[%s17 + $0x130] sm:$0xff] %v7482
    %7649 = vst [vmem:[%s17 + $0x138] sm:$0xff] %v7487
    %7650 = vst [vmem:[%s17 + $0x140] sm:$0xff] %v7492
    %7651 = vst [vmem:[%s17 + $0x148] sm:$0xff] %v7497
    %7652 = vst [vmem:[%s17 + $0x150] sm:$0xff] %v7502
    %7653 = vst [vmem:[%s17 + $0x158] sm:$0xff] %v7507
    %7654 = vst [vmem:[%s17 + $0x160] sm:$0xff] %v7512
    %7655 = vst [vmem:[%s17 + $0x168] sm:$0xff] %v7517
    %7656 = vst [vmem:[%s17 + $0x170] sm:$0xff] %v7522
    %7657 = vst [vmem:[%s17 + $0x178] sm:$0xff] %v7527
    %7658 = vst [vmem:[%s17 + $0x180] sm:$0xff] %v7532
    %7659 = vst [vmem:[%s17 + $0x188] sm:$0xff] %v7537
    %7660 = vst [vmem:[%s17 + $0x190] sm:$0xff] %v7542
    %7661 = vst [vmem:[%s17 + $0x198] sm:$0xff] %v7547
    %7662 = vst [vmem:[%s17 + $0x1a0] sm:$0xff] %v7552
    %7663 = vst [vmem:[%s17 + $0x1a8] sm:$0xff] %v7557
    %7664 = vst [vmem:[%s17 + $0x1b0] sm:$0xff] %v7562
    %7665 = vst [vmem:[%s17 + $0x1b8] sm:$0xff] %v7567
    %7666 = vst [vmem:[%s17 + $0x1c0] sm:$0xff] %v7572
    %7667 = vst [vmem:[%s17 + $0x1c8] sm:$0xff] %v7577
    %7668 = vst [vmem:[%s17 + $0x1d0] sm:$0xff] %v7582
    %7669 = vst [vmem:[%s17 + $0x1d8] sm:$0xff] %v7587
    %7670 = vst [vmem:[%s17 + $0x1e0] sm:$0xff] %v7592
    %7671 = vst [vmem:[%s17 + $0x1e8] sm:$0xff] %v7597
    %7672 = vst [vmem:[%s17 + $0x1f0] sm:$0xff] %v7602
    %7673 = vst [vmem:[%s17 + $0x1f8] sm:$0xff] %v7607
    // Predicated region
    $region78: #{pseudo_label_nn.1} parent=1 // pred_check
      _
    $region79: #{pseudo_label_nn.1} parent=1 // pred_check_branch
      %7675 = sbr.rel (0) target = $region81
    $region80: #{pseudo_label_nn.1} parent=1 // pred_region
      _
    $region81: #{pseudo_label_nn.1} parent=1 // pred_fallthru
      _
    // Predicated region
    $region82: #{pseudo_label_nn.1} parent=1 // pred_check
      _
    $region83: #{pseudo_label_nn.1} parent=1 // pred_check_branch
      %7677 = sbr.rel (0) target = $region85
    $region84: #{pseudo_label_nn.1} parent=1 // pred_region
      _
    $region85: #{pseudo_label_nn.1} parent=1 // pred_fallthru
      _
    %7678 = vsyncpa [#allocation3], 1
    %7679 = vsyncpa [#allocation5], 1

</llo_original>
